<compile_context>
chip_gen: v7x
topology: tpu7x:2x2x1
jax: 0.10.0
libtpu: 0.0.40
codegen_flags: <defaults>
</compile_context>

<pallas_src>
import jax
import jax.numpy as jnp
from jax.experimental import pallas as pl
from jax.experimental.pallas import tpu as pltpu


# -----------------------------------------------------------------------------
# Pallas kernel 1: conv-as-matmul with lane-dense output.
#   out[b] = relu(W @ xt[b] + bias),  xt[b]: [K, M],  M = Ho*Wo on the lane dim.
# -----------------------------------------------------------------------------
def _conv_mm_kernel(xt_ref, w_ref, b_ref, o_ref):
    acc = jnp.dot(w_ref[...], xt_ref[0], preferred_element_type=jnp.float32)
    o_ref[0] = jnp.maximum(acc + b_ref[...], 0.0).astype(o_ref.dtype)


def conv_matmul_relu(xt, w2d, b2d):
    # xt: [B, K, M] (K = Cin*KH*KW, M = Ho*Wo), w2d: [Cout, K], b2d: [Cout, 1]
    B, K, M = xt.shape
    Cout = w2d.shape[0]
    return pl.pallas_call(
        _conv_mm_kernel,
        out_shape=jax.ShapeDtypeStruct((B, Cout, M), jnp.float32),
        grid=(B,),
        in_specs=[
            pl.BlockSpec((1, K, M), lambda b: (b, 0, 0)),
            pl.BlockSpec((Cout, K), lambda b: (0, 0)),
            pl.BlockSpec((Cout, 1), lambda b: (0, 0)),
        ],
        out_specs=pl.BlockSpec((1, Cout, M), lambda b: (b, 0, 0)),
        compiler_params=pltpu.CompilerParams(dimension_semantics=("parallel",)),
    )(xt, w2d, b2d)


def conv3d_relu(x, w2d, b2d, KH, KW, stride):
    # x: [B, Cin, D, H, W]; Conv3d with kernel depth 1 -> 2-D conv per used depth slice.
    B, Cin, D, H, W = x.shape
    Cout = w2d.shape[0]
    Do = (D - 1) // stride + 1
    Ho = (H - KH) // stride + 1
    Wo = (W - KW) // stride + 1
    outs = []
    for d in range(Do):
        xs = x[:, :, d * stride]                        # [B, Cin, H, W]
        taps = []
        for kh in range(KH):
            for kw in range(KW):
                taps.append(xs[:, :,
                               kh:kh + stride * (Ho - 1) + 1:stride,
                               kw:kw + stride * (Wo - 1) + 1:stride])
        xt = jnp.stack(taps, axis=2)                    # [B, Cin, KH*KW, Ho, Wo]
        xt = xt.reshape(B, Cin * KH * KW, Ho * Wo)      # contiguous merges, no transpose
        outs.append(conv_matmul_relu(xt, w2d, b2d))     # [B, Cout, Ho*Wo]
    y = jnp.stack(outs, axis=2)                         # [B, Cout, Do, Ho*Wo]
    return y.reshape(B, Cout, Do, Ho, Wo)


# -----------------------------------------------------------------------------
# Pallas kernel 2: fused fc1(ReLU)+fc2 head.
#   grid = (hidden-tiles, K-tiles) = ("parallel", "arbitrary").
#   Action contribution + bias + ReLU + fc2 happen in the last-K finalize step.
#   Each hidden tile j emits a partial fc2 output; partials are summed outside.
# -----------------------------------------------------------------------------
FC_TK = 3840          # reduction tile (multiple of 128): 15360 / 3840 = 4 steps
FC_TN = 128           # hidden-dim tile: 256 -> two parallel tiles (v7x megacore)
K_CONV_FEAT = 32 * 1 * 25 * 19   # 15200 flattened conv features


def _fc_head_kernel(x_ref, w1_ref, act_ref, w1a_ref, b1_ref, w2_ref, o_ref, acc_ref):
    k = pl.program_id(1)

    @pl.when(k == 0)
    def _():
        acc_ref[...] = jnp.zeros_like(acc_ref)

    acc_ref[...] += jnp.dot(x_ref[...], w1_ref[...],
                            preferred_element_type=jnp.float32)

    @pl.when(k == pl.num_programs(1) - 1)
    def _():
        pre = (acc_ref[...]
               + jnp.dot(act_ref[...], w1a_ref[...],
                         preferred_element_type=jnp.float32)
               + b1_ref[...])
        h = jnp.maximum(pre, 0.0)
        o_ref[0] = jnp.dot(h, w2_ref[...],
                           preferred_element_type=jnp.float32).astype(o_ref.dtype)


def fc_head(feat_p, action, w1_p, w1_act, b1_2d, w2, b2):
    B, Kp = feat_p.shape
    Hdim = w1_p.shape[1]                  # 256
    N = w2.shape[1]                       # 2
    nj = Hdim // FC_TN                    # 2
    nk = Kp // FC_TK                      # 4
    partial = pl.pallas_call(
        _fc_head_kernel,
        out_shape=jax.ShapeDtypeStruct((nj, B, N), jnp.float32),
        grid_spec=pltpu.PrefetchScalarGridSpec(
            num_scalar_prefetch=0,
            grid=(nj, nk),
            in_specs=[
                pl.BlockSpec((B, FC_TK), lambda j, k: (0, k)),       # activations
                pl.BlockSpec((FC_TK, FC_TN), lambda j, k: (k, j)),   # w1 (conv part)
                pl.BlockSpec((B, 2), lambda j, k: (0, 0)),           # action
                pl.BlockSpec((2, FC_TN), lambda j, k: (0, j)),       # w1 (action part)
                pl.BlockSpec((1, FC_TN), lambda j, k: (0, j)),       # b1
                pl.BlockSpec((FC_TN, N), lambda j, k: (j, 0)),       # w2
            ],
            out_specs=pl.BlockSpec((1, B, N), lambda j, k: (j, 0, 0)),
            scratch_shapes=[pltpu.VMEM((B, FC_TN), jnp.float32)],
        ),
        compiler_params=pltpu.CompilerParams(
            dimension_semantics=("parallel", "arbitrary"),
            vmem_limit_bytes=32 * 1024 * 1024,
        ),
    )(feat_p, w1_p, action, w1_act, b1_2d, w2)
    return partial.sum(axis=0) + b2.reshape(1, N)


# -----------------------------------------------------------------------------
# One-time parameter preparation (reshapes / weight padding OUTSIDE the hot path).
# -----------------------------------------------------------------------------
def prepare_params(params):
    Kp = ((K_CONV_FEAT + FC_TK - 1) // FC_TK) * FC_TK      # 15360
    w1 = params["w_fc1"]                                   # (15202, 256)
    w1_main = w1[:K_CONV_FEAT]                             # conv-feature rows
    w1_act = w1[K_CONV_FEAT:]                              # (2, 256) action rows
    return {
        "w_conv1_2d": params["w_conv1"].reshape(16, -1),   # [Cout, Cin*KH*KW]
        "b_conv1_2d": params["b_conv1"].reshape(-1, 1),
        "w_conv2_2d": params["w_conv2"].reshape(32, -1),
        "b_conv2_2d": params["b_conv2"].reshape(-1, 1),
        "w_fc1_main_p": jnp.pad(w1_main, ((0, Kp - K_CONV_FEAT), (0, 0))),
        "w_fc1_act": w1_act,
        "b_fc1_2d": params["b_fc1"].reshape(1, -1),
        "w_fc2": params["w_fc2"],
        "b_fc2": params["b_fc2"],
    }


# -----------------------------------------------------------------------------
# Full forward (matches MultiAgentCNNCritic.forward)
# -----------------------------------------------------------------------------
@jax.jit
def multi_agent_cnn_critic(prep, state, action):
    x = conv3d_relu(state, prep["w_conv1_2d"], prep["b_conv1_2d"], KH=3, KW=3, stride=4)
    x = conv3d_relu(x, prep["w_conv2_2d"], prep["b_conv2_2d"], KH=3, KW=3, stride=2)
    B = x.shape[0]
    flat = x.reshape(B, -1)                                # (B, 15200), torch view order
    Kp = prep["w_fc1_main_p"].shape[0]
    feat_p = jnp.pad(flat, ((0, 0), (0, Kp - flat.shape[1])))   # tiny activation pad only
    return fc_head(feat_p, action, prep["w_fc1_main_p"], prep["w_fc1_act"],
                   prep["b_fc1_2d"], prep["w_fc2"], prep["b_fc2"])


# -----------------------------------------------------------------------------
# Deterministic parameter init (PyTorch-style uniform(-1/sqrt(fan_in), 1/sqrt(fan_in)))
# -----------------------------------------------------------------------------
def init_params(key):
    ks = jax.random.split(key, 8)

    def u(k, shape, fan_in):
        bound = 1.0 / float(fan_in) ** 0.5
        return jax.random.uniform(k, shape, jnp.float32, -bound, bound)

    return {
        "w_conv1": u(ks[0], (16, 4, 1, 3, 3), 4 * 9),
        "b_conv1": u(ks[1], (16,), 4 * 9),
        "w_conv2": u(ks[2], (32, 16, 1, 3, 3), 16 * 9),
        "b_conv2": u(ks[3], (32,), 16 * 9),
        "w_fc1":   u(ks[4], (15202, 256), 15202),   # stored transposed vs. torch Linear.weight
        "b_fc1":   u(ks[5], (256,), 15202),
        "w_fc2":   u(ks[6], (256, 2), 256),
        "b_fc2":   u(ks[7], (2,), 256),
    }


# -----------------------------------------------------------------------------
# Pure-JAX reference for a correctness check.
# -----------------------------------------------------------------------------
def reference_forward(params, state, action):
    dn1 = jax.lax.conv_dimension_numbers(state.shape, params["w_conv1"].shape,
                                         ("NCDHW", "OIDHW", "NCDHW"))
    x = jax.lax.conv_general_dilated(state, params["w_conv1"], (4, 4, 4), "VALID",
                                     dimension_numbers=dn1)
    x = jnp.maximum(x + params["b_conv1"].reshape(1, -1, 1, 1, 1), 0.0)
    dn2 = jax.lax.conv_dimension_numbers(x.shape, params["w_conv2"].shape,
                                         ("NCDHW", "OIDHW", "NCDHW"))
    x = jax.lax.conv_general_dilated(x, params["w_conv2"], (2, 2, 2), "VALID",
                                     dimension_numbers=dn2)
    x = jnp.maximum(x + params["b_conv2"].reshape(1, -1, 1, 1, 1), 0.0)
    x = x.reshape(x.shape[0], -1)
    x = jnp.concatenate([x, action], axis=1)
    x = jnp.maximum(x @ params["w_fc1"] + params["b_fc1"], 0.0)
    return x @ params["w_fc2"] + params["b_fc2"]


if __name__ == "__main__":
    key = jax.random.PRNGKey(0)
    k_p, k_s, k_a = jax.random.split(key, 3)
    params = init_params(k_p)
    prep = prepare_params(params)    # one-time weight reshape/pad, outside the hot path

    # Shapes implied by fc1.in_features == 15202: state [B, 4, 2, 210, 160], action [B, 2]
    state = jax.random.normal(k_s, (2, 4, 2, 210, 160), jnp.float32)
    action = jax.random.normal(k_a, (2, 2), jnp.float32)

    out = jax.block_until_ready(multi_agent_cnn_critic(prep, state, action))
    assert out.shape == (2, 2), out.shape

    ref = reference_forward(params, state, action)
    err = float(jnp.max(jnp.abs(out - ref)))
    scale = float(jnp.max(jnp.abs(ref))) + 1.0
    assert err <= 5e-3 * scale, f"mismatch: max abs err {err}, ref scale {scale}"

    print("KERNEL_OK")
</pallas_src>

<mosaic_0001>
module attributes {stable_mosaic.version = 11 : i64} {
  func.func @_conv_mm_kernel(%arg0: i32, %arg1: memref<1x36x2080xf32, #tpu.memory_space<vmem>>, %arg2: memref<16x36xf32, #tpu.memory_space<vmem>>, %arg3: memref<16x1xf32, #tpu.memory_space<vmem>>, %arg4: memref<1x16x2080xf32, #tpu.memory_space<vmem>>) attributes {dimension_semantics = [#tpu.dimension_semantics<parallel>], iteration_bounds = array<i64: 2>, scalar_prefetch = 0 : i64, scratch_operands = 0 : i64, tpu.core_type = #tpu.core_type<tc>, window_params = [{transform_indices = @transform_0, window_bounds = array<i64: 1, 36, 2080>}, {pipeline_mode = #tpu.pipeline_mode<synchronous>, transform_indices = @transform_1, window_bounds = array<i64: 16, 36>}, {pipeline_mode = #tpu.pipeline_mode<synchronous>, transform_indices = @transform_2, window_bounds = array<i64: 16, 1>}, {transform_indices = @transform_3, window_bounds = array<i64: 1, 16, 2080>}]} {
    %c0 = arith.constant 0 : index
    %c0_0 = arith.constant 0 : index
    %0 = vector.load %arg2[%c0, %c0_0] : memref<16x36xf32, #tpu.memory_space<vmem>>, vector<16x36xf32>
    %c0_1 = arith.constant 0 : index
    %c0_2 = arith.constant 0 : index
    %c0_3 = arith.constant 0 : index
    %1 = vector.load %arg1[%c0_1, %c0_2, %c0_3] : memref<1x36x2080xf32, #tpu.memory_space<vmem>>, vector<1x36x2080xf32>
    %2 = vector.shape_cast %1 : vector<1x36x2080xf32> to vector<36x2080xf32>
    %cst = arith.constant dense<0.000000e+00> : vector<16x2080xf32>
    %3 = tpu.matmul %0, %2, %cst {dimension_numbers = #tpu.dot_dimension_numbers<[1], [0], [0], [1], [0, 0, 1, 1], [], []>} : vector<16x36xf32>, vector<36x2080xf32>, vector<16x2080xf32> -> vector<16x2080xf32>
    %c0_4 = arith.constant 0 : index
    %c0_5 = arith.constant 0 : index
    %4 = vector.load %arg3[%c0_4, %c0_5] : memref<16x1xf32, #tpu.memory_space<vmem>>, vector<16x1xf32>
    %5 = vector.broadcast %4 : vector<16x1xf32> to vector<16x2080xf32>
    %6 = arith.addf %3, %5 : vector<16x2080xf32>
    %cst_6 = arith.constant 0.000000e+00 : f32
    %7 = vector.broadcast %cst_6 : f32 to vector<16x2080xf32>
    %8 = arith.maximumf %6, %7 : vector<16x2080xf32>
    %c0_7 = arith.constant 0 : index
    %c0_8 = arith.constant 0 : index
    %c0_9 = arith.constant 0 : index
    %9 = vector.load %arg4[%c0_7, %c0_8, %c0_9] : memref<1x16x2080xf32, #tpu.memory_space<vmem>>, vector<1x16x2080xf32>
    %10 = vector.shape_cast %9 : vector<1x16x2080xf32> to vector<16x2080xf32>
    %11 = vector.shape_cast %8 : vector<16x2080xf32> to vector<1x16x2080xf32>
    tpu.vector_store %arg4[%c0_7, %c0_8, %c0_9], %11 {strides = array<i32>} : memref<1x16x2080xf32, #tpu.memory_space<vmem>>, vector<1x16x2080xf32>,
    return
  }
  func.func @transform_0(%arg0: i32) -> (i32, i32, i32) {
    %c0_i32 = arith.constant 0 : i32
    %c0_i32_0 = arith.constant 0 : i32
    %c0_i32_1 = arith.constant 0 : i32
    return %arg0, %c0_i32, %c0_i32_0 : i32, i32, i32
  }
  func.func @transform_1(%arg0: i32) -> (i32, i32) {
    %c0_i32 = arith.constant 0 : i32
    %c0_i32_0 = arith.constant 0 : i32
    %c0_i32_1 = arith.constant 0 : i32
    return %c0_i32, %c0_i32_0 : i32, i32
  }
  func.func @transform_2(%arg0: i32) -> (i32, i32) {
    %c0_i32 = arith.constant 0 : i32
    %c0_i32_0 = arith.constant 0 : i32
    %c0_i32_1 = arith.constant 0 : i32
    return %c0_i32, %c0_i32_0 : i32, i32
  }
  func.func @transform_3(%arg0: i32) -> (i32, i32, i32) {
    %c0_i32 = arith.constant 0 : i32
    %c0_i32_0 = arith.constant 0 : i32
    %c0_i32_1 = arith.constant 0 : i32
    return %arg0, %c0_i32, %c0_i32_0 : i32, i32, i32
  }
}

module attributes {stable_mosaic.version = 11 : i64} {
  func.func @_conv_mm_kernel(%arg0: i32, %arg1: memref<1x144x475xf32, #tpu.memory_space<vmem>>, %arg2: memref<32x144xf32, #tpu.memory_space<vmem>>, %arg3: memref<32x1xf32, #tpu.memory_space<vmem>>, %arg4: memref<1x32x475xf32, #tpu.memory_space<vmem>>) attributes {dimension_semantics = [#tpu.dimension_semantics<parallel>], iteration_bounds = array<i64: 2>, scalar_prefetch = 0 : i64, scratch_operands = 0 : i64, tpu.core_type = #tpu.core_type<tc>, window_params = [{transform_indices = @transform_0, window_bounds = array<i64: 1, 144, 475>}, {pipeline_mode = #tpu.pipeline_mode<synchronous>, transform_indices = @transform_1, window_bounds = array<i64: 32, 144>}, {pipeline_mode = #tpu.pipeline_mode<synchronous>, transform_indices = @transform_2, window_bounds = array<i64: 32, 1>}, {transform_indices = @transform_3, window_bounds = array<i64: 1, 32, 475>}]} {
    %c0 = arith.constant 0 : index
    %c0_0 = arith.constant 0 : index
    %0 = vector.load %arg2[%c0, %c0_0] : memref<32x144xf32, #tpu.memory_space<vmem>>, vector<32x144xf32>
    %c0_1 = arith.constant 0 : index
    %c0_2 = arith.constant 0 : index
    %c0_3 = arith.constant 0 : index
    %1 = vector.load %arg1[%c0_1, %c0_2, %c0_3] : memref<1x144x475xf32, #tpu.memory_space<vmem>>, vector<1x144x475xf32>
    %2 = vector.shape_cast %1 : vector<1x144x475xf32> to vector<144x475xf32>
    %cst = arith.constant dense<0.000000e+00> : vector<32x475xf32>
    %3 = tpu.matmul %0, %2, %cst {dimension_numbers = #tpu.dot_dimension_numbers<[1], [0], [0], [1], [0, 0, 1, 1], [], []>} : vector<32x144xf32>, vector<144x475xf32>, vector<32x475xf32> -> vector<32x475xf32>
    %c0_4 = arith.constant 0 : index
    %c0_5 = arith.constant 0 : index
    %4 = vector.load %arg3[%c0_4, %c0_5] : memref<32x1xf32, #tpu.memory_space<vmem>>, vector<32x1xf32>
    %5 = vector.broadcast %4 : vector<32x1xf32> to vector<32x475xf32>
    %6 = arith.addf %3, %5 : vector<32x475xf32>
    %cst_6 = arith.constant 0.000000e+00 : f32
    %7 = vector.broadcast %cst_6 : f32 to vector<32x475xf32>
    %8 = arith.maximumf %6, %7 : vector<32x475xf32>
    %c0_7 = arith.constant 0 : index
    %c0_8 = arith.constant 0 : index
    %c0_9 = arith.constant 0 : index
    %9 = vector.load %arg4[%c0_7, %c0_8, %c0_9] : memref<1x32x475xf32, #tpu.memory_space<vmem>>, vector<1x32x475xf32>
    %10 = vector.shape_cast %9 : vector<1x32x475xf32> to vector<32x475xf32>
    %11 = vector.shape_cast %8 : vector<32x475xf32> to vector<1x32x475xf32>
    tpu.vector_store %arg4[%c0_7, %c0_8, %c0_9], %11 {strides = array<i32>} : memref<1x32x475xf32, #tpu.memory_space<vmem>>, vector<1x32x475xf32>,
    return
  }
  func.func @transform_0(%arg0: i32) -> (i32, i32, i32) {
    %c0_i32 = arith.constant 0 : i32
    %c0_i32_0 = arith.constant 0 : i32
    %c0_i32_1 = arith.constant 0 : i32
    return %arg0, %c0_i32, %c0_i32_0 : i32, i32, i32
  }
  func.func @transform_1(%arg0: i32) -> (i32, i32) {
    %c0_i32 = arith.constant 0 : i32
    %c0_i32_0 = arith.constant 0 : i32
    %c0_i32_1 = arith.constant 0 : i32
    return %c0_i32, %c0_i32_0 : i32, i32
  }
  func.func @transform_2(%arg0: i32) -> (i32, i32) {
    %c0_i32 = arith.constant 0 : i32
    %c0_i32_0 = arith.constant 0 : i32
    %c0_i32_1 = arith.constant 0 : i32
    return %c0_i32, %c0_i32_0 : i32, i32
  }
  func.func @transform_3(%arg0: i32) -> (i32, i32, i32) {
    %c0_i32 = arith.constant 0 : i32
    %c0_i32_0 = arith.constant 0 : i32
    %c0_i32_1 = arith.constant 0 : i32
    return %arg0, %c0_i32, %c0_i32_0 : i32, i32, i32
  }
}

module attributes {stable_mosaic.version = 11 : i64} {
  func.func @_fc_head_kernel(%arg0: i32, %arg1: i32, %arg2: memref<2x3840xf32, #tpu.memory_space<vmem>>, %arg3: memref<3840x128xf32, #tpu.memory_space<vmem>>, %arg4: memref<2x2xf32, #tpu.memory_space<vmem>>, %arg5: memref<2x128xf32, #tpu.memory_space<vmem>>, %arg6: memref<1x128xf32, #tpu.memory_space<vmem>>, %arg7: memref<128x2xf32, #tpu.memory_space<vmem>>, %arg8: memref<1x2x2xf32, #tpu.memory_space<vmem>>, %arg9: memref<2x128xf32, #tpu.memory_space<vmem>>) attributes {dimension_semantics = [#tpu.dimension_semantics<parallel>, #tpu.dimension_semantics<arbitrary>], iteration_bounds = array<i64: 2, 4>, scalar_prefetch = 0 : i64, scratch_operands = 1 : i64, tpu.core_type = #tpu.core_type<tc>, window_params = [{transform_indices = @transform_0, window_bounds = array<i64: 2, 3840>}, {transform_indices = @transform_1, window_bounds = array<i64: 3840, 128>}, {pipeline_mode = #tpu.pipeline_mode<synchronous>, transform_indices = @transform_2, window_bounds = array<i64: 2, 2>}, {transform_indices = @transform_3, window_bounds = array<i64: 2, 128>}, {transform_indices = @transform_4, window_bounds = array<i64: 1, 128>}, {transform_indices = @transform_5, window_bounds = array<i64: 128, 2>}, {transform_indices = @transform_6, window_bounds = array<i64: 1, 2, 2>}]} {
    %c0_i32 = arith.constant 0 : i32
    %0 = arith.cmpi eq, %arg1, %c0_i32 : i32
    %1 = arith.extui %0 : i1 to i32
    %c0_i32_0 = arith.constant 0 : i32
    %2 = arith.cmpi ne, %1, %c0_i32_0 : i32
    scf.if %2 {
      %cst_9 = arith.constant 0.000000e+00 : f32
      %12 = vector.broadcast %cst_9 : f32 to vector<2x128xf32>
      %c0_10 = arith.constant 0 : index
      %c0_11 = arith.constant 0 : index
      %13 = vector.load %arg9[%c0_10, %c0_11] : memref<2x128xf32, #tpu.memory_space<vmem>>, vector<2x128xf32>
      tpu.vector_store %arg9[%c0_10, %c0_11], %12 {strides = array<i32>} : memref<2x128xf32, #tpu.memory_space<vmem>>, vector<2x128xf32>,
    } else {
    }
    %c0 = arith.constant 0 : index
    %c0_1 = arith.constant 0 : index
    %3 = vector.load %arg9[%c0, %c0_1] : memref<2x128xf32, #tpu.memory_space<vmem>>, vector<2x128xf32>
    %c0_2 = arith.constant 0 : index
    %c0_3 = arith.constant 0 : index
    %4 = vector.load %arg2[%c0_2, %c0_3] : memref<2x3840xf32, #tpu.memory_space<vmem>>, vector<2x3840xf32>
    %c0_4 = arith.constant 0 : index
    %c0_5 = arith.constant 0 : index
    %5 = vector.load %arg3[%c0_4, %c0_5] : memref<3840x128xf32, #tpu.memory_space<vmem>>, vector<3840x128xf32>
    %cst = arith.constant dense<0.000000e+00> : vector<2x128xf32>
    %6 = tpu.matmul %4, %5, %cst {dimension_numbers = #tpu.dot_dimension_numbers<[1], [0], [0], [1], [0, 0, 1, 1], [], []>} : vector<2x3840xf32>, vector<3840x128xf32>, vector<2x128xf32> -> vector<2x128xf32>
    %7 = arith.addf %3, %6 : vector<2x128xf32>
    %c0_6 = arith.constant 0 : index
    %c0_7 = arith.constant 0 : index
    %8 = vector.load %arg9[%c0_6, %c0_7] : memref<2x128xf32, #tpu.memory_space<vmem>>, vector<2x128xf32>
    tpu.vector_store %arg9[%c0_6, %c0_7], %7 {strides = array<i32>} : memref<2x128xf32, #tpu.memory_space<vmem>>, vector<2x128xf32>,
    %c3_i32 = arith.constant 3 : i32
    %9 = arith.cmpi eq, %arg1, %c3_i32 : i32
    %10 = arith.extui %9 : i1 to i32
    %c0_i32_8 = arith.constant 0 : i32
    %11 = arith.cmpi ne, %10, %c0_i32_8 : i32
    scf.if %11 {
      %c0_9 = arith.constant 0 : index
      %c0_10 = arith.constant 0 : index
      %12 = vector.load %arg9[%c0_9, %c0_10] : memref<2x128xf32, #tpu.memory_space<vmem>>, vector<2x128xf32>
      %c0_11 = arith.constant 0 : index
      %c0_12 = arith.constant 0 : index
      %13 = vector.load %arg4[%c0_11, %c0_12] : memref<2x2xf32, #tpu.memory_space<vmem>>, vector<2x2xf32>
      %c0_13 = arith.constant 0 : index
      %c0_14 = arith.constant 0 : index
      %14 = vector.load %arg5[%c0_13, %c0_14] : memref<2x128xf32, #tpu.memory_space<vmem>>, vector<2x128xf32>
      %cst_15 = arith.constant dense<0.000000e+00> : vector<2x128xf32>
      %15 = tpu.matmul %13, %14, %cst_15 {dimension_numbers = #tpu.dot_dimension_numbers<[1], [0], [0], [1], [0, 0, 1, 1], [], []>} : vector<2x2xf32>, vector<2x128xf32>, vector<2x128xf32> -> vector<2x128xf32>
      %16 = arith.addf %12, %15 : vector<2x128xf32>
      %c0_16 = arith.constant 0 : index
      %c0_17 = arith.constant 0 : index
      %17 = vector.load %arg6[%c0_16, %c0_17] : memref<1x128xf32, #tpu.memory_space<vmem>>, vector<1x128xf32>
      %18 = vector.broadcast %17 : vector<1x128xf32> to vector<2x128xf32>
      %19 = arith.addf %16, %18 : vector<2x128xf32>
      %cst_18 = arith.constant 0.000000e+00 : f32
      %20 = vector.broadcast %cst_18 : f32 to vector<2x128xf32>
      %21 = arith.maximumf %19, %20 : vector<2x128xf32>
      %c0_19 = arith.constant 0 : index
      %c0_20 = arith.constant 0 : index
      %22 = vector.load %arg7[%c0_19, %c0_20] : memref<128x2xf32, #tpu.memory_space<vmem>>, vector<128x2xf32>
      %cst_21 = arith.constant dense<0.000000e+00> : vector<2x2xf32>
      %23 = tpu.matmul %21, %22, %cst_21 {dimension_numbers = #tpu.dot_dimension_numbers<[1], [0], [0], [1], [0, 0, 1, 1], [], []>} : vector<2x128xf32>, vector<128x2xf32>, vector<2x2xf32> -> vector<2x2xf32>
      %c0_22 = arith.constant 0 : index
      %c0_23 = arith.constant 0 : index
      %c0_24 = arith.constant 0 : index
      %24 = vector.load %arg8[%c0_22, %c0_23, %c0_24] : memref<1x2x2xf32, #tpu.memory_space<vmem>>, vector<1x2x2xf32>
      %25 = vector.shape_cast %24 : vector<1x2x2xf32> to vector<2x2xf32>
      %26 = vector.shape_cast %23 : vector<2x2xf32> to vector<1x2x2xf32>
      tpu.vector_store %arg8[%c0_22, %c0_23, %c0_24], %26 {strides = array<i32>} : memref<1x2x2xf32, #tpu.memory_space<vmem>>, vector<1x2x2xf32>,
    } else {
    }
    return
  }
  func.func @transform_0(%arg0: i32, %arg1: i32) -> (i32, i32) {
    %c0_i32 = arith.constant 0 : i32
    %c0_i32_0 = arith.constant 0 : i32
    return %c0_i32, %arg1 : i32, i32
  }
  func.func @transform_1(%arg0: i32, %arg1: i32) -> (i32, i32) {
    %c0_i32 = arith.constant 0 : i32
    return %arg1, %arg0 : i32, i32
  }
  func.func @transform_2(%arg0: i32, %arg1: i32) -> (i32, i32) {
    %c0_i32 = arith.constant 0 : i32
    %c0_i32_0 = arith.constant 0 : i32
    %c0_i32_1 = arith.constant 0 : i32
    return %c0_i32, %c0_i32_0 : i32, i32
  }
  func.func @transform_3(%arg0: i32, %arg1: i32) -> (i32, i32) {
    %c0_i32 = arith.constant 0 : i32
    %c0_i32_0 = arith.constant 0 : i32
    return %c0_i32, %arg0 : i32, i32
  }
  func.func @transform_4(%arg0: i32, %arg1: i32) -> (i32, i32) {
    %c0_i32 = arith.constant 0 : i32
    %c0_i32_0 = arith.constant 0 : i32
    return %c0_i32, %arg0 : i32, i32
  }
  func.func @transform_5(%arg0: i32, %arg1: i32) -> (i32, i32) {
    %c0_i32 = arith.constant 0 : i32
    %c0_i32_0 = arith.constant 0 : i32
    return %arg0, %c0_i32 : i32, i32
  }
  func.func @transform_6(%arg0: i32, %arg1: i32) -> (i32, i32, i32) {
    %c0_i32 = arith.constant 0 : i32
    %c0_i32_0 = arith.constant 0 : i32
    %c0_i32_1 = arith.constant 0 : i32
    return %arg0, %c0_i32, %c0_i32_0 : i32, i32, i32
  }
}

</mosaic_0001>

<llo_original>
// kernel: multi_agent_cnn_critic.3
$region0: #{multi_agent_cnn_critic.3}
  #allocation0 [shape = 'u32[]', space=smem, size = 0x4, offset = 0x4, fixed_abs, tag = 'smem constant byte address 0x4 - core index']
  #allocation1 [shape = 'u32[144,128]{1,0:T(1,128)}', space=vmem, size = 0x12000, scoped, tag = 'internal scratch']
  %s0 = inlined_call_operand.vmem [shape: f32[2,36,2080], index: 0, kind: input, shape index: {}]
  %s1 = inlined_call_operand.vmem [shape: f32[16,36], index: 1, kind: input, shape index: {}]
  %s2 = inlined_call_operand.vmem [shape: f32[16,1], index: 2, kind: input, shape index: {}]
  %s3 = inlined_call_operand.vmem [shape: f32[2,16,2080], index: 3, kind: output, shape index: {}]
  %s4 = sld [smem:[#allocation0]]
  $region45: #{multi_agent_cnn_critic.3} parent=0
    _
  %s6 = ssub.s32 1, %s4
  %s7 = scalar_select 0, %s6, %s4
  loop: start=0, step=1, limit=4
  $region2: #{multi_agent_cnn_critic.3} parent=0 // loop_pre_header
    _
  $region3: #{multi_agent_cnn_critic.3} parent=0 // loop_header
    %s9 = sphi 0, %s13
    %p10 = scmp.ge.s32.totalorder %s9, 4
    %s19 = sphi 0, %s21
    %s22 = sphi 0, %s19
    %s23 = sphi 0, %s22
    %s39 = sphi 0, %s23
    %s43 = sphi 0, %s43
    %s45 = sphi 0, %s43
    %s46 = sphi 0, %s45
    %s60 = sphi 0, %s46
    %s64 = sphi 0, %s64
    %s66 = sphi 0, %s64
    %s67 = sphi 0, %s66
    %s81 = sphi 0, %s67
    %s87 = sphi 0, %s89
    %s90 = sphi 0, %s87
    %s91 = sphi 0, %s90
    %s107 = sphi 0, %s91
  $region4: #{multi_agent_cnn_critic.3} parent=0 // loop_header_branch
    %12 = sbr.rel (%p10) target = $region8
  $region5: #{multi_agent_cnn_critic.3} parent=0 // loop_body
    %s14 = ssub.s32 %s9, 1
    %s15 = ssub.s32 %s9, 2
    %s16 = sadd.s32 %s9, 1
    %s17 = ssub.s32 %s9, %s16
    %p18 = scmp.eq.s32.totalorder %s17, 0
    %s20 = sadd.s32 %s19, 1
    %s21 = scalar_select %p18, %s19, %s20
    %p24 = pneg %p18
    %p25 = scmp.eq.s32.totalorder %s9, 1
    %p26 = por %p24, %p25
    %p27 = scmp.ne.s32.totalorder %s19, %s22
    %p28 = scmp.eq.s32.totalorder %s9, 0
    %p29 = por %p27, %p28
    %p30 = scmp.ne.s32.totalorder %s19, %s22
    %p31 = scmp.eq.s32.totalorder %s14, 1
    %p32 = por %p30, %p31
    %p33 = scmp.ne.s32.totalorder %s22, %s23
    %p34 = scmp.eq.s32.totalorder %s14, 0
    %p35 = por %p33, %p34
    %p36 = scmp.ne.s32.totalorder %s22, %s23
    %p37 = scmp.eq.s32.totalorder %s15, 1
    %p38 = por %p36, %p37
    %p40 = scmp.ne.s32.totalorder %s23, %s39
    %p41 = scmp.eq.s32.totalorder %s15, 0
    %p42 = por %p40, %p41
    %s44 = sadd.s32 %s43, 1
    %p47 = scmp.eq.s32.totalorder %s9, 1
    %p48 = scmp.ne.s32.totalorder %s43, %s45
    %p49 = scmp.eq.s32.totalorder %s9, 0
    %p50 = por %p48, %p49
    %p51 = scmp.ne.s32.totalorder %s43, %s45
    %p52 = scmp.eq.s32.totalorder %s14, 1
    %p53 = por %p51, %p52
    %p54 = scmp.ne.s32.totalorder %s45, %s46
    %p55 = scmp.eq.s32.totalorder %s14, 0
    %p56 = por %p54, %p55
    %p57 = scmp.ne.s32.totalorder %s45, %s46
    %p58 = scmp.eq.s32.totalorder %s15, 1
    %p59 = por %p57, %p58
    %p61 = scmp.ne.s32.totalorder %s46, %s60
    %p62 = scmp.eq.s32.totalorder %s15, 0
    %p63 = por %p61, %p62
    %s65 = sadd.s32 %s64, 1
    %p68 = scmp.eq.s32.totalorder %s9, 1
    %p69 = scmp.ne.s32.totalorder %s64, %s66
    %p70 = scmp.eq.s32.totalorder %s9, 0
    %p71 = por %p69, %p70
    %p72 = scmp.ne.s32.totalorder %s64, %s66
    %p73 = scmp.eq.s32.totalorder %s14, 1
    %p74 = por %p72, %p73
    %p75 = scmp.ne.s32.totalorder %s66, %s67
    %p76 = scmp.eq.s32.totalorder %s14, 0
    %p77 = por %p75, %p76
    %p78 = scmp.ne.s32.totalorder %s66, %s67
    %p79 = scmp.eq.s32.totalorder %s15, 1
    %p80 = por %p78, %p79
    %p82 = scmp.ne.s32.totalorder %s67, %s81
    %p83 = scmp.eq.s32.totalorder %s15, 0
    %p84 = por %p82, %p83
    %s85 = ssub.s32 %s9, %s16
    %p86 = scmp.eq.s32.totalorder %s85, 0
    %s88 = sadd.s32 %s87, 1
    %s89 = scalar_select %p86, %s87, %s88
    %p92 = pneg %p86
    %p93 = scmp.eq.s32.totalorder %s9, 1
    %p94 = por %p92, %p93
    %p95 = scmp.ne.s32.totalorder %s87, %s90
    %p96 = scmp.eq.s32.totalorder %s9, 0
    %p97 = por %p95, %p96
    %p98 = scmp.ne.s32.totalorder %s87, %s90
    %p99 = scmp.eq.s32.totalorder %s14, 1
    %p100 = por %p98, %p99
    %p101 = scmp.ne.s32.totalorder %s90, %s91
    %p102 = scmp.eq.s32.totalorder %s14, 0
    %p103 = por %p101, %p102
    %p104 = scmp.ne.s32.totalorder %s90, %s91
    %p105 = scmp.eq.s32.totalorder %s15, 1
    %p106 = por %p104, %p105
    %p108 = scmp.ne.s32.totalorder %s91, %s107
    %p109 = scmp.eq.s32.totalorder %s15, 0
    %p110 = por %p108, %p109
    %p111 = scmp.le.s32.totalorder 1, %s9
    %p112 = scmp.lt.s32.totalorder %s9, 3
    %p113 = pnand %p111, %p112
    %p114 = pneg %p113
    // Predicated region
    $region9: #{multi_agent_cnn_critic.3} parent=5 // pred_check
      _
    $region10: #{multi_agent_cnn_critic.3} parent=5 // pred_check_branch
      %116 = sbr.rel (%p113) target = $region12
    $region11: #{multi_agent_cnn_critic.3} parent=5 // pred_region
      %s117 = ssub.s32 %s9, 1
      // Predicated region
      $region13: #{multi_agent_cnn_critic.3} parent=11 // pred_check
        %p118 = pneg %p56
      $region14: #{multi_agent_cnn_critic.3} parent=11 // pred_check_branch
        %120 = sbr.rel (%p118) target = $region16
      $region15: #{multi_agent_cnn_critic.3} parent=11 // pred_region
        _
      $region16: #{multi_agent_cnn_critic.3} parent=11 // pred_fallthru
        _
      // Predicated region
      $region17: #{multi_agent_cnn_critic.3} parent=11 // pred_check
        %p121 = pneg %p77
      $region18: #{multi_agent_cnn_critic.3} parent=11 // pred_check_branch
        %123 = sbr.rel (%p121) target = $region20
      $region19: #{multi_agent_cnn_critic.3} parent=11 // pred_region
        _
      $region20: #{multi_agent_cnn_critic.3} parent=11 // pred_fallthru
        _
    $region12: #{multi_agent_cnn_critic.3} parent=5 // pred_fallthru
      _
    %p124 = scmp.lt.s32.totalorder %s9, 2
    // Predicated region
    $region21: #{multi_agent_cnn_critic.3} parent=5 // pred_check
      %p125 = pneg %p124
    $region22: #{multi_agent_cnn_critic.3} parent=5 // pred_check_branch
      %127 = sbr.rel (%p125) target = $region24
    $region23: #{multi_agent_cnn_critic.3} parent=5 // pred_region
      // Predicated region
      $region25: #{multi_agent_cnn_critic.3} parent=23 // pred_check
        %p128 = pneg %p29
      $region26: #{multi_agent_cnn_critic.3} parent=23 // pred_check_branch
        %130 = sbr.rel (%p128) target = $region28
      $region27: #{multi_agent_cnn_critic.3} parent=23 // pred_region
        %p131 = scmp.lt.s32.totalorder %s9, 1
        %s132 = scalar_select %p131, %s9, 1
        %s133 = smul.addr %s132, 85
        %s134 = smul.addr %s133, 8
        %s135 = scalar_lea.vmem %s0, %s134
      $region28: #{multi_agent_cnn_critic.3} parent=23 // pred_fallthru
        _
    $region24: #{multi_agent_cnn_critic.3} parent=5 // pred_fallthru
      _
    %p136 = scmp.le.s32.totalorder 1, %s9
    %p137 = scmp.lt.s32.totalorder %s9, 3
    %p138 = pnand %p136, %p137
    %p139 = pneg %p138
    // Predicated region
    $region29: #{multi_agent_cnn_critic.3} parent=5 // pred_check
      _
    $region30: #{multi_agent_cnn_critic.3} parent=5 // pred_check_branch
      %141 = sbr.rel (%p138) target = $region32
    $region31: #{multi_agent_cnn_critic.3} parent=5 // pred_region
      %s142 = ssub.s32 %s9, 1
      %p143 = scmp.lt.s32.totalorder %s14, 1
      %s144 = scalar_select %p143, %s14, 1
      %s145 = smul.addr %s144, 85
      %s146 = smul.addr %s145, 8
      %s147 = scalar_lea.vmem %s0, %s146
      %p148 = pneg %p35
      %p149 = pneg %p32
      %p150 = pneg %p56
      %p151 = pneg %p53
      %p152 = pneg %p77
      %p153 = pneg %p74
      %p154 = pneg %p103
      %p155 = pneg %p100
      %p156 = scmp.lt.s32.totalorder %s14, 1
      %s157 = scalar_select %p156, %s14, 1
      %s158 = smul.addr %s157, 34
      %s159 = smul.addr %s158, 8
      %s160 = scalar_lea.vmem %s3, %s159
      %p161 = scmp.lt.s32.totalorder %s14, 1
      %s162 = scalar_select %p161, %s14, 1
      %s163 = smul.addr %s162, 85
      %s164 = smul.addr %s163, 8
      %s165 = scalar_lea.vmem %s0, %s164
      %p166 = scmp.lt.s32.totalorder %s14, 1
      %s167 = scalar_select %p166, %s14, 1
      %s168 = smul.addr %s167, 34
      %s169 = smul.addr %s168, 8
      %s170 = scalar_lea.vmem %s3, %s169
      %v171 = vld [vmem:[%s1] sm:$0xff]
      %v172 = vld [vmem:[%s1 + $0x8] sm:$0xff]
      %v173 = vld [vmem:[%s165] sm:$0xff]
      %v174 = vld [vmem:[%s165 + $0x8] sm:$0xff]
      %v175 = vld [vmem:[%s165 + $0x10] sm:$0xff]
      %v176 = vld [vmem:[%s165 + $0x18] sm:$0xff]
      %v177 = vld [vmem:[%s165 + $0x20] sm:$0xff]
      %v178 = vld [vmem:[%s165 + $0x28] sm:$0xff]
      %v179 = vld [vmem:[%s165 + $0x30] sm:$0xff]
      %v180 = vld [vmem:[%s165 + $0x38] sm:$0xff]
      %v181 = vld [vmem:[%s165 + $0x40] sm:$0xff]
      %v182 = vld [vmem:[%s165 + $0x48] sm:$0xff]
      %v183 = vld [vmem:[%s165 + $0x50] sm:$0xff]
      %v184 = vld [vmem:[%s165 + $0x58] sm:$0xff]
      %v185 = vld [vmem:[%s165 + $0x60] sm:$0xff]
      %v186 = vld [vmem:[%s165 + $0x68] sm:$0xff]
      %v187 = vld [vmem:[%s165 + $0x70] sm:$0xff]
      %v188 = vld [vmem:[%s165 + $0x78] sm:$0xff]
      %v189 = vld [vmem:[%s165 + $0x80] sm:$0xff]
      %v190 = vld [vmem:[%s165 + $0x88] sm:$0xff]
      %v191 = vld [vmem:[%s165 + $0x90] sm:$0xff]
      %v192 = vld [vmem:[%s165 + $0x98] sm:$0xff]
      %v193 = vld [vmem:[%s165 + $0xa0] sm:$0xff]
      %v194 = vld [vmem:[%s165 + $0xa8] sm:$0xff]
      %v195 = vld [vmem:[%s165 + $0xb0] sm:$0xff]
      %v196 = vld [vmem:[%s165 + $0xb8] sm:$0xff]
      %v197 = vld [vmem:[%s165 + $0xc0] sm:$0xff]
      %v198 = vld [vmem:[%s165 + $0xc8] sm:$0xff]
      %v199 = vld [vmem:[%s165 + $0xd0] sm:$0xff]
      %v200 = vld [vmem:[%s165 + $0xd8] sm:$0xff]
      %v201 = vld [vmem:[%s165 + $0xe0] sm:$0xff]
      %v202 = vld [vmem:[%s165 + $0xe8] sm:$0xff]
      %v203 = vld [vmem:[%s165 + $0xf0] sm:$0xff]
      %v204 = vld [vmem:[%s165 + $0xf8] sm:$0xff]
      %v205 = vld [vmem:[%s165 + $0x100] sm:$0xff]
      %v206 = vld [vmem:[%s165 + $0x108] sm:$0xff]
      %v207 = vld [vmem:[%s165 + $0x110] sm:$0xff]
      %v208 = vld [vmem:[%s165 + $0x118] sm:$0xff]
      %v209 = vld [vmem:[%s165 + $0x120] sm:$0xff]
      %v210 = vld [vmem:[%s165 + $0x128] sm:$0xff]
      %v211 = vld [vmem:[%s165 + $0x130] sm:$0xff]
      %v212 = vld [vmem:[%s165 + $0x138] sm:$0xff]
      %v213 = vld [vmem:[%s165 + $0x140] sm:$0xff]
      %v214 = vld [vmem:[%s165 + $0x148] sm:$0xff]
      %v215 = vld [vmem:[%s165 + $0x150] sm:$0xff]
      %v216 = vld [vmem:[%s165 + $0x158] sm:$0xff]
      %v217 = vld [vmem:[%s165 + $0x160] sm:$0xff]
      %v218 = vld [vmem:[%s165 + $0x168] sm:$0xff]
      %v219 = vld [vmem:[%s165 + $0x170] sm:$0xff]
      %v220 = vld [vmem:[%s165 + $0x178] sm:$0xff]
      %v221 = vld [vmem:[%s165 + $0x180] sm:$0xff]
      %v222 = vld [vmem:[%s165 + $0x188] sm:$0xff]
      %v223 = vld [vmem:[%s165 + $0x190] sm:$0xff]
      %v224 = vld [vmem:[%s165 + $0x198] sm:$0xff]
      %v225 = vld [vmem:[%s165 + $0x1a0] sm:$0xff]
      %v226 = vld [vmem:[%s165 + $0x1a8] sm:$0xff]
      %v227 = vld [vmem:[%s165 + $0x1b0] sm:$0xff]
      %v228 = vld [vmem:[%s165 + $0x1b8] sm:$0xff]
      %v229 = vld [vmem:[%s165 + $0x1c0] sm:$0xff]
      %v230 = vld [vmem:[%s165 + $0x1c8] sm:$0xff]
      %v231 = vld [vmem:[%s165 + $0x1d0] sm:$0xff]
      %v232 = vld [vmem:[%s165 + $0x1d8] sm:$0xff]
      %v233 = vld [vmem:[%s165 + $0x1e0] sm:$0xff]
      %v234 = vld [vmem:[%s165 + $0x1e8] sm:$0xff]
      %v235 = vld [vmem:[%s165 + $0x1f0] sm:$0xff]
      %v236 = vld [vmem:[%s165 + $0x1f8] sm:$0xff]
      %v237 = vld [vmem:[%s165 + $0x200] sm:$0xff]
      %v238 = vld [vmem:[%s165 + $0x208] sm:$0xff]
      %v239 = vld [vmem:[%s165 + $0x210] sm:$0xff]
      %v240 = vld [vmem:[%s165 + $0x218] sm:$0xff]
      %v241 = vld [vmem:[%s165 + $0x220] sm:$0xf]
      %v242 = vld [vmem:[%s165 + $0x228] sm:$0xf]
      %v243 = vld [vmem:[%s165 + $0x230] sm:$0xf]
      %v244 = vld [vmem:[%s165 + $0x238] sm:$0xf]
      %v245 = vld [vmem:[%s165 + $0x240] sm:$0xf]
      %v246 = vld [vmem:[%s165 + $0x248] sm:$0xf]
      %v247 = vld [vmem:[%s165 + $0x250] sm:$0xf]
      %v248 = vld [vmem:[%s165 + $0x258] sm:$0xf]
      %v249 = vld [vmem:[%s165 + $0x260] sm:$0xf]
      %v250 = vld [vmem:[%s165 + $0x268] sm:$0xf]
      %v251 = vld [vmem:[%s165 + $0x270] sm:$0xf]
      %v252 = vld [vmem:[%s165 + $0x278] sm:$0xf]
      %v253 = vld [vmem:[%s165 + $0x280] sm:$0xf]
      %v254 = vld [vmem:[%s165 + $0x288] sm:$0xf]
      %v255 = vld [vmem:[%s165 + $0x290] sm:$0xf]
      %v256 = vld [vmem:[%s165 + $0x298] sm:$0xf]
      %v257 = vld [vmem:[%s165 + $0x2a0] sm:$0xf]
      %v258 = vld [vmem:[%s2] sm:$0xff]
      %v259 = vld [vmem:[%s2 + $0x8] sm:$0xff]
      %261 = vset.pattern.permute.xlu0 0
      %262 = vperm.xlu0 %261, %v258
      %v263 = vpop.permute.xlu0 %262
      %266 = vset.pattern.permute.xlu0 0
      %267 = vperm.xlu0 %266, %v259
      %v268 = vpop.permute.xlu0 %267
      %vm270 = vcmask 293888
      %v272 = vsel %vm270, %v171, 0
      %v275 = vsel %vm270, %v172, 0
      %vm277 = vcmask 1043456
      %v279 = vsel %vm277, %v241, 0
      %v282 = vsel %vm277, %v242, 0
      %v285 = vsel %vm277, %v243, 0
      %v288 = vsel %vm277, %v244, 0
      %v291 = vsel %vm277, %v245, 0
      %v294 = vsel %vm277, %v246, 0
      %v297 = vsel %vm277, %v247, 0
      %v300 = vsel %vm277, %v248, 0
      %v303 = vsel %vm277, %v249, 0
      %v306 = vsel %vm277, %v250, 0
      %v309 = vsel %vm277, %v251, 0
      %v312 = vsel %vm277, %v252, 0
      %v315 = vsel %vm277, %v253, 0
      %v318 = vsel %vm277, %v254, 0
      %v321 = vsel %vm277, %v255, 0
      %v324 = vsel %vm277, %v256, 0
      %v327 = vsel %vm277, %v257, 0
      %329 = vmatprep.subr.mxu0 %v174
      %330 = vmatpush1.msra.mxu0 %v173
      %331 = vmatprep.subr.mxu0 %v191
      %332 = vmatpush1.msra.mxu0 %v190
      %333 = vmatprep.subr.mxu0 %v208
      %334 = vmatpush1.msra.mxu0 %v207
      %335 = vmatprep.subr.mxu0 %v225
      %336 = vmatpush1.msra.mxu0 %v224
      %337 = vmatprep.subr.mxu0 %v282
      %338 = vmatpush1.msra.mxu0 %v279
      %339 = vmatprep.subr.mxu0 0.0
      %340 = vmatpush1.msra.mxu0 0.0
      %341 = vmatprep.subr.mxu0 0.0
      %342 = vmatpush1.msra.mxu0 0.0
      %343 = vmatprep.subr.mxu0 0.0
      %344 = vmatpush1.msra.mxu0 0.0
      %345 = vmatprep.subr.mxu0 0.0
      %346 = vmatpush1.msra.mxu0 0.0
      %347 = vmatprep.subr.mxu0 0.0
      %348 = vmatpush1.msra.mxu0 0.0
      %349 = vmatprep.subr.mxu0 0.0
      %350 = vmatpush1.msra.mxu0 0.0
      %351 = vmatprep.subr.mxu0 0.0
      %352 = vmatpush1.msra.mxu0 0.0
      %353 = vmatprep.subr.mxu0 0.0
      %354 = vmatpush1.msra.mxu0 0.0
      %355 = vmatprep.subr.mxu0 0.0
      %356 = vmatpush1.msra.mxu0 0.0
      %357 = vmatprep.subr.mxu0 0.0
      %358 = vmatpush1.msra.mxu0 0.0
      %359 = vmatprep.subr.mxu0 0.0
      %360 = vmatpush1.msra.mxu0 0.0
      %361 = vmatprep.subr.mxu0 0.0
      %362 = vmatpush1.msra.mxu0 0.0
      %363 = vmatprep.subr.mxu0 0.0
      %364 = vmatpush1.msra.mxu0 0.0
      %365 = vmatprep.subr.mxu0 0.0
      %366 = vmatpush1.msra.mxu0 0.0
      %367 = vmatprep.subr.mxu0 0.0
      %368 = vmatpush1.msra.mxu0 0.0
      %369 = vmatprep.subr.mxu0 0.0
      %370 = vmatpush1.msra.mxu0 0.0
      %371 = vmatprep.subr.mxu0 0.0
      %372 = vmatpush1.msra.mxu0 0.0
      %373 = vmatprep.subr.mxu0 0.0
      %374 = vmatpush1.msra.mxu0 0.0
      %375 = vmatprep.subr.mxu0 0.0
      %376 = vmatpush1.msra.mxu0 0.0
      %377 = vmatprep.subr.mxu0 0.0
      %378 = vmatpush1.msra.mxu0 0.0
      %379 = vmatprep.subr.mxu0 0.0
      %380 = vmatpush1.msra.mxu0 0.0
      %381 = vmatprep.subr.mxu0 0.0
      %382 = vmatpush1.msra.mxu0 0.0
      %383 = vmatprep.subr.mxu0 0.0
      %384 = vmatpush1.msra.mxu0 0.0
      %385 = vmatprep.subr.mxu0 0.0
      %386 = vmatpush1.msra.mxu0 0.0
      %387 = vmatprep.subr.mxu0 0.0
      %388 = vmatpush1.msra.mxu0 0.0
      %389 = vmatprep.subr.mxu0 0.0
      %390 = vmatpush1.msra.mxu0 0.0
      %391 = vmatprep.subr.mxu0 0.0
      %392 = vmatpush1.msra.mxu0 0.0
      %393 = vmatprep.mubr.f32.mxu0 0.0
      %394 = vmatmul.mubr.f32.gmra.mrb[0].mxu0 %v272
      %v395 = vpop.f32.mrb[0].mxu0
      %v396 = vadd.f32 %v263, %v395
      %v397 = vpop.f32.mrb[0].mxu0
      %v398 = vadd.f32 %v263, %v397
      %399 = vmatprep.mubr.f32.mxu0 0.0
      %400 = vmatmul.mubr.f32.gmra.mrb[0].mxu0 %v275
      %v401 = vpop.f32.mrb[0].mxu0
      %v402 = vadd.f32 %v268, %v401
      %v403 = vpop.f32.mrb[0].mxu0
      %v404 = vadd.f32 %v268, %v403
      %405 = vdwg.mxu0
      %406 = vmatprep.subr.mxu0 %v176
      %407 = vmatpush1.msra.mxu0 %v175
      %408 = vmatprep.subr.mxu0 %v193
      %409 = vmatpush1.msra.mxu0 %v192
      %410 = vmatprep.subr.mxu0 %v210
      %411 = vmatpush1.msra.mxu0 %v209
      %412 = vmatprep.subr.mxu0 %v227
      %413 = vmatpush1.msra.mxu0 %v226
      %414 = vmatprep.subr.mxu0 %v288
      %415 = vmatpush1.msra.mxu0 %v285
      %416 = vmatprep.subr.mxu0 0.0
      %417 = vmatpush1.msra.mxu0 0.0
      %418 = vmatprep.subr.mxu0 0.0
      %419 = vmatpush1.msra.mxu0 0.0
      %420 = vmatprep.subr.mxu0 0.0
      %421 = vmatpush1.msra.mxu0 0.0
      %422 = vmatprep.subr.mxu0 0.0
      %423 = vmatpush1.msra.mxu0 0.0
      %424 = vmatprep.subr.mxu0 0.0
      %425 = vmatpush1.msra.mxu0 0.0
      %426 = vmatprep.subr.mxu0 0.0
      %427 = vmatpush1.msra.mxu0 0.0
      %428 = vmatprep.subr.mxu0 0.0
      %429 = vmatpush1.msra.mxu0 0.0
      %430 = vmatprep.subr.mxu0 0.0
      %431 = vmatpush1.msra.mxu0 0.0
      %432 = vmatprep.subr.mxu0 0.0
      %433 = vmatpush1.msra.mxu0 0.0
      %434 = vmatprep.subr.mxu0 0.0
      %435 = vmatpush1.msra.mxu0 0.0
      %436 = vmatprep.subr.mxu0 0.0
      %437 = vmatpush1.msra.mxu0 0.0
      %438 = vmatprep.subr.mxu0 0.0
      %439 = vmatpush1.msra.mxu0 0.0
      %440 = vmatprep.subr.mxu0 0.0
      %441 = vmatpush1.msra.mxu0 0.0
      %442 = vmatprep.subr.mxu0 0.0
      %443 = vmatpush1.msra.mxu0 0.0
      %444 = vmatprep.subr.mxu0 0.0
      %445 = vmatpush1.msra.mxu0 0.0
      %446 = vmatprep.subr.mxu0 0.0
      %447 = vmatpush1.msra.mxu0 0.0
      %448 = vmatprep.subr.mxu0 0.0
      %449 = vmatpush1.msra.mxu0 0.0
      %450 = vmatprep.subr.mxu0 0.0
      %451 = vmatpush1.msra.mxu0 0.0
      %452 = vmatprep.subr.mxu0 0.0
      %453 = vmatpush1.msra.mxu0 0.0
      %454 = vmatprep.subr.mxu0 0.0
      %455 = vmatpush1.msra.mxu0 0.0
      %456 = vmatprep.subr.mxu0 0.0
      %457 = vmatpush1.msra.mxu0 0.0
      %458 = vmatprep.subr.mxu0 0.0
      %459 = vmatpush1.msra.mxu0 0.0
      %460 = vmatprep.subr.mxu0 0.0
      %461 = vmatpush1.msra.mxu0 0.0
      %462 = vmatprep.subr.mxu0 0.0
      %463 = vmatpush1.msra.mxu0 0.0
      %464 = vmatprep.subr.mxu0 0.0
      %465 = vmatpush1.msra.mxu0 0.0
      %466 = vmatprep.subr.mxu0 0.0
      %467 = vmatpush1.msra.mxu0 0.0
      %468 = vmatprep.subr.mxu0 0.0
      %469 = vmatpush1.msra.mxu0 0.0
      %470 = vmatprep.mubr.f32.mxu0 0.0
      %471 = vmatmul.mubr.f32.gmra.mrb[0].mxu0 %v272
      %v472 = vpop.f32.mrb[0].mxu0
      %v473 = vadd.f32 %v263, %v472
      %v474 = vpop.f32.mrb[0].mxu0
      %v475 = vadd.f32 %v263, %v474
      %476 = vmatprep.mubr.f32.mxu0 0.0
      %477 = vmatmul.mubr.f32.gmra.mrb[0].mxu0 %v275
      %v478 = vpop.f32.mrb[0].mxu0
      %v479 = vadd.f32 %v268, %v478
      %v480 = vpop.f32.mrb[0].mxu0
      %v481 = vadd.f32 %v268, %v480
      %482 = vdwg.mxu0
      %483 = vmatprep.subr.mxu0 %v178
      %484 = vmatpush1.msra.mxu0 %v177
      %485 = vmatprep.subr.mxu0 %v195
      %486 = vmatpush1.msra.mxu0 %v194
      %487 = vmatprep.subr.mxu0 %v212
      %488 = vmatpush1.msra.mxu0 %v211
      %489 = vmatprep.subr.mxu0 %v229
      %490 = vmatpush1.msra.mxu0 %v228
      %491 = vmatprep.subr.mxu0 %v294
      %492 = vmatpush1.msra.mxu0 %v291
      %493 = vmatprep.subr.mxu0 0.0
      %494 = vmatpush1.msra.mxu0 0.0
      %495 = vmatprep.subr.mxu0 0.0
      %496 = vmatpush1.msra.mxu0 0.0
      %497 = vmatprep.subr.mxu0 0.0
      %498 = vmatpush1.msra.mxu0 0.0
      %499 = vmatprep.subr.mxu0 0.0
      %500 = vmatpush1.msra.mxu0 0.0
      %501 = vmatprep.subr.mxu0 0.0
      %502 = vmatpush1.msra.mxu0 0.0
      %503 = vmatprep.subr.mxu0 0.0
      %504 = vmatpush1.msra.mxu0 0.0
      %505 = vmatprep.subr.mxu0 0.0
      %506 = vmatpush1.msra.mxu0 0.0
      %507 = vmatprep.subr.mxu0 0.0
      %508 = vmatpush1.msra.mxu0 0.0
      %509 = vmatprep.subr.mxu0 0.0
      %510 = vmatpush1.msra.mxu0 0.0
      %511 = vmatprep.subr.mxu0 0.0
      %512 = vmatpush1.msra.mxu0 0.0
      %513 = vmatprep.subr.mxu0 0.0
      %514 = vmatpush1.msra.mxu0 0.0
      %515 = vmatprep.subr.mxu0 0.0
      %516 = vmatpush1.msra.mxu0 0.0
      %517 = vmatprep.subr.mxu0 0.0
      %518 = vmatpush1.msra.mxu0 0.0
      %519 = vmatprep.subr.mxu0 0.0
      %520 = vmatpush1.msra.mxu0 0.0
      %521 = vmatprep.subr.mxu0 0.0
      %522 = vmatpush1.msra.mxu0 0.0
      %523 = vmatprep.subr.mxu0 0.0
      %524 = vmatpush1.msra.mxu0 0.0
      %525 = vmatprep.subr.mxu0 0.0
      %526 = vmatpush1.msra.mxu0 0.0
      %527 = vmatprep.subr.mxu0 0.0
      %528 = vmatpush1.msra.mxu0 0.0
      %529 = vmatprep.subr.mxu0 0.0
      %530 = vmatpush1.msra.mxu0 0.0
      %531 = vmatprep.subr.mxu0 0.0
      %532 = vmatpush1.msra.mxu0 0.0
      %533 = vmatprep.subr.mxu0 0.0
      %534 = vmatpush1.msra.mxu0 0.0
      %535 = vmatprep.subr.mxu0 0.0
      %536 = vmatpush1.msra.mxu0 0.0
      %537 = vmatprep.subr.mxu0 0.0
      %538 = vmatpush1.msra.mxu0 0.0
      %539 = vmatprep.subr.mxu0 0.0
      %540 = vmatpush1.msra.mxu0 0.0
      %541 = vmatprep.subr.mxu0 0.0
      %542 = vmatpush1.msra.mxu0 0.0
      %543 = vmatprep.subr.mxu0 0.0
      %544 = vmatpush1.msra.mxu0 0.0
      %545 = vmatprep.subr.mxu0 0.0
      %546 = vmatpush1.msra.mxu0 0.0
      %547 = vmatprep.mubr.f32.mxu0 0.0
      %548 = vmatmul.mubr.f32.gmra.mrb[0].mxu0 %v272
      %v549 = vpop.f32.mrb[0].mxu0
      %v550 = vadd.f32 %v263, %v549
      %v551 = vpop.f32.mrb[0].mxu0
      %v552 = vadd.f32 %v263, %v551
      %553 = vmatprep.mubr.f32.mxu0 0.0
      %554 = vmatmul.mubr.f32.gmra.mrb[0].mxu0 %v275
      %v555 = vpop.f32.mrb[0].mxu0
      %v556 = vadd.f32 %v268, %v555
      %v557 = vpop.f32.mrb[0].mxu0
      %v558 = vadd.f32 %v268, %v557
      %559 = vdwg.mxu0
      %560 = vmatprep.subr.mxu0 %v180
      %561 = vmatpush1.msra.mxu0 %v179
      %562 = vmatprep.subr.mxu0 %v197
      %563 = vmatpush1.msra.mxu0 %v196
      %564 = vmatprep.subr.mxu0 %v214
      %565 = vmatpush1.msra.mxu0 %v213
      %566 = vmatprep.subr.mxu0 %v231
      %567 = vmatpush1.msra.mxu0 %v230
      %568 = vmatprep.subr.mxu0 %v300
      %569 = vmatpush1.msra.mxu0 %v297
      %570 = vmatprep.subr.mxu0 0.0
      %571 = vmatpush1.msra.mxu0 0.0
      %572 = vmatprep.subr.mxu0 0.0
      %573 = vmatpush1.msra.mxu0 0.0
      %574 = vmatprep.subr.mxu0 0.0
      %575 = vmatpush1.msra.mxu0 0.0
      %576 = vmatprep.subr.mxu0 0.0
      %577 = vmatpush1.msra.mxu0 0.0
      %578 = vmatprep.subr.mxu0 0.0
      %579 = vmatpush1.msra.mxu0 0.0
      %580 = vmatprep.subr.mxu0 0.0
      %581 = vmatpush1.msra.mxu0 0.0
      %582 = vmatprep.subr.mxu0 0.0
      %583 = vmatpush1.msra.mxu0 0.0
      %584 = vmatprep.subr.mxu0 0.0
      %585 = vmatpush1.msra.mxu0 0.0
      %586 = vmatprep.subr.mxu0 0.0
      %587 = vmatpush1.msra.mxu0 0.0
      %588 = vmatprep.subr.mxu0 0.0
      %589 = vmatpush1.msra.mxu0 0.0
      %590 = vmatprep.subr.mxu0 0.0
      %591 = vmatpush1.msra.mxu0 0.0
      %592 = vmatprep.subr.mxu0 0.0
      %593 = vmatpush1.msra.mxu0 0.0
      %594 = vmatprep.subr.mxu0 0.0
      %595 = vmatpush1.msra.mxu0 0.0
      %596 = vmatprep.subr.mxu0 0.0
      %597 = vmatpush1.msra.mxu0 0.0
      %598 = vmatprep.subr.mxu0 0.0
      %599 = vmatpush1.msra.mxu0 0.0
      %600 = vmatprep.subr.mxu0 0.0
      %601 = vmatpush1.msra.mxu0 0.0
      %602 = vmatprep.subr.mxu0 0.0
      %603 = vmatpush1.msra.mxu0 0.0
      %604 = vmatprep.subr.mxu0 0.0
      %605 = vmatpush1.msra.mxu0 0.0
      %606 = vmatprep.subr.mxu0 0.0
      %607 = vmatpush1.msra.mxu0 0.0
      %608 = vmatprep.subr.mxu0 0.0
      %609 = vmatpush1.msra.mxu0 0.0
      %610 = vmatprep.subr.mxu0 0.0
      %611 = vmatpush1.msra.mxu0 0.0
      %612 = vmatprep.subr.mxu0 0.0
      %613 = vmatpush1.msra.mxu0 0.0
      %614 = vmatprep.subr.mxu0 0.0
      %615 = vmatpush1.msra.mxu0 0.0
      %616 = vmatprep.subr.mxu0 0.0
      %617 = vmatpush1.msra.mxu0 0.0
      %618 = vmatprep.subr.mxu0 0.0
      %619 = vmatpush1.msra.mxu0 0.0
      %620 = vmatprep.subr.mxu0 0.0
      %621 = vmatpush1.msra.mxu0 0.0
      %622 = vmatprep.subr.mxu0 0.0
      %623 = vmatpush1.msra.mxu0 0.0
      %624 = vmatprep.mubr.f32.mxu0 0.0
      %625 = vmatmul.mubr.f32.gmra.mrb[0].mxu0 %v272
      %v626 = vpop.f32.mrb[0].mxu0
      %v627 = vadd.f32 %v263, %v626
      %v628 = vpop.f32.mrb[0].mxu0
      %v629 = vadd.f32 %v263, %v628
      %630 = vmatprep.mubr.f32.mxu0 0.0
      %631 = vmatmul.mubr.f32.gmra.mrb[0].mxu0 %v275
      %v632 = vpop.f32.mrb[0].mxu0
      %v633 = vadd.f32 %v268, %v632
      %v634 = vpop.f32.mrb[0].mxu0
      %v635 = vadd.f32 %v268, %v634
      %636 = vdwg.mxu0
      %637 = vmatprep.subr.mxu0 %v182
      %638 = vmatpush1.msra.mxu0 %v181
      %639 = vmatprep.subr.mxu0 %v199
      %640 = vmatpush1.msra.mxu0 %v198
      %641 = vmatprep.subr.mxu0 %v216
      %642 = vmatpush1.msra.mxu0 %v215
      %643 = vmatprep.subr.mxu0 %v233
      %644 = vmatpush1.msra.mxu0 %v232
      %645 = vmatprep.subr.mxu0 %v306
      %646 = vmatpush1.msra.mxu0 %v303
      %647 = vmatprep.subr.mxu0 0.0
      %648 = vmatpush1.msra.mxu0 0.0
      %649 = vmatprep.subr.mxu0 0.0
      %650 = vmatpush1.msra.mxu0 0.0
      %651 = vmatprep.subr.mxu0 0.0
      %652 = vmatpush1.msra.mxu0 0.0
      %653 = vmatprep.subr.mxu0 0.0
      %654 = vmatpush1.msra.mxu0 0.0
      %655 = vmatprep.subr.mxu0 0.0
      %656 = vmatpush1.msra.mxu0 0.0
      %657 = vmatprep.subr.mxu0 0.0
      %658 = vmatpush1.msra.mxu0 0.0
      %659 = vmatprep.subr.mxu0 0.0
      %660 = vmatpush1.msra.mxu0 0.0
      %661 = vmatprep.subr.mxu0 0.0
      %662 = vmatpush1.msra.mxu0 0.0
      %663 = vmatprep.subr.mxu0 0.0
      %664 = vmatpush1.msra.mxu0 0.0
      %665 = vmatprep.subr.mxu0 0.0
      %666 = vmatpush1.msra.mxu0 0.0
      %667 = vmatprep.subr.mxu0 0.0
      %668 = vmatpush1.msra.mxu0 0.0
      %669 = vmatprep.subr.mxu0 0.0
      %670 = vmatpush1.msra.mxu0 0.0
      %671 = vmatprep.subr.mxu0 0.0
      %672 = vmatpush1.msra.mxu0 0.0
      %673 = vmatprep.subr.mxu0 0.0
      %674 = vmatpush1.msra.mxu0 0.0
      %675 = vmatprep.subr.mxu0 0.0
      %676 = vmatpush1.msra.mxu0 0.0
      %677 = vmatprep.subr.mxu0 0.0
      %678 = vmatpush1.msra.mxu0 0.0
      %679 = vmatprep.subr.mxu0 0.0
      %680 = vmatpush1.msra.mxu0 0.0
      %681 = vmatprep.subr.mxu0 0.0
      %682 = vmatpush1.msra.mxu0 0.0
      %683 = vmatprep.subr.mxu0 0.0
      %684 = vmatpush1.msra.mxu0 0.0
      %685 = vmatprep.subr.mxu0 0.0
      %686 = vmatpush1.msra.mxu0 0.0
      %687 = vmatprep.subr.mxu0 0.0
      %688 = vmatpush1.msra.mxu0 0.0
      %689 = vmatprep.subr.mxu0 0.0
      %690 = vmatpush1.msra.mxu0 0.0
      %691 = vmatprep.subr.mxu0 0.0
      %692 = vmatpush1.msra.mxu0 0.0
      %693 = vmatprep.subr.mxu0 0.0
      %694 = vmatpush1.msra.mxu0 0.0
      %695 = vmatprep.subr.mxu0 0.0
      %696 = vmatpush1.msra.mxu0 0.0
      %697 = vmatprep.subr.mxu0 0.0
      %698 = vmatpush1.msra.mxu0 0.0
      %699 = vmatprep.subr.mxu0 0.0
      %700 = vmatpush1.msra.mxu0 0.0
      %701 = vmatprep.mubr.f32.mxu0 0.0
      %702 = vmatmul.mubr.f32.gmra.mrb[0].mxu0 %v272
      %v703 = vpop.f32.mrb[0].mxu0
      %v704 = vadd.f32 %v263, %v703
      %v705 = vpop.f32.mrb[0].mxu0
      %v706 = vadd.f32 %v263, %v705
      %707 = vmatprep.mubr.f32.mxu0 0.0
      %708 = vmatmul.mubr.f32.gmra.mrb[0].mxu0 %v275
      %v709 = vpop.f32.mrb[0].mxu0
      %v710 = vadd.f32 %v268, %v709
      %v711 = vpop.f32.mrb[0].mxu0
      %v712 = vadd.f32 %v268, %v711
      %713 = vdwg.mxu0
      %714 = vmatprep.subr.mxu0 %v184
      %715 = vmatpush1.msra.mxu0 %v183
      %716 = vmatprep.subr.mxu0 %v201
      %717 = vmatpush1.msra.mxu0 %v200
      %718 = vmatprep.subr.mxu0 %v218
      %719 = vmatpush1.msra.mxu0 %v217
      %720 = vmatprep.subr.mxu0 %v235
      %721 = vmatpush1.msra.mxu0 %v234
      %722 = vmatprep.subr.mxu0 %v312
      %723 = vmatpush1.msra.mxu0 %v309
      %724 = vmatprep.subr.mxu0 0.0
      %725 = vmatpush1.msra.mxu0 0.0
      %726 = vmatprep.subr.mxu0 0.0
      %727 = vmatpush1.msra.mxu0 0.0
      %728 = vmatprep.subr.mxu0 0.0
      %729 = vmatpush1.msra.mxu0 0.0
      %730 = vmatprep.subr.mxu0 0.0
      %731 = vmatpush1.msra.mxu0 0.0
      %732 = vmatprep.subr.mxu0 0.0
      %733 = vmatpush1.msra.mxu0 0.0
      %734 = vmatprep.subr.mxu0 0.0
      %735 = vmatpush1.msra.mxu0 0.0
      %736 = vmatprep.subr.mxu0 0.0
      %737 = vmatpush1.msra.mxu0 0.0
      %738 = vmatprep.subr.mxu0 0.0
      %739 = vmatpush1.msra.mxu0 0.0
      %740 = vmatprep.subr.mxu0 0.0
      %741 = vmatpush1.msra.mxu0 0.0
      %742 = vmatprep.subr.mxu0 0.0
      %743 = vmatpush1.msra.mxu0 0.0
      %744 = vmatprep.subr.mxu0 0.0
      %745 = vmatpush1.msra.mxu0 0.0
      %746 = vmatprep.subr.mxu0 0.0
      %747 = vmatpush1.msra.mxu0 0.0
      %748 = vmatprep.subr.mxu0 0.0
      %749 = vmatpush1.msra.mxu0 0.0
      %750 = vmatprep.subr.mxu0 0.0
      %751 = vmatpush1.msra.mxu0 0.0
      %752 = vmatprep.subr.mxu0 0.0
      %753 = vmatpush1.msra.mxu0 0.0
      %754 = vmatprep.subr.mxu0 0.0
      %755 = vmatpush1.msra.mxu0 0.0
      %756 = vmatprep.subr.mxu0 0.0
      %757 = vmatpush1.msra.mxu0 0.0
      %758 = vmatprep.subr.mxu0 0.0
      %759 = vmatpush1.msra.mxu0 0.0
      %760 = vmatprep.subr.mxu0 0.0
      %761 = vmatpush1.msra.mxu0 0.0
      %762 = vmatprep.subr.mxu0 0.0
      %763 = vmatpush1.msra.mxu0 0.0
      %764 = vmatprep.subr.mxu0 0.0
      %765 = vmatpush1.msra.mxu0 0.0
      %766 = vmatprep.subr.mxu0 0.0
      %767 = vmatpush1.msra.mxu0 0.0
      %768 = vmatprep.subr.mxu0 0.0
      %769 = vmatpush1.msra.mxu0 0.0
      %770 = vmatprep.subr.mxu0 0.0
      %771 = vmatpush1.msra.mxu0 0.0
      %772 = vmatprep.subr.mxu0 0.0
      %773 = vmatpush1.msra.mxu0 0.0
      %774 = vmatprep.subr.mxu0 0.0
      %775 = vmatpush1.msra.mxu0 0.0
      %776 = vmatprep.subr.mxu0 0.0
      %777 = vmatpush1.msra.mxu0 0.0
      %778 = vmatprep.mubr.f32.mxu0 0.0
      %779 = vmatmul.mubr.f32.gmra.mrb[0].mxu0 %v272
      %v780 = vpop.f32.mrb[0].mxu0
      %v781 = vadd.f32 %v263, %v780
      %v782 = vpop.f32.mrb[0].mxu0
      %v783 = vadd.f32 %v263, %v782
      %784 = vmatprep.mubr.f32.mxu0 0.0
      %785 = vmatmul.mubr.f32.gmra.mrb[0].mxu0 %v275
      %v786 = vpop.f32.mrb[0].mxu0
      %v787 = vadd.f32 %v268, %v786
      %v788 = vpop.f32.mrb[0].mxu0
      %v789 = vadd.f32 %v268, %v788
      %790 = vdwg.mxu0
      %791 = vmatprep.subr.mxu0 %v186
      %792 = vmatpush1.msra.mxu0 %v185
      %793 = vmatprep.subr.mxu0 %v203
      %794 = vmatpush1.msra.mxu0 %v202
      %795 = vmatprep.subr.mxu0 %v220
      %796 = vmatpush1.msra.mxu0 %v219
      %797 = vmatprep.subr.mxu0 %v237
      %798 = vmatpush1.msra.mxu0 %v236
      %799 = vmatprep.subr.mxu0 %v318
      %800 = vmatpush1.msra.mxu0 %v315
      %801 = vmatprep.subr.mxu0 0.0
      %802 = vmatpush1.msra.mxu0 0.0
      %803 = vmatprep.subr.mxu0 0.0
      %804 = vmatpush1.msra.mxu0 0.0
      %805 = vmatprep.subr.mxu0 0.0
      %806 = vmatpush1.msra.mxu0 0.0
      %807 = vmatprep.subr.mxu0 0.0
      %808 = vmatpush1.msra.mxu0 0.0
      %809 = vmatprep.subr.mxu0 0.0
      %810 = vmatpush1.msra.mxu0 0.0
      %811 = vmatprep.subr.mxu0 0.0
      %812 = vmatpush1.msra.mxu0 0.0
      %813 = vmatprep.subr.mxu0 0.0
      %814 = vmatpush1.msra.mxu0 0.0
      %815 = vmatprep.subr.mxu0 0.0
      %816 = vmatpush1.msra.mxu0 0.0
      %817 = vmatprep.subr.mxu0 0.0
      %818 = vmatpush1.msra.mxu0 0.0
      %819 = vmatprep.subr.mxu0 0.0
      %820 = vmatpush1.msra.mxu0 0.0
      %821 = vmatprep.subr.mxu0 0.0
      %822 = vmatpush1.msra.mxu0 0.0
      %823 = vmatprep.subr.mxu0 0.0
      %824 = vmatpush1.msra.mxu0 0.0
      %825 = vmatprep.subr.mxu0 0.0
      %826 = vmatpush1.msra.mxu0 0.0
      %827 = vmatprep.subr.mxu0 0.0
      %828 = vmatpush1.msra.mxu0 0.0
      %829 = vmatprep.subr.mxu0 0.0
      %830 = vmatpush1.msra.mxu0 0.0
      %831 = vmatprep.subr.mxu0 0.0
      %832 = vmatpush1.msra.mxu0 0.0
      %833 = vmatprep.subr.mxu0 0.0
      %834 = vmatpush1.msra.mxu0 0.0
      %835 = vmatprep.subr.mxu0 0.0
      %836 = vmatpush1.msra.mxu0 0.0
      %837 = vmatprep.subr.mxu0 0.0
      %838 = vmatpush1.msra.mxu0 0.0
      %839 = vmatprep.subr.mxu0 0.0
      %840 = vmatpush1.msra.mxu0 0.0
      %841 = vmatprep.subr.mxu0 0.0
      %842 = vmatpush1.msra.mxu0 0.0
      %843 = vmatprep.subr.mxu0 0.0
      %844 = vmatpush1.msra.mxu0 0.0
      %845 = vmatprep.subr.mxu0 0.0
      %846 = vmatpush1.msra.mxu0 0.0
      %847 = vmatprep.subr.mxu0 0.0
      %848 = vmatpush1.msra.mxu0 0.0
      %849 = vmatprep.subr.mxu0 0.0
      %850 = vmatpush1.msra.mxu0 0.0
      %851 = vmatprep.subr.mxu0 0.0
      %852 = vmatpush1.msra.mxu0 0.0
      %853 = vmatprep.subr.mxu0 0.0
      %854 = vmatpush1.msra.mxu0 0.0
      %855 = vmatprep.mubr.f32.mxu0 0.0
      %856 = vmatmul.mubr.f32.gmra.mrb[0].mxu0 %v272
      %v857 = vpop.f32.mrb[0].mxu0
      %v858 = vadd.f32 %v263, %v857
      %v859 = vpop.f32.mrb[0].mxu0
      %v860 = vadd.f32 %v263, %v859
      %861 = vmatprep.mubr.f32.mxu0 0.0
      %862 = vmatmul.mubr.f32.gmra.mrb[0].mxu0 %v275
      %v863 = vpop.f32.mrb[0].mxu0
      %v864 = vadd.f32 %v268, %v863
      %v865 = vpop.f32.mrb[0].mxu0
      %v866 = vadd.f32 %v268, %v865
      %867 = vdwg.mxu0
      %868 = vmatprep.subr.mxu0 %v188
      %869 = vmatpush1.msra.mxu0 %v187
      %870 = vmatprep.subr.mxu0 %v205
      %871 = vmatpush1.msra.mxu0 %v204
      %872 = vmatprep.subr.mxu0 %v222
      %873 = vmatpush1.msra.mxu0 %v221
      %874 = vmatprep.subr.mxu0 %v239
      %875 = vmatpush1.msra.mxu0 %v238
      %876 = vmatprep.subr.mxu0 %v324
      %877 = vmatpush1.msra.mxu0 %v321
      %878 = vmatprep.subr.mxu0 0.0
      %879 = vmatpush1.msra.mxu0 0.0
      %880 = vmatprep.subr.mxu0 0.0
      %881 = vmatpush1.msra.mxu0 0.0
      %882 = vmatprep.subr.mxu0 0.0
      %883 = vmatpush1.msra.mxu0 0.0
      %884 = vmatprep.subr.mxu0 0.0
      %885 = vmatpush1.msra.mxu0 0.0
      %886 = vmatprep.subr.mxu0 0.0
      %887 = vmatpush1.msra.mxu0 0.0
      %888 = vmatprep.subr.mxu0 0.0
      %889 = vmatpush1.msra.mxu0 0.0
      %890 = vmatprep.subr.mxu0 0.0
      %891 = vmatpush1.msra.mxu0 0.0
      %892 = vmatprep.subr.mxu0 0.0
      %893 = vmatpush1.msra.mxu0 0.0
      %894 = vmatprep.subr.mxu0 0.0
      %895 = vmatpush1.msra.mxu0 0.0
      %896 = vmatprep.subr.mxu0 0.0
      %897 = vmatpush1.msra.mxu0 0.0
      %898 = vmatprep.subr.mxu0 0.0
      %899 = vmatpush1.msra.mxu0 0.0
      %900 = vmatprep.subr.mxu0 0.0
      %901 = vmatpush1.msra.mxu0 0.0
      %902 = vmatprep.subr.mxu0 0.0
      %903 = vmatpush1.msra.mxu0 0.0
      %904 = vmatprep.subr.mxu0 0.0
      %905 = vmatpush1.msra.mxu0 0.0
      %906 = vmatprep.subr.mxu0 0.0
      %907 = vmatpush1.msra.mxu0 0.0
      %908 = vmatprep.subr.mxu0 0.0
      %909 = vmatpush1.msra.mxu0 0.0
      %910 = vmatprep.subr.mxu0 0.0
      %911 = vmatpush1.msra.mxu0 0.0
      %912 = vmatprep.subr.mxu0 0.0
      %913 = vmatpush1.msra.mxu0 0.0
      %914 = vmatprep.subr.mxu0 0.0
      %915 = vmatpush1.msra.mxu0 0.0
      %916 = vmatprep.subr.mxu0 0.0
      %917 = vmatpush1.msra.mxu0 0.0
      %918 = vmatprep.subr.mxu0 0.0
      %919 = vmatpush1.msra.mxu0 0.0
      %920 = vmatprep.subr.mxu0 0.0
      %921 = vmatpush1.msra.mxu0 0.0
      %922 = vmatprep.subr.mxu0 0.0
      %923 = vmatpush1.msra.mxu0 0.0
      %924 = vmatprep.subr.mxu0 0.0
      %925 = vmatpush1.msra.mxu0 0.0
      %926 = vmatprep.subr.mxu0 0.0
      %927 = vmatpush1.msra.mxu0 0.0
      %928 = vmatprep.subr.mxu0 0.0
      %929 = vmatpush1.msra.mxu0 0.0
      %930 = vmatprep.subr.mxu0 0.0
      %931 = vmatpush1.msra.mxu0 0.0
      %932 = vmatprep.mubr.f32.mxu0 0.0
      %933 = vmatmul.mubr.f32.gmra.mrb[0].mxu0 %v272
      %v934 = vpop.f32.mrb[0].mxu0
      %v935 = vadd.f32 %v263, %v934
      %v936 = vpop.f32.mrb[0].mxu0
      %v937 = vadd.f32 %v263, %v936
      %938 = vmatprep.mubr.f32.mxu0 0.0
      %939 = vmatmul.mubr.f32.gmra.mrb[0].mxu0 %v275
      %v940 = vpop.f32.mrb[0].mxu0
      %v941 = vadd.f32 %v268, %v940
      %v942 = vpop.f32.mrb[0].mxu0
      %v943 = vadd.f32 %v268, %v942
      %944 = vdwg.mxu0
      %945 = vmatprep.subr.mxu0 0.0
      %946 = vmatpush1.msra.mxu0 %v189
      %947 = vmatprep.subr.mxu0 0.0
      %948 = vmatpush1.msra.mxu0 %v206
      %949 = vmatprep.subr.mxu0 0.0
      %950 = vmatpush1.msra.mxu0 %v223
      %951 = vmatprep.subr.mxu0 0.0
      %952 = vmatpush1.msra.mxu0 %v240
      %953 = vmatprep.subr.mxu0 0.0
      %954 = vmatpush1.msra.mxu0 %v327
      %955 = vmatprep.subr.mxu0 0.0
      %956 = vmatpush1.msra.mxu0 0.0
      %957 = vmatprep.subr.mxu0 0.0
      %958 = vmatpush1.msra.mxu0 0.0
      %959 = vmatprep.subr.mxu0 0.0
      %960 = vmatpush1.msra.mxu0 0.0
      %961 = vmatprep.subr.mxu0 0.0
      %962 = vmatpush1.msra.mxu0 0.0
      %963 = vmatprep.subr.mxu0 0.0
      %964 = vmatpush1.msra.mxu0 0.0
      %965 = vmatprep.subr.mxu0 0.0
      %966 = vmatpush1.msra.mxu0 0.0
      %967 = vmatprep.subr.mxu0 0.0
      %968 = vmatpush1.msra.mxu0 0.0
      %969 = vmatprep.subr.mxu0 0.0
      %970 = vmatpush1.msra.mxu0 0.0
      %971 = vmatprep.subr.mxu0 0.0
      %972 = vmatpush1.msra.mxu0 0.0
      %973 = vmatprep.subr.mxu0 0.0
      %974 = vmatpush1.msra.mxu0 0.0
      %975 = vmatprep.subr.mxu0 0.0
      %976 = vmatpush1.msra.mxu0 0.0
      %977 = vmatprep.subr.mxu0 0.0
      %978 = vmatpush1.msra.mxu0 0.0
      %979 = vmatprep.subr.mxu0 0.0
      %980 = vmatpush1.msra.mxu0 0.0
      %981 = vmatprep.subr.mxu0 0.0
      %982 = vmatpush1.msra.mxu0 0.0
      %983 = vmatprep.subr.mxu0 0.0
      %984 = vmatpush1.msra.mxu0 0.0
      %985 = vmatprep.subr.mxu0 0.0
      %986 = vmatpush1.msra.mxu0 0.0
      %987 = vmatprep.subr.mxu0 0.0
      %988 = vmatpush1.msra.mxu0 0.0
      %989 = vmatprep.subr.mxu0 0.0
      %990 = vmatpush1.msra.mxu0 0.0
      %991 = vmatprep.subr.mxu0 0.0
      %992 = vmatpush1.msra.mxu0 0.0
      %993 = vmatprep.subr.mxu0 0.0
      %994 = vmatpush1.msra.mxu0 0.0
      %995 = vmatprep.subr.mxu0 0.0
      %996 = vmatpush1.msra.mxu0 0.0
      %997 = vmatprep.subr.mxu0 0.0
      %998 = vmatpush1.msra.mxu0 0.0
      %999 = vmatprep.subr.mxu0 0.0
      %1000 = vmatpush1.msra.mxu0 0.0
      %1001 = vmatprep.subr.mxu0 0.0
      %1002 = vmatpush1.msra.mxu0 0.0
      %1003 = vmatprep.subr.mxu0 0.0
      %1004 = vmatpush1.msra.mxu0 0.0
      %1005 = vmatprep.subr.mxu0 0.0
      %1006 = vmatpush1.msra.mxu0 0.0
      %1007 = vmatprep.subr.mxu0 0.0
      %1008 = vmatpush1.msra.mxu0 0.0
      %1009 = vmatprep.mubr.f32.mxu0 0.0
      %1010 = vmatmul.mubr.f32.gmra.mrb[0].mxu0 %v272
      %v1011 = vpop.f32.mrb[0].mxu0
      %v1012 = vadd.f32 %v263, %v1011
      %v1013 = vpop.f32.mrb[0].mxu0
      %1014 = vmatprep.mubr.f32.mxu0 0.0
      %1015 = vmatmul.mubr.f32.gmra.mrb[0].mxu0 %v275
      %v1016 = vpop.f32.mrb[0].mxu0
      %v1017 = vadd.f32 %v268, %v1016
      %v1018 = vpop.f32.mrb[0].mxu0
      %1019 = vdwg.mxu0
      %v1020 = vmax.f32 %v396, 0.0
      %v1021 = vmax.f32 %v398, 0.0
      %v1022 = vmax.f32 %v473, 0.0
      %v1023 = vmax.f32 %v475, 0.0
      %v1024 = vmax.f32 %v550, 0.0
      %v1025 = vmax.f32 %v552, 0.0
      %v1026 = vmax.f32 %v627, 0.0
      %v1027 = vmax.f32 %v629, 0.0
      %v1028 = vmax.f32 %v704, 0.0
      %v1029 = vmax.f32 %v706, 0.0
      %v1030 = vmax.f32 %v781, 0.0
      %v1031 = vmax.f32 %v783, 0.0
      %v1032 = vmax.f32 %v858, 0.0
      %v1033 = vmax.f32 %v860, 0.0
      %v1034 = vmax.f32 %v935, 0.0
      %v1035 = vmax.f32 %v937, 0.0
      %v1036 = vmax.f32 %v1012, 0.0
      %v1037 = vmax.f32 %v402, 0.0
      %v1038 = vmax.f32 %v404, 0.0
      %v1039 = vmax.f32 %v479, 0.0
      %v1040 = vmax.f32 %v481, 0.0
      %v1041 = vmax.f32 %v556, 0.0
      %v1042 = vmax.f32 %v558, 0.0
      %v1043 = vmax.f32 %v633, 0.0
      %v1044 = vmax.f32 %v635, 0.0
      %v1045 = vmax.f32 %v710, 0.0
      %v1046 = vmax.f32 %v712, 0.0
      %v1047 = vmax.f32 %v787, 0.0
      %v1048 = vmax.f32 %v789, 0.0
      %v1049 = vmax.f32 %v864, 0.0
      %v1050 = vmax.f32 %v866, 0.0
      %v1051 = vmax.f32 %v941, 0.0
      %v1052 = vmax.f32 %v943, 0.0
      %v1053 = vmax.f32 %v1017, 0.0
      %1054 = vst [vmem:[%s170] sm:$0xff] %v1020
      %1055 = vst [vmem:[%s170 + $0x8] sm:$0xff] %v1021
      %1056 = vst [vmem:[%s170 + $0x10] sm:$0xff] %v1022
      %1057 = vst [vmem:[%s170 + $0x18] sm:$0xff] %v1023
      %1058 = vst [vmem:[%s170 + $0x20] sm:$0xff] %v1024
      %1059 = vst [vmem:[%s170 + $0x28] sm:$0xff] %v1025
      %1060 = vst [vmem:[%s170 + $0x30] sm:$0xff] %v1026
      %1061 = vst [vmem:[%s170 + $0x38] sm:$0xff] %v1027
      %1062 = vst [vmem:[%s170 + $0x40] sm:$0xff] %v1028
      %1063 = vst [vmem:[%s170 + $0x48] sm:$0xff] %v1029
      %1064 = vst [vmem:[%s170 + $0x50] sm:$0xff] %v1030
      %1065 = vst [vmem:[%s170 + $0x58] sm:$0xff] %v1031
      %1066 = vst [vmem:[%s170 + $0x60] sm:$0xff] %v1032
      %1067 = vst [vmem:[%s170 + $0x68] sm:$0xff] %v1033
      %1068 = vst [vmem:[%s170 + $0x70] sm:$0xff] %v1034
      %1069 = vst [vmem:[%s170 + $0x78] sm:$0xff] %v1035
      %vm1070 = vcmask 261120
      %1071 = vst.msk [vmem:[%s170 + $0x80] sm:$0xff] %vm1070, %v1036
      %1072 = vst [vmem:[%s170 + $0x88] sm:$0xff] %v1037
      %1073 = vst [vmem:[%s170 + $0x90] sm:$0xff] %v1038
      %1074 = vst [vmem:[%s170 + $0x98] sm:$0xff] %v1039
      %1075 = vst [vmem:[%s170 + $0xa0] sm:$0xff] %v1040
      %1076 = vst [vmem:[%s170 + $0xa8] sm:$0xff] %v1041
      %1077 = vst [vmem:[%s170 + $0xb0] sm:$0xff] %v1042
      %1078 = vst [vmem:[%s170 + $0xb8] sm:$0xff] %v1043
      %1079 = vst [vmem:[%s170 + $0xc0] sm:$0xff] %v1044
      %1080 = vst [vmem:[%s170 + $0xc8] sm:$0xff] %v1045
      %1081 = vst [vmem:[%s170 + $0xd0] sm:$0xff] %v1046
      %1082 = vst [vmem:[%s170 + $0xd8] sm:$0xff] %v1047
      %1083 = vst [vmem:[%s170 + $0xe0] sm:$0xff] %v1048
      %1084 = vst [vmem:[%s170 + $0xe8] sm:$0xff] %v1049
      %1085 = vst [vmem:[%s170 + $0xf0] sm:$0xff] %v1050
      %1086 = vst [vmem:[%s170 + $0xf8] sm:$0xff] %v1051
      %1087 = vst [vmem:[%s170 + $0x100] sm:$0xff] %v1052
      %1088 = vst.msk [vmem:[%s170 + $0x108] sm:$0xff] %vm1070, %v1053
      %p1089 = scmp.lt.s32.totalorder %s14, 1
      %s1090 = scalar_select %p1089, %s14, 1
      %s1091 = smul.addr %s1090, 34
      %s1092 = smul.addr %s1091, 8
      %s1093 = scalar_lea.vmem %s3, %s1092
      // Predicated region
      $region33: #{multi_agent_cnn_critic.3} parent=31 // pred_check
        %p1094 = pneg %p100
      $region34: #{multi_agent_cnn_critic.3} parent=31 // pred_check_branch
        %1096 = sbr.rel (%p1094) target = $region36
      $region35: #{multi_agent_cnn_critic.3} parent=31 // pred_region
        _
      $region36: #{multi_agent_cnn_critic.3} parent=31 // pred_fallthru
        _
    $region32: #{multi_agent_cnn_critic.3} parent=5 // pred_fallthru
      _
    %p1097 = scmp.le.s32.totalorder 2, %s9
    // Predicated region
    $region37: #{multi_agent_cnn_critic.3} parent=5 // pred_check
      %p1098 = pneg %p1097
    $region38: #{multi_agent_cnn_critic.3} parent=5 // pred_check_branch
      %1100 = sbr.rel (%p1098) target = $region40
    $region39: #{multi_agent_cnn_critic.3} parent=5 // pred_region
      %s1101 = ssub.s32 %s9, 2
      // Predicated region
      $region41: #{multi_agent_cnn_critic.3} parent=39 // pred_check
        %p1102 = pneg %p106
      $region42: #{multi_agent_cnn_critic.3} parent=39 // pred_check_branch
        %1104 = sbr.rel (%p1102) target = $region44
      $region43: #{multi_agent_cnn_critic.3} parent=39 // pred_region
        %p1105 = scmp.lt.s32.totalorder %s15, 1
        %s1106 = scalar_select %p1105, %s15, 1
        %s1107 = smul.addr %s1106, 34
        %s1108 = smul.addr %s1107, 8
        %s1109 = scalar_lea.vmem %s3, %s1108
      $region44: #{multi_agent_cnn_critic.3} parent=39 // pred_fallthru
        _
    $region40: #{multi_agent_cnn_critic.3} parent=5 // pred_fallthru
      _
  $region6: #{multi_agent_cnn_critic.3} parent=0 // loop_footer
    %s13 = sadd.s32 1, %s9
  $region7: #{multi_agent_cnn_critic.3} parent=0 // loop_footer_branch
    %8 = sbr.rel target = $region3
  $region8: #{multi_agent_cnn_critic.3} parent=0 // loop_exit
    _

// kernel: multi_agent_cnn_critic.4
$region0: #{multi_agent_cnn_critic.4}
  #allocation0 [shape = 'u32[]', space=smem, size = 0x4, offset = 0x4, fixed_abs, tag = 'smem constant byte address 0x4 - core index']
  #allocation1 [shape = 'u32[144,128]{1,0:T(1,128)}', space=vmem, size = 0x12000, scoped, tag = 'internal scratch']
  %s0 = inlined_call_operand.vmem [shape: f32[2,144,475], index: 0, kind: input, shape index: {}]
  %s1 = inlined_call_operand.vmem [shape: f32[32,144], index: 1, kind: input, shape index: {}]
  %s2 = inlined_call_operand.vmem [shape: f32[32,1], index: 2, kind: input, shape index: {}]
  %s3 = inlined_call_operand.vmem [shape: f32[2,32,475], index: 3, kind: output, shape index: {}]
  %s4 = sld [smem:[#allocation0]]
  $region45: #{multi_agent_cnn_critic.4} parent=0
    _
  %s6 = ssub.s32 1, %s4
  %s7 = scalar_select 0, %s6, %s4
  loop: start=0, step=1, limit=4
  $region2: #{multi_agent_cnn_critic.4} parent=0 // loop_pre_header
    _
  $region3: #{multi_agent_cnn_critic.4} parent=0 // loop_header
    %s9 = sphi 0, %s13
    %p10 = scmp.ge.s32.totalorder %s9, 4
    %s19 = sphi 0, %s21
    %s22 = sphi 0, %s19
    %s23 = sphi 0, %s22
    %s39 = sphi 0, %s23
    %s43 = sphi 0, %s43
    %s45 = sphi 0, %s43
    %s46 = sphi 0, %s45
    %s60 = sphi 0, %s46
    %s64 = sphi 0, %s64
    %s66 = sphi 0, %s64
    %s67 = sphi 0, %s66
    %s81 = sphi 0, %s67
    %s87 = sphi 0, %s89
    %s90 = sphi 0, %s87
    %s91 = sphi 0, %s90
    %s107 = sphi 0, %s91
  $region4: #{multi_agent_cnn_critic.4} parent=0 // loop_header_branch
    %12 = sbr.rel (%p10) target = $region8
  $region5: #{multi_agent_cnn_critic.4} parent=0 // loop_body
    %s14 = ssub.s32 %s9, 1
    %s15 = ssub.s32 %s9, 2
    %s16 = sadd.s32 %s9, 1
    %s17 = ssub.s32 %s9, %s16
    %p18 = scmp.eq.s32.totalorder %s17, 0
    %s20 = sadd.s32 %s19, 1
    %s21 = scalar_select %p18, %s19, %s20
    %p24 = pneg %p18
    %p25 = scmp.eq.s32.totalorder %s9, 1
    %p26 = por %p24, %p25
    %p27 = scmp.ne.s32.totalorder %s19, %s22
    %p28 = scmp.eq.s32.totalorder %s9, 0
    %p29 = por %p27, %p28
    %p30 = scmp.ne.s32.totalorder %s19, %s22
    %p31 = scmp.eq.s32.totalorder %s14, 1
    %p32 = por %p30, %p31
    %p33 = scmp.ne.s32.totalorder %s22, %s23
    %p34 = scmp.eq.s32.totalorder %s14, 0
    %p35 = por %p33, %p34
    %p36 = scmp.ne.s32.totalorder %s22, %s23
    %p37 = scmp.eq.s32.totalorder %s15, 1
    %p38 = por %p36, %p37
    %p40 = scmp.ne.s32.totalorder %s23, %s39
    %p41 = scmp.eq.s32.totalorder %s15, 0
    %p42 = por %p40, %p41
    %s44 = sadd.s32 %s43, 1
    %p47 = scmp.eq.s32.totalorder %s9, 1
    %p48 = scmp.ne.s32.totalorder %s43, %s45
    %p49 = scmp.eq.s32.totalorder %s9, 0
    %p50 = por %p48, %p49
    %p51 = scmp.ne.s32.totalorder %s43, %s45
    %p52 = scmp.eq.s32.totalorder %s14, 1
    %p53 = por %p51, %p52
    %p54 = scmp.ne.s32.totalorder %s45, %s46
    %p55 = scmp.eq.s32.totalorder %s14, 0
    %p56 = por %p54, %p55
    %p57 = scmp.ne.s32.totalorder %s45, %s46
    %p58 = scmp.eq.s32.totalorder %s15, 1
    %p59 = por %p57, %p58
    %p61 = scmp.ne.s32.totalorder %s46, %s60
    %p62 = scmp.eq.s32.totalorder %s15, 0
    %p63 = por %p61, %p62
    %s65 = sadd.s32 %s64, 1
    %p68 = scmp.eq.s32.totalorder %s9, 1
    %p69 = scmp.ne.s32.totalorder %s64, %s66
    %p70 = scmp.eq.s32.totalorder %s9, 0
    %p71 = por %p69, %p70
    %p72 = scmp.ne.s32.totalorder %s64, %s66
    %p73 = scmp.eq.s32.totalorder %s14, 1
    %p74 = por %p72, %p73
    %p75 = scmp.ne.s32.totalorder %s66, %s67
    %p76 = scmp.eq.s32.totalorder %s14, 0
    %p77 = por %p75, %p76
    %p78 = scmp.ne.s32.totalorder %s66, %s67
    %p79 = scmp.eq.s32.totalorder %s15, 1
    %p80 = por %p78, %p79
    %p82 = scmp.ne.s32.totalorder %s67, %s81
    %p83 = scmp.eq.s32.totalorder %s15, 0
    %p84 = por %p82, %p83
    %s85 = ssub.s32 %s9, %s16
    %p86 = scmp.eq.s32.totalorder %s85, 0
    %s88 = sadd.s32 %s87, 1
    %s89 = scalar_select %p86, %s87, %s88
    %p92 = pneg %p86
    %p93 = scmp.eq.s32.totalorder %s9, 1
    %p94 = por %p92, %p93
    %p95 = scmp.ne.s32.totalorder %s87, %s90
    %p96 = scmp.eq.s32.totalorder %s9, 0
    %p97 = por %p95, %p96
    %p98 = scmp.ne.s32.totalorder %s87, %s90
    %p99 = scmp.eq.s32.totalorder %s14, 1
    %p100 = por %p98, %p99
    %p101 = scmp.ne.s32.totalorder %s90, %s91
    %p102 = scmp.eq.s32.totalorder %s14, 0
    %p103 = por %p101, %p102
    %p104 = scmp.ne.s32.totalorder %s90, %s91
    %p105 = scmp.eq.s32.totalorder %s15, 1
    %p106 = por %p104, %p105
    %p108 = scmp.ne.s32.totalorder %s91, %s107
    %p109 = scmp.eq.s32.totalorder %s15, 0
    %p110 = por %p108, %p109
    %p111 = scmp.le.s32.totalorder 1, %s9
    %p112 = scmp.lt.s32.totalorder %s9, 3
    %p113 = pnand %p111, %p112
    %p114 = pneg %p113
    // Predicated region
    $region9: #{multi_agent_cnn_critic.4} parent=5 // pred_check
      _
    $region10: #{multi_agent_cnn_critic.4} parent=5 // pred_check_branch
      %116 = sbr.rel (%p113) target = $region12
    $region11: #{multi_agent_cnn_critic.4} parent=5 // pred_region
      %s117 = ssub.s32 %s9, 1
      // Predicated region
      $region13: #{multi_agent_cnn_critic.4} parent=11 // pred_check
        %p118 = pneg %p56
      $region14: #{multi_agent_cnn_critic.4} parent=11 // pred_check_branch
        %120 = sbr.rel (%p118) target = $region16
      $region15: #{multi_agent_cnn_critic.4} parent=11 // pred_region
        _
      $region16: #{multi_agent_cnn_critic.4} parent=11 // pred_fallthru
        _
      // Predicated region
      $region17: #{multi_agent_cnn_critic.4} parent=11 // pred_check
        %p121 = pneg %p77
      $region18: #{multi_agent_cnn_critic.4} parent=11 // pred_check_branch
        %123 = sbr.rel (%p121) target = $region20
      $region19: #{multi_agent_cnn_critic.4} parent=11 // pred_region
        _
      $region20: #{multi_agent_cnn_critic.4} parent=11 // pred_fallthru
        _
    $region12: #{multi_agent_cnn_critic.4} parent=5 // pred_fallthru
      _
    %p124 = scmp.lt.s32.totalorder %s9, 2
    // Predicated region
    $region21: #{multi_agent_cnn_critic.4} parent=5 // pred_check
      %p125 = pneg %p124
    $region22: #{multi_agent_cnn_critic.4} parent=5 // pred_check_branch
      %127 = sbr.rel (%p125) target = $region24
    $region23: #{multi_agent_cnn_critic.4} parent=5 // pred_region
      // Predicated region
      $region25: #{multi_agent_cnn_critic.4} parent=23 // pred_check
        %p128 = pneg %p29
      $region26: #{multi_agent_cnn_critic.4} parent=23 // pred_check_branch
        %130 = sbr.rel (%p128) target = $region28
      $region27: #{multi_agent_cnn_critic.4} parent=23 // pred_region
        %p131 = scmp.lt.s32.totalorder %s9, 1
        %s132 = scalar_select %p131, %s9, 1
        %s133 = smul.addr %s132, 72
        %s134 = smul.addr %s133, 8
        %s135 = scalar_lea.vmem %s0, %s134
      $region28: #{multi_agent_cnn_critic.4} parent=23 // pred_fallthru
        _
    $region24: #{multi_agent_cnn_critic.4} parent=5 // pred_fallthru
      _
    %p136 = scmp.le.s32.totalorder 1, %s9
    %p137 = scmp.lt.s32.totalorder %s9, 3
    %p138 = pnand %p136, %p137
    %p139 = pneg %p138
    // Predicated region
    $region29: #{multi_agent_cnn_critic.4} parent=5 // pred_check
      _
    $region30: #{multi_agent_cnn_critic.4} parent=5 // pred_check_branch
      %141 = sbr.rel (%p138) target = $region32
    $region31: #{multi_agent_cnn_critic.4} parent=5 // pred_region
      %s142 = ssub.s32 %s9, 1
      %p143 = scmp.lt.s32.totalorder %s14, 1
      %s144 = scalar_select %p143, %s14, 1
      %s145 = smul.addr %s144, 72
      %s146 = smul.addr %s145, 8
      %s147 = scalar_lea.vmem %s0, %s146
      %p148 = pneg %p35
      %p149 = pneg %p32
      %p150 = pneg %p56
      %p151 = pneg %p53
      %p152 = pneg %p77
      %p153 = pneg %p74
      %p154 = pneg %p103
      %p155 = pneg %p100
      %p156 = scmp.lt.s32.totalorder %s14, 1
      %s157 = scalar_select %p156, %s14, 1
      %s158 = smul.addr %s157, 16
      %s159 = smul.addr %s158, 8
      %s160 = scalar_lea.vmem %s3, %s159
      %p161 = scmp.lt.s32.totalorder %s14, 1
      %s162 = scalar_select %p161, %s14, 1
      %s163 = smul.addr %s162, 72
      %s164 = smul.addr %s163, 8
      %s165 = scalar_lea.vmem %s0, %s164
      %p166 = scmp.lt.s32.totalorder %s14, 1
      %s167 = scalar_select %p166, %s14, 1
      %s168 = smul.addr %s167, 16
      %s169 = smul.addr %s168, 8
      %s170 = scalar_lea.vmem %s3, %s169
      %v171 = vld [vmem:[%s1] sm:$0xff]
      %v172 = vld [vmem:[%s1 + $0x8] sm:$0xff]
      %v173 = vld [vmem:[%s1 + $0x10] sm:$0xff]
      %v174 = vld [vmem:[%s1 + $0x18] sm:$0xff]
      %v175 = vld [vmem:[%s1 + $0x20] sm:$0xff]
      %v176 = vld [vmem:[%s1 + $0x28] sm:$0xff]
      %v177 = vld [vmem:[%s1 + $0x30] sm:$0xff]
      %v178 = vld [vmem:[%s1 + $0x38] sm:$0xff]
      %v179 = vld [vmem:[%s165] sm:$0xff]
      %v180 = vld [vmem:[%s165 + $0x8] sm:$0xff]
      %v181 = vld [vmem:[%s165 + $0x10] sm:$0xff]
      %v182 = vld [vmem:[%s165 + $0x18] sm:$0xff]
      %v183 = vld [vmem:[%s165 + $0x20] sm:$0xff]
      %v184 = vld [vmem:[%s165 + $0x28] sm:$0xff]
      %v185 = vld [vmem:[%s165 + $0x30] sm:$0xff]
      %v186 = vld [vmem:[%s165 + $0x38] sm:$0xff]
      %v187 = vld [vmem:[%s165 + $0x40] sm:$0xff]
      %v188 = vld [vmem:[%s165 + $0x48] sm:$0xff]
      %v189 = vld [vmem:[%s165 + $0x50] sm:$0xff]
      %v190 = vld [vmem:[%s165 + $0x58] sm:$0xff]
      %v191 = vld [vmem:[%s165 + $0x60] sm:$0xff]
      %v192 = vld [vmem:[%s165 + $0x68] sm:$0xff]
      %v193 = vld [vmem:[%s165 + $0x70] sm:$0xff]
      %v194 = vld [vmem:[%s165 + $0x78] sm:$0xff]
      %v195 = vld [vmem:[%s165 + $0x80] sm:$0xff]
      %v196 = vld [vmem:[%s165 + $0x88] sm:$0xff]
      %v197 = vld [vmem:[%s165 + $0x90] sm:$0xff]
      %v198 = vld [vmem:[%s165 + $0x98] sm:$0xff]
      %v199 = vld [vmem:[%s165 + $0xa0] sm:$0xff]
      %v200 = vld [vmem:[%s165 + $0xa8] sm:$0xff]
      %v201 = vld [vmem:[%s165 + $0xb0] sm:$0xff]
      %v202 = vld [vmem:[%s165 + $0xb8] sm:$0xff]
      %v203 = vld [vmem:[%s165 + $0xc0] sm:$0xff]
      %v204 = vld [vmem:[%s165 + $0xc8] sm:$0xff]
      %v205 = vld [vmem:[%s165 + $0xd0] sm:$0xff]
      %v206 = vld [vmem:[%s165 + $0xd8] sm:$0xff]
      %v207 = vld [vmem:[%s165 + $0xe0] sm:$0xff]
      %v208 = vld [vmem:[%s165 + $0xe8] sm:$0xff]
      %v209 = vld [vmem:[%s165 + $0xf0] sm:$0xff]
      %v210 = vld [vmem:[%s165 + $0xf8] sm:$0xff]
      %v211 = vld [vmem:[%s165 + $0x100] sm:$0xff]
      %v212 = vld [vmem:[%s165 + $0x108] sm:$0xff]
      %v213 = vld [vmem:[%s165 + $0x110] sm:$0xff]
      %v214 = vld [vmem:[%s165 + $0x118] sm:$0xff]
      %v215 = vld [vmem:[%s165 + $0x120] sm:$0xff]
      %v216 = vld [vmem:[%s165 + $0x128] sm:$0xff]
      %v217 = vld [vmem:[%s165 + $0x130] sm:$0xff]
      %v218 = vld [vmem:[%s165 + $0x138] sm:$0xff]
      %v219 = vld [vmem:[%s165 + $0x140] sm:$0xff]
      %v220 = vld [vmem:[%s165 + $0x148] sm:$0xff]
      %v221 = vld [vmem:[%s165 + $0x150] sm:$0xff]
      %v222 = vld [vmem:[%s165 + $0x158] sm:$0xff]
      %v223 = vld [vmem:[%s165 + $0x160] sm:$0xff]
      %v224 = vld [vmem:[%s165 + $0x168] sm:$0xff]
      %v225 = vld [vmem:[%s165 + $0x170] sm:$0xff]
      %v226 = vld [vmem:[%s165 + $0x178] sm:$0xff]
      %v227 = vld [vmem:[%s165 + $0x180] sm:$0xff]
      %v228 = vld [vmem:[%s165 + $0x188] sm:$0xff]
      %v229 = vld [vmem:[%s165 + $0x190] sm:$0xff]
      %v230 = vld [vmem:[%s165 + $0x198] sm:$0xff]
      %v231 = vld [vmem:[%s165 + $0x1a0] sm:$0xff]
      %v232 = vld [vmem:[%s165 + $0x1a8] sm:$0xff]
      %v233 = vld [vmem:[%s165 + $0x1b0] sm:$0xff]
      %v234 = vld [vmem:[%s165 + $0x1b8] sm:$0xff]
      %v235 = vld [vmem:[%s165 + $0x1c0] sm:$0xff]
      %v236 = vld [vmem:[%s165 + $0x1c8] sm:$0xff]
      %v237 = vld [vmem:[%s165 + $0x1d0] sm:$0xff]
      %v238 = vld [vmem:[%s165 + $0x1d8] sm:$0xff]
      %v239 = vld [vmem:[%s165 + $0x1e0] sm:$0xff]
      %v240 = vld [vmem:[%s165 + $0x1e8] sm:$0xff]
      %v241 = vld [vmem:[%s165 + $0x1f0] sm:$0xff]
      %v242 = vld [vmem:[%s165 + $0x1f8] sm:$0xff]
      %v243 = vld [vmem:[%s165 + $0x200] sm:$0xff]
      %v244 = vld [vmem:[%s165 + $0x208] sm:$0xff]
      %v245 = vld [vmem:[%s165 + $0x210] sm:$0xff]
      %v246 = vld [vmem:[%s165 + $0x218] sm:$0xff]
      %v247 = vld [vmem:[%s165 + $0x220] sm:$0xff]
      %v248 = vld [vmem:[%s165 + $0x228] sm:$0xff]
      %v249 = vld [vmem:[%s165 + $0x230] sm:$0xff]
      %v250 = vld [vmem:[%s165 + $0x238] sm:$0xff]
      %v251 = vld [vmem:[%s2] sm:$0xff]
      %v252 = vld [vmem:[%s2 + $0x8] sm:$0xff]
      %v253 = vld [vmem:[%s2 + $0x10] sm:$0xff]
      %v254 = vld [vmem:[%s2 + $0x18] sm:$0xff]
      %256 = vset.pattern.permute.xlu0 0
      %257 = vperm.xlu0 %256, %v251
      %v258 = vpop.permute.xlu0 %257
      %261 = vset.pattern.permute.xlu0 0
      %262 = vperm.xlu0 %261, %v252
      %v263 = vpop.permute.xlu0 %262
      %266 = vset.pattern.permute.xlu0 0
      %267 = vperm.xlu0 %266, %v253
      %v268 = vpop.permute.xlu0 %267
      %271 = vset.pattern.permute.xlu0 0
      %272 = vperm.xlu0 %271, %v254
      %v273 = vpop.permute.xlu0 %272
      %vm275 = vcmask 130048
      %v277 = vsel %vm275, %v172, 0
      %v280 = vsel %vm275, %v174, 0
      %v283 = vsel %vm275, %v176, 0
      %v286 = vsel %vm275, %v178, 0
      %288 = vmatprep.subr.mxu0 %v180
      %289 = vmatpush1.msra.mxu0 %v179
      %290 = vmatprep.subr.mxu0 %v184
      %291 = vmatpush1.msra.mxu0 %v183
      %292 = vmatprep.subr.mxu0 %v188
      %293 = vmatpush1.msra.mxu0 %v187
      %294 = vmatprep.subr.mxu0 %v192
      %295 = vmatpush1.msra.mxu0 %v191
      %296 = vmatprep.subr.mxu0 %v196
      %297 = vmatpush1.msra.mxu0 %v195
      %298 = vmatprep.subr.mxu0 %v200
      %299 = vmatpush1.msra.mxu0 %v199
      %300 = vmatprep.subr.mxu0 %v204
      %301 = vmatpush1.msra.mxu0 %v203
      %302 = vmatprep.subr.mxu0 %v208
      %303 = vmatpush1.msra.mxu0 %v207
      %304 = vmatprep.subr.mxu0 %v212
      %305 = vmatpush1.msra.mxu0 %v211
      %306 = vmatprep.subr.mxu0 %v216
      %307 = vmatpush1.msra.mxu0 %v215
      %308 = vmatprep.subr.mxu0 %v220
      %309 = vmatpush1.msra.mxu0 %v219
      %310 = vmatprep.subr.mxu0 %v224
      %311 = vmatpush1.msra.mxu0 %v223
      %312 = vmatprep.subr.mxu0 %v228
      %313 = vmatpush1.msra.mxu0 %v227
      %314 = vmatprep.subr.mxu0 %v232
      %315 = vmatpush1.msra.mxu0 %v231
      %316 = vmatprep.subr.mxu0 %v236
      %317 = vmatpush1.msra.mxu0 %v235
      %318 = vmatprep.subr.mxu0 %v240
      %319 = vmatpush1.msra.mxu0 %v239
      %320 = vmatprep.subr.mxu0 %v244
      %321 = vmatpush1.msra.mxu0 %v243
      %322 = vmatprep.subr.mxu0 %v248
      %323 = vmatpush1.msra.mxu0 %v247
      %324 = vmatprep.subr.mxu0 0.0
      %325 = vmatpush1.msra.mxu0 0.0
      %326 = vmatprep.subr.mxu0 0.0
      %327 = vmatpush1.msra.mxu0 0.0
      %328 = vmatprep.subr.mxu0 0.0
      %329 = vmatpush1.msra.mxu0 0.0
      %330 = vmatprep.subr.mxu0 0.0
      %331 = vmatpush1.msra.mxu0 0.0
      %332 = vmatprep.subr.mxu0 0.0
      %333 = vmatpush1.msra.mxu0 0.0
      %334 = vmatprep.subr.mxu0 0.0
      %335 = vmatpush1.msra.mxu0 0.0
      %336 = vmatprep.subr.mxu0 0.0
      %337 = vmatpush1.msra.mxu0 0.0
      %338 = vmatprep.subr.mxu0 0.0
      %339 = vmatpush1.msra.mxu0 0.0
      %340 = vmatprep.subr.mxu0 0.0
      %341 = vmatpush1.msra.mxu0 0.0
      %342 = vmatprep.subr.mxu0 0.0
      %343 = vmatpush1.msra.mxu0 0.0
      %344 = vmatprep.subr.mxu0 0.0
      %345 = vmatpush1.msra.mxu0 0.0
      %346 = vmatprep.subr.mxu0 0.0
      %347 = vmatpush1.msra.mxu0 0.0
      %348 = vmatprep.subr.mxu0 0.0
      %349 = vmatpush1.msra.mxu0 0.0
      %350 = vmatprep.subr.mxu0 0.0
      %351 = vmatpush1.msra.mxu0 0.0
      %352 = vmatprep.mubr.f32.mxu0 %v277
      %353 = vmatmul.mubr.f32.gmra.mrb[0].mxu0 %v171
      %v354 = vpop.f32.mrb[0].mxu0
      %v355 = vadd.f32 %v258, %v354
      %v356 = vpop.f32.mrb[0].mxu0
      %v357 = vadd.f32 %v258, %v356
      %358 = vmatprep.mubr.f32.mxu0 %v280
      %359 = vmatmul.mubr.f32.gmra.mrb[0].mxu0 %v173
      %v360 = vpop.f32.mrb[0].mxu0
      %v361 = vadd.f32 %v263, %v360
      %v362 = vpop.f32.mrb[0].mxu0
      %v363 = vadd.f32 %v263, %v362
      %364 = vmatprep.mubr.f32.mxu0 %v283
      %365 = vmatmul.mubr.f32.gmra.mrb[0].mxu0 %v175
      %v366 = vpop.f32.mrb[0].mxu0
      %v367 = vadd.f32 %v268, %v366
      %v368 = vpop.f32.mrb[0].mxu0
      %v369 = vadd.f32 %v268, %v368
      %370 = vmatprep.mubr.f32.mxu0 %v286
      %371 = vmatmul.mubr.f32.gmra.mrb[0].mxu0 %v177
      %v372 = vpop.f32.mrb[0].mxu0
      %v373 = vadd.f32 %v273, %v372
      %v374 = vpop.f32.mrb[0].mxu0
      %v375 = vadd.f32 %v273, %v374
      %376 = vdwg.mxu0
      %377 = vmatprep.subr.mxu0 %v182
      %378 = vmatpush1.msra.mxu0 %v181
      %379 = vmatprep.subr.mxu0 %v186
      %380 = vmatpush1.msra.mxu0 %v185
      %381 = vmatprep.subr.mxu0 %v190
      %382 = vmatpush1.msra.mxu0 %v189
      %383 = vmatprep.subr.mxu0 %v194
      %384 = vmatpush1.msra.mxu0 %v193
      %385 = vmatprep.subr.mxu0 %v198
      %386 = vmatpush1.msra.mxu0 %v197
      %387 = vmatprep.subr.mxu0 %v202
      %388 = vmatpush1.msra.mxu0 %v201
      %389 = vmatprep.subr.mxu0 %v206
      %390 = vmatpush1.msra.mxu0 %v205
      %391 = vmatprep.subr.mxu0 %v210
      %392 = vmatpush1.msra.mxu0 %v209
      %393 = vmatprep.subr.mxu0 %v214
      %394 = vmatpush1.msra.mxu0 %v213
      %395 = vmatprep.subr.mxu0 %v218
      %396 = vmatpush1.msra.mxu0 %v217
      %397 = vmatprep.subr.mxu0 %v222
      %398 = vmatpush1.msra.mxu0 %v221
      %399 = vmatprep.subr.mxu0 %v226
      %400 = vmatpush1.msra.mxu0 %v225
      %401 = vmatprep.subr.mxu0 %v230
      %402 = vmatpush1.msra.mxu0 %v229
      %403 = vmatprep.subr.mxu0 %v234
      %404 = vmatpush1.msra.mxu0 %v233
      %405 = vmatprep.subr.mxu0 %v238
      %406 = vmatpush1.msra.mxu0 %v237
      %407 = vmatprep.subr.mxu0 %v242
      %408 = vmatpush1.msra.mxu0 %v241
      %409 = vmatprep.subr.mxu0 %v246
      %410 = vmatpush1.msra.mxu0 %v245
      %411 = vmatprep.subr.mxu0 %v250
      %412 = vmatpush1.msra.mxu0 %v249
      %413 = vmatprep.subr.mxu0 0.0
      %414 = vmatpush1.msra.mxu0 0.0
      %415 = vmatprep.subr.mxu0 0.0
      %416 = vmatpush1.msra.mxu0 0.0
      %417 = vmatprep.subr.mxu0 0.0
      %418 = vmatpush1.msra.mxu0 0.0
      %419 = vmatprep.subr.mxu0 0.0
      %420 = vmatpush1.msra.mxu0 0.0
      %421 = vmatprep.subr.mxu0 0.0
      %422 = vmatpush1.msra.mxu0 0.0
      %423 = vmatprep.subr.mxu0 0.0
      %424 = vmatpush1.msra.mxu0 0.0
      %425 = vmatprep.subr.mxu0 0.0
      %426 = vmatpush1.msra.mxu0 0.0
      %427 = vmatprep.subr.mxu0 0.0
      %428 = vmatpush1.msra.mxu0 0.0
      %429 = vmatprep.subr.mxu0 0.0
      %430 = vmatpush1.msra.mxu0 0.0
      %431 = vmatprep.subr.mxu0 0.0
      %432 = vmatpush1.msra.mxu0 0.0
      %433 = vmatprep.subr.mxu0 0.0
      %434 = vmatpush1.msra.mxu0 0.0
      %435 = vmatprep.subr.mxu0 0.0
      %436 = vmatpush1.msra.mxu0 0.0
      %437 = vmatprep.subr.mxu0 0.0
      %438 = vmatpush1.msra.mxu0 0.0
      %439 = vmatprep.subr.mxu0 0.0
      %440 = vmatpush1.msra.mxu0 0.0
      %441 = vmatprep.mubr.f32.mxu0 %v277
      %442 = vmatmul.mubr.f32.gmra.mrb[0].mxu0 %v171
      %v443 = vpop.f32.mrb[0].mxu0
      %v444 = vadd.f32 %v258, %v443
      %v445 = vpop.f32.mrb[0].mxu0
      %v446 = vadd.f32 %v258, %v445
      %447 = vmatprep.mubr.f32.mxu0 %v280
      %448 = vmatmul.mubr.f32.gmra.mrb[0].mxu0 %v173
      %v449 = vpop.f32.mrb[0].mxu0
      %v450 = vadd.f32 %v263, %v449
      %v451 = vpop.f32.mrb[0].mxu0
      %v452 = vadd.f32 %v263, %v451
      %453 = vmatprep.mubr.f32.mxu0 %v283
      %454 = vmatmul.mubr.f32.gmra.mrb[0].mxu0 %v175
      %v455 = vpop.f32.mrb[0].mxu0
      %v456 = vadd.f32 %v268, %v455
      %v457 = vpop.f32.mrb[0].mxu0
      %v458 = vadd.f32 %v268, %v457
      %459 = vmatprep.mubr.f32.mxu0 %v286
      %460 = vmatmul.mubr.f32.gmra.mrb[0].mxu0 %v177
      %v461 = vpop.f32.mrb[0].mxu0
      %v462 = vadd.f32 %v273, %v461
      %v463 = vpop.f32.mrb[0].mxu0
      %v464 = vadd.f32 %v273, %v463
      %465 = vdwg.mxu0
      %v466 = vmax.f32 %v355, 0.0
      %v467 = vmax.f32 %v357, 0.0
      %v468 = vmax.f32 %v444, 0.0
      %v469 = vmax.f32 %v446, 0.0
      %v470 = vmax.f32 %v361, 0.0
      %v471 = vmax.f32 %v363, 0.0
      %v472 = vmax.f32 %v450, 0.0
      %v473 = vmax.f32 %v452, 0.0
      %v474 = vmax.f32 %v367, 0.0
      %v475 = vmax.f32 %v369, 0.0
      %v476 = vmax.f32 %v456, 0.0
      %v477 = vmax.f32 %v458, 0.0
      %v478 = vmax.f32 %v373, 0.0
      %v479 = vmax.f32 %v375, 0.0
      %v480 = vmax.f32 %v462, 0.0
      %v481 = vmax.f32 %v464, 0.0
      %482 = vst [vmem:[%s170] sm:$0xff] %v466
      %483 = vst [vmem:[%s170 + $0x8] sm:$0xff] %v467
      %484 = vst [vmem:[%s170 + $0x10] sm:$0xff] %v468
      %vm485 = vcmask 744448
      %486 = vst.msk [vmem:[%s170 + $0x18] sm:$0xff] %vm485, %v469
      %487 = vst [vmem:[%s170 + $0x20] sm:$0xff] %v470
      %488 = vst [vmem:[%s170 + $0x28] sm:$0xff] %v471
      %489 = vst [vmem:[%s170 + $0x30] sm:$0xff] %v472
      %490 = vst.msk [vmem:[%s170 + $0x38] sm:$0xff] %vm485, %v473
      %491 = vst [vmem:[%s170 + $0x40] sm:$0xff] %v474
      %492 = vst [vmem:[%s170 + $0x48] sm:$0xff] %v475
      %493 = vst [vmem:[%s170 + $0x50] sm:$0xff] %v476
      %494 = vst.msk [vmem:[%s170 + $0x58] sm:$0xff] %vm485, %v477
      %495 = vst [vmem:[%s170 + $0x60] sm:$0xff] %v478
      %496 = vst [vmem:[%s170 + $0x68] sm:$0xff] %v479
      %497 = vst [vmem:[%s170 + $0x70] sm:$0xff] %v480
      %498 = vst.msk [vmem:[%s170 + $0x78] sm:$0xff] %vm485, %v481
      %p499 = scmp.lt.s32.totalorder %s14, 1
      %s500 = scalar_select %p499, %s14, 1
      %s501 = smul.addr %s500, 16
      %s502 = smul.addr %s501, 8
      %s503 = scalar_lea.vmem %s3, %s502
      // Predicated region
      $region33: #{multi_agent_cnn_critic.4} parent=31 // pred_check
        %p504 = pneg %p100
      $region34: #{multi_agent_cnn_critic.4} parent=31 // pred_check_branch
        %506 = sbr.rel (%p504) target = $region36
      $region35: #{multi_agent_cnn_critic.4} parent=31 // pred_region
        _
      $region36: #{multi_agent_cnn_critic.4} parent=31 // pred_fallthru
        _
    $region32: #{multi_agent_cnn_critic.4} parent=5 // pred_fallthru
      _
    %p507 = scmp.le.s32.totalorder 2, %s9
    // Predicated region
    $region37: #{multi_agent_cnn_critic.4} parent=5 // pred_check
      %p508 = pneg %p507
    $region38: #{multi_agent_cnn_critic.4} parent=5 // pred_check_branch
      %510 = sbr.rel (%p508) target = $region40
    $region39: #{multi_agent_cnn_critic.4} parent=5 // pred_region
      %s511 = ssub.s32 %s9, 2
      // Predicated region
      $region41: #{multi_agent_cnn_critic.4} parent=39 // pred_check
        %p512 = pneg %p106
      $region42: #{multi_agent_cnn_critic.4} parent=39 // pred_check_branch
        %514 = sbr.rel (%p512) target = $region44
      $region43: #{multi_agent_cnn_critic.4} parent=39 // pred_region
        %p515 = scmp.lt.s32.totalorder %s15, 1
        %s516 = scalar_select %p515, %s15, 1
        %s517 = smul.addr %s516, 16
        %s518 = smul.addr %s517, 8
        %s519 = scalar_lea.vmem %s3, %s518
      $region44: #{multi_agent_cnn_critic.4} parent=39 // pred_fallthru
        _
    $region40: #{multi_agent_cnn_critic.4} parent=5 // pred_fallthru
      _
  $region6: #{multi_agent_cnn_critic.4} parent=0 // loop_footer
    %s13 = sadd.s32 1, %s9
  $region7: #{multi_agent_cnn_critic.4} parent=0 // loop_footer_branch
    %8 = sbr.rel target = $region3
  $region8: #{multi_agent_cnn_critic.4} parent=0 // loop_exit
    _

// kernel: multi_agent_cnn_critic.5
$region0: #{multi_agent_cnn_critic.5}
  #allocation0 [shape = 'u32[]', space=smem, size = 0x4, offset = 0x4, fixed_abs, tag = 'smem constant byte address 0x4 - core index']
  #allocation1 [shape = 'u32[144,128]{1,0:T(1,128)}', space=vmem, size = 0x12000, scoped, tag = 'internal scratch']
  #allocation2 [shape = 'f32[2,128]{1,0:T(2,128)}', space=vmem, size = 0x400, scoped, tag = 'scratch operand']
  %s0 = inlined_call_operand.vmem [shape: f32[2,15360], index: 0, kind: input, shape index: {}]
  %s1 = inlined_call_operand.vmem [shape: f32[15360,256], index: 1, kind: input, shape index: {}]
  %s2 = inlined_call_operand.vmem [shape: f32[2,2], index: 2, kind: input, shape index: {}]
  %s3 = inlined_call_operand.vmem [shape: f32[2,256], index: 3, kind: input, shape index: {}]
  %s4 = inlined_call_operand.vmem [shape: f32[1,256], index: 4, kind: input, shape index: {}]
  %s5 = inlined_call_operand.vmem [shape: f32[256,2], index: 5, kind: input, shape index: {}]
  %s6 = inlined_call_operand.vmem [shape: f32[2,2,2], index: 6, kind: output, shape index: {}]
  %s7 = sld [smem:[#allocation0]]
  $region103: #{multi_agent_cnn_critic.5} parent=0
    _
  %s9 = ssub.s32 1, %s7
  %s10 = scalar_select 0, %s9, %s7
  $region1: #{multi_agent_cnn_critic.5} parent=0
    #allocation3 [shape = 'u8[3932160]{0}', space=vmem, size = 0x3c0000, scoped, tag = 'input window, operand 1']
    loop: start=0, step=1, limit=10
    $region2: #{multi_agent_cnn_critic.5} parent=1 // loop_pre_header
      _
    $region3: #{multi_agent_cnn_critic.5} parent=1 // loop_header
      %s12 = sphi 0, %s16
      %p13 = scmp.ge.s32.totalorder %s12, 10
      %s19 = sphi 0, %s31
      %s20 = sphi 0, %s27
      %s21 = sphi 0, %s19
      %s22 = sphi 0, %s20
      %s23 = sphi 0, %s21
      %s24 = sphi 0, %s22
      %s34 = sphi 0, %s36
      %s37 = sphi 0, %s34
      %s38 = sphi 0, %s37
      %s54 = sphi 0, %s38
      %s62 = sphi 0, %s64
      %s65 = sphi 0, %s62
      %s66 = sphi 0, %s65
      %s82 = sphi 0, %s66
      %s86 = sphi 0, %s86
      %s88 = sphi 0, %s86
      %s89 = sphi 0, %s88
      %s103 = sphi 0, %s89
      %s109 = sphi 0, %s111
      %s112 = sphi 0, %s109
      %s113 = sphi 0, %s112
      %s129 = sphi 0, %s113
      %s135 = sphi 0, %s137
      %s138 = sphi 0, %s135
      %s139 = sphi 0, %s138
      %s155 = sphi 0, %s139
      %s161 = sphi 0, %s163
      %s164 = sphi 0, %s161
      %s165 = sphi 0, %s164
      %s181 = sphi 0, %s165
      %s187 = sphi 0, %s189
      %s190 = sphi 0, %s187
      %s191 = sphi 0, %s190
      %s207 = sphi 0, %s191
    $region4: #{multi_agent_cnn_critic.5} parent=1 // loop_header_branch
      %15 = sbr.rel (%p13) target = $region8
    $region5: #{multi_agent_cnn_critic.5} parent=1 // loop_body
      %s17 = ssub.s32 %s12, 1
      %s18 = ssub.s32 %s12, 2
      %s25 = sadd.s32 1, %s20
      %p26 = scmp.ge.s32.totalorder %s25, 4
      %s27 = scalar_select %p26, 0, %s25
      %s28 = sadd.s32 1, %s19
      %s29 = scalar_select %p26, %s28, %s19
      %p30 = scmp.ge.s32.totalorder %s29, 2
      %s31 = scalar_select %p30, 0, %s29
      %s32 = ssub.s32 %s20, %s27
      %p33 = scmp.eq.s32.totalorder %s32, 0
      %s35 = sadd.s32 %s34, 1
      %s36 = scalar_select %p33, %s34, %s35
      %p39 = pneg %p33
      %p40 = scmp.eq.s32.totalorder %s12, 7
      %p41 = por %p39, %p40
      %p42 = scmp.ne.s32.totalorder %s34, %s37
      %p43 = scmp.eq.s32.totalorder %s12, 0
      %p44 = por %p42, %p43
      %p45 = scmp.ne.s32.totalorder %s34, %s37
      %p46 = scmp.eq.s32.totalorder %s17, 7
      %p47 = por %p45, %p46
      %p48 = scmp.ne.s32.totalorder %s37, %s38
      %p49 = scmp.eq.s32.totalorder %s17, 0
      %p50 = por %p48, %p49
      %p51 = scmp.ne.s32.totalorder %s37, %s38
      %p52 = scmp.eq.s32.totalorder %s18, 7
      %p53 = por %p51, %p52
      %p55 = scmp.ne.s32.totalorder %s38, %s54
      %p56 = scmp.eq.s32.totalorder %s18, 0
      %p57 = por %p55, %p56
      %s58 = ssub.s32 %s20, %s27
      %s59 = ssub.s32 %s19, %s31
      %s60 = sor.u32 %s58, %s59
      %p61 = scmp.eq.s32.totalorder %s60, 0
      %s63 = sadd.s32 %s62, 1
      %s64 = scalar_select %p61, %s62, %s63
      %p67 = pneg %p61
      %p68 = scmp.eq.s32.totalorder %s12, 7
      %p69 = por %p67, %p68
      %p70 = scmp.ne.s32.totalorder %s62, %s65
      %p71 = scmp.eq.s32.totalorder %s12, 0
      %p72 = por %p70, %p71
      %p73 = scmp.ne.s32.totalorder %s62, %s65
      %p74 = scmp.eq.s32.totalorder %s17, 7
      %p75 = por %p73, %p74
      %p76 = scmp.ne.s32.totalorder %s65, %s66
      %p77 = scmp.eq.s32.totalorder %s17, 0
      %p78 = por %p76, %p77
      %p79 = scmp.ne.s32.totalorder %s65, %s66
      %p80 = scmp.eq.s32.totalorder %s18, 7
      %p81 = por %p79, %p80
      %p83 = scmp.ne.s32.totalorder %s66, %s82
      %p84 = scmp.eq.s32.totalorder %s18, 0
      %p85 = por %p83, %p84
      %s87 = sadd.s32 %s86, 1
      %p90 = scmp.eq.s32.totalorder %s12, 7
      %p91 = scmp.ne.s32.totalorder %s86, %s88
      %p92 = scmp.eq.s32.totalorder %s12, 0
      %p93 = por %p91, %p92
      %p94 = scmp.ne.s32.totalorder %s86, %s88
      %p95 = scmp.eq.s32.totalorder %s17, 7
      %p96 = por %p94, %p95
      %p97 = scmp.ne.s32.totalorder %s88, %s89
      %p98 = scmp.eq.s32.totalorder %s17, 0
      %p99 = por %p97, %p98
      %p100 = scmp.ne.s32.totalorder %s88, %s89
      %p101 = scmp.eq.s32.totalorder %s18, 7
      %p102 = por %p100, %p101
      %p104 = scmp.ne.s32.totalorder %s89, %s103
      %p105 = scmp.eq.s32.totalorder %s18, 0
      %p106 = por %p104, %p105
      %s107 = ssub.s32 %s19, %s31
      %p108 = scmp.eq.s32.totalorder %s107, 0
      %s110 = sadd.s32 %s109, 1
      %s111 = scalar_select %p108, %s109, %s110
      %p114 = pneg %p108
      %p115 = scmp.eq.s32.totalorder %s12, 7
      %p116 = por %p114, %p115
      %p117 = scmp.ne.s32.totalorder %s109, %s112
      %p118 = scmp.eq.s32.totalorder %s12, 0
      %p119 = por %p117, %p118
      %p120 = scmp.ne.s32.totalorder %s109, %s112
      %p121 = scmp.eq.s32.totalorder %s17, 7
      %p122 = por %p120, %p121
      %p123 = scmp.ne.s32.totalorder %s112, %s113
      %p124 = scmp.eq.s32.totalorder %s17, 0
      %p125 = por %p123, %p124
      %p126 = scmp.ne.s32.totalorder %s112, %s113
      %p127 = scmp.eq.s32.totalorder %s18, 7
      %p128 = por %p126, %p127
      %p130 = scmp.ne.s32.totalorder %s113, %s129
      %p131 = scmp.eq.s32.totalorder %s18, 0
      %p132 = por %p130, %p131
      %s133 = ssub.s32 %s19, %s31
      %p134 = scmp.eq.s32.totalorder %s133, 0
      %s136 = sadd.s32 %s135, 1
      %s137 = scalar_select %p134, %s135, %s136
      %p140 = pneg %p134
      %p141 = scmp.eq.s32.totalorder %s12, 7
      %p142 = por %p140, %p141
      %p143 = scmp.ne.s32.totalorder %s135, %s138
      %p144 = scmp.eq.s32.totalorder %s12, 0
      %p145 = por %p143, %p144
      %p146 = scmp.ne.s32.totalorder %s135, %s138
      %p147 = scmp.eq.s32.totalorder %s17, 7
      %p148 = por %p146, %p147
      %p149 = scmp.ne.s32.totalorder %s138, %s139
      %p150 = scmp.eq.s32.totalorder %s17, 0
      %p151 = por %p149, %p150
      %p152 = scmp.ne.s32.totalorder %s138, %s139
      %p153 = scmp.eq.s32.totalorder %s18, 7
      %p154 = por %p152, %p153
      %p156 = scmp.ne.s32.totalorder %s139, %s155
      %p157 = scmp.eq.s32.totalorder %s18, 0
      %p158 = por %p156, %p157
      %s159 = ssub.s32 %s19, %s31
      %p160 = scmp.eq.s32.totalorder %s159, 0
      %s162 = sadd.s32 %s161, 1
      %s163 = scalar_select %p160, %s161, %s162
      %p166 = pneg %p160
      %p167 = scmp.eq.s32.totalorder %s12, 7
      %p168 = por %p166, %p167
      %p169 = scmp.ne.s32.totalorder %s161, %s164
      %p170 = scmp.eq.s32.totalorder %s12, 0
      %p171 = por %p169, %p170
      %p172 = scmp.ne.s32.totalorder %s161, %s164
      %p173 = scmp.eq.s32.totalorder %s17, 7
      %p174 = por %p172, %p173
      %p175 = scmp.ne.s32.totalorder %s164, %s165
      %p176 = scmp.eq.s32.totalorder %s17, 0
      %p177 = por %p175, %p176
      %p178 = scmp.ne.s32.totalorder %s164, %s165
      %p179 = scmp.eq.s32.totalorder %s18, 7
      %p180 = por %p178, %p179
      %p182 = scmp.ne.s32.totalorder %s165, %s181
      %p183 = scmp.eq.s32.totalorder %s18, 0
      %p184 = por %p182, %p183
      %s185 = ssub.s32 %s19, %s31
      %p186 = scmp.eq.s32.totalorder %s185, 0
      %s188 = sadd.s32 %s187, 1
      %s189 = scalar_select %p186, %s187, %s188
      %p192 = pneg %p186
      %p193 = scmp.eq.s32.totalorder %s12, 7
      %p194 = por %p192, %p193
      %p195 = scmp.ne.s32.totalorder %s187, %s190
      %p196 = scmp.eq.s32.totalorder %s12, 0
      %p197 = por %p195, %p196
      %p198 = scmp.ne.s32.totalorder %s187, %s190
      %p199 = scmp.eq.s32.totalorder %s17, 7
      %p200 = por %p198, %p199
      %p201 = scmp.ne.s32.totalorder %s190, %s191
      %p202 = scmp.eq.s32.totalorder %s17, 0
      %p203 = por %p201, %p202
      %p204 = scmp.ne.s32.totalorder %s190, %s191
      %p205 = scmp.eq.s32.totalorder %s18, 7
      %p206 = por %p204, %p205
      %p208 = scmp.ne.s32.totalorder %s191, %s207
      %p209 = scmp.eq.s32.totalorder %s18, 0
      %p210 = por %p208, %p209
      %p211 = scmp.le.s32.totalorder 1, %s12
      %p212 = scmp.lt.s32.totalorder %s12, 9
      %p213 = pnand %p211, %p212
      %p214 = pneg %p213
      // Predicated region
      $region9: #{multi_agent_cnn_critic.5} parent=5 // pred_check
        _
      $region10: #{multi_agent_cnn_critic.5} parent=5 // pred_check_branch
        %216 = sbr.rel (%p213) target = $region12
      $region11: #{multi_agent_cnn_critic.5} parent=5 // pred_region
        %s217 = ssub.s32 %s12, 1
        // Predicated region
        $region13: #{multi_agent_cnn_critic.5} parent=11 // pred_check
          %p218 = pneg %p99
        $region14: #{multi_agent_cnn_critic.5} parent=11 // pred_check_branch
          %220 = sbr.rel (%p218) target = $region16
        $region15: #{multi_agent_cnn_critic.5} parent=11 // pred_region
          _
        $region16: #{multi_agent_cnn_critic.5} parent=11 // pred_fallthru
          _
      $region12: #{multi_agent_cnn_critic.5} parent=5 // pred_fallthru
        _
      %p221 = scmp.lt.s32.totalorder %s12, 8
      // Predicated region
      $region17: #{multi_agent_cnn_critic.5} parent=5 // pred_check
        %p222 = pneg %p221
      $region18: #{multi_agent_cnn_critic.5} parent=5 // pred_check_branch
        %224 = sbr.rel (%p222) target = $region20
      $region19: #{multi_agent_cnn_critic.5} parent=5 // pred_region
        // Predicated region
        $region21: #{multi_agent_cnn_critic.5} parent=19 // pred_check
          %p225 = pneg %p44
        $region22: #{multi_agent_cnn_critic.5} parent=19 // pred_check_branch
          %227 = sbr.rel (%p225) target = $region24
        $region23: #{multi_agent_cnn_critic.5} parent=19 // pred_region
          %s228 = smul.u32 30, %s20
          %p229 = scmp.lt.s32.totalorder %s228, 119
          %s230 = scalar_select %p229, %s228, 119
          %s231 = smul.addr %s230, 2
          %s232 = scalar_lea.vmem %s0, %s231
          %s233 = smul.u32 30, %s20
        $region24: #{multi_agent_cnn_critic.5} parent=19 // pred_fallthru
          _
        // Predicated region
        $region25: #{multi_agent_cnn_critic.5} parent=19 // pred_check
          %p234 = pneg %p72
        $region26: #{multi_agent_cnn_critic.5} parent=19 // pred_check_branch
          %236 = sbr.rel (%p234) target = $region28
        $region27: #{multi_agent_cnn_critic.5} parent=19 // pred_region
          %s237 = sand.u32 %s62, 1
          %s238 = sand.u32 %s62, 1
          %s239 = smul.addr %s238, 3840
          %s240 = scalar_lea.vmem [#allocation3], %s239
          %s241 = smul.u32 480, %s20
          %s242 = smul.addr %s241, 2
          %s243 = sadd.s32 %s19, %s242
          %s244 = smul.addr %s243, 8
          %s245 = scalar_lea.vmem %s1, %s244
          // Predicated region
          $region29: #{multi_agent_cnn_critic.5} parent=27 // pred_check
            _
          $region30: #{multi_agent_cnn_critic.5} parent=27 // pred_check_branch
            %247 = sbr.rel (0) target = $region32
          $region31: #{multi_agent_cnn_critic.5} parent=27 // pred_region
            // Predicated region
            $region33: #{multi_agent_cnn_critic.5} parent=31 // pred_check
              _
            $region34: #{multi_agent_cnn_critic.5} parent=31 // pred_check_branch
              %249 = sbr.rel (0) target = $region36
            $region35: #{multi_agent_cnn_critic.5} parent=31 // pred_region
              // Predicated region
              $region48: #{multi_agent_cnn_critic.5} parent=35 // pred_check
                _
              $region49: #{multi_agent_cnn_critic.5} parent=35 // pred_check_branch
                %1222 = sbr.rel (0) target = $region51
              $region50: #{multi_agent_cnn_critic.5} parent=35 // pred_region
                loop: start=0, step=1, limit=1
                $region52: #{multi_agent_cnn_critic.5} parent=50 // loop_pre_header
                  _
                $region53: #{multi_agent_cnn_critic.5} parent=50 // loop_header
                  %s1224 = sphi 0, %s1228
                  %p1225 = scmp.ge.s32.totalorder %s1224, 1
                  %s1229 = sphi %s245, %s245
                  %s1230 = sphi %s240, %s240
                $region54: #{multi_agent_cnn_critic.5} parent=50 // loop_header_branch
                  %1227 = sbr.rel (%p1225) target = $region58
                $region55: #{multi_agent_cnn_critic.5} parent=50 // loop_body
                  %v1231 = vld [vmem:[%s1229] sm:$0xff]
                  %1232 = vst [vmem:[%s1230] sm:$0xff] %v1231
                  %v1233 = vld [vmem:[%s1229 + $0x10] sm:$0xff]
                  %1234 = vst [vmem:[%s1230 + $0x8] sm:$0xff] %v1233
                  %v1235 = vld [vmem:[%s1229 + $0x20] sm:$0xff]
                  %1236 = vst [vmem:[%s1230 + $0x10] sm:$0xff] %v1235
                  %v1237 = vld [vmem:[%s1229 + $0x30] sm:$0xff]
                  %1238 = vst [vmem:[%s1230 + $0x18] sm:$0xff] %v1237
                  %v1239 = vld [vmem:[%s1229 + $0x40] sm:$0xff]
                  %1240 = vst [vmem:[%s1230 + $0x20] sm:$0xff] %v1239
                  %v1241 = vld [vmem:[%s1229 + $0x50] sm:$0xff]
                  %1242 = vst [vmem:[%s1230 + $0x28] sm:$0xff] %v1241
                  %v1243 = vld [vmem:[%s1229 + $0x60] sm:$0xff]
                  %1244 = vst [vmem:[%s1230 + $0x30] sm:$0xff] %v1243
                  %v1245 = vld [vmem:[%s1229 + $0x70] sm:$0xff]
                  %1246 = vst [vmem:[%s1230 + $0x38] sm:$0xff] %v1245
                  %v1247 = vld [vmem:[%s1229 + $0x80] sm:$0xff]
                  %1248 = vst [vmem:[%s1230 + $0x40] sm:$0xff] %v1247
                  %v1249 = vld [vmem:[%s1229 + $0x90] sm:$0xff]
                  %1250 = vst [vmem:[%s1230 + $0x48] sm:$0xff] %v1249
                  %v1251 = vld [vmem:[%s1229 + $0xa0] sm:$0xff]
                  %1252 = vst [vmem:[%s1230 + $0x50] sm:$0xff] %v1251
                  %v1253 = vld [vmem:[%s1229 + $0xb0] sm:$0xff]
                  %1254 = vst [vmem:[%s1230 + $0x58] sm:$0xff] %v1253
                  %v1255 = vld [vmem:[%s1229 + $0xc0] sm:$0xff]
                  %1256 = vst [vmem:[%s1230 + $0x60] sm:$0xff] %v1255
                  %v1257 = vld [vmem:[%s1229 + $0xd0] sm:$0xff]
                  %1258 = vst [vmem:[%s1230 + $0x68] sm:$0xff] %v1257
                  %v1259 = vld [vmem:[%s1229 + $0xe0] sm:$0xff]
                  %1260 = vst [vmem:[%s1230 + $0x70] sm:$0xff] %v1259
                  %v1261 = vld [vmem:[%s1229 + $0xf0] sm:$0xff]
                  %1262 = vst [vmem:[%s1230 + $0x78] sm:$0xff] %v1261
                  %v1263 = vld [vmem:[%s1229 + $0x100] sm:$0xff]
                  %1264 = vst [vmem:[%s1230 + $0x80] sm:$0xff] %v1263
                  %v1265 = vld [vmem:[%s1229 + $0x110] sm:$0xff]
                  %1266 = vst [vmem:[%s1230 + $0x88] sm:$0xff] %v1265
                  %v1267 = vld [vmem:[%s1229 + $0x120] sm:$0xff]
                  %1268 = vst [vmem:[%s1230 + $0x90] sm:$0xff] %v1267
                  %v1269 = vld [vmem:[%s1229 + $0x130] sm:$0xff]
                  %1270 = vst [vmem:[%s1230 + $0x98] sm:$0xff] %v1269
                  %v1271 = vld [vmem:[%s1229 + $0x140] sm:$0xff]
                  %1272 = vst [vmem:[%s1230 + $0xa0] sm:$0xff] %v1271
                  %v1273 = vld [vmem:[%s1229 + $0x150] sm:$0xff]
                  %1274 = vst [vmem:[%s1230 + $0xa8] sm:$0xff] %v1273
                  %v1275 = vld [vmem:[%s1229 + $0x160] sm:$0xff]
                  %1276 = vst [vmem:[%s1230 + $0xb0] sm:$0xff] %v1275
                  %v1277 = vld [vmem:[%s1229 + $0x170] sm:$0xff]
                  %1278 = vst [vmem:[%s1230 + $0xb8] sm:$0xff] %v1277
                  %v1279 = vld [vmem:[%s1229 + $0x180] sm:$0xff]
                  %1280 = vst [vmem:[%s1230 + $0xc0] sm:$0xff] %v1279
                  %v1281 = vld [vmem:[%s1229 + $0x190] sm:$0xff]
                  %1282 = vst [vmem:[%s1230 + $0xc8] sm:$0xff] %v1281
                  %v1283 = vld [vmem:[%s1229 + $0x1a0] sm:$0xff]
                  %1284 = vst [vmem:[%s1230 + $0xd0] sm:$0xff] %v1283
                  %v1285 = vld [vmem:[%s1229 + $0x1b0] sm:$0xff]
                  %1286 = vst [vmem:[%s1230 + $0xd8] sm:$0xff] %v1285
                  %v1287 = vld [vmem:[%s1229 + $0x1c0] sm:$0xff]
                  %1288 = vst [vmem:[%s1230 + $0xe0] sm:$0xff] %v1287
                  %v1289 = vld [vmem:[%s1229 + $0x1d0] sm:$0xff]
                  %1290 = vst [vmem:[%s1230 + $0xe8] sm:$0xff] %v1289
                  %v1291 = vld [vmem:[%s1229 + $0x1e0] sm:$0xff]
                  %1292 = vst [vmem:[%s1230 + $0xf0] sm:$0xff] %v1291
                  %v1293 = vld [vmem:[%s1229 + $0x1f0] sm:$0xff]
                  %1294 = vst [vmem:[%s1230 + $0xf8] sm:$0xff] %v1293
                  %v1295 = vld [vmem:[%s1229 + $0x200] sm:$0xff]
                  %1296 = vst [vmem:[%s1230 + $0x100] sm:$0xff] %v1295
                  %v1297 = vld [vmem:[%s1229 + $0x210] sm:$0xff]
                  %1298 = vst [vmem:[%s1230 + $0x108] sm:$0xff] %v1297
                  %v1299 = vld [vmem:[%s1229 + $0x220] sm:$0xff]
                  %1300 = vst [vmem:[%s1230 + $0x110] sm:$0xff] %v1299
                  %v1301 = vld [vmem:[%s1229 + $0x230] sm:$0xff]
                  %1302 = vst [vmem:[%s1230 + $0x118] sm:$0xff] %v1301
                  %v1303 = vld [vmem:[%s1229 + $0x240] sm:$0xff]
                  %1304 = vst [vmem:[%s1230 + $0x120] sm:$0xff] %v1303
                  %v1305 = vld [vmem:[%s1229 + $0x250] sm:$0xff]
                  %1306 = vst [vmem:[%s1230 + $0x128] sm:$0xff] %v1305
                  %v1307 = vld [vmem:[%s1229 + $0x260] sm:$0xff]
                  %1308 = vst [vmem:[%s1230 + $0x130] sm:$0xff] %v1307
                  %v1309 = vld [vmem:[%s1229 + $0x270] sm:$0xff]
                  %1310 = vst [vmem:[%s1230 + $0x138] sm:$0xff] %v1309
                  %v1311 = vld [vmem:[%s1229 + $0x280] sm:$0xff]
                  %1312 = vst [vmem:[%s1230 + $0x140] sm:$0xff] %v1311
                  %v1313 = vld [vmem:[%s1229 + $0x290] sm:$0xff]
                  %1314 = vst [vmem:[%s1230 + $0x148] sm:$0xff] %v1313
                  %v1315 = vld [vmem:[%s1229 + $0x2a0] sm:$0xff]
                  %1316 = vst [vmem:[%s1230 + $0x150] sm:$0xff] %v1315
                  %v1317 = vld [vmem:[%s1229 + $0x2b0] sm:$0xff]
                  %1318 = vst [vmem:[%s1230 + $0x158] sm:$0xff] %v1317
                  %v1319 = vld [vmem:[%s1229 + $0x2c0] sm:$0xff]
                  %1320 = vst [vmem:[%s1230 + $0x160] sm:$0xff] %v1319
                  %v1321 = vld [vmem:[%s1229 + $0x2d0] sm:$0xff]
                  %1322 = vst [vmem:[%s1230 + $0x168] sm:$0xff] %v1321
                  %v1323 = vld [vmem:[%s1229 + $0x2e0] sm:$0xff]
                  %1324 = vst [vmem:[%s1230 + $0x170] sm:$0xff] %v1323
                  %v1325 = vld [vmem:[%s1229 + $0x2f0] sm:$0xff]
                  %1326 = vst [vmem:[%s1230 + $0x178] sm:$0xff] %v1325
                  %v1327 = vld [vmem:[%s1229 + $0x300] sm:$0xff]
                  %1328 = vst [vmem:[%s1230 + $0x180] sm:$0xff] %v1327
                  %v1329 = vld [vmem:[%s1229 + $0x310] sm:$0xff]
                  %1330 = vst [vmem:[%s1230 + $0x188] sm:$0xff] %v1329
                  %v1331 = vld [vmem:[%s1229 + $0x320] sm:$0xff]
                  %1332 = vst [vmem:[%s1230 + $0x190] sm:$0xff] %v1331
                  %v1333 = vld [vmem:[%s1229 + $0x330] sm:$0xff]
                  %1334 = vst [vmem:[%s1230 + $0x198] sm:$0xff] %v1333
                  %v1335 = vld [vmem:[%s1229 + $0x340] sm:$0xff]
                  %1336 = vst [vmem:[%s1230 + $0x1a0] sm:$0xff] %v1335
                  %v1337 = vld [vmem:[%s1229 + $0x350] sm:$0xff]
                  %1338 = vst [vmem:[%s1230 + $0x1a8] sm:$0xff] %v1337
                  %v1339 = vld [vmem:[%s1229 + $0x360] sm:$0xff]
                  %1340 = vst [vmem:[%s1230 + $0x1b0] sm:$0xff] %v1339
                  %v1341 = vld [vmem:[%s1229 + $0x370] sm:$0xff]
                  %1342 = vst [vmem:[%s1230 + $0x1b8] sm:$0xff] %v1341
                  %v1343 = vld [vmem:[%s1229 + $0x380] sm:$0xff]
                  %1344 = vst [vmem:[%s1230 + $0x1c0] sm:$0xff] %v1343
                  %v1345 = vld [vmem:[%s1229 + $0x390] sm:$0xff]
                  %1346 = vst [vmem:[%s1230 + $0x1c8] sm:$0xff] %v1345
                  %v1347 = vld [vmem:[%s1229 + $0x3a0] sm:$0xff]
                  %1348 = vst [vmem:[%s1230 + $0x1d0] sm:$0xff] %v1347
                  %v1349 = vld [vmem:[%s1229 + $0x3b0] sm:$0xff]
                  %1350 = vst [vmem:[%s1230 + $0x1d8] sm:$0xff] %v1349
                  %v1351 = vld [vmem:[%s1229 + $0x3c0] sm:$0xff]
                  %1352 = vst [vmem:[%s1230 + $0x1e0] sm:$0xff] %v1351
                  %v1353 = vld [vmem:[%s1229 + $0x3d0] sm:$0xff]
                  %1354 = vst [vmem:[%s1230 + $0x1e8] sm:$0xff] %v1353
                  %v1355 = vld [vmem:[%s1229 + $0x3e0] sm:$0xff]
                  %1356 = vst [vmem:[%s1230 + $0x1f0] sm:$0xff] %v1355
                  %v1357 = vld [vmem:[%s1229 + $0x3f0] sm:$0xff]
                  %1358 = vst [vmem:[%s1230 + $0x1f8] sm:$0xff] %v1357
                  %v1359 = vld [vmem:[%s1229 + $0x400] sm:$0xff]
                  %1360 = vst [vmem:[%s1230 + $0x200] sm:$0xff] %v1359
                  %v1361 = vld [vmem:[%s1229 + $0x410] sm:$0xff]
                  %1362 = vst [vmem:[%s1230 + $0x208] sm:$0xff] %v1361
                  %v1363 = vld [vmem:[%s1229 + $0x420] sm:$0xff]
                  %1364 = vst [vmem:[%s1230 + $0x210] sm:$0xff] %v1363
                  %v1365 = vld [vmem:[%s1229 + $0x430] sm:$0xff]
                  %1366 = vst [vmem:[%s1230 + $0x218] sm:$0xff] %v1365
                  %v1367 = vld [vmem:[%s1229 + $0x440] sm:$0xff]
                  %1368 = vst [vmem:[%s1230 + $0x220] sm:$0xff] %v1367
                  %v1369 = vld [vmem:[%s1229 + $0x450] sm:$0xff]
                  %1370 = vst [vmem:[%s1230 + $0x228] sm:$0xff] %v1369
                  %v1371 = vld [vmem:[%s1229 + $0x460] sm:$0xff]
                  %1372 = vst [vmem:[%s1230 + $0x230] sm:$0xff] %v1371
                  %v1373 = vld [vmem:[%s1229 + $0x470] sm:$0xff]
                  %1374 = vst [vmem:[%s1230 + $0x238] sm:$0xff] %v1373
                  %v1375 = vld [vmem:[%s1229 + $0x480] sm:$0xff]
                  %1376 = vst [vmem:[%s1230 + $0x240] sm:$0xff] %v1375
                  %v1377 = vld [vmem:[%s1229 + $0x490] sm:$0xff]
                  %1378 = vst [vmem:[%s1230 + $0x248] sm:$0xff] %v1377
                  %v1379 = vld [vmem:[%s1229 + $0x4a0] sm:$0xff]
                  %1380 = vst [vmem:[%s1230 + $0x250] sm:$0xff] %v1379
                  %v1381 = vld [vmem:[%s1229 + $0x4b0] sm:$0xff]
                  %1382 = vst [vmem:[%s1230 + $0x258] sm:$0xff] %v1381
                  %v1383 = vld [vmem:[%s1229 + $0x4c0] sm:$0xff]
                  %1384 = vst [vmem:[%s1230 + $0x260] sm:$0xff] %v1383
                  %v1385 = vld [vmem:[%s1229 + $0x4d0] sm:$0xff]
                  %1386 = vst [vmem:[%s1230 + $0x268] sm:$0xff] %v1385
                  %v1387 = vld [vmem:[%s1229 + $0x4e0] sm:$0xff]
                  %1388 = vst [vmem:[%s1230 + $0x270] sm:$0xff] %v1387
                  %v1389 = vld [vmem:[%s1229 + $0x4f0] sm:$0xff]
                  %1390 = vst [vmem:[%s1230 + $0x278] sm:$0xff] %v1389
                  %v1391 = vld [vmem:[%s1229 + $0x500] sm:$0xff]
                  %1392 = vst [vmem:[%s1230 + $0x280] sm:$0xff] %v1391
                  %v1393 = vld [vmem:[%s1229 + $0x510] sm:$0xff]
                  %1394 = vst [vmem:[%s1230 + $0x288] sm:$0xff] %v1393
                  %v1395 = vld [vmem:[%s1229 + $0x520] sm:$0xff]
                  %1396 = vst [vmem:[%s1230 + $0x290] sm:$0xff] %v1395
                  %v1397 = vld [vmem:[%s1229 + $0x530] sm:$0xff]
                  %1398 = vst [vmem:[%s1230 + $0x298] sm:$0xff] %v1397
                  %v1399 = vld [vmem:[%s1229 + $0x540] sm:$0xff]
                  %1400 = vst [vmem:[%s1230 + $0x2a0] sm:$0xff] %v1399
                  %v1401 = vld [vmem:[%s1229 + $0x550] sm:$0xff]
                  %1402 = vst [vmem:[%s1230 + $0x2a8] sm:$0xff] %v1401
                  %v1403 = vld [vmem:[%s1229 + $0x560] sm:$0xff]
                  %1404 = vst [vmem:[%s1230 + $0x2b0] sm:$0xff] %v1403
                  %v1405 = vld [vmem:[%s1229 + $0x570] sm:$0xff]
                  %1406 = vst [vmem:[%s1230 + $0x2b8] sm:$0xff] %v1405
                  %v1407 = vld [vmem:[%s1229 + $0x580] sm:$0xff]
                  %1408 = vst [vmem:[%s1230 + $0x2c0] sm:$0xff] %v1407
                  %v1409 = vld [vmem:[%s1229 + $0x590] sm:$0xff]
                  %1410 = vst [vmem:[%s1230 + $0x2c8] sm:$0xff] %v1409
                  %v1411 = vld [vmem:[%s1229 + $0x5a0] sm:$0xff]
                  %1412 = vst [vmem:[%s1230 + $0x2d0] sm:$0xff] %v1411
                  %v1413 = vld [vmem:[%s1229 + $0x5b0] sm:$0xff]
                  %1414 = vst [vmem:[%s1230 + $0x2d8] sm:$0xff] %v1413
                  %v1415 = vld [vmem:[%s1229 + $0x5c0] sm:$0xff]
                  %1416 = vst [vmem:[%s1230 + $0x2e0] sm:$0xff] %v1415
                  %v1417 = vld [vmem:[%s1229 + $0x5d0] sm:$0xff]
                  %1418 = vst [vmem:[%s1230 + $0x2e8] sm:$0xff] %v1417
                  %v1419 = vld [vmem:[%s1229 + $0x5e0] sm:$0xff]
                  %1420 = vst [vmem:[%s1230 + $0x2f0] sm:$0xff] %v1419
                  %v1421 = vld [vmem:[%s1229 + $0x5f0] sm:$0xff]
                  %1422 = vst [vmem:[%s1230 + $0x2f8] sm:$0xff] %v1421
                  %v1423 = vld [vmem:[%s1229 + $0x600] sm:$0xff]
                  %1424 = vst [vmem:[%s1230 + $0x300] sm:$0xff] %v1423
                  %v1425 = vld [vmem:[%s1229 + $0x610] sm:$0xff]
                  %1426 = vst [vmem:[%s1230 + $0x308] sm:$0xff] %v1425
                  %v1427 = vld [vmem:[%s1229 + $0x620] sm:$0xff]
                  %1428 = vst [vmem:[%s1230 + $0x310] sm:$0xff] %v1427
                  %v1429 = vld [vmem:[%s1229 + $0x630] sm:$0xff]
                  %1430 = vst [vmem:[%s1230 + $0x318] sm:$0xff] %v1429
                  %v1431 = vld [vmem:[%s1229 + $0x640] sm:$0xff]
                  %1432 = vst [vmem:[%s1230 + $0x320] sm:$0xff] %v1431
                  %v1433 = vld [vmem:[%s1229 + $0x650] sm:$0xff]
                  %1434 = vst [vmem:[%s1230 + $0x328] sm:$0xff] %v1433
                  %v1435 = vld [vmem:[%s1229 + $0x660] sm:$0xff]
                  %1436 = vst [vmem:[%s1230 + $0x330] sm:$0xff] %v1435
                  %v1437 = vld [vmem:[%s1229 + $0x670] sm:$0xff]
                  %1438 = vst [vmem:[%s1230 + $0x338] sm:$0xff] %v1437
                  %v1439 = vld [vmem:[%s1229 + $0x680] sm:$0xff]
                  %1440 = vst [vmem:[%s1230 + $0x340] sm:$0xff] %v1439
                  %v1441 = vld [vmem:[%s1229 + $0x690] sm:$0xff]
                  %1442 = vst [vmem:[%s1230 + $0x348] sm:$0xff] %v1441
                  %v1443 = vld [vmem:[%s1229 + $0x6a0] sm:$0xff]
                  %1444 = vst [vmem:[%s1230 + $0x350] sm:$0xff] %v1443
                  %v1445 = vld [vmem:[%s1229 + $0x6b0] sm:$0xff]
                  %1446 = vst [vmem:[%s1230 + $0x358] sm:$0xff] %v1445
                  %v1447 = vld [vmem:[%s1229 + $0x6c0] sm:$0xff]
                  %1448 = vst [vmem:[%s1230 + $0x360] sm:$0xff] %v1447
                  %v1449 = vld [vmem:[%s1229 + $0x6d0] sm:$0xff]
                  %1450 = vst [vmem:[%s1230 + $0x368] sm:$0xff] %v1449
                  %v1451 = vld [vmem:[%s1229 + $0x6e0] sm:$0xff]
                  %1452 = vst [vmem:[%s1230 + $0x370] sm:$0xff] %v1451
                  %v1453 = vld [vmem:[%s1229 + $0x6f0] sm:$0xff]
                  %1454 = vst [vmem:[%s1230 + $0x378] sm:$0xff] %v1453
                  %v1455 = vld [vmem:[%s1229 + $0x700] sm:$0xff]
                  %1456 = vst [vmem:[%s1230 + $0x380] sm:$0xff] %v1455
                  %v1457 = vld [vmem:[%s1229 + $0x710] sm:$0xff]
                  %1458 = vst [vmem:[%s1230 + $0x388] sm:$0xff] %v1457
                  %v1459 = vld [vmem:[%s1229 + $0x720] sm:$0xff]
                  %1460 = vst [vmem:[%s1230 + $0x390] sm:$0xff] %v1459
                  %v1461 = vld [vmem:[%s1229 + $0x730] sm:$0xff]
                  %1462 = vst [vmem:[%s1230 + $0x398] sm:$0xff] %v1461
                  %v1463 = vld [vmem:[%s1229 + $0x740] sm:$0xff]
                  %1464 = vst [vmem:[%s1230 + $0x3a0] sm:$0xff] %v1463
                  %v1465 = vld [vmem:[%s1229 + $0x750] sm:$0xff]
                  %1466 = vst [vmem:[%s1230 + $0x3a8] sm:$0xff] %v1465
                  %v1467 = vld [vmem:[%s1229 + $0x760] sm:$0xff]
                  %1468 = vst [vmem:[%s1230 + $0x3b0] sm:$0xff] %v1467
                  %v1469 = vld [vmem:[%s1229 + $0x770] sm:$0xff]
                  %1470 = vst [vmem:[%s1230 + $0x3b8] sm:$0xff] %v1469
                  %v1471 = vld [vmem:[%s1229 + $0x780] sm:$0xff]
                  %1472 = vst [vmem:[%s1230 + $0x3c0] sm:$0xff] %v1471
                  %v1473 = vld [vmem:[%s1229 + $0x790] sm:$0xff]
                  %1474 = vst [vmem:[%s1230 + $0x3c8] sm:$0xff] %v1473
                  %v1475 = vld [vmem:[%s1229 + $0x7a0] sm:$0xff]
                  %1476 = vst [vmem:[%s1230 + $0x3d0] sm:$0xff] %v1475
                  %v1477 = vld [vmem:[%s1229 + $0x7b0] sm:$0xff]
                  %1478 = vst [vmem:[%s1230 + $0x3d8] sm:$0xff] %v1477
                  %v1479 = vld [vmem:[%s1229 + $0x7c0] sm:$0xff]
                  %1480 = vst [vmem:[%s1230 + $0x3e0] sm:$0xff] %v1479
                  %v1481 = vld [vmem:[%s1229 + $0x7d0] sm:$0xff]
                  %1482 = vst [vmem:[%s1230 + $0x3e8] sm:$0xff] %v1481
                  %v1483 = vld [vmem:[%s1229 + $0x7e0] sm:$0xff]
                  %1484 = vst [vmem:[%s1230 + $0x3f0] sm:$0xff] %v1483
                  %v1485 = vld [vmem:[%s1229 + $0x7f0] sm:$0xff]
                  %1486 = vst [vmem:[%s1230 + $0x3f8] sm:$0xff] %v1485
                  %v1487 = vld [vmem:[%s1229 + $0x800] sm:$0xff]
                  %1488 = vst [vmem:[%s1230 + $0x400] sm:$0xff] %v1487
                  %v1489 = vld [vmem:[%s1229 + $0x810] sm:$0xff]
                  %1490 = vst [vmem:[%s1230 + $0x408] sm:$0xff] %v1489
                  %v1491 = vld [vmem:[%s1229 + $0x820] sm:$0xff]
                  %1492 = vst [vmem:[%s1230 + $0x410] sm:$0xff] %v1491
                  %v1493 = vld [vmem:[%s1229 + $0x830] sm:$0xff]
                  %1494 = vst [vmem:[%s1230 + $0x418] sm:$0xff] %v1493
                  %v1495 = vld [vmem:[%s1229 + $0x840] sm:$0xff]
                  %1496 = vst [vmem:[%s1230 + $0x420] sm:$0xff] %v1495
                  %v1497 = vld [vmem:[%s1229 + $0x850] sm:$0xff]
                  %1498 = vst [vmem:[%s1230 + $0x428] sm:$0xff] %v1497
                  %v1499 = vld [vmem:[%s1229 + $0x860] sm:$0xff]
                  %1500 = vst [vmem:[%s1230 + $0x430] sm:$0xff] %v1499
                  %v1501 = vld [vmem:[%s1229 + $0x870] sm:$0xff]
                  %1502 = vst [vmem:[%s1230 + $0x438] sm:$0xff] %v1501
                  %v1503 = vld [vmem:[%s1229 + $0x880] sm:$0xff]
                  %1504 = vst [vmem:[%s1230 + $0x440] sm:$0xff] %v1503
                  %v1505 = vld [vmem:[%s1229 + $0x890] sm:$0xff]
                  %1506 = vst [vmem:[%s1230 + $0x448] sm:$0xff] %v1505
                  %v1507 = vld [vmem:[%s1229 + $0x8a0] sm:$0xff]
                  %1508 = vst [vmem:[%s1230 + $0x450] sm:$0xff] %v1507
                  %v1509 = vld [vmem:[%s1229 + $0x8b0] sm:$0xff]
                  %1510 = vst [vmem:[%s1230 + $0x458] sm:$0xff] %v1509
                  %v1511 = vld [vmem:[%s1229 + $0x8c0] sm:$0xff]
                  %1512 = vst [vmem:[%s1230 + $0x460] sm:$0xff] %v1511
                  %v1513 = vld [vmem:[%s1229 + $0x8d0] sm:$0xff]
                  %1514 = vst [vmem:[%s1230 + $0x468] sm:$0xff] %v1513
                  %v1515 = vld [vmem:[%s1229 + $0x8e0] sm:$0xff]
                  %1516 = vst [vmem:[%s1230 + $0x470] sm:$0xff] %v1515
                  %v1517 = vld [vmem:[%s1229 + $0x8f0] sm:$0xff]
                  %1518 = vst [vmem:[%s1230 + $0x478] sm:$0xff] %v1517
                  %v1519 = vld [vmem:[%s1229 + $0x900] sm:$0xff]
                  %1520 = vst [vmem:[%s1230 + $0x480] sm:$0xff] %v1519
                  %v1521 = vld [vmem:[%s1229 + $0x910] sm:$0xff]
                  %1522 = vst [vmem:[%s1230 + $0x488] sm:$0xff] %v1521
                  %v1523 = vld [vmem:[%s1229 + $0x920] sm:$0xff]
                  %1524 = vst [vmem:[%s1230 + $0x490] sm:$0xff] %v1523
                  %v1525 = vld [vmem:[%s1229 + $0x930] sm:$0xff]
                  %1526 = vst [vmem:[%s1230 + $0x498] sm:$0xff] %v1525
                  %v1527 = vld [vmem:[%s1229 + $0x940] sm:$0xff]
                  %1528 = vst [vmem:[%s1230 + $0x4a0] sm:$0xff] %v1527
                  %v1529 = vld [vmem:[%s1229 + $0x950] sm:$0xff]
                  %1530 = vst [vmem:[%s1230 + $0x4a8] sm:$0xff] %v1529
                  %v1531 = vld [vmem:[%s1229 + $0x960] sm:$0xff]
                  %1532 = vst [vmem:[%s1230 + $0x4b0] sm:$0xff] %v1531
                  %v1533 = vld [vmem:[%s1229 + $0x970] sm:$0xff]
                  %1534 = vst [vmem:[%s1230 + $0x4b8] sm:$0xff] %v1533
                  %v1535 = vld [vmem:[%s1229 + $0x980] sm:$0xff]
                  %1536 = vst [vmem:[%s1230 + $0x4c0] sm:$0xff] %v1535
                  %v1537 = vld [vmem:[%s1229 + $0x990] sm:$0xff]
                  %1538 = vst [vmem:[%s1230 + $0x4c8] sm:$0xff] %v1537
                  %v1539 = vld [vmem:[%s1229 + $0x9a0] sm:$0xff]
                  %1540 = vst [vmem:[%s1230 + $0x4d0] sm:$0xff] %v1539
                  %v1541 = vld [vmem:[%s1229 + $0x9b0] sm:$0xff]
                  %1542 = vst [vmem:[%s1230 + $0x4d8] sm:$0xff] %v1541
                  %v1543 = vld [vmem:[%s1229 + $0x9c0] sm:$0xff]
                  %1544 = vst [vmem:[%s1230 + $0x4e0] sm:$0xff] %v1543
                  %v1545 = vld [vmem:[%s1229 + $0x9d0] sm:$0xff]
                  %1546 = vst [vmem:[%s1230 + $0x4e8] sm:$0xff] %v1545
                  %v1547 = vld [vmem:[%s1229 + $0x9e0] sm:$0xff]
                  %1548 = vst [vmem:[%s1230 + $0x4f0] sm:$0xff] %v1547
                  %v1549 = vld [vmem:[%s1229 + $0x9f0] sm:$0xff]
                  %1550 = vst [vmem:[%s1230 + $0x4f8] sm:$0xff] %v1549
                  %v1551 = vld [vmem:[%s1229 + $0xa00] sm:$0xff]
                  %1552 = vst [vmem:[%s1230 + $0x500] sm:$0xff] %v1551
                  %v1553 = vld [vmem:[%s1229 + $0xa10] sm:$0xff]
                  %1554 = vst [vmem:[%s1230 + $0x508] sm:$0xff] %v1553
                  %v1555 = vld [vmem:[%s1229 + $0xa20] sm:$0xff]
                  %1556 = vst [vmem:[%s1230 + $0x510] sm:$0xff] %v1555
                  %v1557 = vld [vmem:[%s1229 + $0xa30] sm:$0xff]
                  %1558 = vst [vmem:[%s1230 + $0x518] sm:$0xff] %v1557
                  %v1559 = vld [vmem:[%s1229 + $0xa40] sm:$0xff]
                  %1560 = vst [vmem:[%s1230 + $0x520] sm:$0xff] %v1559
                  %v1561 = vld [vmem:[%s1229 + $0xa50] sm:$0xff]
                  %1562 = vst [vmem:[%s1230 + $0x528] sm:$0xff] %v1561
                  %v1563 = vld [vmem:[%s1229 + $0xa60] sm:$0xff]
                  %1564 = vst [vmem:[%s1230 + $0x530] sm:$0xff] %v1563
                  %v1565 = vld [vmem:[%s1229 + $0xa70] sm:$0xff]
                  %1566 = vst [vmem:[%s1230 + $0x538] sm:$0xff] %v1565
                  %v1567 = vld [vmem:[%s1229 + $0xa80] sm:$0xff]
                  %1568 = vst [vmem:[%s1230 + $0x540] sm:$0xff] %v1567
                  %v1569 = vld [vmem:[%s1229 + $0xa90] sm:$0xff]
                  %1570 = vst [vmem:[%s1230 + $0x548] sm:$0xff] %v1569
                  %v1571 = vld [vmem:[%s1229 + $0xaa0] sm:$0xff]
                  %1572 = vst [vmem:[%s1230 + $0x550] sm:$0xff] %v1571
                  %v1573 = vld [vmem:[%s1229 + $0xab0] sm:$0xff]
                  %1574 = vst [vmem:[%s1230 + $0x558] sm:$0xff] %v1573
                  %v1575 = vld [vmem:[%s1229 + $0xac0] sm:$0xff]
                  %1576 = vst [vmem:[%s1230 + $0x560] sm:$0xff] %v1575
                  %v1577 = vld [vmem:[%s1229 + $0xad0] sm:$0xff]
                  %1578 = vst [vmem:[%s1230 + $0x568] sm:$0xff] %v1577
                  %v1579 = vld [vmem:[%s1229 + $0xae0] sm:$0xff]
                  %1580 = vst [vmem:[%s1230 + $0x570] sm:$0xff] %v1579
                  %v1581 = vld [vmem:[%s1229 + $0xaf0] sm:$0xff]
                  %1582 = vst [vmem:[%s1230 + $0x578] sm:$0xff] %v1581
                  %v1583 = vld [vmem:[%s1229 + $0xb00] sm:$0xff]
                  %1584 = vst [vmem:[%s1230 + $0x580] sm:$0xff] %v1583
                  %v1585 = vld [vmem:[%s1229 + $0xb10] sm:$0xff]
                  %1586 = vst [vmem:[%s1230 + $0x588] sm:$0xff] %v1585
                  %v1587 = vld [vmem:[%s1229 + $0xb20] sm:$0xff]
                  %1588 = vst [vmem:[%s1230 + $0x590] sm:$0xff] %v1587
                  %v1589 = vld [vmem:[%s1229 + $0xb30] sm:$0xff]
                  %1590 = vst [vmem:[%s1230 + $0x598] sm:$0xff] %v1589
                  %v1591 = vld [vmem:[%s1229 + $0xb40] sm:$0xff]
                  %1592 = vst [vmem:[%s1230 + $0x5a0] sm:$0xff] %v1591
                  %v1593 = vld [vmem:[%s1229 + $0xb50] sm:$0xff]
                  %1594 = vst [vmem:[%s1230 + $0x5a8] sm:$0xff] %v1593
                  %v1595 = vld [vmem:[%s1229 + $0xb60] sm:$0xff]
                  %1596 = vst [vmem:[%s1230 + $0x5b0] sm:$0xff] %v1595
                  %v1597 = vld [vmem:[%s1229 + $0xb70] sm:$0xff]
                  %1598 = vst [vmem:[%s1230 + $0x5b8] sm:$0xff] %v1597
                  %v1599 = vld [vmem:[%s1229 + $0xb80] sm:$0xff]
                  %1600 = vst [vmem:[%s1230 + $0x5c0] sm:$0xff] %v1599
                  %v1601 = vld [vmem:[%s1229 + $0xb90] sm:$0xff]
                  %1602 = vst [vmem:[%s1230 + $0x5c8] sm:$0xff] %v1601
                  %v1603 = vld [vmem:[%s1229 + $0xba0] sm:$0xff]
                  %1604 = vst [vmem:[%s1230 + $0x5d0] sm:$0xff] %v1603
                  %v1605 = vld [vmem:[%s1229 + $0xbb0] sm:$0xff]
                  %1606 = vst [vmem:[%s1230 + $0x5d8] sm:$0xff] %v1605
                  %v1607 = vld [vmem:[%s1229 + $0xbc0] sm:$0xff]
                  %1608 = vst [vmem:[%s1230 + $0x5e0] sm:$0xff] %v1607
                  %v1609 = vld [vmem:[%s1229 + $0xbd0] sm:$0xff]
                  %1610 = vst [vmem:[%s1230 + $0x5e8] sm:$0xff] %v1609
                  %v1611 = vld [vmem:[%s1229 + $0xbe0] sm:$0xff]
                  %1612 = vst [vmem:[%s1230 + $0x5f0] sm:$0xff] %v1611
                  %v1613 = vld [vmem:[%s1229 + $0xbf0] sm:$0xff]
                  %1614 = vst [vmem:[%s1230 + $0x5f8] sm:$0xff] %v1613
                  %v1615 = vld [vmem:[%s1229 + $0xc00] sm:$0xff]
                  %1616 = vst [vmem:[%s1230 + $0x600] sm:$0xff] %v1615
                  %v1617 = vld [vmem:[%s1229 + $0xc10] sm:$0xff]
                  %1618 = vst [vmem:[%s1230 + $0x608] sm:$0xff] %v1617
                  %v1619 = vld [vmem:[%s1229 + $0xc20] sm:$0xff]
                  %1620 = vst [vmem:[%s1230 + $0x610] sm:$0xff] %v1619
                  %v1621 = vld [vmem:[%s1229 + $0xc30] sm:$0xff]
                  %1622 = vst [vmem:[%s1230 + $0x618] sm:$0xff] %v1621
                  %v1623 = vld [vmem:[%s1229 + $0xc40] sm:$0xff]
                  %1624 = vst [vmem:[%s1230 + $0x620] sm:$0xff] %v1623
                  %v1625 = vld [vmem:[%s1229 + $0xc50] sm:$0xff]
                  %1626 = vst [vmem:[%s1230 + $0x628] sm:$0xff] %v1625
                  %v1627 = vld [vmem:[%s1229 + $0xc60] sm:$0xff]
                  %1628 = vst [vmem:[%s1230 + $0x630] sm:$0xff] %v1627
                  %v1629 = vld [vmem:[%s1229 + $0xc70] sm:$0xff]
                  %1630 = vst [vmem:[%s1230 + $0x638] sm:$0xff] %v1629
                  %v1631 = vld [vmem:[%s1229 + $0xc80] sm:$0xff]
                  %1632 = vst [vmem:[%s1230 + $0x640] sm:$0xff] %v1631
                  %v1633 = vld [vmem:[%s1229 + $0xc90] sm:$0xff]
                  %1634 = vst [vmem:[%s1230 + $0x648] sm:$0xff] %v1633
                  %v1635 = vld [vmem:[%s1229 + $0xca0] sm:$0xff]
                  %1636 = vst [vmem:[%s1230 + $0x650] sm:$0xff] %v1635
                  %v1637 = vld [vmem:[%s1229 + $0xcb0] sm:$0xff]
                  %1638 = vst [vmem:[%s1230 + $0x658] sm:$0xff] %v1637
                  %v1639 = vld [vmem:[%s1229 + $0xcc0] sm:$0xff]
                  %1640 = vst [vmem:[%s1230 + $0x660] sm:$0xff] %v1639
                  %v1641 = vld [vmem:[%s1229 + $0xcd0] sm:$0xff]
                  %1642 = vst [vmem:[%s1230 + $0x668] sm:$0xff] %v1641
                  %v1643 = vld [vmem:[%s1229 + $0xce0] sm:$0xff]
                  %1644 = vst [vmem:[%s1230 + $0x670] sm:$0xff] %v1643
                  %v1645 = vld [vmem:[%s1229 + $0xcf0] sm:$0xff]
                  %1646 = vst [vmem:[%s1230 + $0x678] sm:$0xff] %v1645
                  %v1647 = vld [vmem:[%s1229 + $0xd00] sm:$0xff]
                  %1648 = vst [vmem:[%s1230 + $0x680] sm:$0xff] %v1647
                  %v1649 = vld [vmem:[%s1229 + $0xd10] sm:$0xff]
                  %1650 = vst [vmem:[%s1230 + $0x688] sm:$0xff] %v1649
                  %v1651 = vld [vmem:[%s1229 + $0xd20] sm:$0xff]
                  %1652 = vst [vmem:[%s1230 + $0x690] sm:$0xff] %v1651
                  %v1653 = vld [vmem:[%s1229 + $0xd30] sm:$0xff]
                  %1654 = vst [vmem:[%s1230 + $0x698] sm:$0xff] %v1653
                  %v1655 = vld [vmem:[%s1229 + $0xd40] sm:$0xff]
                  %1656 = vst [vmem:[%s1230 + $0x6a0] sm:$0xff] %v1655
                  %v1657 = vld [vmem:[%s1229 + $0xd50] sm:$0xff]
                  %1658 = vst [vmem:[%s1230 + $0x6a8] sm:$0xff] %v1657
                  %v1659 = vld [vmem:[%s1229 + $0xd60] sm:$0xff]
                  %1660 = vst [vmem:[%s1230 + $0x6b0] sm:$0xff] %v1659
                  %v1661 = vld [vmem:[%s1229 + $0xd70] sm:$0xff]
                  %1662 = vst [vmem:[%s1230 + $0x6b8] sm:$0xff] %v1661
                  %v1663 = vld [vmem:[%s1229 + $0xd80] sm:$0xff]
                  %1664 = vst [vmem:[%s1230 + $0x6c0] sm:$0xff] %v1663
                  %v1665 = vld [vmem:[%s1229 + $0xd90] sm:$0xff]
                  %1666 = vst [vmem:[%s1230 + $0x6c8] sm:$0xff] %v1665
                  %v1667 = vld [vmem:[%s1229 + $0xda0] sm:$0xff]
                  %1668 = vst [vmem:[%s1230 + $0x6d0] sm:$0xff] %v1667
                  %v1669 = vld [vmem:[%s1229 + $0xdb0] sm:$0xff]
                  %1670 = vst [vmem:[%s1230 + $0x6d8] sm:$0xff] %v1669
                  %v1671 = vld [vmem:[%s1229 + $0xdc0] sm:$0xff]
                  %1672 = vst [vmem:[%s1230 + $0x6e0] sm:$0xff] %v1671
                  %v1673 = vld [vmem:[%s1229 + $0xdd0] sm:$0xff]
                  %1674 = vst [vmem:[%s1230 + $0x6e8] sm:$0xff] %v1673
                  %v1675 = vld [vmem:[%s1229 + $0xde0] sm:$0xff]
                  %1676 = vst [vmem:[%s1230 + $0x6f0] sm:$0xff] %v1675
                  %v1677 = vld [vmem:[%s1229 + $0xdf0] sm:$0xff]
                  %1678 = vst [vmem:[%s1230 + $0x6f8] sm:$0xff] %v1677
                  %v1679 = vld [vmem:[%s1229 + $0xe00] sm:$0xff]
                  %1680 = vst [vmem:[%s1230 + $0x700] sm:$0xff] %v1679
                  %v1681 = vld [vmem:[%s1229 + $0xe10] sm:$0xff]
                  %1682 = vst [vmem:[%s1230 + $0x708] sm:$0xff] %v1681
                  %v1683 = vld [vmem:[%s1229 + $0xe20] sm:$0xff]
                  %1684 = vst [vmem:[%s1230 + $0x710] sm:$0xff] %v1683
                  %v1685 = vld [vmem:[%s1229 + $0xe30] sm:$0xff]
                  %1686 = vst [vmem:[%s1230 + $0x718] sm:$0xff] %v1685
                  %v1687 = vld [vmem:[%s1229 + $0xe40] sm:$0xff]
                  %1688 = vst [vmem:[%s1230 + $0x720] sm:$0xff] %v1687
                  %v1689 = vld [vmem:[%s1229 + $0xe50] sm:$0xff]
                  %1690 = vst [vmem:[%s1230 + $0x728] sm:$0xff] %v1689
                  %v1691 = vld [vmem:[%s1229 + $0xe60] sm:$0xff]
                  %1692 = vst [vmem:[%s1230 + $0x730] sm:$0xff] %v1691
                  %v1693 = vld [vmem:[%s1229 + $0xe70] sm:$0xff]
                  %1694 = vst [vmem:[%s1230 + $0x738] sm:$0xff] %v1693
                  %v1695 = vld [vmem:[%s1229 + $0xe80] sm:$0xff]
                  %1696 = vst [vmem:[%s1230 + $0x740] sm:$0xff] %v1695
                  %v1697 = vld [vmem:[%s1229 + $0xe90] sm:$0xff]
                  %1698 = vst [vmem:[%s1230 + $0x748] sm:$0xff] %v1697
                  %v1699 = vld [vmem:[%s1229 + $0xea0] sm:$0xff]
                  %1700 = vst [vmem:[%s1230 + $0x750] sm:$0xff] %v1699
                  %v1701 = vld [vmem:[%s1229 + $0xeb0] sm:$0xff]
                  %1702 = vst [vmem:[%s1230 + $0x758] sm:$0xff] %v1701
                  %v1703 = vld [vmem:[%s1229 + $0xec0] sm:$0xff]
                  %1704 = vst [vmem:[%s1230 + $0x760] sm:$0xff] %v1703
                  %v1705 = vld [vmem:[%s1229 + $0xed0] sm:$0xff]
                  %1706 = vst [vmem:[%s1230 + $0x768] sm:$0xff] %v1705
                  %v1707 = vld [vmem:[%s1229 + $0xee0] sm:$0xff]
                  %1708 = vst [vmem:[%s1230 + $0x770] sm:$0xff] %v1707
                  %v1709 = vld [vmem:[%s1229 + $0xef0] sm:$0xff]
                  %1710 = vst [vmem:[%s1230 + $0x778] sm:$0xff] %v1709
                  %v1711 = vld [vmem:[%s1229 + $0xf00] sm:$0xff]
                  %1712 = vst [vmem:[%s1230 + $0x780] sm:$0xff] %v1711
                  %v1713 = vld [vmem:[%s1229 + $0xf10] sm:$0xff]
                  %1714 = vst [vmem:[%s1230 + $0x788] sm:$0xff] %v1713
                  %v1715 = vld [vmem:[%s1229 + $0xf20] sm:$0xff]
                  %1716 = vst [vmem:[%s1230 + $0x790] sm:$0xff] %v1715
                  %v1717 = vld [vmem:[%s1229 + $0xf30] sm:$0xff]
                  %1718 = vst [vmem:[%s1230 + $0x798] sm:$0xff] %v1717
                  %v1719 = vld [vmem:[%s1229 + $0xf40] sm:$0xff]
                  %1720 = vst [vmem:[%s1230 + $0x7a0] sm:$0xff] %v1719
                  %v1721 = vld [vmem:[%s1229 + $0xf50] sm:$0xff]
                  %1722 = vst [vmem:[%s1230 + $0x7a8] sm:$0xff] %v1721
                  %v1723 = vld [vmem:[%s1229 + $0xf60] sm:$0xff]
                  %1724 = vst [vmem:[%s1230 + $0x7b0] sm:$0xff] %v1723
                  %v1725 = vld [vmem:[%s1229 + $0xf70] sm:$0xff]
                  %1726 = vst [vmem:[%s1230 + $0x7b8] sm:$0xff] %v1725
                  %v1727 = vld [vmem:[%s1229 + $0xf80] sm:$0xff]
                  %1728 = vst [vmem:[%s1230 + $0x7c0] sm:$0xff] %v1727
                  %v1729 = vld [vmem:[%s1229 + $0xf90] sm:$0xff]
                  %1730 = vst [vmem:[%s1230 + $0x7c8] sm:$0xff] %v1729
                  %v1731 = vld [vmem:[%s1229 + $0xfa0] sm:$0xff]
                  %1732 = vst [vmem:[%s1230 + $0x7d0] sm:$0xff] %v1731
                  %v1733 = vld [vmem:[%s1229 + $0xfb0] sm:$0xff]
                  %1734 = vst [vmem:[%s1230 + $0x7d8] sm:$0xff] %v1733
                  %v1735 = vld [vmem:[%s1229 + $0xfc0] sm:$0xff]
                  %1736 = vst [vmem:[%s1230 + $0x7e0] sm:$0xff] %v1735
                  %v1737 = vld [vmem:[%s1229 + $0xfd0] sm:$0xff]
                  %1738 = vst [vmem:[%s1230 + $0x7e8] sm:$0xff] %v1737
                  %v1739 = vld [vmem:[%s1229 + $0xfe0] sm:$0xff]
                  %1740 = vst [vmem:[%s1230 + $0x7f0] sm:$0xff] %v1739
                  %v1741 = vld [vmem:[%s1229 + $0xff0] sm:$0xff]
                  %1742 = vst [vmem:[%s1230 + $0x7f8] sm:$0xff] %v1741
                  %v1743 = vld [vmem:[%s1229 + $0x1000] sm:$0xff]
                  %1744 = vst [vmem:[%s1230 + $0x800] sm:$0xff] %v1743
                  %v1745 = vld [vmem:[%s1229 + $0x1010] sm:$0xff]
                  %1746 = vst [vmem:[%s1230 + $0x808] sm:$0xff] %v1745
                  %v1747 = vld [vmem:[%s1229 + $0x1020] sm:$0xff]
                  %1748 = vst [vmem:[%s1230 + $0x810] sm:$0xff] %v1747
                  %v1749 = vld [vmem:[%s1229 + $0x1030] sm:$0xff]
                  %1750 = vst [vmem:[%s1230 + $0x818] sm:$0xff] %v1749
                  %v1751 = vld [vmem:[%s1229 + $0x1040] sm:$0xff]
                  %1752 = vst [vmem:[%s1230 + $0x820] sm:$0xff] %v1751
                  %v1753 = vld [vmem:[%s1229 + $0x1050] sm:$0xff]
                  %1754 = vst [vmem:[%s1230 + $0x828] sm:$0xff] %v1753
                  %v1755 = vld [vmem:[%s1229 + $0x1060] sm:$0xff]
                  %1756 = vst [vmem:[%s1230 + $0x830] sm:$0xff] %v1755
                  %v1757 = vld [vmem:[%s1229 + $0x1070] sm:$0xff]
                  %1758 = vst [vmem:[%s1230 + $0x838] sm:$0xff] %v1757
                  %v1759 = vld [vmem:[%s1229 + $0x1080] sm:$0xff]
                  %1760 = vst [vmem:[%s1230 + $0x840] sm:$0xff] %v1759
                  %v1761 = vld [vmem:[%s1229 + $0x1090] sm:$0xff]
                  %1762 = vst [vmem:[%s1230 + $0x848] sm:$0xff] %v1761
                  %v1763 = vld [vmem:[%s1229 + $0x10a0] sm:$0xff]
                  %1764 = vst [vmem:[%s1230 + $0x850] sm:$0xff] %v1763
                  %v1765 = vld [vmem:[%s1229 + $0x10b0] sm:$0xff]
                  %1766 = vst [vmem:[%s1230 + $0x858] sm:$0xff] %v1765
                  %v1767 = vld [vmem:[%s1229 + $0x10c0] sm:$0xff]
                  %1768 = vst [vmem:[%s1230 + $0x860] sm:$0xff] %v1767
                  %v1769 = vld [vmem:[%s1229 + $0x10d0] sm:$0xff]
                  %1770 = vst [vmem:[%s1230 + $0x868] sm:$0xff] %v1769
                  %v1771 = vld [vmem:[%s1229 + $0x10e0] sm:$0xff]
                  %1772 = vst [vmem:[%s1230 + $0x870] sm:$0xff] %v1771
                  %v1773 = vld [vmem:[%s1229 + $0x10f0] sm:$0xff]
                  %1774 = vst [vmem:[%s1230 + $0x878] sm:$0xff] %v1773
                  %v1775 = vld [vmem:[%s1229 + $0x1100] sm:$0xff]
                  %1776 = vst [vmem:[%s1230 + $0x880] sm:$0xff] %v1775
                  %v1777 = vld [vmem:[%s1229 + $0x1110] sm:$0xff]
                  %1778 = vst [vmem:[%s1230 + $0x888] sm:$0xff] %v1777
                  %v1779 = vld [vmem:[%s1229 + $0x1120] sm:$0xff]
                  %1780 = vst [vmem:[%s1230 + $0x890] sm:$0xff] %v1779
                  %v1781 = vld [vmem:[%s1229 + $0x1130] sm:$0xff]
                  %1782 = vst [vmem:[%s1230 + $0x898] sm:$0xff] %v1781
                  %v1783 = vld [vmem:[%s1229 + $0x1140] sm:$0xff]
                  %1784 = vst [vmem:[%s1230 + $0x8a0] sm:$0xff] %v1783
                  %v1785 = vld [vmem:[%s1229 + $0x1150] sm:$0xff]
                  %1786 = vst [vmem:[%s1230 + $0x8a8] sm:$0xff] %v1785
                  %v1787 = vld [vmem:[%s1229 + $0x1160] sm:$0xff]
                  %1788 = vst [vmem:[%s1230 + $0x8b0] sm:$0xff] %v1787
                  %v1789 = vld [vmem:[%s1229 + $0x1170] sm:$0xff]
                  %1790 = vst [vmem:[%s1230 + $0x8b8] sm:$0xff] %v1789
                  %v1791 = vld [vmem:[%s1229 + $0x1180] sm:$0xff]
                  %1792 = vst [vmem:[%s1230 + $0x8c0] sm:$0xff] %v1791
                  %v1793 = vld [vmem:[%s1229 + $0x1190] sm:$0xff]
                  %1794 = vst [vmem:[%s1230 + $0x8c8] sm:$0xff] %v1793
                  %v1795 = vld [vmem:[%s1229 + $0x11a0] sm:$0xff]
                  %1796 = vst [vmem:[%s1230 + $0x8d0] sm:$0xff] %v1795
                  %v1797 = vld [vmem:[%s1229 + $0x11b0] sm:$0xff]
                  %1798 = vst [vmem:[%s1230 + $0x8d8] sm:$0xff] %v1797
                  %v1799 = vld [vmem:[%s1229 + $0x11c0] sm:$0xff]
                  %1800 = vst [vmem:[%s1230 + $0x8e0] sm:$0xff] %v1799
                  %v1801 = vld [vmem:[%s1229 + $0x11d0] sm:$0xff]
                  %1802 = vst [vmem:[%s1230 + $0x8e8] sm:$0xff] %v1801
                  %v1803 = vld [vmem:[%s1229 + $0x11e0] sm:$0xff]
                  %1804 = vst [vmem:[%s1230 + $0x8f0] sm:$0xff] %v1803
                  %v1805 = vld [vmem:[%s1229 + $0x11f0] sm:$0xff]
                  %1806 = vst [vmem:[%s1230 + $0x8f8] sm:$0xff] %v1805
                  %v1807 = vld [vmem:[%s1229 + $0x1200] sm:$0xff]
                  %1808 = vst [vmem:[%s1230 + $0x900] sm:$0xff] %v1807
                  %v1809 = vld [vmem:[%s1229 + $0x1210] sm:$0xff]
                  %1810 = vst [vmem:[%s1230 + $0x908] sm:$0xff] %v1809
                  %v1811 = vld [vmem:[%s1229 + $0x1220] sm:$0xff]
                  %1812 = vst [vmem:[%s1230 + $0x910] sm:$0xff] %v1811
                  %v1813 = vld [vmem:[%s1229 + $0x1230] sm:$0xff]
                  %1814 = vst [vmem:[%s1230 + $0x918] sm:$0xff] %v1813
                  %v1815 = vld [vmem:[%s1229 + $0x1240] sm:$0xff]
                  %1816 = vst [vmem:[%s1230 + $0x920] sm:$0xff] %v1815
                  %v1817 = vld [vmem:[%s1229 + $0x1250] sm:$0xff]
                  %1818 = vst [vmem:[%s1230 + $0x928] sm:$0xff] %v1817
                  %v1819 = vld [vmem:[%s1229 + $0x1260] sm:$0xff]
                  %1820 = vst [vmem:[%s1230 + $0x930] sm:$0xff] %v1819
                  %v1821 = vld [vmem:[%s1229 + $0x1270] sm:$0xff]
                  %1822 = vst [vmem:[%s1230 + $0x938] sm:$0xff] %v1821
                  %v1823 = vld [vmem:[%s1229 + $0x1280] sm:$0xff]
                  %1824 = vst [vmem:[%s1230 + $0x940] sm:$0xff] %v1823
                  %v1825 = vld [vmem:[%s1229 + $0x1290] sm:$0xff]
                  %1826 = vst [vmem:[%s1230 + $0x948] sm:$0xff] %v1825
                  %v1827 = vld [vmem:[%s1229 + $0x12a0] sm:$0xff]
                  %1828 = vst [vmem:[%s1230 + $0x950] sm:$0xff] %v1827
                  %v1829 = vld [vmem:[%s1229 + $0x12b0] sm:$0xff]
                  %1830 = vst [vmem:[%s1230 + $0x958] sm:$0xff] %v1829
                  %v1831 = vld [vmem:[%s1229 + $0x12c0] sm:$0xff]
                  %1832 = vst [vmem:[%s1230 + $0x960] sm:$0xff] %v1831
                  %v1833 = vld [vmem:[%s1229 + $0x12d0] sm:$0xff]
                  %1834 = vst [vmem:[%s1230 + $0x968] sm:$0xff] %v1833
                  %v1835 = vld [vmem:[%s1229 + $0x12e0] sm:$0xff]
                  %1836 = vst [vmem:[%s1230 + $0x970] sm:$0xff] %v1835
                  %v1837 = vld [vmem:[%s1229 + $0x12f0] sm:$0xff]
                  %1838 = vst [vmem:[%s1230 + $0x978] sm:$0xff] %v1837
                  %v1839 = vld [vmem:[%s1229 + $0x1300] sm:$0xff]
                  %1840 = vst [vmem:[%s1230 + $0x980] sm:$0xff] %v1839
                  %v1841 = vld [vmem:[%s1229 + $0x1310] sm:$0xff]
                  %1842 = vst [vmem:[%s1230 + $0x988] sm:$0xff] %v1841
                  %v1843 = vld [vmem:[%s1229 + $0x1320] sm:$0xff]
                  %1844 = vst [vmem:[%s1230 + $0x990] sm:$0xff] %v1843
                  %v1845 = vld [vmem:[%s1229 + $0x1330] sm:$0xff]
                  %1846 = vst [vmem:[%s1230 + $0x998] sm:$0xff] %v1845
                  %v1847 = vld [vmem:[%s1229 + $0x1340] sm:$0xff]
                  %1848 = vst [vmem:[%s1230 + $0x9a0] sm:$0xff] %v1847
                  %v1849 = vld [vmem:[%s1229 + $0x1350] sm:$0xff]
                  %1850 = vst [vmem:[%s1230 + $0x9a8] sm:$0xff] %v1849
                  %v1851 = vld [vmem:[%s1229 + $0x1360] sm:$0xff]
                  %1852 = vst [vmem:[%s1230 + $0x9b0] sm:$0xff] %v1851
                  %v1853 = vld [vmem:[%s1229 + $0x1370] sm:$0xff]
                  %1854 = vst [vmem:[%s1230 + $0x9b8] sm:$0xff] %v1853
                  %v1855 = vld [vmem:[%s1229 + $0x1380] sm:$0xff]
                  %1856 = vst [vmem:[%s1230 + $0x9c0] sm:$0xff] %v1855
                  %v1857 = vld [vmem:[%s1229 + $0x1390] sm:$0xff]
                  %1858 = vst [vmem:[%s1230 + $0x9c8] sm:$0xff] %v1857
                  %v1859 = vld [vmem:[%s1229 + $0x13a0] sm:$0xff]
                  %1860 = vst [vmem:[%s1230 + $0x9d0] sm:$0xff] %v1859
                  %v1861 = vld [vmem:[%s1229 + $0x13b0] sm:$0xff]
                  %1862 = vst [vmem:[%s1230 + $0x9d8] sm:$0xff] %v1861
                  %v1863 = vld [vmem:[%s1229 + $0x13c0] sm:$0xff]
                  %1864 = vst [vmem:[%s1230 + $0x9e0] sm:$0xff] %v1863
                  %v1865 = vld [vmem:[%s1229 + $0x13d0] sm:$0xff]
                  %1866 = vst [vmem:[%s1230 + $0x9e8] sm:$0xff] %v1865
                  %v1867 = vld [vmem:[%s1229 + $0x13e0] sm:$0xff]
                  %1868 = vst [vmem:[%s1230 + $0x9f0] sm:$0xff] %v1867
                  %v1869 = vld [vmem:[%s1229 + $0x13f0] sm:$0xff]
                  %1870 = vst [vmem:[%s1230 + $0x9f8] sm:$0xff] %v1869
                  %v1871 = vld [vmem:[%s1229 + $0x1400] sm:$0xff]
                  %1872 = vst [vmem:[%s1230 + $0xa00] sm:$0xff] %v1871
                  %v1873 = vld [vmem:[%s1229 + $0x1410] sm:$0xff]
                  %1874 = vst [vmem:[%s1230 + $0xa08] sm:$0xff] %v1873
                  %v1875 = vld [vmem:[%s1229 + $0x1420] sm:$0xff]
                  %1876 = vst [vmem:[%s1230 + $0xa10] sm:$0xff] %v1875
                  %v1877 = vld [vmem:[%s1229 + $0x1430] sm:$0xff]
                  %1878 = vst [vmem:[%s1230 + $0xa18] sm:$0xff] %v1877
                  %v1879 = vld [vmem:[%s1229 + $0x1440] sm:$0xff]
                  %1880 = vst [vmem:[%s1230 + $0xa20] sm:$0xff] %v1879
                  %v1881 = vld [vmem:[%s1229 + $0x1450] sm:$0xff]
                  %1882 = vst [vmem:[%s1230 + $0xa28] sm:$0xff] %v1881
                  %v1883 = vld [vmem:[%s1229 + $0x1460] sm:$0xff]
                  %1884 = vst [vmem:[%s1230 + $0xa30] sm:$0xff] %v1883
                  %v1885 = vld [vmem:[%s1229 + $0x1470] sm:$0xff]
                  %1886 = vst [vmem:[%s1230 + $0xa38] sm:$0xff] %v1885
                  %v1887 = vld [vmem:[%s1229 + $0x1480] sm:$0xff]
                  %1888 = vst [vmem:[%s1230 + $0xa40] sm:$0xff] %v1887
                  %v1889 = vld [vmem:[%s1229 + $0x1490] sm:$0xff]
                  %1890 = vst [vmem:[%s1230 + $0xa48] sm:$0xff] %v1889
                  %v1891 = vld [vmem:[%s1229 + $0x14a0] sm:$0xff]
                  %1892 = vst [vmem:[%s1230 + $0xa50] sm:$0xff] %v1891
                  %v1893 = vld [vmem:[%s1229 + $0x14b0] sm:$0xff]
                  %1894 = vst [vmem:[%s1230 + $0xa58] sm:$0xff] %v1893
                  %v1895 = vld [vmem:[%s1229 + $0x14c0] sm:$0xff]
                  %1896 = vst [vmem:[%s1230 + $0xa60] sm:$0xff] %v1895
                  %v1897 = vld [vmem:[%s1229 + $0x14d0] sm:$0xff]
                  %1898 = vst [vmem:[%s1230 + $0xa68] sm:$0xff] %v1897
                  %v1899 = vld [vmem:[%s1229 + $0x14e0] sm:$0xff]
                  %1900 = vst [vmem:[%s1230 + $0xa70] sm:$0xff] %v1899
                  %v1901 = vld [vmem:[%s1229 + $0x14f0] sm:$0xff]
                  %1902 = vst [vmem:[%s1230 + $0xa78] sm:$0xff] %v1901
                  %v1903 = vld [vmem:[%s1229 + $0x1500] sm:$0xff]
                  %1904 = vst [vmem:[%s1230 + $0xa80] sm:$0xff] %v1903
                  %v1905 = vld [vmem:[%s1229 + $0x1510] sm:$0xff]
                  %1906 = vst [vmem:[%s1230 + $0xa88] sm:$0xff] %v1905
                  %v1907 = vld [vmem:[%s1229 + $0x1520] sm:$0xff]
                  %1908 = vst [vmem:[%s1230 + $0xa90] sm:$0xff] %v1907
                  %v1909 = vld [vmem:[%s1229 + $0x1530] sm:$0xff]
                  %1910 = vst [vmem:[%s1230 + $0xa98] sm:$0xff] %v1909
                  %v1911 = vld [vmem:[%s1229 + $0x1540] sm:$0xff]
                  %1912 = vst [vmem:[%s1230 + $0xaa0] sm:$0xff] %v1911
                  %v1913 = vld [vmem:[%s1229 + $0x1550] sm:$0xff]
                  %1914 = vst [vmem:[%s1230 + $0xaa8] sm:$0xff] %v1913
                  %v1915 = vld [vmem:[%s1229 + $0x1560] sm:$0xff]
                  %1916 = vst [vmem:[%s1230 + $0xab0] sm:$0xff] %v1915
                  %v1917 = vld [vmem:[%s1229 + $0x1570] sm:$0xff]
                  %1918 = vst [vmem:[%s1230 + $0xab8] sm:$0xff] %v1917
                  %v1919 = vld [vmem:[%s1229 + $0x1580] sm:$0xff]
                  %1920 = vst [vmem:[%s1230 + $0xac0] sm:$0xff] %v1919
                  %v1921 = vld [vmem:[%s1229 + $0x1590] sm:$0xff]
                  %1922 = vst [vmem:[%s1230 + $0xac8] sm:$0xff] %v1921
                  %v1923 = vld [vmem:[%s1229 + $0x15a0] sm:$0xff]
                  %1924 = vst [vmem:[%s1230 + $0xad0] sm:$0xff] %v1923
                  %v1925 = vld [vmem:[%s1229 + $0x15b0] sm:$0xff]
                  %1926 = vst [vmem:[%s1230 + $0xad8] sm:$0xff] %v1925
                  %v1927 = vld [vmem:[%s1229 + $0x15c0] sm:$0xff]
                  %1928 = vst [vmem:[%s1230 + $0xae0] sm:$0xff] %v1927
                  %v1929 = vld [vmem:[%s1229 + $0x15d0] sm:$0xff]
                  %1930 = vst [vmem:[%s1230 + $0xae8] sm:$0xff] %v1929
                  %v1931 = vld [vmem:[%s1229 + $0x15e0] sm:$0xff]
                  %1932 = vst [vmem:[%s1230 + $0xaf0] sm:$0xff] %v1931
                  %v1933 = vld [vmem:[%s1229 + $0x15f0] sm:$0xff]
                  %1934 = vst [vmem:[%s1230 + $0xaf8] sm:$0xff] %v1933
                  %v1935 = vld [vmem:[%s1229 + $0x1600] sm:$0xff]
                  %1936 = vst [vmem:[%s1230 + $0xb00] sm:$0xff] %v1935
                  %v1937 = vld [vmem:[%s1229 + $0x1610] sm:$0xff]
                  %1938 = vst [vmem:[%s1230 + $0xb08] sm:$0xff] %v1937
                  %v1939 = vld [vmem:[%s1229 + $0x1620] sm:$0xff]
                  %1940 = vst [vmem:[%s1230 + $0xb10] sm:$0xff] %v1939
                  %v1941 = vld [vmem:[%s1229 + $0x1630] sm:$0xff]
                  %1942 = vst [vmem:[%s1230 + $0xb18] sm:$0xff] %v1941
                  %v1943 = vld [vmem:[%s1229 + $0x1640] sm:$0xff]
                  %1944 = vst [vmem:[%s1230 + $0xb20] sm:$0xff] %v1943
                  %v1945 = vld [vmem:[%s1229 + $0x1650] sm:$0xff]
                  %1946 = vst [vmem:[%s1230 + $0xb28] sm:$0xff] %v1945
                  %v1947 = vld [vmem:[%s1229 + $0x1660] sm:$0xff]
                  %1948 = vst [vmem:[%s1230 + $0xb30] sm:$0xff] %v1947
                  %v1949 = vld [vmem:[%s1229 + $0x1670] sm:$0xff]
                  %1950 = vst [vmem:[%s1230 + $0xb38] sm:$0xff] %v1949
                  %v1951 = vld [vmem:[%s1229 + $0x1680] sm:$0xff]
                  %1952 = vst [vmem:[%s1230 + $0xb40] sm:$0xff] %v1951
                  %v1953 = vld [vmem:[%s1229 + $0x1690] sm:$0xff]
                  %1954 = vst [vmem:[%s1230 + $0xb48] sm:$0xff] %v1953
                  %v1955 = vld [vmem:[%s1229 + $0x16a0] sm:$0xff]
                  %1956 = vst [vmem:[%s1230 + $0xb50] sm:$0xff] %v1955
                  %v1957 = vld [vmem:[%s1229 + $0x16b0] sm:$0xff]
                  %1958 = vst [vmem:[%s1230 + $0xb58] sm:$0xff] %v1957
                  %v1959 = vld [vmem:[%s1229 + $0x16c0] sm:$0xff]
                  %1960 = vst [vmem:[%s1230 + $0xb60] sm:$0xff] %v1959
                  %v1961 = vld [vmem:[%s1229 + $0x16d0] sm:$0xff]
                  %1962 = vst [vmem:[%s1230 + $0xb68] sm:$0xff] %v1961
                  %v1963 = vld [vmem:[%s1229 + $0x16e0] sm:$0xff]
                  %1964 = vst [vmem:[%s1230 + $0xb70] sm:$0xff] %v1963
                  %v1965 = vld [vmem:[%s1229 + $0x16f0] sm:$0xff]
                  %1966 = vst [vmem:[%s1230 + $0xb78] sm:$0xff] %v1965
                  %v1967 = vld [vmem:[%s1229 + $0x1700] sm:$0xff]
                  %1968 = vst [vmem:[%s1230 + $0xb80] sm:$0xff] %v1967
                  %v1969 = vld [vmem:[%s1229 + $0x1710] sm:$0xff]
                  %1970 = vst [vmem:[%s1230 + $0xb88] sm:$0xff] %v1969
                  %v1971 = vld [vmem:[%s1229 + $0x1720] sm:$0xff]
                  %1972 = vst [vmem:[%s1230 + $0xb90] sm:$0xff] %v1971
                  %v1973 = vld [vmem:[%s1229 + $0x1730] sm:$0xff]
                  %1974 = vst [vmem:[%s1230 + $0xb98] sm:$0xff] %v1973
                  %v1975 = vld [vmem:[%s1229 + $0x1740] sm:$0xff]
                  %1976 = vst [vmem:[%s1230 + $0xba0] sm:$0xff] %v1975
                  %v1977 = vld [vmem:[%s1229 + $0x1750] sm:$0xff]
                  %1978 = vst [vmem:[%s1230 + $0xba8] sm:$0xff] %v1977
                  %v1979 = vld [vmem:[%s1229 + $0x1760] sm:$0xff]
                  %1980 = vst [vmem:[%s1230 + $0xbb0] sm:$0xff] %v1979
                  %v1981 = vld [vmem:[%s1229 + $0x1770] sm:$0xff]
                  %1982 = vst [vmem:[%s1230 + $0xbb8] sm:$0xff] %v1981
                  %v1983 = vld [vmem:[%s1229 + $0x1780] sm:$0xff]
                  %1984 = vst [vmem:[%s1230 + $0xbc0] sm:$0xff] %v1983
                  %v1985 = vld [vmem:[%s1229 + $0x1790] sm:$0xff]
                  %1986 = vst [vmem:[%s1230 + $0xbc8] sm:$0xff] %v1985
                  %v1987 = vld [vmem:[%s1229 + $0x17a0] sm:$0xff]
                  %1988 = vst [vmem:[%s1230 + $0xbd0] sm:$0xff] %v1987
                  %v1989 = vld [vmem:[%s1229 + $0x17b0] sm:$0xff]
                  %1990 = vst [vmem:[%s1230 + $0xbd8] sm:$0xff] %v1989
                  %v1991 = vld [vmem:[%s1229 + $0x17c0] sm:$0xff]
                  %1992 = vst [vmem:[%s1230 + $0xbe0] sm:$0xff] %v1991
                  %v1993 = vld [vmem:[%s1229 + $0x17d0] sm:$0xff]
                  %1994 = vst [vmem:[%s1230 + $0xbe8] sm:$0xff] %v1993
                  %v1995 = vld [vmem:[%s1229 + $0x17e0] sm:$0xff]
                  %1996 = vst [vmem:[%s1230 + $0xbf0] sm:$0xff] %v1995
                  %v1997 = vld [vmem:[%s1229 + $0x17f0] sm:$0xff]
                  %1998 = vst [vmem:[%s1230 + $0xbf8] sm:$0xff] %v1997
                  %v1999 = vld [vmem:[%s1229 + $0x1800] sm:$0xff]
                  %2000 = vst [vmem:[%s1230 + $0xc00] sm:$0xff] %v1999
                  %v2001 = vld [vmem:[%s1229 + $0x1810] sm:$0xff]
                  %2002 = vst [vmem:[%s1230 + $0xc08] sm:$0xff] %v2001
                  %v2003 = vld [vmem:[%s1229 + $0x1820] sm:$0xff]
                  %2004 = vst [vmem:[%s1230 + $0xc10] sm:$0xff] %v2003
                  %v2005 = vld [vmem:[%s1229 + $0x1830] sm:$0xff]
                  %2006 = vst [vmem:[%s1230 + $0xc18] sm:$0xff] %v2005
                  %v2007 = vld [vmem:[%s1229 + $0x1840] sm:$0xff]
                  %2008 = vst [vmem:[%s1230 + $0xc20] sm:$0xff] %v2007
                  %v2009 = vld [vmem:[%s1229 + $0x1850] sm:$0xff]
                  %2010 = vst [vmem:[%s1230 + $0xc28] sm:$0xff] %v2009
                  %v2011 = vld [vmem:[%s1229 + $0x1860] sm:$0xff]
                  %2012 = vst [vmem:[%s1230 + $0xc30] sm:$0xff] %v2011
                  %v2013 = vld [vmem:[%s1229 + $0x1870] sm:$0xff]
                  %2014 = vst [vmem:[%s1230 + $0xc38] sm:$0xff] %v2013
                  %v2015 = vld [vmem:[%s1229 + $0x1880] sm:$0xff]
                  %2016 = vst [vmem:[%s1230 + $0xc40] sm:$0xff] %v2015
                  %v2017 = vld [vmem:[%s1229 + $0x1890] sm:$0xff]
                  %2018 = vst [vmem:[%s1230 + $0xc48] sm:$0xff] %v2017
                  %v2019 = vld [vmem:[%s1229 + $0x18a0] sm:$0xff]
                  %2020 = vst [vmem:[%s1230 + $0xc50] sm:$0xff] %v2019
                  %v2021 = vld [vmem:[%s1229 + $0x18b0] sm:$0xff]
                  %2022 = vst [vmem:[%s1230 + $0xc58] sm:$0xff] %v2021
                  %v2023 = vld [vmem:[%s1229 + $0x18c0] sm:$0xff]
                  %2024 = vst [vmem:[%s1230 + $0xc60] sm:$0xff] %v2023
                  %v2025 = vld [vmem:[%s1229 + $0x18d0] sm:$0xff]
                  %2026 = vst [vmem:[%s1230 + $0xc68] sm:$0xff] %v2025
                  %v2027 = vld [vmem:[%s1229 + $0x18e0] sm:$0xff]
                  %2028 = vst [vmem:[%s1230 + $0xc70] sm:$0xff] %v2027
                  %v2029 = vld [vmem:[%s1229 + $0x18f0] sm:$0xff]
                  %2030 = vst [vmem:[%s1230 + $0xc78] sm:$0xff] %v2029
                  %v2031 = vld [vmem:[%s1229 + $0x1900] sm:$0xff]
                  %2032 = vst [vmem:[%s1230 + $0xc80] sm:$0xff] %v2031
                  %v2033 = vld [vmem:[%s1229 + $0x1910] sm:$0xff]
                  %2034 = vst [vmem:[%s1230 + $0xc88] sm:$0xff] %v2033
                  %v2035 = vld [vmem:[%s1229 + $0x1920] sm:$0xff]
                  %2036 = vst [vmem:[%s1230 + $0xc90] sm:$0xff] %v2035
                  %v2037 = vld [vmem:[%s1229 + $0x1930] sm:$0xff]
                  %2038 = vst [vmem:[%s1230 + $0xc98] sm:$0xff] %v2037
                  %v2039 = vld [vmem:[%s1229 + $0x1940] sm:$0xff]
                  %2040 = vst [vmem:[%s1230 + $0xca0] sm:$0xff] %v2039
                  %v2041 = vld [vmem:[%s1229 + $0x1950] sm:$0xff]
                  %2042 = vst [vmem:[%s1230 + $0xca8] sm:$0xff] %v2041
                  %v2043 = vld [vmem:[%s1229 + $0x1960] sm:$0xff]
                  %2044 = vst [vmem:[%s1230 + $0xcb0] sm:$0xff] %v2043
                  %v2045 = vld [vmem:[%s1229 + $0x1970] sm:$0xff]
                  %2046 = vst [vmem:[%s1230 + $0xcb8] sm:$0xff] %v2045
                  %v2047 = vld [vmem:[%s1229 + $0x1980] sm:$0xff]
                  %2048 = vst [vmem:[%s1230 + $0xcc0] sm:$0xff] %v2047
                  %v2049 = vld [vmem:[%s1229 + $0x1990] sm:$0xff]
                  %2050 = vst [vmem:[%s1230 + $0xcc8] sm:$0xff] %v2049
                  %v2051 = vld [vmem:[%s1229 + $0x19a0] sm:$0xff]
                  %2052 = vst [vmem:[%s1230 + $0xcd0] sm:$0xff] %v2051
                  %v2053 = vld [vmem:[%s1229 + $0x19b0] sm:$0xff]
                  %2054 = vst [vmem:[%s1230 + $0xcd8] sm:$0xff] %v2053
                  %v2055 = vld [vmem:[%s1229 + $0x19c0] sm:$0xff]
                  %2056 = vst [vmem:[%s1230 + $0xce0] sm:$0xff] %v2055
                  %v2057 = vld [vmem:[%s1229 + $0x19d0] sm:$0xff]
                  %2058 = vst [vmem:[%s1230 + $0xce8] sm:$0xff] %v2057
                  %v2059 = vld [vmem:[%s1229 + $0x19e0] sm:$0xff]
                  %2060 = vst [vmem:[%s1230 + $0xcf0] sm:$0xff] %v2059
                  %v2061 = vld [vmem:[%s1229 + $0x19f0] sm:$0xff]
                  %2062 = vst [vmem:[%s1230 + $0xcf8] sm:$0xff] %v2061
                  %v2063 = vld [vmem:[%s1229 + $0x1a00] sm:$0xff]
                  %2064 = vst [vmem:[%s1230 + $0xd00] sm:$0xff] %v2063
                  %v2065 = vld [vmem:[%s1229 + $0x1a10] sm:$0xff]
                  %2066 = vst [vmem:[%s1230 + $0xd08] sm:$0xff] %v2065
                  %v2067 = vld [vmem:[%s1229 + $0x1a20] sm:$0xff]
                  %2068 = vst [vmem:[%s1230 + $0xd10] sm:$0xff] %v2067
                  %v2069 = vld [vmem:[%s1229 + $0x1a30] sm:$0xff]
                  %2070 = vst [vmem:[%s1230 + $0xd18] sm:$0xff] %v2069
                  %v2071 = vld [vmem:[%s1229 + $0x1a40] sm:$0xff]
                  %2072 = vst [vmem:[%s1230 + $0xd20] sm:$0xff] %v2071
                  %v2073 = vld [vmem:[%s1229 + $0x1a50] sm:$0xff]
                  %2074 = vst [vmem:[%s1230 + $0xd28] sm:$0xff] %v2073
                  %v2075 = vld [vmem:[%s1229 + $0x1a60] sm:$0xff]
                  %2076 = vst [vmem:[%s1230 + $0xd30] sm:$0xff] %v2075
                  %v2077 = vld [vmem:[%s1229 + $0x1a70] sm:$0xff]
                  %2078 = vst [vmem:[%s1230 + $0xd38] sm:$0xff] %v2077
                  %v2079 = vld [vmem:[%s1229 + $0x1a80] sm:$0xff]
                  %2080 = vst [vmem:[%s1230 + $0xd40] sm:$0xff] %v2079
                  %v2081 = vld [vmem:[%s1229 + $0x1a90] sm:$0xff]
                  %2082 = vst [vmem:[%s1230 + $0xd48] sm:$0xff] %v2081
                  %v2083 = vld [vmem:[%s1229 + $0x1aa0] sm:$0xff]
                  %2084 = vst [vmem:[%s1230 + $0xd50] sm:$0xff] %v2083
                  %v2085 = vld [vmem:[%s1229 + $0x1ab0] sm:$0xff]
                  %2086 = vst [vmem:[%s1230 + $0xd58] sm:$0xff] %v2085
                  %v2087 = vld [vmem:[%s1229 + $0x1ac0] sm:$0xff]
                  %2088 = vst [vmem:[%s1230 + $0xd60] sm:$0xff] %v2087
                  %v2089 = vld [vmem:[%s1229 + $0x1ad0] sm:$0xff]
                  %2090 = vst [vmem:[%s1230 + $0xd68] sm:$0xff] %v2089
                  %v2091 = vld [vmem:[%s1229 + $0x1ae0] sm:$0xff]
                  %2092 = vst [vmem:[%s1230 + $0xd70] sm:$0xff] %v2091
                  %v2093 = vld [vmem:[%s1229 + $0x1af0] sm:$0xff]
                  %2094 = vst [vmem:[%s1230 + $0xd78] sm:$0xff] %v2093
                  %v2095 = vld [vmem:[%s1229 + $0x1b00] sm:$0xff]
                  %2096 = vst [vmem:[%s1230 + $0xd80] sm:$0xff] %v2095
                  %v2097 = vld [vmem:[%s1229 + $0x1b10] sm:$0xff]
                  %2098 = vst [vmem:[%s1230 + $0xd88] sm:$0xff] %v2097
                  %v2099 = vld [vmem:[%s1229 + $0x1b20] sm:$0xff]
                  %2100 = vst [vmem:[%s1230 + $0xd90] sm:$0xff] %v2099
                  %v2101 = vld [vmem:[%s1229 + $0x1b30] sm:$0xff]
                  %2102 = vst [vmem:[%s1230 + $0xd98] sm:$0xff] %v2101
                  %v2103 = vld [vmem:[%s1229 + $0x1b40] sm:$0xff]
                  %2104 = vst [vmem:[%s1230 + $0xda0] sm:$0xff] %v2103
                  %v2105 = vld [vmem:[%s1229 + $0x1b50] sm:$0xff]
                  %2106 = vst [vmem:[%s1230 + $0xda8] sm:$0xff] %v2105
                  %v2107 = vld [vmem:[%s1229 + $0x1b60] sm:$0xff]
                  %2108 = vst [vmem:[%s1230 + $0xdb0] sm:$0xff] %v2107
                  %v2109 = vld [vmem:[%s1229 + $0x1b70] sm:$0xff]
                  %2110 = vst [vmem:[%s1230 + $0xdb8] sm:$0xff] %v2109
                  %v2111 = vld [vmem:[%s1229 + $0x1b80] sm:$0xff]
                  %2112 = vst [vmem:[%s1230 + $0xdc0] sm:$0xff] %v2111
                  %v2113 = vld [vmem:[%s1229 + $0x1b90] sm:$0xff]
                  %2114 = vst [vmem:[%s1230 + $0xdc8] sm:$0xff] %v2113
                  %v2115 = vld [vmem:[%s1229 + $0x1ba0] sm:$0xff]
                  %2116 = vst [vmem:[%s1230 + $0xdd0] sm:$0xff] %v2115
                  %v2117 = vld [vmem:[%s1229 + $0x1bb0] sm:$0xff]
                  %2118 = vst [vmem:[%s1230 + $0xdd8] sm:$0xff] %v2117
                  %v2119 = vld [vmem:[%s1229 + $0x1bc0] sm:$0xff]
                  %2120 = vst [vmem:[%s1230 + $0xde0] sm:$0xff] %v2119
                  %v2121 = vld [vmem:[%s1229 + $0x1bd0] sm:$0xff]
                  %2122 = vst [vmem:[%s1230 + $0xde8] sm:$0xff] %v2121
                  %v2123 = vld [vmem:[%s1229 + $0x1be0] sm:$0xff]
                  %2124 = vst [vmem:[%s1230 + $0xdf0] sm:$0xff] %v2123
                  %v2125 = vld [vmem:[%s1229 + $0x1bf0] sm:$0xff]
                  %2126 = vst [vmem:[%s1230 + $0xdf8] sm:$0xff] %v2125
                  %v2127 = vld [vmem:[%s1229 + $0x1c00] sm:$0xff]
                  %2128 = vst [vmem:[%s1230 + $0xe00] sm:$0xff] %v2127
                  %v2129 = vld [vmem:[%s1229 + $0x1c10] sm:$0xff]
                  %2130 = vst [vmem:[%s1230 + $0xe08] sm:$0xff] %v2129
                  %v2131 = vld [vmem:[%s1229 + $0x1c20] sm:$0xff]
                  %2132 = vst [vmem:[%s1230 + $0xe10] sm:$0xff] %v2131
                  %v2133 = vld [vmem:[%s1229 + $0x1c30] sm:$0xff]
                  %2134 = vst [vmem:[%s1230 + $0xe18] sm:$0xff] %v2133
                  %v2135 = vld [vmem:[%s1229 + $0x1c40] sm:$0xff]
                  %2136 = vst [vmem:[%s1230 + $0xe20] sm:$0xff] %v2135
                  %v2137 = vld [vmem:[%s1229 + $0x1c50] sm:$0xff]
                  %2138 = vst [vmem:[%s1230 + $0xe28] sm:$0xff] %v2137
                  %v2139 = vld [vmem:[%s1229 + $0x1c60] sm:$0xff]
                  %2140 = vst [vmem:[%s1230 + $0xe30] sm:$0xff] %v2139
                  %v2141 = vld [vmem:[%s1229 + $0x1c70] sm:$0xff]
                  %2142 = vst [vmem:[%s1230 + $0xe38] sm:$0xff] %v2141
                  %v2143 = vld [vmem:[%s1229 + $0x1c80] sm:$0xff]
                  %2144 = vst [vmem:[%s1230 + $0xe40] sm:$0xff] %v2143
                  %v2145 = vld [vmem:[%s1229 + $0x1c90] sm:$0xff]
                  %2146 = vst [vmem:[%s1230 + $0xe48] sm:$0xff] %v2145
                  %v2147 = vld [vmem:[%s1229 + $0x1ca0] sm:$0xff]
                  %2148 = vst [vmem:[%s1230 + $0xe50] sm:$0xff] %v2147
                  %v2149 = vld [vmem:[%s1229 + $0x1cb0] sm:$0xff]
                  %2150 = vst [vmem:[%s1230 + $0xe58] sm:$0xff] %v2149
                  %v2151 = vld [vmem:[%s1229 + $0x1cc0] sm:$0xff]
                  %2152 = vst [vmem:[%s1230 + $0xe60] sm:$0xff] %v2151
                  %v2153 = vld [vmem:[%s1229 + $0x1cd0] sm:$0xff]
                  %2154 = vst [vmem:[%s1230 + $0xe68] sm:$0xff] %v2153
                  %v2155 = vld [vmem:[%s1229 + $0x1ce0] sm:$0xff]
                  %2156 = vst [vmem:[%s1230 + $0xe70] sm:$0xff] %v2155
                  %v2157 = vld [vmem:[%s1229 + $0x1cf0] sm:$0xff]
                  %2158 = vst [vmem:[%s1230 + $0xe78] sm:$0xff] %v2157
                  %v2159 = vld [vmem:[%s1229 + $0x1d00] sm:$0xff]
                  %2160 = vst [vmem:[%s1230 + $0xe80] sm:$0xff] %v2159
                  %v2161 = vld [vmem:[%s1229 + $0x1d10] sm:$0xff]
                  %2162 = vst [vmem:[%s1230 + $0xe88] sm:$0xff] %v2161
                  %v2163 = vld [vmem:[%s1229 + $0x1d20] sm:$0xff]
                  %2164 = vst [vmem:[%s1230 + $0xe90] sm:$0xff] %v2163
                  %v2165 = vld [vmem:[%s1229 + $0x1d30] sm:$0xff]
                  %2166 = vst [vmem:[%s1230 + $0xe98] sm:$0xff] %v2165
                  %v2167 = vld [vmem:[%s1229 + $0x1d40] sm:$0xff]
                  %2168 = vst [vmem:[%s1230 + $0xea0] sm:$0xff] %v2167
                  %v2169 = vld [vmem:[%s1229 + $0x1d50] sm:$0xff]
                  %2170 = vst [vmem:[%s1230 + $0xea8] sm:$0xff] %v2169
                  %v2171 = vld [vmem:[%s1229 + $0x1d60] sm:$0xff]
                  %2172 = vst [vmem:[%s1230 + $0xeb0] sm:$0xff] %v2171
                  %v2173 = vld [vmem:[%s1229 + $0x1d70] sm:$0xff]
                  %2174 = vst [vmem:[%s1230 + $0xeb8] sm:$0xff] %v2173
                  %v2175 = vld [vmem:[%s1229 + $0x1d80] sm:$0xff]
                  %2176 = vst [vmem:[%s1230 + $0xec0] sm:$0xff] %v2175
                  %v2177 = vld [vmem:[%s1229 + $0x1d90] sm:$0xff]
                  %2178 = vst [vmem:[%s1230 + $0xec8] sm:$0xff] %v2177
                  %v2179 = vld [vmem:[%s1229 + $0x1da0] sm:$0xff]
                  %2180 = vst [vmem:[%s1230 + $0xed0] sm:$0xff] %v2179
                  %v2181 = vld [vmem:[%s1229 + $0x1db0] sm:$0xff]
                  %2182 = vst [vmem:[%s1230 + $0xed8] sm:$0xff] %v2181
                  %v2183 = vld [vmem:[%s1229 + $0x1dc0] sm:$0xff]
                  %2184 = vst [vmem:[%s1230 + $0xee0] sm:$0xff] %v2183
                  %v2185 = vld [vmem:[%s1229 + $0x1dd0] sm:$0xff]
                  %2186 = vst [vmem:[%s1230 + $0xee8] sm:$0xff] %v2185
                  %v2187 = vld [vmem:[%s1229 + $0x1de0] sm:$0xff]
                  %2188 = vst [vmem:[%s1230 + $0xef0] sm:$0xff] %v2187
                  %v2189 = vld [vmem:[%s1229 + $0x1df0] sm:$0xff]
                  %2190 = vst [vmem:[%s1230 + $0xef8] sm:$0xff] %v2189
                $region56: #{multi_agent_cnn_critic.5} parent=50 // loop_footer
                  %s1228 = sadd.s32 1, %s1224
                $region57: #{multi_agent_cnn_critic.5} parent=50 // loop_footer_branch
                  %1223 = sbr.rel target = $region53
                $region58: #{multi_agent_cnn_critic.5} parent=50 // loop_exit
                  _
              $region51: #{multi_agent_cnn_critic.5} parent=35 // pred_fallthru
                _
              // Predicated region
              $region59: #{multi_agent_cnn_critic.5} parent=35 // pred_check
                _
              $region60: #{multi_agent_cnn_critic.5} parent=35 // pred_check_branch
                %2192 = sbr.rel target = $region62
              $region61: #{multi_agent_cnn_critic.5} parent=35 // pred_region
                _
              $region62: #{multi_agent_cnn_critic.5} parent=35 // pred_fallthru
                _
            $region36: #{multi_agent_cnn_critic.5} parent=31 // pred_fallthru
              _
            // Predicated region
            $region37: #{multi_agent_cnn_critic.5} parent=31 // pred_check
              _
            $region38: #{multi_agent_cnn_critic.5} parent=31 // pred_check_branch
              %251 = sbr.rel target = $region40
            $region39: #{multi_agent_cnn_critic.5} parent=31 // pred_region
              loop: start=0, step=1, limit=1
              $region41: #{multi_agent_cnn_critic.5} parent=39 // loop_pre_header
                _
              $region42: #{multi_agent_cnn_critic.5} parent=39 // loop_header
                %s254 = sphi 0, %s258
                %p255 = scmp.ge.s32.totalorder %s254, 1
                %s259 = sphi %s245, %s245
                %s260 = sphi %s240, %s240
              $region43: #{multi_agent_cnn_critic.5} parent=39 // loop_header_branch
                %257 = sbr.rel (%p255) target = $region47
              $region44: #{multi_agent_cnn_critic.5} parent=39 // loop_body
                %v261 = vld [vmem:[%s259] sm:$0xff]
                %262 = vst [vmem:[%s260] sm:$0xff] %v261
                %v263 = vld [vmem:[%s259 + $0x10] sm:$0xff]
                %264 = vst [vmem:[%s260 + $0x8] sm:$0xff] %v263
                %v265 = vld [vmem:[%s259 + $0x20] sm:$0xff]
                %266 = vst [vmem:[%s260 + $0x10] sm:$0xff] %v265
                %v267 = vld [vmem:[%s259 + $0x30] sm:$0xff]
                %268 = vst [vmem:[%s260 + $0x18] sm:$0xff] %v267
                %v269 = vld [vmem:[%s259 + $0x40] sm:$0xff]
                %270 = vst [vmem:[%s260 + $0x20] sm:$0xff] %v269
                %v271 = vld [vmem:[%s259 + $0x50] sm:$0xff]
                %272 = vst [vmem:[%s260 + $0x28] sm:$0xff] %v271
                %v273 = vld [vmem:[%s259 + $0x60] sm:$0xff]
                %274 = vst [vmem:[%s260 + $0x30] sm:$0xff] %v273
                %v275 = vld [vmem:[%s259 + $0x70] sm:$0xff]
                %276 = vst [vmem:[%s260 + $0x38] sm:$0xff] %v275
                %v277 = vld [vmem:[%s259 + $0x80] sm:$0xff]
                %278 = vst [vmem:[%s260 + $0x40] sm:$0xff] %v277
                %v279 = vld [vmem:[%s259 + $0x90] sm:$0xff]
                %280 = vst [vmem:[%s260 + $0x48] sm:$0xff] %v279
                %v281 = vld [vmem:[%s259 + $0xa0] sm:$0xff]
                %282 = vst [vmem:[%s260 + $0x50] sm:$0xff] %v281
                %v283 = vld [vmem:[%s259 + $0xb0] sm:$0xff]
                %284 = vst [vmem:[%s260 + $0x58] sm:$0xff] %v283
                %v285 = vld [vmem:[%s259 + $0xc0] sm:$0xff]
                %286 = vst [vmem:[%s260 + $0x60] sm:$0xff] %v285
                %v287 = vld [vmem:[%s259 + $0xd0] sm:$0xff]
                %288 = vst [vmem:[%s260 + $0x68] sm:$0xff] %v287
                %v289 = vld [vmem:[%s259 + $0xe0] sm:$0xff]
                %290 = vst [vmem:[%s260 + $0x70] sm:$0xff] %v289
                %v291 = vld [vmem:[%s259 + $0xf0] sm:$0xff]
                %292 = vst [vmem:[%s260 + $0x78] sm:$0xff] %v291
                %v293 = vld [vmem:[%s259 + $0x100] sm:$0xff]
                %294 = vst [vmem:[%s260 + $0x80] sm:$0xff] %v293
                %v295 = vld [vmem:[%s259 + $0x110] sm:$0xff]
                %296 = vst [vmem:[%s260 + $0x88] sm:$0xff] %v295
                %v297 = vld [vmem:[%s259 + $0x120] sm:$0xff]
                %298 = vst [vmem:[%s260 + $0x90] sm:$0xff] %v297
                %v299 = vld [vmem:[%s259 + $0x130] sm:$0xff]
                %300 = vst [vmem:[%s260 + $0x98] sm:$0xff] %v299
                %v301 = vld [vmem:[%s259 + $0x140] sm:$0xff]
                %302 = vst [vmem:[%s260 + $0xa0] sm:$0xff] %v301
                %v303 = vld [vmem:[%s259 + $0x150] sm:$0xff]
                %304 = vst [vmem:[%s260 + $0xa8] sm:$0xff] %v303
                %v305 = vld [vmem:[%s259 + $0x160] sm:$0xff]
                %306 = vst [vmem:[%s260 + $0xb0] sm:$0xff] %v305
                %v307 = vld [vmem:[%s259 + $0x170] sm:$0xff]
                %308 = vst [vmem:[%s260 + $0xb8] sm:$0xff] %v307
                %v309 = vld [vmem:[%s259 + $0x180] sm:$0xff]
                %310 = vst [vmem:[%s260 + $0xc0] sm:$0xff] %v309
                %v311 = vld [vmem:[%s259 + $0x190] sm:$0xff]
                %312 = vst [vmem:[%s260 + $0xc8] sm:$0xff] %v311
                %v313 = vld [vmem:[%s259 + $0x1a0] sm:$0xff]
                %314 = vst [vmem:[%s260 + $0xd0] sm:$0xff] %v313
                %v315 = vld [vmem:[%s259 + $0x1b0] sm:$0xff]
                %316 = vst [vmem:[%s260 + $0xd8] sm:$0xff] %v315
                %v317 = vld [vmem:[%s259 + $0x1c0] sm:$0xff]
                %318 = vst [vmem:[%s260 + $0xe0] sm:$0xff] %v317
                %v319 = vld [vmem:[%s259 + $0x1d0] sm:$0xff]
                %320 = vst [vmem:[%s260 + $0xe8] sm:$0xff] %v319
                %v321 = vld [vmem:[%s259 + $0x1e0] sm:$0xff]
                %322 = vst [vmem:[%s260 + $0xf0] sm:$0xff] %v321
                %v323 = vld [vmem:[%s259 + $0x1f0] sm:$0xff]
                %324 = vst [vmem:[%s260 + $0xf8] sm:$0xff] %v323
                %v325 = vld [vmem:[%s259 + $0x200] sm:$0xff]
                %326 = vst [vmem:[%s260 + $0x100] sm:$0xff] %v325
                %v327 = vld [vmem:[%s259 + $0x210] sm:$0xff]
                %328 = vst [vmem:[%s260 + $0x108] sm:$0xff] %v327
                %v329 = vld [vmem:[%s259 + $0x220] sm:$0xff]
                %330 = vst [vmem:[%s260 + $0x110] sm:$0xff] %v329
                %v331 = vld [vmem:[%s259 + $0x230] sm:$0xff]
                %332 = vst [vmem:[%s260 + $0x118] sm:$0xff] %v331
                %v333 = vld [vmem:[%s259 + $0x240] sm:$0xff]
                %334 = vst [vmem:[%s260 + $0x120] sm:$0xff] %v333
                %v335 = vld [vmem:[%s259 + $0x250] sm:$0xff]
                %336 = vst [vmem:[%s260 + $0x128] sm:$0xff] %v335
                %v337 = vld [vmem:[%s259 + $0x260] sm:$0xff]
                %338 = vst [vmem:[%s260 + $0x130] sm:$0xff] %v337
                %v339 = vld [vmem:[%s259 + $0x270] sm:$0xff]
                %340 = vst [vmem:[%s260 + $0x138] sm:$0xff] %v339
                %v341 = vld [vmem:[%s259 + $0x280] sm:$0xff]
                %342 = vst [vmem:[%s260 + $0x140] sm:$0xff] %v341
                %v343 = vld [vmem:[%s259 + $0x290] sm:$0xff]
                %344 = vst [vmem:[%s260 + $0x148] sm:$0xff] %v343
                %v345 = vld [vmem:[%s259 + $0x2a0] sm:$0xff]
                %346 = vst [vmem:[%s260 + $0x150] sm:$0xff] %v345
                %v347 = vld [vmem:[%s259 + $0x2b0] sm:$0xff]
                %348 = vst [vmem:[%s260 + $0x158] sm:$0xff] %v347
                %v349 = vld [vmem:[%s259 + $0x2c0] sm:$0xff]
                %350 = vst [vmem:[%s260 + $0x160] sm:$0xff] %v349
                %v351 = vld [vmem:[%s259 + $0x2d0] sm:$0xff]
                %352 = vst [vmem:[%s260 + $0x168] sm:$0xff] %v351
                %v353 = vld [vmem:[%s259 + $0x2e0] sm:$0xff]
                %354 = vst [vmem:[%s260 + $0x170] sm:$0xff] %v353
                %v355 = vld [vmem:[%s259 + $0x2f0] sm:$0xff]
                %356 = vst [vmem:[%s260 + $0x178] sm:$0xff] %v355
                %v357 = vld [vmem:[%s259 + $0x300] sm:$0xff]
                %358 = vst [vmem:[%s260 + $0x180] sm:$0xff] %v357
                %v359 = vld [vmem:[%s259 + $0x310] sm:$0xff]
                %360 = vst [vmem:[%s260 + $0x188] sm:$0xff] %v359
                %v361 = vld [vmem:[%s259 + $0x320] sm:$0xff]
                %362 = vst [vmem:[%s260 + $0x190] sm:$0xff] %v361
                %v363 = vld [vmem:[%s259 + $0x330] sm:$0xff]
                %364 = vst [vmem:[%s260 + $0x198] sm:$0xff] %v363
                %v365 = vld [vmem:[%s259 + $0x340] sm:$0xff]
                %366 = vst [vmem:[%s260 + $0x1a0] sm:$0xff] %v365
                %v367 = vld [vmem:[%s259 + $0x350] sm:$0xff]
                %368 = vst [vmem:[%s260 + $0x1a8] sm:$0xff] %v367
                %v369 = vld [vmem:[%s259 + $0x360] sm:$0xff]
                %370 = vst [vmem:[%s260 + $0x1b0] sm:$0xff] %v369
                %v371 = vld [vmem:[%s259 + $0x370] sm:$0xff]
                %372 = vst [vmem:[%s260 + $0x1b8] sm:$0xff] %v371
                %v373 = vld [vmem:[%s259 + $0x380] sm:$0xff]
                %374 = vst [vmem:[%s260 + $0x1c0] sm:$0xff] %v373
                %v375 = vld [vmem:[%s259 + $0x390] sm:$0xff]
                %376 = vst [vmem:[%s260 + $0x1c8] sm:$0xff] %v375
                %v377 = vld [vmem:[%s259 + $0x3a0] sm:$0xff]
                %378 = vst [vmem:[%s260 + $0x1d0] sm:$0xff] %v377
                %v379 = vld [vmem:[%s259 + $0x3b0] sm:$0xff]
                %380 = vst [vmem:[%s260 + $0x1d8] sm:$0xff] %v379
                %v381 = vld [vmem:[%s259 + $0x3c0] sm:$0xff]
                %382 = vst [vmem:[%s260 + $0x1e0] sm:$0xff] %v381
                %v383 = vld [vmem:[%s259 + $0x3d0] sm:$0xff]
                %384 = vst [vmem:[%s260 + $0x1e8] sm:$0xff] %v383
                %v385 = vld [vmem:[%s259 + $0x3e0] sm:$0xff]
                %386 = vst [vmem:[%s260 + $0x1f0] sm:$0xff] %v385
                %v387 = vld [vmem:[%s259 + $0x3f0] sm:$0xff]
                %388 = vst [vmem:[%s260 + $0x1f8] sm:$0xff] %v387
                %v389 = vld [vmem:[%s259 + $0x400] sm:$0xff]
                %390 = vst [vmem:[%s260 + $0x200] sm:$0xff] %v389
                %v391 = vld [vmem:[%s259 + $0x410] sm:$0xff]
                %392 = vst [vmem:[%s260 + $0x208] sm:$0xff] %v391
                %v393 = vld [vmem:[%s259 + $0x420] sm:$0xff]
                %394 = vst [vmem:[%s260 + $0x210] sm:$0xff] %v393
                %v395 = vld [vmem:[%s259 + $0x430] sm:$0xff]
                %396 = vst [vmem:[%s260 + $0x218] sm:$0xff] %v395
                %v397 = vld [vmem:[%s259 + $0x440] sm:$0xff]
                %398 = vst [vmem:[%s260 + $0x220] sm:$0xff] %v397
                %v399 = vld [vmem:[%s259 + $0x450] sm:$0xff]
                %400 = vst [vmem:[%s260 + $0x228] sm:$0xff] %v399
                %v401 = vld [vmem:[%s259 + $0x460] sm:$0xff]
                %402 = vst [vmem:[%s260 + $0x230] sm:$0xff] %v401
                %v403 = vld [vmem:[%s259 + $0x470] sm:$0xff]
                %404 = vst [vmem:[%s260 + $0x238] sm:$0xff] %v403
                %v405 = vld [vmem:[%s259 + $0x480] sm:$0xff]
                %406 = vst [vmem:[%s260 + $0x240] sm:$0xff] %v405
                %v407 = vld [vmem:[%s259 + $0x490] sm:$0xff]
                %408 = vst [vmem:[%s260 + $0x248] sm:$0xff] %v407
                %v409 = vld [vmem:[%s259 + $0x4a0] sm:$0xff]
                %410 = vst [vmem:[%s260 + $0x250] sm:$0xff] %v409
                %v411 = vld [vmem:[%s259 + $0x4b0] sm:$0xff]
                %412 = vst [vmem:[%s260 + $0x258] sm:$0xff] %v411
                %v413 = vld [vmem:[%s259 + $0x4c0] sm:$0xff]
                %414 = vst [vmem:[%s260 + $0x260] sm:$0xff] %v413
                %v415 = vld [vmem:[%s259 + $0x4d0] sm:$0xff]
                %416 = vst [vmem:[%s260 + $0x268] sm:$0xff] %v415
                %v417 = vld [vmem:[%s259 + $0x4e0] sm:$0xff]
                %418 = vst [vmem:[%s260 + $0x270] sm:$0xff] %v417
                %v419 = vld [vmem:[%s259 + $0x4f0] sm:$0xff]
                %420 = vst [vmem:[%s260 + $0x278] sm:$0xff] %v419
                %v421 = vld [vmem:[%s259 + $0x500] sm:$0xff]
                %422 = vst [vmem:[%s260 + $0x280] sm:$0xff] %v421
                %v423 = vld [vmem:[%s259 + $0x510] sm:$0xff]
                %424 = vst [vmem:[%s260 + $0x288] sm:$0xff] %v423
                %v425 = vld [vmem:[%s259 + $0x520] sm:$0xff]
                %426 = vst [vmem:[%s260 + $0x290] sm:$0xff] %v425
                %v427 = vld [vmem:[%s259 + $0x530] sm:$0xff]
                %428 = vst [vmem:[%s260 + $0x298] sm:$0xff] %v427
                %v429 = vld [vmem:[%s259 + $0x540] sm:$0xff]
                %430 = vst [vmem:[%s260 + $0x2a0] sm:$0xff] %v429
                %v431 = vld [vmem:[%s259 + $0x550] sm:$0xff]
                %432 = vst [vmem:[%s260 + $0x2a8] sm:$0xff] %v431
                %v433 = vld [vmem:[%s259 + $0x560] sm:$0xff]
                %434 = vst [vmem:[%s260 + $0x2b0] sm:$0xff] %v433
                %v435 = vld [vmem:[%s259 + $0x570] sm:$0xff]
                %436 = vst [vmem:[%s260 + $0x2b8] sm:$0xff] %v435
                %v437 = vld [vmem:[%s259 + $0x580] sm:$0xff]
                %438 = vst [vmem:[%s260 + $0x2c0] sm:$0xff] %v437
                %v439 = vld [vmem:[%s259 + $0x590] sm:$0xff]
                %440 = vst [vmem:[%s260 + $0x2c8] sm:$0xff] %v439
                %v441 = vld [vmem:[%s259 + $0x5a0] sm:$0xff]
                %442 = vst [vmem:[%s260 + $0x2d0] sm:$0xff] %v441
                %v443 = vld [vmem:[%s259 + $0x5b0] sm:$0xff]
                %444 = vst [vmem:[%s260 + $0x2d8] sm:$0xff] %v443
                %v445 = vld [vmem:[%s259 + $0x5c0] sm:$0xff]
                %446 = vst [vmem:[%s260 + $0x2e0] sm:$0xff] %v445
                %v447 = vld [vmem:[%s259 + $0x5d0] sm:$0xff]
                %448 = vst [vmem:[%s260 + $0x2e8] sm:$0xff] %v447
                %v449 = vld [vmem:[%s259 + $0x5e0] sm:$0xff]
                %450 = vst [vmem:[%s260 + $0x2f0] sm:$0xff] %v449
                %v451 = vld [vmem:[%s259 + $0x5f0] sm:$0xff]
                %452 = vst [vmem:[%s260 + $0x2f8] sm:$0xff] %v451
                %v453 = vld [vmem:[%s259 + $0x600] sm:$0xff]
                %454 = vst [vmem:[%s260 + $0x300] sm:$0xff] %v453
                %v455 = vld [vmem:[%s259 + $0x610] sm:$0xff]
                %456 = vst [vmem:[%s260 + $0x308] sm:$0xff] %v455
                %v457 = vld [vmem:[%s259 + $0x620] sm:$0xff]
                %458 = vst [vmem:[%s260 + $0x310] sm:$0xff] %v457
                %v459 = vld [vmem:[%s259 + $0x630] sm:$0xff]
                %460 = vst [vmem:[%s260 + $0x318] sm:$0xff] %v459
                %v461 = vld [vmem:[%s259 + $0x640] sm:$0xff]
                %462 = vst [vmem:[%s260 + $0x320] sm:$0xff] %v461
                %v463 = vld [vmem:[%s259 + $0x650] sm:$0xff]
                %464 = vst [vmem:[%s260 + $0x328] sm:$0xff] %v463
                %v465 = vld [vmem:[%s259 + $0x660] sm:$0xff]
                %466 = vst [vmem:[%s260 + $0x330] sm:$0xff] %v465
                %v467 = vld [vmem:[%s259 + $0x670] sm:$0xff]
                %468 = vst [vmem:[%s260 + $0x338] sm:$0xff] %v467
                %v469 = vld [vmem:[%s259 + $0x680] sm:$0xff]
                %470 = vst [vmem:[%s260 + $0x340] sm:$0xff] %v469
                %v471 = vld [vmem:[%s259 + $0x690] sm:$0xff]
                %472 = vst [vmem:[%s260 + $0x348] sm:$0xff] %v471
                %v473 = vld [vmem:[%s259 + $0x6a0] sm:$0xff]
                %474 = vst [vmem:[%s260 + $0x350] sm:$0xff] %v473
                %v475 = vld [vmem:[%s259 + $0x6b0] sm:$0xff]
                %476 = vst [vmem:[%s260 + $0x358] sm:$0xff] %v475
                %v477 = vld [vmem:[%s259 + $0x6c0] sm:$0xff]
                %478 = vst [vmem:[%s260 + $0x360] sm:$0xff] %v477
                %v479 = vld [vmem:[%s259 + $0x6d0] sm:$0xff]
                %480 = vst [vmem:[%s260 + $0x368] sm:$0xff] %v479
                %v481 = vld [vmem:[%s259 + $0x6e0] sm:$0xff]
                %482 = vst [vmem:[%s260 + $0x370] sm:$0xff] %v481
                %v483 = vld [vmem:[%s259 + $0x6f0] sm:$0xff]
                %484 = vst [vmem:[%s260 + $0x378] sm:$0xff] %v483
                %v485 = vld [vmem:[%s259 + $0x700] sm:$0xff]
                %486 = vst [vmem:[%s260 + $0x380] sm:$0xff] %v485
                %v487 = vld [vmem:[%s259 + $0x710] sm:$0xff]
                %488 = vst [vmem:[%s260 + $0x388] sm:$0xff] %v487
                %v489 = vld [vmem:[%s259 + $0x720] sm:$0xff]
                %490 = vst [vmem:[%s260 + $0x390] sm:$0xff] %v489
                %v491 = vld [vmem:[%s259 + $0x730] sm:$0xff]
                %492 = vst [vmem:[%s260 + $0x398] sm:$0xff] %v491
                %v493 = vld [vmem:[%s259 + $0x740] sm:$0xff]
                %494 = vst [vmem:[%s260 + $0x3a0] sm:$0xff] %v493
                %v495 = vld [vmem:[%s259 + $0x750] sm:$0xff]
                %496 = vst [vmem:[%s260 + $0x3a8] sm:$0xff] %v495
                %v497 = vld [vmem:[%s259 + $0x760] sm:$0xff]
                %498 = vst [vmem:[%s260 + $0x3b0] sm:$0xff] %v497
                %v499 = vld [vmem:[%s259 + $0x770] sm:$0xff]
                %500 = vst [vmem:[%s260 + $0x3b8] sm:$0xff] %v499
                %v501 = vld [vmem:[%s259 + $0x780] sm:$0xff]
                %502 = vst [vmem:[%s260 + $0x3c0] sm:$0xff] %v501
                %v503 = vld [vmem:[%s259 + $0x790] sm:$0xff]
                %504 = vst [vmem:[%s260 + $0x3c8] sm:$0xff] %v503
                %v505 = vld [vmem:[%s259 + $0x7a0] sm:$0xff]
                %506 = vst [vmem:[%s260 + $0x3d0] sm:$0xff] %v505
                %v507 = vld [vmem:[%s259 + $0x7b0] sm:$0xff]
                %508 = vst [vmem:[%s260 + $0x3d8] sm:$0xff] %v507
                %v509 = vld [vmem:[%s259 + $0x7c0] sm:$0xff]
                %510 = vst [vmem:[%s260 + $0x3e0] sm:$0xff] %v509
                %v511 = vld [vmem:[%s259 + $0x7d0] sm:$0xff]
                %512 = vst [vmem:[%s260 + $0x3e8] sm:$0xff] %v511
                %v513 = vld [vmem:[%s259 + $0x7e0] sm:$0xff]
                %514 = vst [vmem:[%s260 + $0x3f0] sm:$0xff] %v513
                %v515 = vld [vmem:[%s259 + $0x7f0] sm:$0xff]
                %516 = vst [vmem:[%s260 + $0x3f8] sm:$0xff] %v515
                %v517 = vld [vmem:[%s259 + $0x800] sm:$0xff]
                %518 = vst [vmem:[%s260 + $0x400] sm:$0xff] %v517
                %v519 = vld [vmem:[%s259 + $0x810] sm:$0xff]
                %520 = vst [vmem:[%s260 + $0x408] sm:$0xff] %v519
                %v521 = vld [vmem:[%s259 + $0x820] sm:$0xff]
                %522 = vst [vmem:[%s260 + $0x410] sm:$0xff] %v521
                %v523 = vld [vmem:[%s259 + $0x830] sm:$0xff]
                %524 = vst [vmem:[%s260 + $0x418] sm:$0xff] %v523
                %v525 = vld [vmem:[%s259 + $0x840] sm:$0xff]
                %526 = vst [vmem:[%s260 + $0x420] sm:$0xff] %v525
                %v527 = vld [vmem:[%s259 + $0x850] sm:$0xff]
                %528 = vst [vmem:[%s260 + $0x428] sm:$0xff] %v527
                %v529 = vld [vmem:[%s259 + $0x860] sm:$0xff]
                %530 = vst [vmem:[%s260 + $0x430] sm:$0xff] %v529
                %v531 = vld [vmem:[%s259 + $0x870] sm:$0xff]
                %532 = vst [vmem:[%s260 + $0x438] sm:$0xff] %v531
                %v533 = vld [vmem:[%s259 + $0x880] sm:$0xff]
                %534 = vst [vmem:[%s260 + $0x440] sm:$0xff] %v533
                %v535 = vld [vmem:[%s259 + $0x890] sm:$0xff]
                %536 = vst [vmem:[%s260 + $0x448] sm:$0xff] %v535
                %v537 = vld [vmem:[%s259 + $0x8a0] sm:$0xff]
                %538 = vst [vmem:[%s260 + $0x450] sm:$0xff] %v537
                %v539 = vld [vmem:[%s259 + $0x8b0] sm:$0xff]
                %540 = vst [vmem:[%s260 + $0x458] sm:$0xff] %v539
                %v541 = vld [vmem:[%s259 + $0x8c0] sm:$0xff]
                %542 = vst [vmem:[%s260 + $0x460] sm:$0xff] %v541
                %v543 = vld [vmem:[%s259 + $0x8d0] sm:$0xff]
                %544 = vst [vmem:[%s260 + $0x468] sm:$0xff] %v543
                %v545 = vld [vmem:[%s259 + $0x8e0] sm:$0xff]
                %546 = vst [vmem:[%s260 + $0x470] sm:$0xff] %v545
                %v547 = vld [vmem:[%s259 + $0x8f0] sm:$0xff]
                %548 = vst [vmem:[%s260 + $0x478] sm:$0xff] %v547
                %v549 = vld [vmem:[%s259 + $0x900] sm:$0xff]
                %550 = vst [vmem:[%s260 + $0x480] sm:$0xff] %v549
                %v551 = vld [vmem:[%s259 + $0x910] sm:$0xff]
                %552 = vst [vmem:[%s260 + $0x488] sm:$0xff] %v551
                %v553 = vld [vmem:[%s259 + $0x920] sm:$0xff]
                %554 = vst [vmem:[%s260 + $0x490] sm:$0xff] %v553
                %v555 = vld [vmem:[%s259 + $0x930] sm:$0xff]
                %556 = vst [vmem:[%s260 + $0x498] sm:$0xff] %v555
                %v557 = vld [vmem:[%s259 + $0x940] sm:$0xff]
                %558 = vst [vmem:[%s260 + $0x4a0] sm:$0xff] %v557
                %v559 = vld [vmem:[%s259 + $0x950] sm:$0xff]
                %560 = vst [vmem:[%s260 + $0x4a8] sm:$0xff] %v559
                %v561 = vld [vmem:[%s259 + $0x960] sm:$0xff]
                %562 = vst [vmem:[%s260 + $0x4b0] sm:$0xff] %v561
                %v563 = vld [vmem:[%s259 + $0x970] sm:$0xff]
                %564 = vst [vmem:[%s260 + $0x4b8] sm:$0xff] %v563
                %v565 = vld [vmem:[%s259 + $0x980] sm:$0xff]
                %566 = vst [vmem:[%s260 + $0x4c0] sm:$0xff] %v565
                %v567 = vld [vmem:[%s259 + $0x990] sm:$0xff]
                %568 = vst [vmem:[%s260 + $0x4c8] sm:$0xff] %v567
                %v569 = vld [vmem:[%s259 + $0x9a0] sm:$0xff]
                %570 = vst [vmem:[%s260 + $0x4d0] sm:$0xff] %v569
                %v571 = vld [vmem:[%s259 + $0x9b0] sm:$0xff]
                %572 = vst [vmem:[%s260 + $0x4d8] sm:$0xff] %v571
                %v573 = vld [vmem:[%s259 + $0x9c0] sm:$0xff]
                %574 = vst [vmem:[%s260 + $0x4e0] sm:$0xff] %v573
                %v575 = vld [vmem:[%s259 + $0x9d0] sm:$0xff]
                %576 = vst [vmem:[%s260 + $0x4e8] sm:$0xff] %v575
                %v577 = vld [vmem:[%s259 + $0x9e0] sm:$0xff]
                %578 = vst [vmem:[%s260 + $0x4f0] sm:$0xff] %v577
                %v579 = vld [vmem:[%s259 + $0x9f0] sm:$0xff]
                %580 = vst [vmem:[%s260 + $0x4f8] sm:$0xff] %v579
                %v581 = vld [vmem:[%s259 + $0xa00] sm:$0xff]
                %582 = vst [vmem:[%s260 + $0x500] sm:$0xff] %v581
                %v583 = vld [vmem:[%s259 + $0xa10] sm:$0xff]
                %584 = vst [vmem:[%s260 + $0x508] sm:$0xff] %v583
                %v585 = vld [vmem:[%s259 + $0xa20] sm:$0xff]
                %586 = vst [vmem:[%s260 + $0x510] sm:$0xff] %v585
                %v587 = vld [vmem:[%s259 + $0xa30] sm:$0xff]
                %588 = vst [vmem:[%s260 + $0x518] sm:$0xff] %v587
                %v589 = vld [vmem:[%s259 + $0xa40] sm:$0xff]
                %590 = vst [vmem:[%s260 + $0x520] sm:$0xff] %v589
                %v591 = vld [vmem:[%s259 + $0xa50] sm:$0xff]
                %592 = vst [vmem:[%s260 + $0x528] sm:$0xff] %v591
                %v593 = vld [vmem:[%s259 + $0xa60] sm:$0xff]
                %594 = vst [vmem:[%s260 + $0x530] sm:$0xff] %v593
                %v595 = vld [vmem:[%s259 + $0xa70] sm:$0xff]
                %596 = vst [vmem:[%s260 + $0x538] sm:$0xff] %v595
                %v597 = vld [vmem:[%s259 + $0xa80] sm:$0xff]
                %598 = vst [vmem:[%s260 + $0x540] sm:$0xff] %v597
                %v599 = vld [vmem:[%s259 + $0xa90] sm:$0xff]
                %600 = vst [vmem:[%s260 + $0x548] sm:$0xff] %v599
                %v601 = vld [vmem:[%s259 + $0xaa0] sm:$0xff]
                %602 = vst [vmem:[%s260 + $0x550] sm:$0xff] %v601
                %v603 = vld [vmem:[%s259 + $0xab0] sm:$0xff]
                %604 = vst [vmem:[%s260 + $0x558] sm:$0xff] %v603
                %v605 = vld [vmem:[%s259 + $0xac0] sm:$0xff]
                %606 = vst [vmem:[%s260 + $0x560] sm:$0xff] %v605
                %v607 = vld [vmem:[%s259 + $0xad0] sm:$0xff]
                %608 = vst [vmem:[%s260 + $0x568] sm:$0xff] %v607
                %v609 = vld [vmem:[%s259 + $0xae0] sm:$0xff]
                %610 = vst [vmem:[%s260 + $0x570] sm:$0xff] %v609
                %v611 = vld [vmem:[%s259 + $0xaf0] sm:$0xff]
                %612 = vst [vmem:[%s260 + $0x578] sm:$0xff] %v611
                %v613 = vld [vmem:[%s259 + $0xb00] sm:$0xff]
                %614 = vst [vmem:[%s260 + $0x580] sm:$0xff] %v613
                %v615 = vld [vmem:[%s259 + $0xb10] sm:$0xff]
                %616 = vst [vmem:[%s260 + $0x588] sm:$0xff] %v615
                %v617 = vld [vmem:[%s259 + $0xb20] sm:$0xff]
                %618 = vst [vmem:[%s260 + $0x590] sm:$0xff] %v617
                %v619 = vld [vmem:[%s259 + $0xb30] sm:$0xff]
                %620 = vst [vmem:[%s260 + $0x598] sm:$0xff] %v619
                %v621 = vld [vmem:[%s259 + $0xb40] sm:$0xff]
                %622 = vst [vmem:[%s260 + $0x5a0] sm:$0xff] %v621
                %v623 = vld [vmem:[%s259 + $0xb50] sm:$0xff]
                %624 = vst [vmem:[%s260 + $0x5a8] sm:$0xff] %v623
                %v625 = vld [vmem:[%s259 + $0xb60] sm:$0xff]
                %626 = vst [vmem:[%s260 + $0x5b0] sm:$0xff] %v625
                %v627 = vld [vmem:[%s259 + $0xb70] sm:$0xff]
                %628 = vst [vmem:[%s260 + $0x5b8] sm:$0xff] %v627
                %v629 = vld [vmem:[%s259 + $0xb80] sm:$0xff]
                %630 = vst [vmem:[%s260 + $0x5c0] sm:$0xff] %v629
                %v631 = vld [vmem:[%s259 + $0xb90] sm:$0xff]
                %632 = vst [vmem:[%s260 + $0x5c8] sm:$0xff] %v631
                %v633 = vld [vmem:[%s259 + $0xba0] sm:$0xff]
                %634 = vst [vmem:[%s260 + $0x5d0] sm:$0xff] %v633
                %v635 = vld [vmem:[%s259 + $0xbb0] sm:$0xff]
                %636 = vst [vmem:[%s260 + $0x5d8] sm:$0xff] %v635
                %v637 = vld [vmem:[%s259 + $0xbc0] sm:$0xff]
                %638 = vst [vmem:[%s260 + $0x5e0] sm:$0xff] %v637
                %v639 = vld [vmem:[%s259 + $0xbd0] sm:$0xff]
                %640 = vst [vmem:[%s260 + $0x5e8] sm:$0xff] %v639
                %v641 = vld [vmem:[%s259 + $0xbe0] sm:$0xff]
                %642 = vst [vmem:[%s260 + $0x5f0] sm:$0xff] %v641
                %v643 = vld [vmem:[%s259 + $0xbf0] sm:$0xff]
                %644 = vst [vmem:[%s260 + $0x5f8] sm:$0xff] %v643
                %v645 = vld [vmem:[%s259 + $0xc00] sm:$0xff]
                %646 = vst [vmem:[%s260 + $0x600] sm:$0xff] %v645
                %v647 = vld [vmem:[%s259 + $0xc10] sm:$0xff]
                %648 = vst [vmem:[%s260 + $0x608] sm:$0xff] %v647
                %v649 = vld [vmem:[%s259 + $0xc20] sm:$0xff]
                %650 = vst [vmem:[%s260 + $0x610] sm:$0xff] %v649
                %v651 = vld [vmem:[%s259 + $0xc30] sm:$0xff]
                %652 = vst [vmem:[%s260 + $0x618] sm:$0xff] %v651
                %v653 = vld [vmem:[%s259 + $0xc40] sm:$0xff]
                %654 = vst [vmem:[%s260 + $0x620] sm:$0xff] %v653
                %v655 = vld [vmem:[%s259 + $0xc50] sm:$0xff]
                %656 = vst [vmem:[%s260 + $0x628] sm:$0xff] %v655
                %v657 = vld [vmem:[%s259 + $0xc60] sm:$0xff]
                %658 = vst [vmem:[%s260 + $0x630] sm:$0xff] %v657
                %v659 = vld [vmem:[%s259 + $0xc70] sm:$0xff]
                %660 = vst [vmem:[%s260 + $0x638] sm:$0xff] %v659
                %v661 = vld [vmem:[%s259 + $0xc80] sm:$0xff]
                %662 = vst [vmem:[%s260 + $0x640] sm:$0xff] %v661
                %v663 = vld [vmem:[%s259 + $0xc90] sm:$0xff]
                %664 = vst [vmem:[%s260 + $0x648] sm:$0xff] %v663
                %v665 = vld [vmem:[%s259 + $0xca0] sm:$0xff]
                %666 = vst [vmem:[%s260 + $0x650] sm:$0xff] %v665
                %v667 = vld [vmem:[%s259 + $0xcb0] sm:$0xff]
                %668 = vst [vmem:[%s260 + $0x658] sm:$0xff] %v667
                %v669 = vld [vmem:[%s259 + $0xcc0] sm:$0xff]
                %670 = vst [vmem:[%s260 + $0x660] sm:$0xff] %v669
                %v671 = vld [vmem:[%s259 + $0xcd0] sm:$0xff]
                %672 = vst [vmem:[%s260 + $0x668] sm:$0xff] %v671
                %v673 = vld [vmem:[%s259 + $0xce0] sm:$0xff]
                %674 = vst [vmem:[%s260 + $0x670] sm:$0xff] %v673
                %v675 = vld [vmem:[%s259 + $0xcf0] sm:$0xff]
                %676 = vst [vmem:[%s260 + $0x678] sm:$0xff] %v675
                %v677 = vld [vmem:[%s259 + $0xd00] sm:$0xff]
                %678 = vst [vmem:[%s260 + $0x680] sm:$0xff] %v677
                %v679 = vld [vmem:[%s259 + $0xd10] sm:$0xff]
                %680 = vst [vmem:[%s260 + $0x688] sm:$0xff] %v679
                %v681 = vld [vmem:[%s259 + $0xd20] sm:$0xff]
                %682 = vst [vmem:[%s260 + $0x690] sm:$0xff] %v681
                %v683 = vld [vmem:[%s259 + $0xd30] sm:$0xff]
                %684 = vst [vmem:[%s260 + $0x698] sm:$0xff] %v683
                %v685 = vld [vmem:[%s259 + $0xd40] sm:$0xff]
                %686 = vst [vmem:[%s260 + $0x6a0] sm:$0xff] %v685
                %v687 = vld [vmem:[%s259 + $0xd50] sm:$0xff]
                %688 = vst [vmem:[%s260 + $0x6a8] sm:$0xff] %v687
                %v689 = vld [vmem:[%s259 + $0xd60] sm:$0xff]
                %690 = vst [vmem:[%s260 + $0x6b0] sm:$0xff] %v689
                %v691 = vld [vmem:[%s259 + $0xd70] sm:$0xff]
                %692 = vst [vmem:[%s260 + $0x6b8] sm:$0xff] %v691
                %v693 = vld [vmem:[%s259 + $0xd80] sm:$0xff]
                %694 = vst [vmem:[%s260 + $0x6c0] sm:$0xff] %v693
                %v695 = vld [vmem:[%s259 + $0xd90] sm:$0xff]
                %696 = vst [vmem:[%s260 + $0x6c8] sm:$0xff] %v695
                %v697 = vld [vmem:[%s259 + $0xda0] sm:$0xff]
                %698 = vst [vmem:[%s260 + $0x6d0] sm:$0xff] %v697
                %v699 = vld [vmem:[%s259 + $0xdb0] sm:$0xff]
                %700 = vst [vmem:[%s260 + $0x6d8] sm:$0xff] %v699
                %v701 = vld [vmem:[%s259 + $0xdc0] sm:$0xff]
                %702 = vst [vmem:[%s260 + $0x6e0] sm:$0xff] %v701
                %v703 = vld [vmem:[%s259 + $0xdd0] sm:$0xff]
                %704 = vst [vmem:[%s260 + $0x6e8] sm:$0xff] %v703
                %v705 = vld [vmem:[%s259 + $0xde0] sm:$0xff]
                %706 = vst [vmem:[%s260 + $0x6f0] sm:$0xff] %v705
                %v707 = vld [vmem:[%s259 + $0xdf0] sm:$0xff]
                %708 = vst [vmem:[%s260 + $0x6f8] sm:$0xff] %v707
                %v709 = vld [vmem:[%s259 + $0xe00] sm:$0xff]
                %710 = vst [vmem:[%s260 + $0x700] sm:$0xff] %v709
                %v711 = vld [vmem:[%s259 + $0xe10] sm:$0xff]
                %712 = vst [vmem:[%s260 + $0x708] sm:$0xff] %v711
                %v713 = vld [vmem:[%s259 + $0xe20] sm:$0xff]
                %714 = vst [vmem:[%s260 + $0x710] sm:$0xff] %v713
                %v715 = vld [vmem:[%s259 + $0xe30] sm:$0xff]
                %716 = vst [vmem:[%s260 + $0x718] sm:$0xff] %v715
                %v717 = vld [vmem:[%s259 + $0xe40] sm:$0xff]
                %718 = vst [vmem:[%s260 + $0x720] sm:$0xff] %v717
                %v719 = vld [vmem:[%s259 + $0xe50] sm:$0xff]
                %720 = vst [vmem:[%s260 + $0x728] sm:$0xff] %v719
                %v721 = vld [vmem:[%s259 + $0xe60] sm:$0xff]
                %722 = vst [vmem:[%s260 + $0x730] sm:$0xff] %v721
                %v723 = vld [vmem:[%s259 + $0xe70] sm:$0xff]
                %724 = vst [vmem:[%s260 + $0x738] sm:$0xff] %v723
                %v725 = vld [vmem:[%s259 + $0xe80] sm:$0xff]
                %726 = vst [vmem:[%s260 + $0x740] sm:$0xff] %v725
                %v727 = vld [vmem:[%s259 + $0xe90] sm:$0xff]
                %728 = vst [vmem:[%s260 + $0x748] sm:$0xff] %v727
                %v729 = vld [vmem:[%s259 + $0xea0] sm:$0xff]
                %730 = vst [vmem:[%s260 + $0x750] sm:$0xff] %v729
                %v731 = vld [vmem:[%s259 + $0xeb0] sm:$0xff]
                %732 = vst [vmem:[%s260 + $0x758] sm:$0xff] %v731
                %v733 = vld [vmem:[%s259 + $0xec0] sm:$0xff]
                %734 = vst [vmem:[%s260 + $0x760] sm:$0xff] %v733
                %v735 = vld [vmem:[%s259 + $0xed0] sm:$0xff]
                %736 = vst [vmem:[%s260 + $0x768] sm:$0xff] %v735
                %v737 = vld [vmem:[%s259 + $0xee0] sm:$0xff]
                %738 = vst [vmem:[%s260 + $0x770] sm:$0xff] %v737
                %v739 = vld [vmem:[%s259 + $0xef0] sm:$0xff]
                %740 = vst [vmem:[%s260 + $0x778] sm:$0xff] %v739
                %v741 = vld [vmem:[%s259 + $0xf00] sm:$0xff]
                %742 = vst [vmem:[%s260 + $0x780] sm:$0xff] %v741
                %v743 = vld [vmem:[%s259 + $0xf10] sm:$0xff]
                %744 = vst [vmem:[%s260 + $0x788] sm:$0xff] %v743
                %v745 = vld [vmem:[%s259 + $0xf20] sm:$0xff]
                %746 = vst [vmem:[%s260 + $0x790] sm:$0xff] %v745
                %v747 = vld [vmem:[%s259 + $0xf30] sm:$0xff]
                %748 = vst [vmem:[%s260 + $0x798] sm:$0xff] %v747
                %v749 = vld [vmem:[%s259 + $0xf40] sm:$0xff]
                %750 = vst [vmem:[%s260 + $0x7a0] sm:$0xff] %v749
                %v751 = vld [vmem:[%s259 + $0xf50] sm:$0xff]
                %752 = vst [vmem:[%s260 + $0x7a8] sm:$0xff] %v751
                %v753 = vld [vmem:[%s259 + $0xf60] sm:$0xff]
                %754 = vst [vmem:[%s260 + $0x7b0] sm:$0xff] %v753
                %v755 = vld [vmem:[%s259 + $0xf70] sm:$0xff]
                %756 = vst [vmem:[%s260 + $0x7b8] sm:$0xff] %v755
                %v757 = vld [vmem:[%s259 + $0xf80] sm:$0xff]
                %758 = vst [vmem:[%s260 + $0x7c0] sm:$0xff] %v757
                %v759 = vld [vmem:[%s259 + $0xf90] sm:$0xff]
                %760 = vst [vmem:[%s260 + $0x7c8] sm:$0xff] %v759
                %v761 = vld [vmem:[%s259 + $0xfa0] sm:$0xff]
                %762 = vst [vmem:[%s260 + $0x7d0] sm:$0xff] %v761
                %v763 = vld [vmem:[%s259 + $0xfb0] sm:$0xff]
                %764 = vst [vmem:[%s260 + $0x7d8] sm:$0xff] %v763
                %v765 = vld [vmem:[%s259 + $0xfc0] sm:$0xff]
                %766 = vst [vmem:[%s260 + $0x7e0] sm:$0xff] %v765
                %v767 = vld [vmem:[%s259 + $0xfd0] sm:$0xff]
                %768 = vst [vmem:[%s260 + $0x7e8] sm:$0xff] %v767
                %v769 = vld [vmem:[%s259 + $0xfe0] sm:$0xff]
                %770 = vst [vmem:[%s260 + $0x7f0] sm:$0xff] %v769
                %v771 = vld [vmem:[%s259 + $0xff0] sm:$0xff]
                %772 = vst [vmem:[%s260 + $0x7f8] sm:$0xff] %v771
                %v773 = vld [vmem:[%s259 + $0x1000] sm:$0xff]
                %774 = vst [vmem:[%s260 + $0x800] sm:$0xff] %v773
                %v775 = vld [vmem:[%s259 + $0x1010] sm:$0xff]
                %776 = vst [vmem:[%s260 + $0x808] sm:$0xff] %v775
                %v777 = vld [vmem:[%s259 + $0x1020] sm:$0xff]
                %778 = vst [vmem:[%s260 + $0x810] sm:$0xff] %v777
                %v779 = vld [vmem:[%s259 + $0x1030] sm:$0xff]
                %780 = vst [vmem:[%s260 + $0x818] sm:$0xff] %v779
                %v781 = vld [vmem:[%s259 + $0x1040] sm:$0xff]
                %782 = vst [vmem:[%s260 + $0x820] sm:$0xff] %v781
                %v783 = vld [vmem:[%s259 + $0x1050] sm:$0xff]
                %784 = vst [vmem:[%s260 + $0x828] sm:$0xff] %v783
                %v785 = vld [vmem:[%s259 + $0x1060] sm:$0xff]
                %786 = vst [vmem:[%s260 + $0x830] sm:$0xff] %v785
                %v787 = vld [vmem:[%s259 + $0x1070] sm:$0xff]
                %788 = vst [vmem:[%s260 + $0x838] sm:$0xff] %v787
                %v789 = vld [vmem:[%s259 + $0x1080] sm:$0xff]
                %790 = vst [vmem:[%s260 + $0x840] sm:$0xff] %v789
                %v791 = vld [vmem:[%s259 + $0x1090] sm:$0xff]
                %792 = vst [vmem:[%s260 + $0x848] sm:$0xff] %v791
                %v793 = vld [vmem:[%s259 + $0x10a0] sm:$0xff]
                %794 = vst [vmem:[%s260 + $0x850] sm:$0xff] %v793
                %v795 = vld [vmem:[%s259 + $0x10b0] sm:$0xff]
                %796 = vst [vmem:[%s260 + $0x858] sm:$0xff] %v795
                %v797 = vld [vmem:[%s259 + $0x10c0] sm:$0xff]
                %798 = vst [vmem:[%s260 + $0x860] sm:$0xff] %v797
                %v799 = vld [vmem:[%s259 + $0x10d0] sm:$0xff]
                %800 = vst [vmem:[%s260 + $0x868] sm:$0xff] %v799
                %v801 = vld [vmem:[%s259 + $0x10e0] sm:$0xff]
                %802 = vst [vmem:[%s260 + $0x870] sm:$0xff] %v801
                %v803 = vld [vmem:[%s259 + $0x10f0] sm:$0xff]
                %804 = vst [vmem:[%s260 + $0x878] sm:$0xff] %v803
                %v805 = vld [vmem:[%s259 + $0x1100] sm:$0xff]
                %806 = vst [vmem:[%s260 + $0x880] sm:$0xff] %v805
                %v807 = vld [vmem:[%s259 + $0x1110] sm:$0xff]
                %808 = vst [vmem:[%s260 + $0x888] sm:$0xff] %v807
                %v809 = vld [vmem:[%s259 + $0x1120] sm:$0xff]
                %810 = vst [vmem:[%s260 + $0x890] sm:$0xff] %v809
                %v811 = vld [vmem:[%s259 + $0x1130] sm:$0xff]
                %812 = vst [vmem:[%s260 + $0x898] sm:$0xff] %v811
                %v813 = vld [vmem:[%s259 + $0x1140] sm:$0xff]
                %814 = vst [vmem:[%s260 + $0x8a0] sm:$0xff] %v813
                %v815 = vld [vmem:[%s259 + $0x1150] sm:$0xff]
                %816 = vst [vmem:[%s260 + $0x8a8] sm:$0xff] %v815
                %v817 = vld [vmem:[%s259 + $0x1160] sm:$0xff]
                %818 = vst [vmem:[%s260 + $0x8b0] sm:$0xff] %v817
                %v819 = vld [vmem:[%s259 + $0x1170] sm:$0xff]
                %820 = vst [vmem:[%s260 + $0x8b8] sm:$0xff] %v819
                %v821 = vld [vmem:[%s259 + $0x1180] sm:$0xff]
                %822 = vst [vmem:[%s260 + $0x8c0] sm:$0xff] %v821
                %v823 = vld [vmem:[%s259 + $0x1190] sm:$0xff]
                %824 = vst [vmem:[%s260 + $0x8c8] sm:$0xff] %v823
                %v825 = vld [vmem:[%s259 + $0x11a0] sm:$0xff]
                %826 = vst [vmem:[%s260 + $0x8d0] sm:$0xff] %v825
                %v827 = vld [vmem:[%s259 + $0x11b0] sm:$0xff]
                %828 = vst [vmem:[%s260 + $0x8d8] sm:$0xff] %v827
                %v829 = vld [vmem:[%s259 + $0x11c0] sm:$0xff]
                %830 = vst [vmem:[%s260 + $0x8e0] sm:$0xff] %v829
                %v831 = vld [vmem:[%s259 + $0x11d0] sm:$0xff]
                %832 = vst [vmem:[%s260 + $0x8e8] sm:$0xff] %v831
                %v833 = vld [vmem:[%s259 + $0x11e0] sm:$0xff]
                %834 = vst [vmem:[%s260 + $0x8f0] sm:$0xff] %v833
                %v835 = vld [vmem:[%s259 + $0x11f0] sm:$0xff]
                %836 = vst [vmem:[%s260 + $0x8f8] sm:$0xff] %v835
                %v837 = vld [vmem:[%s259 + $0x1200] sm:$0xff]
                %838 = vst [vmem:[%s260 + $0x900] sm:$0xff] %v837
                %v839 = vld [vmem:[%s259 + $0x1210] sm:$0xff]
                %840 = vst [vmem:[%s260 + $0x908] sm:$0xff] %v839
                %v841 = vld [vmem:[%s259 + $0x1220] sm:$0xff]
                %842 = vst [vmem:[%s260 + $0x910] sm:$0xff] %v841
                %v843 = vld [vmem:[%s259 + $0x1230] sm:$0xff]
                %844 = vst [vmem:[%s260 + $0x918] sm:$0xff] %v843
                %v845 = vld [vmem:[%s259 + $0x1240] sm:$0xff]
                %846 = vst [vmem:[%s260 + $0x920] sm:$0xff] %v845
                %v847 = vld [vmem:[%s259 + $0x1250] sm:$0xff]
                %848 = vst [vmem:[%s260 + $0x928] sm:$0xff] %v847
                %v849 = vld [vmem:[%s259 + $0x1260] sm:$0xff]
                %850 = vst [vmem:[%s260 + $0x930] sm:$0xff] %v849
                %v851 = vld [vmem:[%s259 + $0x1270] sm:$0xff]
                %852 = vst [vmem:[%s260 + $0x938] sm:$0xff] %v851
                %v853 = vld [vmem:[%s259 + $0x1280] sm:$0xff]
                %854 = vst [vmem:[%s260 + $0x940] sm:$0xff] %v853
                %v855 = vld [vmem:[%s259 + $0x1290] sm:$0xff]
                %856 = vst [vmem:[%s260 + $0x948] sm:$0xff] %v855
                %v857 = vld [vmem:[%s259 + $0x12a0] sm:$0xff]
                %858 = vst [vmem:[%s260 + $0x950] sm:$0xff] %v857
                %v859 = vld [vmem:[%s259 + $0x12b0] sm:$0xff]
                %860 = vst [vmem:[%s260 + $0x958] sm:$0xff] %v859
                %v861 = vld [vmem:[%s259 + $0x12c0] sm:$0xff]
                %862 = vst [vmem:[%s260 + $0x960] sm:$0xff] %v861
                %v863 = vld [vmem:[%s259 + $0x12d0] sm:$0xff]
                %864 = vst [vmem:[%s260 + $0x968] sm:$0xff] %v863
                %v865 = vld [vmem:[%s259 + $0x12e0] sm:$0xff]
                %866 = vst [vmem:[%s260 + $0x970] sm:$0xff] %v865
                %v867 = vld [vmem:[%s259 + $0x12f0] sm:$0xff]
                %868 = vst [vmem:[%s260 + $0x978] sm:$0xff] %v867
                %v869 = vld [vmem:[%s259 + $0x1300] sm:$0xff]
                %870 = vst [vmem:[%s260 + $0x980] sm:$0xff] %v869
                %v871 = vld [vmem:[%s259 + $0x1310] sm:$0xff]
                %872 = vst [vmem:[%s260 + $0x988] sm:$0xff] %v871
                %v873 = vld [vmem:[%s259 + $0x1320] sm:$0xff]
                %874 = vst [vmem:[%s260 + $0x990] sm:$0xff] %v873
                %v875 = vld [vmem:[%s259 + $0x1330] sm:$0xff]
                %876 = vst [vmem:[%s260 + $0x998] sm:$0xff] %v875
                %v877 = vld [vmem:[%s259 + $0x1340] sm:$0xff]
                %878 = vst [vmem:[%s260 + $0x9a0] sm:$0xff] %v877
                %v879 = vld [vmem:[%s259 + $0x1350] sm:$0xff]
                %880 = vst [vmem:[%s260 + $0x9a8] sm:$0xff] %v879
                %v881 = vld [vmem:[%s259 + $0x1360] sm:$0xff]
                %882 = vst [vmem:[%s260 + $0x9b0] sm:$0xff] %v881
                %v883 = vld [vmem:[%s259 + $0x1370] sm:$0xff]
                %884 = vst [vmem:[%s260 + $0x9b8] sm:$0xff] %v883
                %v885 = vld [vmem:[%s259 + $0x1380] sm:$0xff]
                %886 = vst [vmem:[%s260 + $0x9c0] sm:$0xff] %v885
                %v887 = vld [vmem:[%s259 + $0x1390] sm:$0xff]
                %888 = vst [vmem:[%s260 + $0x9c8] sm:$0xff] %v887
                %v889 = vld [vmem:[%s259 + $0x13a0] sm:$0xff]
                %890 = vst [vmem:[%s260 + $0x9d0] sm:$0xff] %v889
                %v891 = vld [vmem:[%s259 + $0x13b0] sm:$0xff]
                %892 = vst [vmem:[%s260 + $0x9d8] sm:$0xff] %v891
                %v893 = vld [vmem:[%s259 + $0x13c0] sm:$0xff]
                %894 = vst [vmem:[%s260 + $0x9e0] sm:$0xff] %v893
                %v895 = vld [vmem:[%s259 + $0x13d0] sm:$0xff]
                %896 = vst [vmem:[%s260 + $0x9e8] sm:$0xff] %v895
                %v897 = vld [vmem:[%s259 + $0x13e0] sm:$0xff]
                %898 = vst [vmem:[%s260 + $0x9f0] sm:$0xff] %v897
                %v899 = vld [vmem:[%s259 + $0x13f0] sm:$0xff]
                %900 = vst [vmem:[%s260 + $0x9f8] sm:$0xff] %v899
                %v901 = vld [vmem:[%s259 + $0x1400] sm:$0xff]
                %902 = vst [vmem:[%s260 + $0xa00] sm:$0xff] %v901
                %v903 = vld [vmem:[%s259 + $0x1410] sm:$0xff]
                %904 = vst [vmem:[%s260 + $0xa08] sm:$0xff] %v903
                %v905 = vld [vmem:[%s259 + $0x1420] sm:$0xff]
                %906 = vst [vmem:[%s260 + $0xa10] sm:$0xff] %v905
                %v907 = vld [vmem:[%s259 + $0x1430] sm:$0xff]
                %908 = vst [vmem:[%s260 + $0xa18] sm:$0xff] %v907
                %v909 = vld [vmem:[%s259 + $0x1440] sm:$0xff]
                %910 = vst [vmem:[%s260 + $0xa20] sm:$0xff] %v909
                %v911 = vld [vmem:[%s259 + $0x1450] sm:$0xff]
                %912 = vst [vmem:[%s260 + $0xa28] sm:$0xff] %v911
                %v913 = vld [vmem:[%s259 + $0x1460] sm:$0xff]
                %914 = vst [vmem:[%s260 + $0xa30] sm:$0xff] %v913
                %v915 = vld [vmem:[%s259 + $0x1470] sm:$0xff]
                %916 = vst [vmem:[%s260 + $0xa38] sm:$0xff] %v915
                %v917 = vld [vmem:[%s259 + $0x1480] sm:$0xff]
                %918 = vst [vmem:[%s260 + $0xa40] sm:$0xff] %v917
                %v919 = vld [vmem:[%s259 + $0x1490] sm:$0xff]
                %920 = vst [vmem:[%s260 + $0xa48] sm:$0xff] %v919
                %v921 = vld [vmem:[%s259 + $0x14a0] sm:$0xff]
                %922 = vst [vmem:[%s260 + $0xa50] sm:$0xff] %v921
                %v923 = vld [vmem:[%s259 + $0x14b0] sm:$0xff]
                %924 = vst [vmem:[%s260 + $0xa58] sm:$0xff] %v923
                %v925 = vld [vmem:[%s259 + $0x14c0] sm:$0xff]
                %926 = vst [vmem:[%s260 + $0xa60] sm:$0xff] %v925
                %v927 = vld [vmem:[%s259 + $0x14d0] sm:$0xff]
                %928 = vst [vmem:[%s260 + $0xa68] sm:$0xff] %v927
                %v929 = vld [vmem:[%s259 + $0x14e0] sm:$0xff]
                %930 = vst [vmem:[%s260 + $0xa70] sm:$0xff] %v929
                %v931 = vld [vmem:[%s259 + $0x14f0] sm:$0xff]
                %932 = vst [vmem:[%s260 + $0xa78] sm:$0xff] %v931
                %v933 = vld [vmem:[%s259 + $0x1500] sm:$0xff]
                %934 = vst [vmem:[%s260 + $0xa80] sm:$0xff] %v933
                %v935 = vld [vmem:[%s259 + $0x1510] sm:$0xff]
                %936 = vst [vmem:[%s260 + $0xa88] sm:$0xff] %v935
                %v937 = vld [vmem:[%s259 + $0x1520] sm:$0xff]
                %938 = vst [vmem:[%s260 + $0xa90] sm:$0xff] %v937
                %v939 = vld [vmem:[%s259 + $0x1530] sm:$0xff]
                %940 = vst [vmem:[%s260 + $0xa98] sm:$0xff] %v939
                %v941 = vld [vmem:[%s259 + $0x1540] sm:$0xff]
                %942 = vst [vmem:[%s260 + $0xaa0] sm:$0xff] %v941
                %v943 = vld [vmem:[%s259 + $0x1550] sm:$0xff]
                %944 = vst [vmem:[%s260 + $0xaa8] sm:$0xff] %v943
                %v945 = vld [vmem:[%s259 + $0x1560] sm:$0xff]
                %946 = vst [vmem:[%s260 + $0xab0] sm:$0xff] %v945
                %v947 = vld [vmem:[%s259 + $0x1570] sm:$0xff]
                %948 = vst [vmem:[%s260 + $0xab8] sm:$0xff] %v947
                %v949 = vld [vmem:[%s259 + $0x1580] sm:$0xff]
                %950 = vst [vmem:[%s260 + $0xac0] sm:$0xff] %v949
                %v951 = vld [vmem:[%s259 + $0x1590] sm:$0xff]
                %952 = vst [vmem:[%s260 + $0xac8] sm:$0xff] %v951
                %v953 = vld [vmem:[%s259 + $0x15a0] sm:$0xff]
                %954 = vst [vmem:[%s260 + $0xad0] sm:$0xff] %v953
                %v955 = vld [vmem:[%s259 + $0x15b0] sm:$0xff]
                %956 = vst [vmem:[%s260 + $0xad8] sm:$0xff] %v955
                %v957 = vld [vmem:[%s259 + $0x15c0] sm:$0xff]
                %958 = vst [vmem:[%s260 + $0xae0] sm:$0xff] %v957
                %v959 = vld [vmem:[%s259 + $0x15d0] sm:$0xff]
                %960 = vst [vmem:[%s260 + $0xae8] sm:$0xff] %v959
                %v961 = vld [vmem:[%s259 + $0x15e0] sm:$0xff]
                %962 = vst [vmem:[%s260 + $0xaf0] sm:$0xff] %v961
                %v963 = vld [vmem:[%s259 + $0x15f0] sm:$0xff]
                %964 = vst [vmem:[%s260 + $0xaf8] sm:$0xff] %v963
                %v965 = vld [vmem:[%s259 + $0x1600] sm:$0xff]
                %966 = vst [vmem:[%s260 + $0xb00] sm:$0xff] %v965
                %v967 = vld [vmem:[%s259 + $0x1610] sm:$0xff]
                %968 = vst [vmem:[%s260 + $0xb08] sm:$0xff] %v967
                %v969 = vld [vmem:[%s259 + $0x1620] sm:$0xff]
                %970 = vst [vmem:[%s260 + $0xb10] sm:$0xff] %v969
                %v971 = vld [vmem:[%s259 + $0x1630] sm:$0xff]
                %972 = vst [vmem:[%s260 + $0xb18] sm:$0xff] %v971
                %v973 = vld [vmem:[%s259 + $0x1640] sm:$0xff]
                %974 = vst [vmem:[%s260 + $0xb20] sm:$0xff] %v973
                %v975 = vld [vmem:[%s259 + $0x1650] sm:$0xff]
                %976 = vst [vmem:[%s260 + $0xb28] sm:$0xff] %v975
                %v977 = vld [vmem:[%s259 + $0x1660] sm:$0xff]
                %978 = vst [vmem:[%s260 + $0xb30] sm:$0xff] %v977
                %v979 = vld [vmem:[%s259 + $0x1670] sm:$0xff]
                %980 = vst [vmem:[%s260 + $0xb38] sm:$0xff] %v979
                %v981 = vld [vmem:[%s259 + $0x1680] sm:$0xff]
                %982 = vst [vmem:[%s260 + $0xb40] sm:$0xff] %v981
                %v983 = vld [vmem:[%s259 + $0x1690] sm:$0xff]
                %984 = vst [vmem:[%s260 + $0xb48] sm:$0xff] %v983
                %v985 = vld [vmem:[%s259 + $0x16a0] sm:$0xff]
                %986 = vst [vmem:[%s260 + $0xb50] sm:$0xff] %v985
                %v987 = vld [vmem:[%s259 + $0x16b0] sm:$0xff]
                %988 = vst [vmem:[%s260 + $0xb58] sm:$0xff] %v987
                %v989 = vld [vmem:[%s259 + $0x16c0] sm:$0xff]
                %990 = vst [vmem:[%s260 + $0xb60] sm:$0xff] %v989
                %v991 = vld [vmem:[%s259 + $0x16d0] sm:$0xff]
                %992 = vst [vmem:[%s260 + $0xb68] sm:$0xff] %v991
                %v993 = vld [vmem:[%s259 + $0x16e0] sm:$0xff]
                %994 = vst [vmem:[%s260 + $0xb70] sm:$0xff] %v993
                %v995 = vld [vmem:[%s259 + $0x16f0] sm:$0xff]
                %996 = vst [vmem:[%s260 + $0xb78] sm:$0xff] %v995
                %v997 = vld [vmem:[%s259 + $0x1700] sm:$0xff]
                %998 = vst [vmem:[%s260 + $0xb80] sm:$0xff] %v997
                %v999 = vld [vmem:[%s259 + $0x1710] sm:$0xff]
                %1000 = vst [vmem:[%s260 + $0xb88] sm:$0xff] %v999
                %v1001 = vld [vmem:[%s259 + $0x1720] sm:$0xff]
                %1002 = vst [vmem:[%s260 + $0xb90] sm:$0xff] %v1001
                %v1003 = vld [vmem:[%s259 + $0x1730] sm:$0xff]
                %1004 = vst [vmem:[%s260 + $0xb98] sm:$0xff] %v1003
                %v1005 = vld [vmem:[%s259 + $0x1740] sm:$0xff]
                %1006 = vst [vmem:[%s260 + $0xba0] sm:$0xff] %v1005
                %v1007 = vld [vmem:[%s259 + $0x1750] sm:$0xff]
                %1008 = vst [vmem:[%s260 + $0xba8] sm:$0xff] %v1007
                %v1009 = vld [vmem:[%s259 + $0x1760] sm:$0xff]
                %1010 = vst [vmem:[%s260 + $0xbb0] sm:$0xff] %v1009
                %v1011 = vld [vmem:[%s259 + $0x1770] sm:$0xff]
                %1012 = vst [vmem:[%s260 + $0xbb8] sm:$0xff] %v1011
                %v1013 = vld [vmem:[%s259 + $0x1780] sm:$0xff]
                %1014 = vst [vmem:[%s260 + $0xbc0] sm:$0xff] %v1013
                %v1015 = vld [vmem:[%s259 + $0x1790] sm:$0xff]
                %1016 = vst [vmem:[%s260 + $0xbc8] sm:$0xff] %v1015
                %v1017 = vld [vmem:[%s259 + $0x17a0] sm:$0xff]
                %1018 = vst [vmem:[%s260 + $0xbd0] sm:$0xff] %v1017
                %v1019 = vld [vmem:[%s259 + $0x17b0] sm:$0xff]
                %1020 = vst [vmem:[%s260 + $0xbd8] sm:$0xff] %v1019
                %v1021 = vld [vmem:[%s259 + $0x17c0] sm:$0xff]
                %1022 = vst [vmem:[%s260 + $0xbe0] sm:$0xff] %v1021
                %v1023 = vld [vmem:[%s259 + $0x17d0] sm:$0xff]
                %1024 = vst [vmem:[%s260 + $0xbe8] sm:$0xff] %v1023
                %v1025 = vld [vmem:[%s259 + $0x17e0] sm:$0xff]
                %1026 = vst [vmem:[%s260 + $0xbf0] sm:$0xff] %v1025
                %v1027 = vld [vmem:[%s259 + $0x17f0] sm:$0xff]
                %1028 = vst [vmem:[%s260 + $0xbf8] sm:$0xff] %v1027
                %v1029 = vld [vmem:[%s259 + $0x1800] sm:$0xff]
                %1030 = vst [vmem:[%s260 + $0xc00] sm:$0xff] %v1029
                %v1031 = vld [vmem:[%s259 + $0x1810] sm:$0xff]
                %1032 = vst [vmem:[%s260 + $0xc08] sm:$0xff] %v1031
                %v1033 = vld [vmem:[%s259 + $0x1820] sm:$0xff]
                %1034 = vst [vmem:[%s260 + $0xc10] sm:$0xff] %v1033
                %v1035 = vld [vmem:[%s259 + $0x1830] sm:$0xff]
                %1036 = vst [vmem:[%s260 + $0xc18] sm:$0xff] %v1035
                %v1037 = vld [vmem:[%s259 + $0x1840] sm:$0xff]
                %1038 = vst [vmem:[%s260 + $0xc20] sm:$0xff] %v1037
                %v1039 = vld [vmem:[%s259 + $0x1850] sm:$0xff]
                %1040 = vst [vmem:[%s260 + $0xc28] sm:$0xff] %v1039
                %v1041 = vld [vmem:[%s259 + $0x1860] sm:$0xff]
                %1042 = vst [vmem:[%s260 + $0xc30] sm:$0xff] %v1041
                %v1043 = vld [vmem:[%s259 + $0x1870] sm:$0xff]
                %1044 = vst [vmem:[%s260 + $0xc38] sm:$0xff] %v1043
                %v1045 = vld [vmem:[%s259 + $0x1880] sm:$0xff]
                %1046 = vst [vmem:[%s260 + $0xc40] sm:$0xff] %v1045
                %v1047 = vld [vmem:[%s259 + $0x1890] sm:$0xff]
                %1048 = vst [vmem:[%s260 + $0xc48] sm:$0xff] %v1047
                %v1049 = vld [vmem:[%s259 + $0x18a0] sm:$0xff]
                %1050 = vst [vmem:[%s260 + $0xc50] sm:$0xff] %v1049
                %v1051 = vld [vmem:[%s259 + $0x18b0] sm:$0xff]
                %1052 = vst [vmem:[%s260 + $0xc58] sm:$0xff] %v1051
                %v1053 = vld [vmem:[%s259 + $0x18c0] sm:$0xff]
                %1054 = vst [vmem:[%s260 + $0xc60] sm:$0xff] %v1053
                %v1055 = vld [vmem:[%s259 + $0x18d0] sm:$0xff]
                %1056 = vst [vmem:[%s260 + $0xc68] sm:$0xff] %v1055
                %v1057 = vld [vmem:[%s259 + $0x18e0] sm:$0xff]
                %1058 = vst [vmem:[%s260 + $0xc70] sm:$0xff] %v1057
                %v1059 = vld [vmem:[%s259 + $0x18f0] sm:$0xff]
                %1060 = vst [vmem:[%s260 + $0xc78] sm:$0xff] %v1059
                %v1061 = vld [vmem:[%s259 + $0x1900] sm:$0xff]
                %1062 = vst [vmem:[%s260 + $0xc80] sm:$0xff] %v1061
                %v1063 = vld [vmem:[%s259 + $0x1910] sm:$0xff]
                %1064 = vst [vmem:[%s260 + $0xc88] sm:$0xff] %v1063
                %v1065 = vld [vmem:[%s259 + $0x1920] sm:$0xff]
                %1066 = vst [vmem:[%s260 + $0xc90] sm:$0xff] %v1065
                %v1067 = vld [vmem:[%s259 + $0x1930] sm:$0xff]
                %1068 = vst [vmem:[%s260 + $0xc98] sm:$0xff] %v1067
                %v1069 = vld [vmem:[%s259 + $0x1940] sm:$0xff]
                %1070 = vst [vmem:[%s260 + $0xca0] sm:$0xff] %v1069
                %v1071 = vld [vmem:[%s259 + $0x1950] sm:$0xff]
                %1072 = vst [vmem:[%s260 + $0xca8] sm:$0xff] %v1071
                %v1073 = vld [vmem:[%s259 + $0x1960] sm:$0xff]
                %1074 = vst [vmem:[%s260 + $0xcb0] sm:$0xff] %v1073
                %v1075 = vld [vmem:[%s259 + $0x1970] sm:$0xff]
                %1076 = vst [vmem:[%s260 + $0xcb8] sm:$0xff] %v1075
                %v1077 = vld [vmem:[%s259 + $0x1980] sm:$0xff]
                %1078 = vst [vmem:[%s260 + $0xcc0] sm:$0xff] %v1077
                %v1079 = vld [vmem:[%s259 + $0x1990] sm:$0xff]
                %1080 = vst [vmem:[%s260 + $0xcc8] sm:$0xff] %v1079
                %v1081 = vld [vmem:[%s259 + $0x19a0] sm:$0xff]
                %1082 = vst [vmem:[%s260 + $0xcd0] sm:$0xff] %v1081
                %v1083 = vld [vmem:[%s259 + $0x19b0] sm:$0xff]
                %1084 = vst [vmem:[%s260 + $0xcd8] sm:$0xff] %v1083
                %v1085 = vld [vmem:[%s259 + $0x19c0] sm:$0xff]
                %1086 = vst [vmem:[%s260 + $0xce0] sm:$0xff] %v1085
                %v1087 = vld [vmem:[%s259 + $0x19d0] sm:$0xff]
                %1088 = vst [vmem:[%s260 + $0xce8] sm:$0xff] %v1087
                %v1089 = vld [vmem:[%s259 + $0x19e0] sm:$0xff]
                %1090 = vst [vmem:[%s260 + $0xcf0] sm:$0xff] %v1089
                %v1091 = vld [vmem:[%s259 + $0x19f0] sm:$0xff]
                %1092 = vst [vmem:[%s260 + $0xcf8] sm:$0xff] %v1091
                %v1093 = vld [vmem:[%s259 + $0x1a00] sm:$0xff]
                %1094 = vst [vmem:[%s260 + $0xd00] sm:$0xff] %v1093
                %v1095 = vld [vmem:[%s259 + $0x1a10] sm:$0xff]
                %1096 = vst [vmem:[%s260 + $0xd08] sm:$0xff] %v1095
                %v1097 = vld [vmem:[%s259 + $0x1a20] sm:$0xff]
                %1098 = vst [vmem:[%s260 + $0xd10] sm:$0xff] %v1097
                %v1099 = vld [vmem:[%s259 + $0x1a30] sm:$0xff]
                %1100 = vst [vmem:[%s260 + $0xd18] sm:$0xff] %v1099
                %v1101 = vld [vmem:[%s259 + $0x1a40] sm:$0xff]
                %1102 = vst [vmem:[%s260 + $0xd20] sm:$0xff] %v1101
                %v1103 = vld [vmem:[%s259 + $0x1a50] sm:$0xff]
                %1104 = vst [vmem:[%s260 + $0xd28] sm:$0xff] %v1103
                %v1105 = vld [vmem:[%s259 + $0x1a60] sm:$0xff]
                %1106 = vst [vmem:[%s260 + $0xd30] sm:$0xff] %v1105
                %v1107 = vld [vmem:[%s259 + $0x1a70] sm:$0xff]
                %1108 = vst [vmem:[%s260 + $0xd38] sm:$0xff] %v1107
                %v1109 = vld [vmem:[%s259 + $0x1a80] sm:$0xff]
                %1110 = vst [vmem:[%s260 + $0xd40] sm:$0xff] %v1109
                %v1111 = vld [vmem:[%s259 + $0x1a90] sm:$0xff]
                %1112 = vst [vmem:[%s260 + $0xd48] sm:$0xff] %v1111
                %v1113 = vld [vmem:[%s259 + $0x1aa0] sm:$0xff]
                %1114 = vst [vmem:[%s260 + $0xd50] sm:$0xff] %v1113
                %v1115 = vld [vmem:[%s259 + $0x1ab0] sm:$0xff]
                %1116 = vst [vmem:[%s260 + $0xd58] sm:$0xff] %v1115
                %v1117 = vld [vmem:[%s259 + $0x1ac0] sm:$0xff]
                %1118 = vst [vmem:[%s260 + $0xd60] sm:$0xff] %v1117
                %v1119 = vld [vmem:[%s259 + $0x1ad0] sm:$0xff]
                %1120 = vst [vmem:[%s260 + $0xd68] sm:$0xff] %v1119
                %v1121 = vld [vmem:[%s259 + $0x1ae0] sm:$0xff]
                %1122 = vst [vmem:[%s260 + $0xd70] sm:$0xff] %v1121
                %v1123 = vld [vmem:[%s259 + $0x1af0] sm:$0xff]
                %1124 = vst [vmem:[%s260 + $0xd78] sm:$0xff] %v1123
                %v1125 = vld [vmem:[%s259 + $0x1b00] sm:$0xff]
                %1126 = vst [vmem:[%s260 + $0xd80] sm:$0xff] %v1125
                %v1127 = vld [vmem:[%s259 + $0x1b10] sm:$0xff]
                %1128 = vst [vmem:[%s260 + $0xd88] sm:$0xff] %v1127
                %v1129 = vld [vmem:[%s259 + $0x1b20] sm:$0xff]
                %1130 = vst [vmem:[%s260 + $0xd90] sm:$0xff] %v1129
                %v1131 = vld [vmem:[%s259 + $0x1b30] sm:$0xff]
                %1132 = vst [vmem:[%s260 + $0xd98] sm:$0xff] %v1131
                %v1133 = vld [vmem:[%s259 + $0x1b40] sm:$0xff]
                %1134 = vst [vmem:[%s260 + $0xda0] sm:$0xff] %v1133
                %v1135 = vld [vmem:[%s259 + $0x1b50] sm:$0xff]
                %1136 = vst [vmem:[%s260 + $0xda8] sm:$0xff] %v1135
                %v1137 = vld [vmem:[%s259 + $0x1b60] sm:$0xff]
                %1138 = vst [vmem:[%s260 + $0xdb0] sm:$0xff] %v1137
                %v1139 = vld [vmem:[%s259 + $0x1b70] sm:$0xff]
                %1140 = vst [vmem:[%s260 + $0xdb8] sm:$0xff] %v1139
                %v1141 = vld [vmem:[%s259 + $0x1b80] sm:$0xff]
                %1142 = vst [vmem:[%s260 + $0xdc0] sm:$0xff] %v1141
                %v1143 = vld [vmem:[%s259 + $0x1b90] sm:$0xff]
                %1144 = vst [vmem:[%s260 + $0xdc8] sm:$0xff] %v1143
                %v1145 = vld [vmem:[%s259 + $0x1ba0] sm:$0xff]
                %1146 = vst [vmem:[%s260 + $0xdd0] sm:$0xff] %v1145
                %v1147 = vld [vmem:[%s259 + $0x1bb0] sm:$0xff]
                %1148 = vst [vmem:[%s260 + $0xdd8] sm:$0xff] %v1147
                %v1149 = vld [vmem:[%s259 + $0x1bc0] sm:$0xff]
                %1150 = vst [vmem:[%s260 + $0xde0] sm:$0xff] %v1149
                %v1151 = vld [vmem:[%s259 + $0x1bd0] sm:$0xff]
                %1152 = vst [vmem:[%s260 + $0xde8] sm:$0xff] %v1151
                %v1153 = vld [vmem:[%s259 + $0x1be0] sm:$0xff]
                %1154 = vst [vmem:[%s260 + $0xdf0] sm:$0xff] %v1153
                %v1155 = vld [vmem:[%s259 + $0x1bf0] sm:$0xff]
                %1156 = vst [vmem:[%s260 + $0xdf8] sm:$0xff] %v1155
                %v1157 = vld [vmem:[%s259 + $0x1c00] sm:$0xff]
                %1158 = vst [vmem:[%s260 + $0xe00] sm:$0xff] %v1157
                %v1159 = vld [vmem:[%s259 + $0x1c10] sm:$0xff]
                %1160 = vst [vmem:[%s260 + $0xe08] sm:$0xff] %v1159
                %v1161 = vld [vmem:[%s259 + $0x1c20] sm:$0xff]
                %1162 = vst [vmem:[%s260 + $0xe10] sm:$0xff] %v1161
                %v1163 = vld [vmem:[%s259 + $0x1c30] sm:$0xff]
                %1164 = vst [vmem:[%s260 + $0xe18] sm:$0xff] %v1163
                %v1165 = vld [vmem:[%s259 + $0x1c40] sm:$0xff]
                %1166 = vst [vmem:[%s260 + $0xe20] sm:$0xff] %v1165
                %v1167 = vld [vmem:[%s259 + $0x1c50] sm:$0xff]
                %1168 = vst [vmem:[%s260 + $0xe28] sm:$0xff] %v1167
                %v1169 = vld [vmem:[%s259 + $0x1c60] sm:$0xff]
                %1170 = vst [vmem:[%s260 + $0xe30] sm:$0xff] %v1169
                %v1171 = vld [vmem:[%s259 + $0x1c70] sm:$0xff]
                %1172 = vst [vmem:[%s260 + $0xe38] sm:$0xff] %v1171
                %v1173 = vld [vmem:[%s259 + $0x1c80] sm:$0xff]
                %1174 = vst [vmem:[%s260 + $0xe40] sm:$0xff] %v1173
                %v1175 = vld [vmem:[%s259 + $0x1c90] sm:$0xff]
                %1176 = vst [vmem:[%s260 + $0xe48] sm:$0xff] %v1175
                %v1177 = vld [vmem:[%s259 + $0x1ca0] sm:$0xff]
                %1178 = vst [vmem:[%s260 + $0xe50] sm:$0xff] %v1177
                %v1179 = vld [vmem:[%s259 + $0x1cb0] sm:$0xff]
                %1180 = vst [vmem:[%s260 + $0xe58] sm:$0xff] %v1179
                %v1181 = vld [vmem:[%s259 + $0x1cc0] sm:$0xff]
                %1182 = vst [vmem:[%s260 + $0xe60] sm:$0xff] %v1181
                %v1183 = vld [vmem:[%s259 + $0x1cd0] sm:$0xff]
                %1184 = vst [vmem:[%s260 + $0xe68] sm:$0xff] %v1183
                %v1185 = vld [vmem:[%s259 + $0x1ce0] sm:$0xff]
                %1186 = vst [vmem:[%s260 + $0xe70] sm:$0xff] %v1185
                %v1187 = vld [vmem:[%s259 + $0x1cf0] sm:$0xff]
                %1188 = vst [vmem:[%s260 + $0xe78] sm:$0xff] %v1187
                %v1189 = vld [vmem:[%s259 + $0x1d00] sm:$0xff]
                %1190 = vst [vmem:[%s260 + $0xe80] sm:$0xff] %v1189
                %v1191 = vld [vmem:[%s259 + $0x1d10] sm:$0xff]
                %1192 = vst [vmem:[%s260 + $0xe88] sm:$0xff] %v1191
                %v1193 = vld [vmem:[%s259 + $0x1d20] sm:$0xff]
                %1194 = vst [vmem:[%s260 + $0xe90] sm:$0xff] %v1193
                %v1195 = vld [vmem:[%s259 + $0x1d30] sm:$0xff]
                %1196 = vst [vmem:[%s260 + $0xe98] sm:$0xff] %v1195
                %v1197 = vld [vmem:[%s259 + $0x1d40] sm:$0xff]
                %1198 = vst [vmem:[%s260 + $0xea0] sm:$0xff] %v1197
                %v1199 = vld [vmem:[%s259 + $0x1d50] sm:$0xff]
                %1200 = vst [vmem:[%s260 + $0xea8] sm:$0xff] %v1199
                %v1201 = vld [vmem:[%s259 + $0x1d60] sm:$0xff]
                %1202 = vst [vmem:[%s260 + $0xeb0] sm:$0xff] %v1201
                %v1203 = vld [vmem:[%s259 + $0x1d70] sm:$0xff]
                %1204 = vst [vmem:[%s260 + $0xeb8] sm:$0xff] %v1203
                %v1205 = vld [vmem:[%s259 + $0x1d80] sm:$0xff]
                %1206 = vst [vmem:[%s260 + $0xec0] sm:$0xff] %v1205
                %v1207 = vld [vmem:[%s259 + $0x1d90] sm:$0xff]
                %1208 = vst [vmem:[%s260 + $0xec8] sm:$0xff] %v1207
                %v1209 = vld [vmem:[%s259 + $0x1da0] sm:$0xff]
                %1210 = vst [vmem:[%s260 + $0xed0] sm:$0xff] %v1209
                %v1211 = vld [vmem:[%s259 + $0x1db0] sm:$0xff]
                %1212 = vst [vmem:[%s260 + $0xed8] sm:$0xff] %v1211
                %v1213 = vld [vmem:[%s259 + $0x1dc0] sm:$0xff]
                %1214 = vst [vmem:[%s260 + $0xee0] sm:$0xff] %v1213
                %v1215 = vld [vmem:[%s259 + $0x1dd0] sm:$0xff]
                %1216 = vst [vmem:[%s260 + $0xee8] sm:$0xff] %v1215
                %v1217 = vld [vmem:[%s259 + $0x1de0] sm:$0xff]
                %1218 = vst [vmem:[%s260 + $0xef0] sm:$0xff] %v1217
                %v1219 = vld [vmem:[%s259 + $0x1df0] sm:$0xff]
                %1220 = vst [vmem:[%s260 + $0xef8] sm:$0xff] %v1219
              $region45: #{multi_agent_cnn_critic.5} parent=39 // loop_footer
                %s258 = sadd.s32 1, %s254
              $region46: #{multi_agent_cnn_critic.5} parent=39 // loop_footer_branch
                %253 = sbr.rel target = $region42
              $region47: #{multi_agent_cnn_critic.5} parent=39 // loop_exit
                _
            $region40: #{multi_agent_cnn_critic.5} parent=31 // pred_fallthru
              _
          $region32: #{multi_agent_cnn_critic.5} parent=27 // pred_fallthru
            _
          %2193 = vnop
        $region28: #{multi_agent_cnn_critic.5} parent=19 // pred_fallthru
          _
        // Predicated region
        $region63: #{multi_agent_cnn_critic.5} parent=19 // pred_check
          %p2194 = pneg %p119
        $region64: #{multi_agent_cnn_critic.5} parent=19 // pred_check_branch
          %2196 = sbr.rel (%p2194) target = $region66
        $region65: #{multi_agent_cnn_critic.5} parent=19 // pred_region
          %p2197 = scmp.lt.s32.totalorder %s19, 1
          %s2198 = scalar_select %p2197, %s19, 1
          %s2199 = smul.addr %s2198, 2
          %s2200 = scalar_lea.vmem %s3, %s2199
        $region66: #{multi_agent_cnn_critic.5} parent=19 // pred_fallthru
          _
        // Predicated region
        $region67: #{multi_agent_cnn_critic.5} parent=19 // pred_check
          %p2201 = pneg %p145
        $region68: #{multi_agent_cnn_critic.5} parent=19 // pred_check_branch
          %2203 = sbr.rel (%p2201) target = $region70
        $region69: #{multi_agent_cnn_critic.5} parent=19 // pred_region
          %p2204 = scmp.lt.s32.totalorder %s19, 1
          %s2205 = scalar_select %p2204, %s19, 1
          %s2206 = scalar_lea.vmem %s4, %s2205
        $region70: #{multi_agent_cnn_critic.5} parent=19 // pred_fallthru
          _
        // Predicated region
        $region71: #{multi_agent_cnn_critic.5} parent=19 // pred_check
          %p2207 = pneg %p171
        $region72: #{multi_agent_cnn_critic.5} parent=19 // pred_check_branch
          %2209 = sbr.rel (%p2207) target = $region74
        $region73: #{multi_agent_cnn_critic.5} parent=19 // pred_region
          %s2210 = smul.u32 16, %s19
          %p2211 = scmp.lt.s32.totalorder %s2210, 31
          %s2212 = scalar_select %p2211, %s2210, 31
          %s2213 = smul.addr %s2212, 8
          %s2214 = scalar_lea.vmem %s5, %s2213
          %s2215 = smul.u32 16, %s19
        $region74: #{multi_agent_cnn_critic.5} parent=19 // pred_fallthru
          _
      $region20: #{multi_agent_cnn_critic.5} parent=5 // pred_fallthru
        _
      %p2216 = scmp.le.s32.totalorder 1, %s12
      %p2217 = scmp.lt.s32.totalorder %s12, 9
      %p2218 = pnand %p2216, %p2217
      %p2219 = pneg %p2218
      // Predicated region
      $region75: #{multi_agent_cnn_critic.5} parent=5 // pred_check
        _
      $region76: #{multi_agent_cnn_critic.5} parent=5 // pred_check_branch
        %2221 = sbr.rel (%p2218) target = $region78
      $region77: #{multi_agent_cnn_critic.5} parent=5 // pred_region
        %s2222 = ssub.s32 %s12, 1
        %s2223 = sand.u32 %s65, 1
        %s2224 = sand.u32 %s65, 1
        %s2225 = smul.addr %s2224, 3840
        %s2226 = scalar_lea.vmem [#allocation3], %s2225
        // Predicated region
        $region79: #{multi_agent_cnn_critic.5} parent=77 // pred_check
          %p2227 = pneg %p78
        $region80: #{multi_agent_cnn_critic.5} parent=77 // pred_check_branch
          %2229 = sbr.rel (%p2227) target = $region82
        $region81: #{multi_agent_cnn_critic.5} parent=77 // pred_region
          _
        $region82: #{multi_agent_cnn_critic.5} parent=77 // pred_fallthru
          _
        %s2230 = smul.u32 30, %s22
        %p2231 = scmp.lt.s32.totalorder %s2230, 119
        %s2232 = scalar_select %p2231, %s2230, 119
        %s2233 = smul.addr %s2232, 2
        %s2234 = scalar_lea.vmem %s0, %s2233
        %p2235 = pneg %p50
        %p2236 = pneg %p47
        %s2237 = sand.u32 %s65, 1
        %s2238 = sand.u32 %s65, 1
        %s2239 = smul.addr %s2238, 3840
        %s2240 = scalar_lea.vmem [#allocation3], %s2239
        %p2241 = pneg %p78
        %p2242 = pneg %p75
        %p2243 = pneg %p99
        %p2244 = pneg %p96
        %p2245 = scmp.lt.s32.totalorder %s21, 1
        %s2246 = scalar_select %p2245, %s21, 1
        %s2247 = smul.addr %s2246, 2
        %s2248 = scalar_lea.vmem %s3, %s2247
        %p2249 = pneg %p125
        %p2250 = pneg %p122
        %p2251 = scmp.lt.s32.totalorder %s21, 1
        %s2252 = scalar_select %p2251, %s21, 1
        %s2253 = scalar_lea.vmem %s4, %s2252
        %p2254 = pneg %p151
        %p2255 = pneg %p148
        %s2256 = smul.u32 16, %s21
        %p2257 = scmp.lt.s32.totalorder %s2256, 31
        %s2258 = scalar_select %p2257, %s2256, 31
        %s2259 = smul.addr %s2258, 8
        %s2260 = scalar_lea.vmem %s5, %s2259
        %p2261 = pneg %p177
        %p2262 = pneg %p174
        %p2263 = pneg %p203
        %p2264 = pneg %p200
        %p2265 = scmp.lt.s32.totalorder %s21, 1
        %s2266 = scalar_select %p2265, %s21, 1
        %s2267 = smul.addr %s2266, 2
        %s2268 = scalar_lea.vmem %s6, %s2267
        %s2269 = smul.u32 30, %s22
        %p2270 = scmp.lt.s32.totalorder %s2269, 119
        %s2271 = scalar_select %p2270, %s2269, 119
        %s2272 = smul.addr %s2271, 2
        %s2273 = scalar_lea.vmem %s0, %s2272
        %s2274 = smul.u32 30, %s22
        %s2275 = smul.u32 480, %s22
        %p2276 = scmp.lt.s32.totalorder %s21, 1
        %s2277 = scalar_select %p2276, %s21, 1
        %s2278 = smul.addr %s2277, 2
        %s2279 = scalar_lea.vmem %s3, %s2278
        %p2280 = scmp.lt.s32.totalorder %s21, 1
        %s2281 = scalar_select %p2280, %s21, 1
        %s2282 = scalar_lea.vmem %s4, %s2281
        %s2283 = smul.u32 16, %s21
        %p2284 = scmp.lt.s32.totalorder %s2283, 31
        %s2285 = scalar_select %p2284, %s2283, 31
        %s2286 = smul.addr %s2285, 8
        %s2287 = scalar_lea.vmem %s5, %s2286
        %s2288 = smul.u32 16, %s21
        %p2289 = scmp.lt.s32.totalorder %s21, 1
        %s2290 = scalar_select %p2289, %s21, 1
        %s2291 = smul.addr %s2290, 2
        %s2292 = scalar_lea.vmem %s6, %s2291
        %p2293 = scmp.eq.s32.totalorder %s22, 0
        // Predicated region
        $region83: #{multi_agent_cnn_critic.5} parent=77 // pred_check
          %p2294 = pneg %p2293
        $region84: #{multi_agent_cnn_critic.5} parent=77 // pred_check_branch
          %2296 = sbr.rel (%p2294) target = $region86
        $region85: #{multi_agent_cnn_critic.5} parent=77 // pred_region
          %2297 = vst [vmem:[#allocation2] sm:$0x3] 0.0
        $region86: #{multi_agent_cnn_critic.5} parent=77 // pred_fallthru
          _
        %v2298 = vld [vmem:[#allocation2] sm:$0x3]
        %v2299 = vld [vmem:[%s2273] sm:$0xff]
        %v2300 = vld [vmem:[%s2273 + $0x8] sm:$0xff]
        %v2301 = vld [vmem:[%s2273 + $0x10] sm:$0xff]
        %v2302 = vld [vmem:[%s2273 + $0x18] sm:$0xff]
        %v2303 = vld [vmem:[%s2273 + $0x20] sm:$0xff]
        %v2304 = vld [vmem:[%s2273 + $0x28] sm:$0xff]
        %v2305 = vld [vmem:[%s2273 + $0x30] sm:$0xff]
        %v2306 = vld [vmem:[%s2273 + $0x38] sm:$0xf]
        %v2307 = vld [vmem:[%s2226] sm:$0xff]
        %v2308 = vld [vmem:[%s2226 + $0x8] sm:$0xff]
        %v2309 = vld [vmem:[%s2226 + $0x10] sm:$0xff]
        %v2310 = vld [vmem:[%s2226 + $0x18] sm:$0xff]
        %v2311 = vld [vmem:[%s2226 + $0x20] sm:$0xff]
        %v2312 = vld [vmem:[%s2226 + $0x28] sm:$0xff]
        %v2313 = vld [vmem:[%s2226 + $0x30] sm:$0xff]
        %v2314 = vld [vmem:[%s2226 + $0x38] sm:$0xff]
        %v2315 = vld [vmem:[%s2226 + $0x40] sm:$0xff]
        %v2316 = vld [vmem:[%s2226 + $0x48] sm:$0xff]
        %v2317 = vld [vmem:[%s2226 + $0x50] sm:$0xff]
        %v2318 = vld [vmem:[%s2226 + $0x58] sm:$0xff]
        %v2319 = vld [vmem:[%s2226 + $0x60] sm:$0xff]
        %v2320 = vld [vmem:[%s2226 + $0x68] sm:$0xff]
        %v2321 = vld [vmem:[%s2226 + $0x70] sm:$0xff]
        %v2322 = vld [vmem:[%s2226 + $0x78] sm:$0xff]
        %v2323 = vld [vmem:[%s2226 + $0x80] sm:$0xff]
        %v2324 = vld [vmem:[%s2226 + $0x88] sm:$0xff]
        %v2325 = vld [vmem:[%s2226 + $0x90] sm:$0xff]
        %v2326 = vld [vmem:[%s2226 + $0x98] sm:$0xff]
        %v2327 = vld [vmem:[%s2226 + $0xa0] sm:$0xff]
        %v2328 = vld [vmem:[%s2226 + $0xa8] sm:$0xff]
        %v2329 = vld [vmem:[%s2226 + $0xb0] sm:$0xff]
        %v2330 = vld [vmem:[%s2226 + $0xb8] sm:$0xff]
        %v2331 = vld [vmem:[%s2226 + $0xc0] sm:$0xff]
        %v2332 = vld [vmem:[%s2226 + $0xc8] sm:$0xff]
        %v2333 = vld [vmem:[%s2226 + $0xd0] sm:$0xff]
        %v2334 = vld [vmem:[%s2226 + $0xd8] sm:$0xff]
        %v2335 = vld [vmem:[%s2226 + $0xe0] sm:$0xff]
        %v2336 = vld [vmem:[%s2226 + $0xe8] sm:$0xff]
        %v2337 = vld [vmem:[%s2226 + $0xf0] sm:$0xff]
        %v2338 = vld [vmem:[%s2226 + $0xf8] sm:$0xff]
        %v2339 = vld [vmem:[%s2226 + $0x100] sm:$0xff]
        %v2340 = vld [vmem:[%s2226 + $0x108] sm:$0xff]
        %v2341 = vld [vmem:[%s2226 + $0x110] sm:$0xff]
        %v2342 = vld [vmem:[%s2226 + $0x118] sm:$0xff]
        %v2343 = vld [vmem:[%s2226 + $0x120] sm:$0xff]
        %v2344 = vld [vmem:[%s2226 + $0x128] sm:$0xff]
        %v2345 = vld [vmem:[%s2226 + $0x130] sm:$0xff]
        %v2346 = vld [vmem:[%s2226 + $0x138] sm:$0xff]
        %v2347 = vld [vmem:[%s2226 + $0x140] sm:$0xff]
        %v2348 = vld [vmem:[%s2226 + $0x148] sm:$0xff]
        %v2349 = vld [vmem:[%s2226 + $0x150] sm:$0xff]
        %v2350 = vld [vmem:[%s2226 + $0x158] sm:$0xff]
        %v2351 = vld [vmem:[%s2226 + $0x160] sm:$0xff]
        %v2352 = vld [vmem:[%s2226 + $0x168] sm:$0xff]
        %v2353 = vld [vmem:[%s2226 + $0x170] sm:$0xff]
        %v2354 = vld [vmem:[%s2226 + $0x178] sm:$0xff]
        %v2355 = vld [vmem:[%s2226 + $0x180] sm:$0xff]
        %v2356 = vld [vmem:[%s2226 + $0x188] sm:$0xff]
        %v2357 = vld [vmem:[%s2226 + $0x190] sm:$0xff]
        %v2358 = vld [vmem:[%s2226 + $0x198] sm:$0xff]
        %v2359 = vld [vmem:[%s2226 + $0x1a0] sm:$0xff]
        %v2360 = vld [vmem:[%s2226 + $0x1a8] sm:$0xff]
        %v2361 = vld [vmem:[%s2226 + $0x1b0] sm:$0xff]
        %v2362 = vld [vmem:[%s2226 + $0x1b8] sm:$0xff]
        %v2363 = vld [vmem:[%s2226 + $0x1c0] sm:$0xff]
        %v2364 = vld [vmem:[%s2226 + $0x1c8] sm:$0xff]
        %v2365 = vld [vmem:[%s2226 + $0x1d0] sm:$0xff]
        %v2366 = vld [vmem:[%s2226 + $0x1d8] sm:$0xff]
        %v2367 = vld [vmem:[%s2226 + $0x1e0] sm:$0xff]
        %v2368 = vld [vmem:[%s2226 + $0x1e8] sm:$0xff]
        %v2369 = vld [vmem:[%s2226 + $0x1f0] sm:$0xff]
        %v2370 = vld [vmem:[%s2226 + $0x1f8] sm:$0xff]
        %v2371 = vld [vmem:[%s2226 + $0x200] sm:$0xff]
        %v2372 = vld [vmem:[%s2226 + $0x208] sm:$0xff]
        %v2373 = vld [vmem:[%s2226 + $0x210] sm:$0xff]
        %v2374 = vld [vmem:[%s2226 + $0x218] sm:$0xff]
        %v2375 = vld [vmem:[%s2226 + $0x220] sm:$0xff]
        %v2376 = vld [vmem:[%s2226 + $0x228] sm:$0xff]
        %v2377 = vld [vmem:[%s2226 + $0x230] sm:$0xff]
        %v2378 = vld [vmem:[%s2226 + $0x238] sm:$0xff]
        %v2379 = vld [vmem:[%s2226 + $0x240] sm:$0xff]
        %v2380 = vld [vmem:[%s2226 + $0x248] sm:$0xff]
        %v2381 = vld [vmem:[%s2226 + $0x250] sm:$0xff]
        %v2382 = vld [vmem:[%s2226 + $0x258] sm:$0xff]
        %v2383 = vld [vmem:[%s2226 + $0x260] sm:$0xff]
        %v2384 = vld [vmem:[%s2226 + $0x268] sm:$0xff]
        %v2385 = vld [vmem:[%s2226 + $0x270] sm:$0xff]
        %v2386 = vld [vmem:[%s2226 + $0x278] sm:$0xff]
        %v2387 = vld [vmem:[%s2226 + $0x280] sm:$0xff]
        %v2388 = vld [vmem:[%s2226 + $0x288] sm:$0xff]
        %v2389 = vld [vmem:[%s2226 + $0x290] sm:$0xff]
        %v2390 = vld [vmem:[%s2226 + $0x298] sm:$0xff]
        %v2391 = vld [vmem:[%s2226 + $0x2a0] sm:$0xff]
        %v2392 = vld [vmem:[%s2226 + $0x2a8] sm:$0xff]
        %v2393 = vld [vmem:[%s2226 + $0x2b0] sm:$0xff]
        %v2394 = vld [vmem:[%s2226 + $0x2b8] sm:$0xff]
        %v2395 = vld [vmem:[%s2226 + $0x2c0] sm:$0xff]
        %v2396 = vld [vmem:[%s2226 + $0x2c8] sm:$0xff]
        %v2397 = vld [vmem:[%s2226 + $0x2d0] sm:$0xff]
        %v2398 = vld [vmem:[%s2226 + $0x2d8] sm:$0xff]
        %v2399 = vld [vmem:[%s2226 + $0x2e0] sm:$0xff]
        %v2400 = vld [vmem:[%s2226 + $0x2e8] sm:$0xff]
        %v2401 = vld [vmem:[%s2226 + $0x2f0] sm:$0xff]
        %v2402 = vld [vmem:[%s2226 + $0x2f8] sm:$0xff]
        %v2403 = vld [vmem:[%s2226 + $0x300] sm:$0xff]
        %v2404 = vld [vmem:[%s2226 + $0x308] sm:$0xff]
        %v2405 = vld [vmem:[%s2226 + $0x310] sm:$0xff]
        %v2406 = vld [vmem:[%s2226 + $0x318] sm:$0xff]
        %v2407 = vld [vmem:[%s2226 + $0x320] sm:$0xff]
        %v2408 = vld [vmem:[%s2226 + $0x328] sm:$0xff]
        %v2409 = vld [vmem:[%s2226 + $0x330] sm:$0xff]
        %v2410 = vld [vmem:[%s2226 + $0x338] sm:$0xff]
        %v2411 = vld [vmem:[%s2226 + $0x340] sm:$0xff]
        %v2412 = vld [vmem:[%s2226 + $0x348] sm:$0xff]
        %v2413 = vld [vmem:[%s2226 + $0x350] sm:$0xff]
        %v2414 = vld [vmem:[%s2226 + $0x358] sm:$0xff]
        %v2415 = vld [vmem:[%s2226 + $0x360] sm:$0xff]
        %v2416 = vld [vmem:[%s2226 + $0x368] sm:$0xff]
        %v2417 = vld [vmem:[%s2226 + $0x370] sm:$0xff]
        %v2418 = vld [vmem:[%s2226 + $0x378] sm:$0xff]
        %v2419 = vld [vmem:[%s2226 + $0x380] sm:$0xff]
        %v2420 = vld [vmem:[%s2226 + $0x388] sm:$0xff]
        %v2421 = vld [vmem:[%s2226 + $0x390] sm:$0xff]
        %v2422 = vld [vmem:[%s2226 + $0x398] sm:$0xff]
        %v2423 = vld [vmem:[%s2226 + $0x3a0] sm:$0xff]
        %v2424 = vld [vmem:[%s2226 + $0x3a8] sm:$0xff]
        %v2425 = vld [vmem:[%s2226 + $0x3b0] sm:$0xff]
        %v2426 = vld [vmem:[%s2226 + $0x3b8] sm:$0xff]
        %v2427 = vld [vmem:[%s2226 + $0x3c0] sm:$0xff]
        %v2428 = vld [vmem:[%s2226 + $0x3c8] sm:$0xff]
        %v2429 = vld [vmem:[%s2226 + $0x3d0] sm:$0xff]
        %v2430 = vld [vmem:[%s2226 + $0x3d8] sm:$0xff]
        %v2431 = vld [vmem:[%s2226 + $0x3e0] sm:$0xff]
        %v2432 = vld [vmem:[%s2226 + $0x3e8] sm:$0xff]
        %v2433 = vld [vmem:[%s2226 + $0x3f0] sm:$0xff]
        %v2434 = vld [vmem:[%s2226 + $0x3f8] sm:$0xff]
        %v2435 = vld [vmem:[%s2226 + $0x400] sm:$0xff]
        %v2436 = vld [vmem:[%s2226 + $0x408] sm:$0xff]
        %v2437 = vld [vmem:[%s2226 + $0x410] sm:$0xff]
        %v2438 = vld [vmem:[%s2226 + $0x418] sm:$0xff]
        %v2439 = vld [vmem:[%s2226 + $0x420] sm:$0xff]
        %v2440 = vld [vmem:[%s2226 + $0x428] sm:$0xff]
        %v2441 = vld [vmem:[%s2226 + $0x430] sm:$0xff]
        %v2442 = vld [vmem:[%s2226 + $0x438] sm:$0xff]
        %v2443 = vld [vmem:[%s2226 + $0x440] sm:$0xff]
        %v2444 = vld [vmem:[%s2226 + $0x448] sm:$0xff]
        %v2445 = vld [vmem:[%s2226 + $0x450] sm:$0xff]
        %v2446 = vld [vmem:[%s2226 + $0x458] sm:$0xff]
        %v2447 = vld [vmem:[%s2226 + $0x460] sm:$0xff]
        %v2448 = vld [vmem:[%s2226 + $0x468] sm:$0xff]
        %v2449 = vld [vmem:[%s2226 + $0x470] sm:$0xff]
        %v2450 = vld [vmem:[%s2226 + $0x478] sm:$0xff]
        %v2451 = vld [vmem:[%s2226 + $0x480] sm:$0xff]
        %v2452 = vld [vmem:[%s2226 + $0x488] sm:$0xff]
        %v2453 = vld [vmem:[%s2226 + $0x490] sm:$0xff]
        %v2454 = vld [vmem:[%s2226 + $0x498] sm:$0xff]
        %v2455 = vld [vmem:[%s2226 + $0x4a0] sm:$0xff]
        %v2456 = vld [vmem:[%s2226 + $0x4a8] sm:$0xff]
        %v2457 = vld [vmem:[%s2226 + $0x4b0] sm:$0xff]
        %v2458 = vld [vmem:[%s2226 + $0x4b8] sm:$0xff]
        %v2459 = vld [vmem:[%s2226 + $0x4c0] sm:$0xff]
        %v2460 = vld [vmem:[%s2226 + $0x4c8] sm:$0xff]
        %v2461 = vld [vmem:[%s2226 + $0x4d0] sm:$0xff]
        %v2462 = vld [vmem:[%s2226 + $0x4d8] sm:$0xff]
        %v2463 = vld [vmem:[%s2226 + $0x4e0] sm:$0xff]
        %v2464 = vld [vmem:[%s2226 + $0x4e8] sm:$0xff]
        %v2465 = vld [vmem:[%s2226 + $0x4f0] sm:$0xff]
        %v2466 = vld [vmem:[%s2226 + $0x4f8] sm:$0xff]
        %v2467 = vld [vmem:[%s2226 + $0x500] sm:$0xff]
        %v2468 = vld [vmem:[%s2226 + $0x508] sm:$0xff]
        %v2469 = vld [vmem:[%s2226 + $0x510] sm:$0xff]
        %v2470 = vld [vmem:[%s2226 + $0x518] sm:$0xff]
        %v2471 = vld [vmem:[%s2226 + $0x520] sm:$0xff]
        %v2472 = vld [vmem:[%s2226 + $0x528] sm:$0xff]
        %v2473 = vld [vmem:[%s2226 + $0x530] sm:$0xff]
        %v2474 = vld [vmem:[%s2226 + $0x538] sm:$0xff]
        %v2475 = vld [vmem:[%s2226 + $0x540] sm:$0xff]
        %v2476 = vld [vmem:[%s2226 + $0x548] sm:$0xff]
        %v2477 = vld [vmem:[%s2226 + $0x550] sm:$0xff]
        %v2478 = vld [vmem:[%s2226 + $0x558] sm:$0xff]
        %v2479 = vld [vmem:[%s2226 + $0x560] sm:$0xff]
        %v2480 = vld [vmem:[%s2226 + $0x568] sm:$0xff]
        %v2481 = vld [vmem:[%s2226 + $0x570] sm:$0xff]
        %v2482 = vld [vmem:[%s2226 + $0x578] sm:$0xff]
        %v2483 = vld [vmem:[%s2226 + $0x580] sm:$0xff]
        %v2484 = vld [vmem:[%s2226 + $0x588] sm:$0xff]
        %v2485 = vld [vmem:[%s2226 + $0x590] sm:$0xff]
        %v2486 = vld [vmem:[%s2226 + $0x598] sm:$0xff]
        %v2487 = vld [vmem:[%s2226 + $0x5a0] sm:$0xff]
        %v2488 = vld [vmem:[%s2226 + $0x5a8] sm:$0xff]
        %v2489 = vld [vmem:[%s2226 + $0x5b0] sm:$0xff]
        %v2490 = vld [vmem:[%s2226 + $0x5b8] sm:$0xff]
        %v2491 = vld [vmem:[%s2226 + $0x5c0] sm:$0xff]
        %v2492 = vld [vmem:[%s2226 + $0x5c8] sm:$0xff]
        %v2493 = vld [vmem:[%s2226 + $0x5d0] sm:$0xff]
        %v2494 = vld [vmem:[%s2226 + $0x5d8] sm:$0xff]
        %v2495 = vld [vmem:[%s2226 + $0x5e0] sm:$0xff]
        %v2496 = vld [vmem:[%s2226 + $0x5e8] sm:$0xff]
        %v2497 = vld [vmem:[%s2226 + $0x5f0] sm:$0xff]
        %v2498 = vld [vmem:[%s2226 + $0x5f8] sm:$0xff]
        %v2499 = vld [vmem:[%s2226 + $0x600] sm:$0xff]
        %v2500 = vld [vmem:[%s2226 + $0x608] sm:$0xff]
        %v2501 = vld [vmem:[%s2226 + $0x610] sm:$0xff]
        %v2502 = vld [vmem:[%s2226 + $0x618] sm:$0xff]
        %v2503 = vld [vmem:[%s2226 + $0x620] sm:$0xff]
        %v2504 = vld [vmem:[%s2226 + $0x628] sm:$0xff]
        %v2505 = vld [vmem:[%s2226 + $0x630] sm:$0xff]
        %v2506 = vld [vmem:[%s2226 + $0x638] sm:$0xff]
        %v2507 = vld [vmem:[%s2226 + $0x640] sm:$0xff]
        %v2508 = vld [vmem:[%s2226 + $0x648] sm:$0xff]
        %v2509 = vld [vmem:[%s2226 + $0x650] sm:$0xff]
        %v2510 = vld [vmem:[%s2226 + $0x658] sm:$0xff]
        %v2511 = vld [vmem:[%s2226 + $0x660] sm:$0xff]
        %v2512 = vld [vmem:[%s2226 + $0x668] sm:$0xff]
        %v2513 = vld [vmem:[%s2226 + $0x670] sm:$0xff]
        %v2514 = vld [vmem:[%s2226 + $0x678] sm:$0xff]
        %v2515 = vld [vmem:[%s2226 + $0x680] sm:$0xff]
        %v2516 = vld [vmem:[%s2226 + $0x688] sm:$0xff]
        %v2517 = vld [vmem:[%s2226 + $0x690] sm:$0xff]
        %v2518 = vld [vmem:[%s2226 + $0x698] sm:$0xff]
        %v2519 = vld [vmem:[%s2226 + $0x6a0] sm:$0xff]
        %v2520 = vld [vmem:[%s2226 + $0x6a8] sm:$0xff]
        %v2521 = vld [vmem:[%s2226 + $0x6b0] sm:$0xff]
        %v2522 = vld [vmem:[%s2226 + $0x6b8] sm:$0xff]
        %v2523 = vld [vmem:[%s2226 + $0x6c0] sm:$0xff]
        %v2524 = vld [vmem:[%s2226 + $0x6c8] sm:$0xff]
        %v2525 = vld [vmem:[%s2226 + $0x6d0] sm:$0xff]
        %v2526 = vld [vmem:[%s2226 + $0x6d8] sm:$0xff]
        %v2527 = vld [vmem:[%s2226 + $0x6e0] sm:$0xff]
        %v2528 = vld [vmem:[%s2226 + $0x6e8] sm:$0xff]
        %v2529 = vld [vmem:[%s2226 + $0x6f0] sm:$0xff]
        %v2530 = vld [vmem:[%s2226 + $0x6f8] sm:$0xff]
        %v2531 = vld [vmem:[%s2226 + $0x700] sm:$0xff]
        %v2532 = vld [vmem:[%s2226 + $0x708] sm:$0xff]
        %v2533 = vld [vmem:[%s2226 + $0x710] sm:$0xff]
        %v2534 = vld [vmem:[%s2226 + $0x718] sm:$0xff]
        %v2535 = vld [vmem:[%s2226 + $0x720] sm:$0xff]
        %v2536 = vld [vmem:[%s2226 + $0x728] sm:$0xff]
        %v2537 = vld [vmem:[%s2226 + $0x730] sm:$0xff]
        %v2538 = vld [vmem:[%s2226 + $0x738] sm:$0xff]
        %v2539 = vld [vmem:[%s2226 + $0x740] sm:$0xff]
        %v2540 = vld [vmem:[%s2226 + $0x748] sm:$0xff]
        %v2541 = vld [vmem:[%s2226 + $0x750] sm:$0xff]
        %v2542 = vld [vmem:[%s2226 + $0x758] sm:$0xff]
        %v2543 = vld [vmem:[%s2226 + $0x760] sm:$0xff]
        %v2544 = vld [vmem:[%s2226 + $0x768] sm:$0xff]
        %v2545 = vld [vmem:[%s2226 + $0x770] sm:$0xff]
        %v2546 = vld [vmem:[%s2226 + $0x778] sm:$0xff]
        %v2547 = vld [vmem:[%s2226 + $0x780] sm:$0xff]
        %v2548 = vld [vmem:[%s2226 + $0x788] sm:$0xff]
        %v2549 = vld [vmem:[%s2226 + $0x790] sm:$0xff]
        %v2550 = vld [vmem:[%s2226 + $0x798] sm:$0xff]
        %v2551 = vld [vmem:[%s2226 + $0x7a0] sm:$0xff]
        %v2552 = vld [vmem:[%s2226 + $0x7a8] sm:$0xff]
        %v2553 = vld [vmem:[%s2226 + $0x7b0] sm:$0xff]
        %v2554 = vld [vmem:[%s2226 + $0x7b8] sm:$0xff]
        %v2555 = vld [vmem:[%s2226 + $0x7c0] sm:$0xff]
        %v2556 = vld [vmem:[%s2226 + $0x7c8] sm:$0xff]
        %v2557 = vld [vmem:[%s2226 + $0x7d0] sm:$0xff]
        %v2558 = vld [vmem:[%s2226 + $0x7d8] sm:$0xff]
        %v2559 = vld [vmem:[%s2226 + $0x7e0] sm:$0xff]
        %v2560 = vld [vmem:[%s2226 + $0x7e8] sm:$0xff]
        %v2561 = vld [vmem:[%s2226 + $0x7f0] sm:$0xff]
        %v2562 = vld [vmem:[%s2226 + $0x7f8] sm:$0xff]
        %v2563 = vld [vmem:[%s2226 + $0x800] sm:$0xff]
        %v2564 = vld [vmem:[%s2226 + $0x808] sm:$0xff]
        %v2565 = vld [vmem:[%s2226 + $0x810] sm:$0xff]
        %v2566 = vld [vmem:[%s2226 + $0x818] sm:$0xff]
        %v2567 = vld [vmem:[%s2226 + $0x820] sm:$0xff]
        %v2568 = vld [vmem:[%s2226 + $0x828] sm:$0xff]
        %v2569 = vld [vmem:[%s2226 + $0x830] sm:$0xff]
        %v2570 = vld [vmem:[%s2226 + $0x838] sm:$0xff]
        %v2571 = vld [vmem:[%s2226 + $0x840] sm:$0xff]
        %v2572 = vld [vmem:[%s2226 + $0x848] sm:$0xff]
        %v2573 = vld [vmem:[%s2226 + $0x850] sm:$0xff]
        %v2574 = vld [vmem:[%s2226 + $0x858] sm:$0xff]
        %v2575 = vld [vmem:[%s2226 + $0x860] sm:$0xff]
        %v2576 = vld [vmem:[%s2226 + $0x868] sm:$0xff]
        %v2577 = vld [vmem:[%s2226 + $0x870] sm:$0xff]
        %v2578 = vld [vmem:[%s2226 + $0x878] sm:$0xff]
        %v2579 = vld [vmem:[%s2226 + $0x880] sm:$0xff]
        %v2580 = vld [vmem:[%s2226 + $0x888] sm:$0xff]
        %v2581 = vld [vmem:[%s2226 + $0x890] sm:$0xff]
        %v2582 = vld [vmem:[%s2226 + $0x898] sm:$0xff]
        %v2583 = vld [vmem:[%s2226 + $0x8a0] sm:$0xff]
        %v2584 = vld [vmem:[%s2226 + $0x8a8] sm:$0xff]
        %v2585 = vld [vmem:[%s2226 + $0x8b0] sm:$0xff]
        %v2586 = vld [vmem:[%s2226 + $0x8b8] sm:$0xff]
        %v2587 = vld [vmem:[%s2226 + $0x8c0] sm:$0xff]
        %v2588 = vld [vmem:[%s2226 + $0x8c8] sm:$0xff]
        %v2589 = vld [vmem:[%s2226 + $0x8d0] sm:$0xff]
        %v2590 = vld [vmem:[%s2226 + $0x8d8] sm:$0xff]
        %v2591 = vld [vmem:[%s2226 + $0x8e0] sm:$0xff]
        %v2592 = vld [vmem:[%s2226 + $0x8e8] sm:$0xff]
        %v2593 = vld [vmem:[%s2226 + $0x8f0] sm:$0xff]
        %v2594 = vld [vmem:[%s2226 + $0x8f8] sm:$0xff]
        %v2595 = vld [vmem:[%s2226 + $0x900] sm:$0xff]
        %v2596 = vld [vmem:[%s2226 + $0x908] sm:$0xff]
        %v2597 = vld [vmem:[%s2226 + $0x910] sm:$0xff]
        %v2598 = vld [vmem:[%s2226 + $0x918] sm:$0xff]
        %v2599 = vld [vmem:[%s2226 + $0x920] sm:$0xff]
        %v2600 = vld [vmem:[%s2226 + $0x928] sm:$0xff]
        %v2601 = vld [vmem:[%s2226 + $0x930] sm:$0xff]
        %v2602 = vld [vmem:[%s2226 + $0x938] sm:$0xff]
        %v2603 = vld [vmem:[%s2226 + $0x940] sm:$0xff]
        %v2604 = vld [vmem:[%s2226 + $0x948] sm:$0xff]
        %v2605 = vld [vmem:[%s2226 + $0x950] sm:$0xff]
        %v2606 = vld [vmem:[%s2226 + $0x958] sm:$0xff]
        %v2607 = vld [vmem:[%s2226 + $0x960] sm:$0xff]
        %v2608 = vld [vmem:[%s2226 + $0x968] sm:$0xff]
        %v2609 = vld [vmem:[%s2226 + $0x970] sm:$0xff]
        %v2610 = vld [vmem:[%s2226 + $0x978] sm:$0xff]
        %v2611 = vld [vmem:[%s2226 + $0x980] sm:$0xff]
        %v2612 = vld [vmem:[%s2226 + $0x988] sm:$0xff]
        %v2613 = vld [vmem:[%s2226 + $0x990] sm:$0xff]
        %v2614 = vld [vmem:[%s2226 + $0x998] sm:$0xff]
        %v2615 = vld [vmem:[%s2226 + $0x9a0] sm:$0xff]
        %v2616 = vld [vmem:[%s2226 + $0x9a8] sm:$0xff]
        %v2617 = vld [vmem:[%s2226 + $0x9b0] sm:$0xff]
        %v2618 = vld [vmem:[%s2226 + $0x9b8] sm:$0xff]
        %v2619 = vld [vmem:[%s2226 + $0x9c0] sm:$0xff]
        %v2620 = vld [vmem:[%s2226 + $0x9c8] sm:$0xff]
        %v2621 = vld [vmem:[%s2226 + $0x9d0] sm:$0xff]
        %v2622 = vld [vmem:[%s2226 + $0x9d8] sm:$0xff]
        %v2623 = vld [vmem:[%s2226 + $0x9e0] sm:$0xff]
        %v2624 = vld [vmem:[%s2226 + $0x9e8] sm:$0xff]
        %v2625 = vld [vmem:[%s2226 + $0x9f0] sm:$0xff]
        %v2626 = vld [vmem:[%s2226 + $0x9f8] sm:$0xff]
        %v2627 = vld [vmem:[%s2226 + $0xa00] sm:$0xff]
        %v2628 = vld [vmem:[%s2226 + $0xa08] sm:$0xff]
        %v2629 = vld [vmem:[%s2226 + $0xa10] sm:$0xff]
        %v2630 = vld [vmem:[%s2226 + $0xa18] sm:$0xff]
        %v2631 = vld [vmem:[%s2226 + $0xa20] sm:$0xff]
        %v2632 = vld [vmem:[%s2226 + $0xa28] sm:$0xff]
        %v2633 = vld [vmem:[%s2226 + $0xa30] sm:$0xff]
        %v2634 = vld [vmem:[%s2226 + $0xa38] sm:$0xff]
        %v2635 = vld [vmem:[%s2226 + $0xa40] sm:$0xff]
        %v2636 = vld [vmem:[%s2226 + $0xa48] sm:$0xff]
        %v2637 = vld [vmem:[%s2226 + $0xa50] sm:$0xff]
        %v2638 = vld [vmem:[%s2226 + $0xa58] sm:$0xff]
        %v2639 = vld [vmem:[%s2226 + $0xa60] sm:$0xff]
        %v2640 = vld [vmem:[%s2226 + $0xa68] sm:$0xff]
        %v2641 = vld [vmem:[%s2226 + $0xa70] sm:$0xff]
        %v2642 = vld [vmem:[%s2226 + $0xa78] sm:$0xff]
        %v2643 = vld [vmem:[%s2226 + $0xa80] sm:$0xff]
        %v2644 = vld [vmem:[%s2226 + $0xa88] sm:$0xff]
        %v2645 = vld [vmem:[%s2226 + $0xa90] sm:$0xff]
        %v2646 = vld [vmem:[%s2226 + $0xa98] sm:$0xff]
        %v2647 = vld [vmem:[%s2226 + $0xaa0] sm:$0xff]
        %v2648 = vld [vmem:[%s2226 + $0xaa8] sm:$0xff]
        %v2649 = vld [vmem:[%s2226 + $0xab0] sm:$0xff]
        %v2650 = vld [vmem:[%s2226 + $0xab8] sm:$0xff]
        %v2651 = vld [vmem:[%s2226 + $0xac0] sm:$0xff]
        %v2652 = vld [vmem:[%s2226 + $0xac8] sm:$0xff]
        %v2653 = vld [vmem:[%s2226 + $0xad0] sm:$0xff]
        %v2654 = vld [vmem:[%s2226 + $0xad8] sm:$0xff]
        %v2655 = vld [vmem:[%s2226 + $0xae0] sm:$0xff]
        %v2656 = vld [vmem:[%s2226 + $0xae8] sm:$0xff]
        %v2657 = vld [vmem:[%s2226 + $0xaf0] sm:$0xff]
        %v2658 = vld [vmem:[%s2226 + $0xaf8] sm:$0xff]
        %v2659 = vld [vmem:[%s2226 + $0xb00] sm:$0xff]
        %v2660 = vld [vmem:[%s2226 + $0xb08] sm:$0xff]
        %v2661 = vld [vmem:[%s2226 + $0xb10] sm:$0xff]
        %v2662 = vld [vmem:[%s2226 + $0xb18] sm:$0xff]
        %v2663 = vld [vmem:[%s2226 + $0xb20] sm:$0xff]
        %v2664 = vld [vmem:[%s2226 + $0xb28] sm:$0xff]
        %v2665 = vld [vmem:[%s2226 + $0xb30] sm:$0xff]
        %v2666 = vld [vmem:[%s2226 + $0xb38] sm:$0xff]
        %v2667 = vld [vmem:[%s2226 + $0xb40] sm:$0xff]
        %v2668 = vld [vmem:[%s2226 + $0xb48] sm:$0xff]
        %v2669 = vld [vmem:[%s2226 + $0xb50] sm:$0xff]
        %v2670 = vld [vmem:[%s2226 + $0xb58] sm:$0xff]
        %v2671 = vld [vmem:[%s2226 + $0xb60] sm:$0xff]
        %v2672 = vld [vmem:[%s2226 + $0xb68] sm:$0xff]
        %v2673 = vld [vmem:[%s2226 + $0xb70] sm:$0xff]
        %v2674 = vld [vmem:[%s2226 + $0xb78] sm:$0xff]
        %v2675 = vld [vmem:[%s2226 + $0xb80] sm:$0xff]
        %v2676 = vld [vmem:[%s2226 + $0xb88] sm:$0xff]
        %v2677 = vld [vmem:[%s2226 + $0xb90] sm:$0xff]
        %v2678 = vld [vmem:[%s2226 + $0xb98] sm:$0xff]
        %v2679 = vld [vmem:[%s2226 + $0xba0] sm:$0xff]
        %v2680 = vld [vmem:[%s2226 + $0xba8] sm:$0xff]
        %v2681 = vld [vmem:[%s2226 + $0xbb0] sm:$0xff]
        %v2682 = vld [vmem:[%s2226 + $0xbb8] sm:$0xff]
        %v2683 = vld [vmem:[%s2226 + $0xbc0] sm:$0xff]
        %v2684 = vld [vmem:[%s2226 + $0xbc8] sm:$0xff]
        %v2685 = vld [vmem:[%s2226 + $0xbd0] sm:$0xff]
        %v2686 = vld [vmem:[%s2226 + $0xbd8] sm:$0xff]
        %v2687 = vld [vmem:[%s2226 + $0xbe0] sm:$0xff]
        %v2688 = vld [vmem:[%s2226 + $0xbe8] sm:$0xff]
        %v2689 = vld [vmem:[%s2226 + $0xbf0] sm:$0xff]
        %v2690 = vld [vmem:[%s2226 + $0xbf8] sm:$0xff]
        %v2691 = vld [vmem:[%s2226 + $0xc00] sm:$0xff]
        %v2692 = vld [vmem:[%s2226 + $0xc08] sm:$0xff]
        %v2693 = vld [vmem:[%s2226 + $0xc10] sm:$0xff]
        %v2694 = vld [vmem:[%s2226 + $0xc18] sm:$0xff]
        %v2695 = vld [vmem:[%s2226 + $0xc20] sm:$0xff]
        %v2696 = vld [vmem:[%s2226 + $0xc28] sm:$0xff]
        %v2697 = vld [vmem:[%s2226 + $0xc30] sm:$0xff]
        %v2698 = vld [vmem:[%s2226 + $0xc38] sm:$0xff]
        %v2699 = vld [vmem:[%s2226 + $0xc40] sm:$0xff]
        %v2700 = vld [vmem:[%s2226 + $0xc48] sm:$0xff]
        %v2701 = vld [vmem:[%s2226 + $0xc50] sm:$0xff]
        %v2702 = vld [vmem:[%s2226 + $0xc58] sm:$0xff]
        %v2703 = vld [vmem:[%s2226 + $0xc60] sm:$0xff]
        %v2704 = vld [vmem:[%s2226 + $0xc68] sm:$0xff]
        %v2705 = vld [vmem:[%s2226 + $0xc70] sm:$0xff]
        %v2706 = vld [vmem:[%s2226 + $0xc78] sm:$0xff]
        %v2707 = vld [vmem:[%s2226 + $0xc80] sm:$0xff]
        %v2708 = vld [vmem:[%s2226 + $0xc88] sm:$0xff]
        %v2709 = vld [vmem:[%s2226 + $0xc90] sm:$0xff]
        %v2710 = vld [vmem:[%s2226 + $0xc98] sm:$0xff]
        %v2711 = vld [vmem:[%s2226 + $0xca0] sm:$0xff]
        %v2712 = vld [vmem:[%s2226 + $0xca8] sm:$0xff]
        %v2713 = vld [vmem:[%s2226 + $0xcb0] sm:$0xff]
        %v2714 = vld [vmem:[%s2226 + $0xcb8] sm:$0xff]
        %v2715 = vld [vmem:[%s2226 + $0xcc0] sm:$0xff]
        %v2716 = vld [vmem:[%s2226 + $0xcc8] sm:$0xff]
        %v2717 = vld [vmem:[%s2226 + $0xcd0] sm:$0xff]
        %v2718 = vld [vmem:[%s2226 + $0xcd8] sm:$0xff]
        %v2719 = vld [vmem:[%s2226 + $0xce0] sm:$0xff]
        %v2720 = vld [vmem:[%s2226 + $0xce8] sm:$0xff]
        %v2721 = vld [vmem:[%s2226 + $0xcf0] sm:$0xff]
        %v2722 = vld [vmem:[%s2226 + $0xcf8] sm:$0xff]
        %v2723 = vld [vmem:[%s2226 + $0xd00] sm:$0xff]
        %v2724 = vld [vmem:[%s2226 + $0xd08] sm:$0xff]
        %v2725 = vld [vmem:[%s2226 + $0xd10] sm:$0xff]
        %v2726 = vld [vmem:[%s2226 + $0xd18] sm:$0xff]
        %v2727 = vld [vmem:[%s2226 + $0xd20] sm:$0xff]
        %v2728 = vld [vmem:[%s2226 + $0xd28] sm:$0xff]
        %v2729 = vld [vmem:[%s2226 + $0xd30] sm:$0xff]
        %v2730 = vld [vmem:[%s2226 + $0xd38] sm:$0xff]
        %v2731 = vld [vmem:[%s2226 + $0xd40] sm:$0xff]
        %v2732 = vld [vmem:[%s2226 + $0xd48] sm:$0xff]
        %v2733 = vld [vmem:[%s2226 + $0xd50] sm:$0xff]
        %v2734 = vld [vmem:[%s2226 + $0xd58] sm:$0xff]
        %v2735 = vld [vmem:[%s2226 + $0xd60] sm:$0xff]
        %v2736 = vld [vmem:[%s2226 + $0xd68] sm:$0xff]
        %v2737 = vld [vmem:[%s2226 + $0xd70] sm:$0xff]
        %v2738 = vld [vmem:[%s2226 + $0xd78] sm:$0xff]
        %v2739 = vld [vmem:[%s2226 + $0xd80] sm:$0xff]
        %v2740 = vld [vmem:[%s2226 + $0xd88] sm:$0xff]
        %v2741 = vld [vmem:[%s2226 + $0xd90] sm:$0xff]
        %v2742 = vld [vmem:[%s2226 + $0xd98] sm:$0xff]
        %v2743 = vld [vmem:[%s2226 + $0xda0] sm:$0xff]
        %v2744 = vld [vmem:[%s2226 + $0xda8] sm:$0xff]
        %v2745 = vld [vmem:[%s2226 + $0xdb0] sm:$0xff]
        %v2746 = vld [vmem:[%s2226 + $0xdb8] sm:$0xff]
        %v2747 = vld [vmem:[%s2226 + $0xdc0] sm:$0xff]
        %v2748 = vld [vmem:[%s2226 + $0xdc8] sm:$0xff]
        %v2749 = vld [vmem:[%s2226 + $0xdd0] sm:$0xff]
        %v2750 = vld [vmem:[%s2226 + $0xdd8] sm:$0xff]
        %v2751 = vld [vmem:[%s2226 + $0xde0] sm:$0xff]
        %v2752 = vld [vmem:[%s2226 + $0xde8] sm:$0xff]
        %v2753 = vld [vmem:[%s2226 + $0xdf0] sm:$0xff]
        %v2754 = vld [vmem:[%s2226 + $0xdf8] sm:$0xff]
        %v2755 = vld [vmem:[%s2226 + $0xe00] sm:$0xff]
        %v2756 = vld [vmem:[%s2226 + $0xe08] sm:$0xff]
        %v2757 = vld [vmem:[%s2226 + $0xe10] sm:$0xff]
        %v2758 = vld [vmem:[%s2226 + $0xe18] sm:$0xff]
        %v2759 = vld [vmem:[%s2226 + $0xe20] sm:$0xff]
        %v2760 = vld [vmem:[%s2226 + $0xe28] sm:$0xff]
        %v2761 = vld [vmem:[%s2226 + $0xe30] sm:$0xff]
        %v2762 = vld [vmem:[%s2226 + $0xe38] sm:$0xff]
        %v2763 = vld [vmem:[%s2226 + $0xe40] sm:$0xff]
        %v2764 = vld [vmem:[%s2226 + $0xe48] sm:$0xff]
        %v2765 = vld [vmem:[%s2226 + $0xe50] sm:$0xff]
        %v2766 = vld [vmem:[%s2226 + $0xe58] sm:$0xff]
        %v2767 = vld [vmem:[%s2226 + $0xe60] sm:$0xff]
        %v2768 = vld [vmem:[%s2226 + $0xe68] sm:$0xff]
        %v2769 = vld [vmem:[%s2226 + $0xe70] sm:$0xff]
        %v2770 = vld [vmem:[%s2226 + $0xe78] sm:$0xff]
        %v2771 = vld [vmem:[%s2226 + $0xe80] sm:$0xff]
        %v2772 = vld [vmem:[%s2226 + $0xe88] sm:$0xff]
        %v2773 = vld [vmem:[%s2226 + $0xe90] sm:$0xff]
        %v2774 = vld [vmem:[%s2226 + $0xe98] sm:$0xff]
        %v2775 = vld [vmem:[%s2226 + $0xea0] sm:$0xff]
        %v2776 = vld [vmem:[%s2226 + $0xea8] sm:$0xff]
        %v2777 = vld [vmem:[%s2226 + $0xeb0] sm:$0xff]
        %v2778 = vld [vmem:[%s2226 + $0xeb8] sm:$0xff]
        %v2779 = vld [vmem:[%s2226 + $0xec0] sm:$0xff]
        %v2780 = vld [vmem:[%s2226 + $0xec8] sm:$0xff]
        %v2781 = vld [vmem:[%s2226 + $0xed0] sm:$0xff]
        %v2782 = vld [vmem:[%s2226 + $0xed8] sm:$0xff]
        %v2783 = vld [vmem:[%s2226 + $0xee0] sm:$0xff]
        %v2784 = vld [vmem:[%s2226 + $0xee8] sm:$0xff]
        %v2785 = vld [vmem:[%s2226 + $0xef0] sm:$0xff]
        %v2786 = vld [vmem:[%s2226 + $0xef8] sm:$0xff]
        %v2795 = vcombine.high %v2299, %v2299
        %v2797 = vunpack.c.l.s4 1983009808
        %v2798 = vunpack.c.0.s8 %v2797
        %v2799 = vlaneseq
        %v2800 = vshrl.u32 %v2799, 7
        %v2801 = vsub.s32 %v2798, %v2800
        %v2802 = vrot.slane %v2299, %v2801
        %v2804 = vunpack.c.l.s4 1983009808
        %v2805 = vunpack.c.0.s8 %v2804
        %v2806 = vlaneseq
        %v2807 = vshrl.u32 %v2806, 7
        %v2808 = vsub.s32 %v2805, %v2807
        %v2809 = vrot.slane %v2795, %v2808
        %v2810 = vcombine.high %v2802, %v2802
        %v2811 = vcombine.high %v2809, %v2809
        %v2812 = vcombine.high %v2300, %v2300
        %v2814 = vunpack.c.l.s4 1983009808
        %v2815 = vunpack.c.0.s8 %v2814
        %v2816 = vlaneseq
        %v2817 = vshrl.u32 %v2816, 7
        %v2818 = vsub.s32 %v2815, %v2817
        %v2819 = vrot.slane %v2300, %v2818
        %v2821 = vunpack.c.l.s4 1983009808
        %v2822 = vunpack.c.0.s8 %v2821
        %v2823 = vlaneseq
        %v2824 = vshrl.u32 %v2823, 7
        %v2825 = vsub.s32 %v2822, %v2824
        %v2826 = vrot.slane %v2812, %v2825
        %v2827 = vcombine.high %v2819, %v2819
        %v2828 = vcombine.high %v2826, %v2826
        %v2829 = vcombine.high %v2301, %v2301
        %v2831 = vunpack.c.l.s4 1983009808
        %v2832 = vunpack.c.0.s8 %v2831
        %v2833 = vlaneseq
        %v2834 = vshrl.u32 %v2833, 7
        %v2835 = vsub.s32 %v2832, %v2834
        %v2836 = vrot.slane %v2301, %v2835
        %v2838 = vunpack.c.l.s4 1983009808
        %v2839 = vunpack.c.0.s8 %v2838
        %v2840 = vlaneseq
        %v2841 = vshrl.u32 %v2840, 7
        %v2842 = vsub.s32 %v2839, %v2841
        %v2843 = vrot.slane %v2829, %v2842
        %v2844 = vcombine.high %v2836, %v2836
        %v2845 = vcombine.high %v2843, %v2843
        %v2846 = vcombine.high %v2302, %v2302
        %v2848 = vunpack.c.l.s4 1983009808
        %v2849 = vunpack.c.0.s8 %v2848
        %v2850 = vlaneseq
        %v2851 = vshrl.u32 %v2850, 7
        %v2852 = vsub.s32 %v2849, %v2851
        %v2853 = vrot.slane %v2302, %v2852
        %v2855 = vunpack.c.l.s4 1983009808
        %v2856 = vunpack.c.0.s8 %v2855
        %v2857 = vlaneseq
        %v2858 = vshrl.u32 %v2857, 7
        %v2859 = vsub.s32 %v2856, %v2858
        %v2860 = vrot.slane %v2846, %v2859
        %v2861 = vcombine.high %v2853, %v2853
        %v2862 = vcombine.high %v2860, %v2860
        %v2863 = vcombine.high %v2303, %v2303
        %v2865 = vunpack.c.l.s4 1983009808
        %v2866 = vunpack.c.0.s8 %v2865
        %v2867 = vlaneseq
        %v2868 = vshrl.u32 %v2867, 7
        %v2869 = vsub.s32 %v2866, %v2868
        %v2870 = vrot.slane %v2303, %v2869
        %v2872 = vunpack.c.l.s4 1983009808
        %v2873 = vunpack.c.0.s8 %v2872
        %v2874 = vlaneseq
        %v2875 = vshrl.u32 %v2874, 7
        %v2876 = vsub.s32 %v2873, %v2875
        %v2877 = vrot.slane %v2863, %v2876
        %v2878 = vcombine.high %v2870, %v2870
        %v2879 = vcombine.high %v2877, %v2877
        %v2880 = vcombine.high %v2304, %v2304
        %v2882 = vunpack.c.l.s4 1983009808
        %v2883 = vunpack.c.0.s8 %v2882
        %v2884 = vlaneseq
        %v2885 = vshrl.u32 %v2884, 7
        %v2886 = vsub.s32 %v2883, %v2885
        %v2887 = vrot.slane %v2304, %v2886
        %v2889 = vunpack.c.l.s4 1983009808
        %v2890 = vunpack.c.0.s8 %v2889
        %v2891 = vlaneseq
        %v2892 = vshrl.u32 %v2891, 7
        %v2893 = vsub.s32 %v2890, %v2892
        %v2894 = vrot.slane %v2880, %v2893
        %v2895 = vcombine.high %v2887, %v2887
        %v2896 = vcombine.high %v2894, %v2894
        %v2897 = vcombine.high %v2305, %v2305
        %v2899 = vunpack.c.l.s4 1983009808
        %v2900 = vunpack.c.0.s8 %v2899
        %v2901 = vlaneseq
        %v2902 = vshrl.u32 %v2901, 7
        %v2903 = vsub.s32 %v2900, %v2902
        %v2904 = vrot.slane %v2305, %v2903
        %v2906 = vunpack.c.l.s4 1983009808
        %v2907 = vunpack.c.0.s8 %v2906
        %v2908 = vlaneseq
        %v2909 = vshrl.u32 %v2908, 7
        %v2910 = vsub.s32 %v2907, %v2909
        %v2911 = vrot.slane %v2897, %v2910
        %v2912 = vcombine.high %v2904, %v2904
        %v2913 = vcombine.high %v2911, %v2911
        %v2915 = vunpack.c.l.s4 1983009808
        %v2916 = vunpack.c.0.s8 %v2915
        %v2917 = vlaneseq
        %v2918 = vshrl.u32 %v2917, 7
        %v2919 = vsub.s32 %v2916, %v2918
        %v2920 = vrot.slane %v2306, %v2919
        %v2921 = vcombine.high %v2920, %v2920
        %2952 = vmatprep.subr.mxu0 0.0
        %2953 = vmatpush1.msra.mxu0 %v2307
        %2954 = vmatprep.subr.mxu0 0.0
        %2955 = vmatpush1.msra.mxu0 %v2308
        %2956 = vmatprep.subr.mxu0 0.0
        %2957 = vmatpush1.msra.mxu0 %v2309
        %2958 = vmatprep.subr.mxu0 0.0
        %2959 = vmatpush1.msra.mxu0 %v2310
        %2960 = vmatprep.subr.mxu0 0.0
        %2961 = vmatpush1.msra.mxu0 %v2311
        %2962 = vmatprep.subr.mxu0 0.0
        %2963 = vmatpush1.msra.mxu0 %v2312
        %2964 = vmatprep.subr.mxu0 0.0
        %2965 = vmatpush1.msra.mxu0 %v2313
        %2966 = vmatprep.subr.mxu0 0.0
        %2967 = vmatpush1.msra.mxu0 %v2314
        %2968 = vmatprep.subr.mxu0 0.0
        %2969 = vmatpush1.msra.mxu0 %v2315
        %2970 = vmatprep.subr.mxu0 0.0
        %2971 = vmatpush1.msra.mxu0 %v2316
        %2972 = vmatprep.subr.mxu0 0.0
        %2973 = vmatpush1.msra.mxu0 %v2317
        %2974 = vmatprep.subr.mxu0 0.0
        %2975 = vmatpush1.msra.mxu0 %v2318
        %2976 = vmatprep.subr.mxu0 0.0
        %2977 = vmatpush1.msra.mxu0 %v2319
        %2978 = vmatprep.subr.mxu0 0.0
        %2979 = vmatpush1.msra.mxu0 %v2320
        %2980 = vmatprep.subr.mxu0 0.0
        %2981 = vmatpush1.msra.mxu0 %v2321
        %2982 = vmatprep.subr.mxu0 0.0
        %2983 = vmatpush1.msra.mxu0 %v2322
        %2984 = vmatprep.subr.mxu0 0.0
        %2985 = vmatpush1.msra.mxu0 %v2323
        %2986 = vmatprep.subr.mxu0 0.0
        %2987 = vmatpush1.msra.mxu0 %v2324
        %2988 = vmatprep.subr.mxu0 0.0
        %2989 = vmatpush1.msra.mxu0 %v2325
        %2990 = vmatprep.subr.mxu0 0.0
        %2991 = vmatpush1.msra.mxu0 %v2326
        %2992 = vmatprep.subr.mxu0 0.0
        %2993 = vmatpush1.msra.mxu0 %v2327
        %2994 = vmatprep.subr.mxu0 0.0
        %2995 = vmatpush1.msra.mxu0 %v2328
        %2996 = vmatprep.subr.mxu0 0.0
        %2997 = vmatpush1.msra.mxu0 %v2329
        %2998 = vmatprep.subr.mxu0 0.0
        %2999 = vmatpush1.msra.mxu0 %v2330
        %3000 = vmatprep.subr.mxu0 0.0
        %3001 = vmatpush1.msra.mxu0 %v2331
        %3002 = vmatprep.subr.mxu0 0.0
        %3003 = vmatpush1.msra.mxu0 %v2332
        %3004 = vmatprep.subr.mxu0 0.0
        %3005 = vmatpush1.msra.mxu0 %v2333
        %3006 = vmatprep.subr.mxu0 0.0
        %3007 = vmatpush1.msra.mxu0 %v2334
        %3008 = vmatprep.subr.mxu0 0.0
        %3009 = vmatpush1.msra.mxu0 %v2335
        %3010 = vmatprep.subr.mxu0 0.0
        %3011 = vmatpush1.msra.mxu0 %v2336
        %3012 = vmatprep.subr.mxu0 0.0
        %3013 = vmatpush1.msra.mxu0 %v2337
        %3014 = vmatprep.subr.mxu0 0.0
        %3015 = vmatpush1.msra.mxu0 %v2338
        %3016 = vmatprep.mubr.f32.mxu0 %v2810
        %3017 = vmatmul.mubr.f32.gmra.mrb[0].mxu0 %v2802
        %v3018 = vpop.f32.mrb[0].mxu0
        %v3019 = vadd.f32 0.0, %v3018
        %v3020 = vpop.f32.mrb[0].mxu0
        %3021 = vdwg.mxu0
        %3022 = vmatprep.subr.mxu0 0.0
        %3023 = vmatpush1.msra.mxu0 %v2339
        %3024 = vmatprep.subr.mxu0 0.0
        %3025 = vmatpush1.msra.mxu0 %v2340
        %3026 = vmatprep.subr.mxu0 0.0
        %3027 = vmatpush1.msra.mxu0 %v2341
        %3028 = vmatprep.subr.mxu0 0.0
        %3029 = vmatpush1.msra.mxu0 %v2342
        %3030 = vmatprep.subr.mxu0 0.0
        %3031 = vmatpush1.msra.mxu0 %v2343
        %3032 = vmatprep.subr.mxu0 0.0
        %3033 = vmatpush1.msra.mxu0 %v2344
        %3034 = vmatprep.subr.mxu0 0.0
        %3035 = vmatpush1.msra.mxu0 %v2345
        %3036 = vmatprep.subr.mxu0 0.0
        %3037 = vmatpush1.msra.mxu0 %v2346
        %3038 = vmatprep.subr.mxu0 0.0
        %3039 = vmatpush1.msra.mxu0 %v2347
        %3040 = vmatprep.subr.mxu0 0.0
        %3041 = vmatpush1.msra.mxu0 %v2348
        %3042 = vmatprep.subr.mxu0 0.0
        %3043 = vmatpush1.msra.mxu0 %v2349
        %3044 = vmatprep.subr.mxu0 0.0
        %3045 = vmatpush1.msra.mxu0 %v2350
        %3046 = vmatprep.subr.mxu0 0.0
        %3047 = vmatpush1.msra.mxu0 %v2351
        %3048 = vmatprep.subr.mxu0 0.0
        %3049 = vmatpush1.msra.mxu0 %v2352
        %3050 = vmatprep.subr.mxu0 0.0
        %3051 = vmatpush1.msra.mxu0 %v2353
        %3052 = vmatprep.subr.mxu0 0.0
        %3053 = vmatpush1.msra.mxu0 %v2354
        %3054 = vmatprep.subr.mxu0 0.0
        %3055 = vmatpush1.msra.mxu0 %v2355
        %3056 = vmatprep.subr.mxu0 0.0
        %3057 = vmatpush1.msra.mxu0 %v2356
        %3058 = vmatprep.subr.mxu0 0.0
        %3059 = vmatpush1.msra.mxu0 %v2357
        %3060 = vmatprep.subr.mxu0 0.0
        %3061 = vmatpush1.msra.mxu0 %v2358
        %3062 = vmatprep.subr.mxu0 0.0
        %3063 = vmatpush1.msra.mxu0 %v2359
        %3064 = vmatprep.subr.mxu0 0.0
        %3065 = vmatpush1.msra.mxu0 %v2360
        %3066 = vmatprep.subr.mxu0 0.0
        %3067 = vmatpush1.msra.mxu0 %v2361
        %3068 = vmatprep.subr.mxu0 0.0
        %3069 = vmatpush1.msra.mxu0 %v2362
        %3070 = vmatprep.subr.mxu0 0.0
        %3071 = vmatpush1.msra.mxu0 %v2363
        %3072 = vmatprep.subr.mxu0 0.0
        %3073 = vmatpush1.msra.mxu0 %v2364
        %3074 = vmatprep.subr.mxu0 0.0
        %3075 = vmatpush1.msra.mxu0 %v2365
        %3076 = vmatprep.subr.mxu0 0.0
        %3077 = vmatpush1.msra.mxu0 %v2366
        %3078 = vmatprep.subr.mxu0 0.0
        %3079 = vmatpush1.msra.mxu0 %v2367
        %3080 = vmatprep.subr.mxu0 0.0
        %3081 = vmatpush1.msra.mxu0 %v2368
        %3082 = vmatprep.subr.mxu0 0.0
        %3083 = vmatpush1.msra.mxu0 %v2369
        %3084 = vmatprep.subr.mxu0 0.0
        %3085 = vmatpush1.msra.mxu0 %v2370
        %3086 = vmatprep.mubr.f32.mxu0 %v2811
        %3087 = vmatmul.mubr.f32.gmra.mrb[0].mxu0 %v2809
        %v3088 = vpop.f32.mrb[0].mxu0
        %v3089 = vadd.f32 %v3019, %v3088
        %v3090 = vpop.f32.mrb[0].mxu0
        %3091 = vdwg.mxu0
        %3092 = vmatprep.subr.mxu0 0.0
        %3093 = vmatpush1.msra.mxu0 %v2371
        %3094 = vmatprep.subr.mxu0 0.0
        %3095 = vmatpush1.msra.mxu0 %v2372
        %3096 = vmatprep.subr.mxu0 0.0
        %3097 = vmatpush1.msra.mxu0 %v2373
        %3098 = vmatprep.subr.mxu0 0.0
        %3099 = vmatpush1.msra.mxu0 %v2374
        %3100 = vmatprep.subr.mxu0 0.0
        %3101 = vmatpush1.msra.mxu0 %v2375
        %3102 = vmatprep.subr.mxu0 0.0
        %3103 = vmatpush1.msra.mxu0 %v2376
        %3104 = vmatprep.subr.mxu0 0.0
        %3105 = vmatpush1.msra.mxu0 %v2377
        %3106 = vmatprep.subr.mxu0 0.0
        %3107 = vmatpush1.msra.mxu0 %v2378
        %3108 = vmatprep.subr.mxu0 0.0
        %3109 = vmatpush1.msra.mxu0 %v2379
        %3110 = vmatprep.subr.mxu0 0.0
        %3111 = vmatpush1.msra.mxu0 %v2380
        %3112 = vmatprep.subr.mxu0 0.0
        %3113 = vmatpush1.msra.mxu0 %v2381
        %3114 = vmatprep.subr.mxu0 0.0
        %3115 = vmatpush1.msra.mxu0 %v2382
        %3116 = vmatprep.subr.mxu0 0.0
        %3117 = vmatpush1.msra.mxu0 %v2383
        %3118 = vmatprep.subr.mxu0 0.0
        %3119 = vmatpush1.msra.mxu0 %v2384
        %3120 = vmatprep.subr.mxu0 0.0
        %3121 = vmatpush1.msra.mxu0 %v2385
        %3122 = vmatprep.subr.mxu0 0.0
        %3123 = vmatpush1.msra.mxu0 %v2386
        %3124 = vmatprep.subr.mxu0 0.0
        %3125 = vmatpush1.msra.mxu0 %v2387
        %3126 = vmatprep.subr.mxu0 0.0
        %3127 = vmatpush1.msra.mxu0 %v2388
        %3128 = vmatprep.subr.mxu0 0.0
        %3129 = vmatpush1.msra.mxu0 %v2389
        %3130 = vmatprep.subr.mxu0 0.0
        %3131 = vmatpush1.msra.mxu0 %v2390
        %3132 = vmatprep.subr.mxu0 0.0
        %3133 = vmatpush1.msra.mxu0 %v2391
        %3134 = vmatprep.subr.mxu0 0.0
        %3135 = vmatpush1.msra.mxu0 %v2392
        %3136 = vmatprep.subr.mxu0 0.0
        %3137 = vmatpush1.msra.mxu0 %v2393
        %3138 = vmatprep.subr.mxu0 0.0
        %3139 = vmatpush1.msra.mxu0 %v2394
        %3140 = vmatprep.subr.mxu0 0.0
        %3141 = vmatpush1.msra.mxu0 %v2395
        %3142 = vmatprep.subr.mxu0 0.0
        %3143 = vmatpush1.msra.mxu0 %v2396
        %3144 = vmatprep.subr.mxu0 0.0
        %3145 = vmatpush1.msra.mxu0 %v2397
        %3146 = vmatprep.subr.mxu0 0.0
        %3147 = vmatpush1.msra.mxu0 %v2398
        %3148 = vmatprep.subr.mxu0 0.0
        %3149 = vmatpush1.msra.mxu0 %v2399
        %3150 = vmatprep.subr.mxu0 0.0
        %3151 = vmatpush1.msra.mxu0 %v2400
        %3152 = vmatprep.subr.mxu0 0.0
        %3153 = vmatpush1.msra.mxu0 %v2401
        %3154 = vmatprep.subr.mxu0 0.0
        %3155 = vmatpush1.msra.mxu0 %v2402
        %3156 = vmatprep.mubr.f32.mxu0 %v2827
        %3157 = vmatmul.mubr.f32.gmra.mrb[0].mxu0 %v2819
        %v3158 = vpop.f32.mrb[0].mxu0
        %v3159 = vadd.f32 %v3089, %v3158
        %v3160 = vpop.f32.mrb[0].mxu0
        %3161 = vdwg.mxu0
        %3162 = vmatprep.subr.mxu0 0.0
        %3163 = vmatpush1.msra.mxu0 %v2403
        %3164 = vmatprep.subr.mxu0 0.0
        %3165 = vmatpush1.msra.mxu0 %v2404
        %3166 = vmatprep.subr.mxu0 0.0
        %3167 = vmatpush1.msra.mxu0 %v2405
        %3168 = vmatprep.subr.mxu0 0.0
        %3169 = vmatpush1.msra.mxu0 %v2406
        %3170 = vmatprep.subr.mxu0 0.0
        %3171 = vmatpush1.msra.mxu0 %v2407
        %3172 = vmatprep.subr.mxu0 0.0
        %3173 = vmatpush1.msra.mxu0 %v2408
        %3174 = vmatprep.subr.mxu0 0.0
        %3175 = vmatpush1.msra.mxu0 %v2409
        %3176 = vmatprep.subr.mxu0 0.0
        %3177 = vmatpush1.msra.mxu0 %v2410
        %3178 = vmatprep.subr.mxu0 0.0
        %3179 = vmatpush1.msra.mxu0 %v2411
        %3180 = vmatprep.subr.mxu0 0.0
        %3181 = vmatpush1.msra.mxu0 %v2412
        %3182 = vmatprep.subr.mxu0 0.0
        %3183 = vmatpush1.msra.mxu0 %v2413
        %3184 = vmatprep.subr.mxu0 0.0
        %3185 = vmatpush1.msra.mxu0 %v2414
        %3186 = vmatprep.subr.mxu0 0.0
        %3187 = vmatpush1.msra.mxu0 %v2415
        %3188 = vmatprep.subr.mxu0 0.0
        %3189 = vmatpush1.msra.mxu0 %v2416
        %3190 = vmatprep.subr.mxu0 0.0
        %3191 = vmatpush1.msra.mxu0 %v2417
        %3192 = vmatprep.subr.mxu0 0.0
        %3193 = vmatpush1.msra.mxu0 %v2418
        %3194 = vmatprep.subr.mxu0 0.0
        %3195 = vmatpush1.msra.mxu0 %v2419
        %3196 = vmatprep.subr.mxu0 0.0
        %3197 = vmatpush1.msra.mxu0 %v2420
        %3198 = vmatprep.subr.mxu0 0.0
        %3199 = vmatpush1.msra.mxu0 %v2421
        %3200 = vmatprep.subr.mxu0 0.0
        %3201 = vmatpush1.msra.mxu0 %v2422
        %3202 = vmatprep.subr.mxu0 0.0
        %3203 = vmatpush1.msra.mxu0 %v2423
        %3204 = vmatprep.subr.mxu0 0.0
        %3205 = vmatpush1.msra.mxu0 %v2424
        %3206 = vmatprep.subr.mxu0 0.0
        %3207 = vmatpush1.msra.mxu0 %v2425
        %3208 = vmatprep.subr.mxu0 0.0
        %3209 = vmatpush1.msra.mxu0 %v2426
        %3210 = vmatprep.subr.mxu0 0.0
        %3211 = vmatpush1.msra.mxu0 %v2427
        %3212 = vmatprep.subr.mxu0 0.0
        %3213 = vmatpush1.msra.mxu0 %v2428
        %3214 = vmatprep.subr.mxu0 0.0
        %3215 = vmatpush1.msra.mxu0 %v2429
        %3216 = vmatprep.subr.mxu0 0.0
        %3217 = vmatpush1.msra.mxu0 %v2430
        %3218 = vmatprep.subr.mxu0 0.0
        %3219 = vmatpush1.msra.mxu0 %v2431
        %3220 = vmatprep.subr.mxu0 0.0
        %3221 = vmatpush1.msra.mxu0 %v2432
        %3222 = vmatprep.subr.mxu0 0.0
        %3223 = vmatpush1.msra.mxu0 %v2433
        %3224 = vmatprep.subr.mxu0 0.0
        %3225 = vmatpush1.msra.mxu0 %v2434
        %3226 = vmatprep.mubr.f32.mxu0 %v2828
        %3227 = vmatmul.mubr.f32.gmra.mrb[0].mxu0 %v2826
        %v3228 = vpop.f32.mrb[0].mxu0
        %v3229 = vadd.f32 %v3159, %v3228
        %v3230 = vpop.f32.mrb[0].mxu0
        %3231 = vdwg.mxu0
        %3232 = vmatprep.subr.mxu0 0.0
        %3233 = vmatpush1.msra.mxu0 %v2435
        %3234 = vmatprep.subr.mxu0 0.0
        %3235 = vmatpush1.msra.mxu0 %v2436
        %3236 = vmatprep.subr.mxu0 0.0
        %3237 = vmatpush1.msra.mxu0 %v2437
        %3238 = vmatprep.subr.mxu0 0.0
        %3239 = vmatpush1.msra.mxu0 %v2438
        %3240 = vmatprep.subr.mxu0 0.0
        %3241 = vmatpush1.msra.mxu0 %v2439
        %3242 = vmatprep.subr.mxu0 0.0
        %3243 = vmatpush1.msra.mxu0 %v2440
        %3244 = vmatprep.subr.mxu0 0.0
        %3245 = vmatpush1.msra.mxu0 %v2441
        %3246 = vmatprep.subr.mxu0 0.0
        %3247 = vmatpush1.msra.mxu0 %v2442
        %3248 = vmatprep.subr.mxu0 0.0
        %3249 = vmatpush1.msra.mxu0 %v2443
        %3250 = vmatprep.subr.mxu0 0.0
        %3251 = vmatpush1.msra.mxu0 %v2444
        %3252 = vmatprep.subr.mxu0 0.0
        %3253 = vmatpush1.msra.mxu0 %v2445
        %3254 = vmatprep.subr.mxu0 0.0
        %3255 = vmatpush1.msra.mxu0 %v2446
        %3256 = vmatprep.subr.mxu0 0.0
        %3257 = vmatpush1.msra.mxu0 %v2447
        %3258 = vmatprep.subr.mxu0 0.0
        %3259 = vmatpush1.msra.mxu0 %v2448
        %3260 = vmatprep.subr.mxu0 0.0
        %3261 = vmatpush1.msra.mxu0 %v2449
        %3262 = vmatprep.subr.mxu0 0.0
        %3263 = vmatpush1.msra.mxu0 %v2450
        %3264 = vmatprep.subr.mxu0 0.0
        %3265 = vmatpush1.msra.mxu0 %v2451
        %3266 = vmatprep.subr.mxu0 0.0
        %3267 = vmatpush1.msra.mxu0 %v2452
        %3268 = vmatprep.subr.mxu0 0.0
        %3269 = vmatpush1.msra.mxu0 %v2453
        %3270 = vmatprep.subr.mxu0 0.0
        %3271 = vmatpush1.msra.mxu0 %v2454
        %3272 = vmatprep.subr.mxu0 0.0
        %3273 = vmatpush1.msra.mxu0 %v2455
        %3274 = vmatprep.subr.mxu0 0.0
        %3275 = vmatpush1.msra.mxu0 %v2456
        %3276 = vmatprep.subr.mxu0 0.0
        %3277 = vmatpush1.msra.mxu0 %v2457
        %3278 = vmatprep.subr.mxu0 0.0
        %3279 = vmatpush1.msra.mxu0 %v2458
        %3280 = vmatprep.subr.mxu0 0.0
        %3281 = vmatpush1.msra.mxu0 %v2459
        %3282 = vmatprep.subr.mxu0 0.0
        %3283 = vmatpush1.msra.mxu0 %v2460
        %3284 = vmatprep.subr.mxu0 0.0
        %3285 = vmatpush1.msra.mxu0 %v2461
        %3286 = vmatprep.subr.mxu0 0.0
        %3287 = vmatpush1.msra.mxu0 %v2462
        %3288 = vmatprep.subr.mxu0 0.0
        %3289 = vmatpush1.msra.mxu0 %v2463
        %3290 = vmatprep.subr.mxu0 0.0
        %3291 = vmatpush1.msra.mxu0 %v2464
        %3292 = vmatprep.subr.mxu0 0.0
        %3293 = vmatpush1.msra.mxu0 %v2465
        %3294 = vmatprep.subr.mxu0 0.0
        %3295 = vmatpush1.msra.mxu0 %v2466
        %3296 = vmatprep.mubr.f32.mxu0 %v2844
        %3297 = vmatmul.mubr.f32.gmra.mrb[0].mxu0 %v2836
        %v3298 = vpop.f32.mrb[0].mxu0
        %v3299 = vadd.f32 %v3229, %v3298
        %v3300 = vpop.f32.mrb[0].mxu0
        %3301 = vdwg.mxu0
        %3302 = vmatprep.subr.mxu0 0.0
        %3303 = vmatpush1.msra.mxu0 %v2467
        %3304 = vmatprep.subr.mxu0 0.0
        %3305 = vmatpush1.msra.mxu0 %v2468
        %3306 = vmatprep.subr.mxu0 0.0
        %3307 = vmatpush1.msra.mxu0 %v2469
        %3308 = vmatprep.subr.mxu0 0.0
        %3309 = vmatpush1.msra.mxu0 %v2470
        %3310 = vmatprep.subr.mxu0 0.0
        %3311 = vmatpush1.msra.mxu0 %v2471
        %3312 = vmatprep.subr.mxu0 0.0
        %3313 = vmatpush1.msra.mxu0 %v2472
        %3314 = vmatprep.subr.mxu0 0.0
        %3315 = vmatpush1.msra.mxu0 %v2473
        %3316 = vmatprep.subr.mxu0 0.0
        %3317 = vmatpush1.msra.mxu0 %v2474
        %3318 = vmatprep.subr.mxu0 0.0
        %3319 = vmatpush1.msra.mxu0 %v2475
        %3320 = vmatprep.subr.mxu0 0.0
        %3321 = vmatpush1.msra.mxu0 %v2476
        %3322 = vmatprep.subr.mxu0 0.0
        %3323 = vmatpush1.msra.mxu0 %v2477
        %3324 = vmatprep.subr.mxu0 0.0
        %3325 = vmatpush1.msra.mxu0 %v2478
        %3326 = vmatprep.subr.mxu0 0.0
        %3327 = vmatpush1.msra.mxu0 %v2479
        %3328 = vmatprep.subr.mxu0 0.0
        %3329 = vmatpush1.msra.mxu0 %v2480
        %3330 = vmatprep.subr.mxu0 0.0
        %3331 = vmatpush1.msra.mxu0 %v2481
        %3332 = vmatprep.subr.mxu0 0.0
        %3333 = vmatpush1.msra.mxu0 %v2482
        %3334 = vmatprep.subr.mxu0 0.0
        %3335 = vmatpush1.msra.mxu0 %v2483
        %3336 = vmatprep.subr.mxu0 0.0
        %3337 = vmatpush1.msra.mxu0 %v2484
        %3338 = vmatprep.subr.mxu0 0.0
        %3339 = vmatpush1.msra.mxu0 %v2485
        %3340 = vmatprep.subr.mxu0 0.0
        %3341 = vmatpush1.msra.mxu0 %v2486
        %3342 = vmatprep.subr.mxu0 0.0
        %3343 = vmatpush1.msra.mxu0 %v2487
        %3344 = vmatprep.subr.mxu0 0.0
        %3345 = vmatpush1.msra.mxu0 %v2488
        %3346 = vmatprep.subr.mxu0 0.0
        %3347 = vmatpush1.msra.mxu0 %v2489
        %3348 = vmatprep.subr.mxu0 0.0
        %3349 = vmatpush1.msra.mxu0 %v2490
        %3350 = vmatprep.subr.mxu0 0.0
        %3351 = vmatpush1.msra.mxu0 %v2491
        %3352 = vmatprep.subr.mxu0 0.0
        %3353 = vmatpush1.msra.mxu0 %v2492
        %3354 = vmatprep.subr.mxu0 0.0
        %3355 = vmatpush1.msra.mxu0 %v2493
        %3356 = vmatprep.subr.mxu0 0.0
        %3357 = vmatpush1.msra.mxu0 %v2494
        %3358 = vmatprep.subr.mxu0 0.0
        %3359 = vmatpush1.msra.mxu0 %v2495
        %3360 = vmatprep.subr.mxu0 0.0
        %3361 = vmatpush1.msra.mxu0 %v2496
        %3362 = vmatprep.subr.mxu0 0.0
        %3363 = vmatpush1.msra.mxu0 %v2497
        %3364 = vmatprep.subr.mxu0 0.0
        %3365 = vmatpush1.msra.mxu0 %v2498
        %3366 = vmatprep.mubr.f32.mxu0 %v2845
        %3367 = vmatmul.mubr.f32.gmra.mrb[0].mxu0 %v2843
        %v3368 = vpop.f32.mrb[0].mxu0
        %v3369 = vadd.f32 %v3299, %v3368
        %v3370 = vpop.f32.mrb[0].mxu0
        %3371 = vdwg.mxu0
        %3372 = vmatprep.subr.mxu0 0.0
        %3373 = vmatpush1.msra.mxu0 %v2499
        %3374 = vmatprep.subr.mxu0 0.0
        %3375 = vmatpush1.msra.mxu0 %v2500
        %3376 = vmatprep.subr.mxu0 0.0
        %3377 = vmatpush1.msra.mxu0 %v2501
        %3378 = vmatprep.subr.mxu0 0.0
        %3379 = vmatpush1.msra.mxu0 %v2502
        %3380 = vmatprep.subr.mxu0 0.0
        %3381 = vmatpush1.msra.mxu0 %v2503
        %3382 = vmatprep.subr.mxu0 0.0
        %3383 = vmatpush1.msra.mxu0 %v2504
        %3384 = vmatprep.subr.mxu0 0.0
        %3385 = vmatpush1.msra.mxu0 %v2505
        %3386 = vmatprep.subr.mxu0 0.0
        %3387 = vmatpush1.msra.mxu0 %v2506
        %3388 = vmatprep.subr.mxu0 0.0
        %3389 = vmatpush1.msra.mxu0 %v2507
        %3390 = vmatprep.subr.mxu0 0.0
        %3391 = vmatpush1.msra.mxu0 %v2508
        %3392 = vmatprep.subr.mxu0 0.0
        %3393 = vmatpush1.msra.mxu0 %v2509
        %3394 = vmatprep.subr.mxu0 0.0
        %3395 = vmatpush1.msra.mxu0 %v2510
        %3396 = vmatprep.subr.mxu0 0.0
        %3397 = vmatpush1.msra.mxu0 %v2511
        %3398 = vmatprep.subr.mxu0 0.0
        %3399 = vmatpush1.msra.mxu0 %v2512
        %3400 = vmatprep.subr.mxu0 0.0
        %3401 = vmatpush1.msra.mxu0 %v2513
        %3402 = vmatprep.subr.mxu0 0.0
        %3403 = vmatpush1.msra.mxu0 %v2514
        %3404 = vmatprep.subr.mxu0 0.0
        %3405 = vmatpush1.msra.mxu0 %v2515
        %3406 = vmatprep.subr.mxu0 0.0
        %3407 = vmatpush1.msra.mxu0 %v2516
        %3408 = vmatprep.subr.mxu0 0.0
        %3409 = vmatpush1.msra.mxu0 %v2517
        %3410 = vmatprep.subr.mxu0 0.0
        %3411 = vmatpush1.msra.mxu0 %v2518
        %3412 = vmatprep.subr.mxu0 0.0
        %3413 = vmatpush1.msra.mxu0 %v2519
        %3414 = vmatprep.subr.mxu0 0.0
        %3415 = vmatpush1.msra.mxu0 %v2520
        %3416 = vmatprep.subr.mxu0 0.0
        %3417 = vmatpush1.msra.mxu0 %v2521
        %3418 = vmatprep.subr.mxu0 0.0
        %3419 = vmatpush1.msra.mxu0 %v2522
        %3420 = vmatprep.subr.mxu0 0.0
        %3421 = vmatpush1.msra.mxu0 %v2523
        %3422 = vmatprep.subr.mxu0 0.0
        %3423 = vmatpush1.msra.mxu0 %v2524
        %3424 = vmatprep.subr.mxu0 0.0
        %3425 = vmatpush1.msra.mxu0 %v2525
        %3426 = vmatprep.subr.mxu0 0.0
        %3427 = vmatpush1.msra.mxu0 %v2526
        %3428 = vmatprep.subr.mxu0 0.0
        %3429 = vmatpush1.msra.mxu0 %v2527
        %3430 = vmatprep.subr.mxu0 0.0
        %3431 = vmatpush1.msra.mxu0 %v2528
        %3432 = vmatprep.subr.mxu0 0.0
        %3433 = vmatpush1.msra.mxu0 %v2529
        %3434 = vmatprep.subr.mxu0 0.0
        %3435 = vmatpush1.msra.mxu0 %v2530
        %3436 = vmatprep.mubr.f32.mxu0 %v2861
        %3437 = vmatmul.mubr.f32.gmra.mrb[0].mxu0 %v2853
        %v3438 = vpop.f32.mrb[0].mxu0
        %v3439 = vadd.f32 %v3369, %v3438
        %v3440 = vpop.f32.mrb[0].mxu0
        %3441 = vdwg.mxu0
        %3442 = vmatprep.subr.mxu0 0.0
        %3443 = vmatpush1.msra.mxu0 %v2531
        %3444 = vmatprep.subr.mxu0 0.0
        %3445 = vmatpush1.msra.mxu0 %v2532
        %3446 = vmatprep.subr.mxu0 0.0
        %3447 = vmatpush1.msra.mxu0 %v2533
        %3448 = vmatprep.subr.mxu0 0.0
        %3449 = vmatpush1.msra.mxu0 %v2534
        %3450 = vmatprep.subr.mxu0 0.0
        %3451 = vmatpush1.msra.mxu0 %v2535
        %3452 = vmatprep.subr.mxu0 0.0
        %3453 = vmatpush1.msra.mxu0 %v2536
        %3454 = vmatprep.subr.mxu0 0.0
        %3455 = vmatpush1.msra.mxu0 %v2537
        %3456 = vmatprep.subr.mxu0 0.0
        %3457 = vmatpush1.msra.mxu0 %v2538
        %3458 = vmatprep.subr.mxu0 0.0
        %3459 = vmatpush1.msra.mxu0 %v2539
        %3460 = vmatprep.subr.mxu0 0.0
        %3461 = vmatpush1.msra.mxu0 %v2540
        %3462 = vmatprep.subr.mxu0 0.0
        %3463 = vmatpush1.msra.mxu0 %v2541
        %3464 = vmatprep.subr.mxu0 0.0
        %3465 = vmatpush1.msra.mxu0 %v2542
        %3466 = vmatprep.subr.mxu0 0.0
        %3467 = vmatpush1.msra.mxu0 %v2543
        %3468 = vmatprep.subr.mxu0 0.0
        %3469 = vmatpush1.msra.mxu0 %v2544
        %3470 = vmatprep.subr.mxu0 0.0
        %3471 = vmatpush1.msra.mxu0 %v2545
        %3472 = vmatprep.subr.mxu0 0.0
        %3473 = vmatpush1.msra.mxu0 %v2546
        %3474 = vmatprep.subr.mxu0 0.0
        %3475 = vmatpush1.msra.mxu0 %v2547
        %3476 = vmatprep.subr.mxu0 0.0
        %3477 = vmatpush1.msra.mxu0 %v2548
        %3478 = vmatprep.subr.mxu0 0.0
        %3479 = vmatpush1.msra.mxu0 %v2549
        %3480 = vmatprep.subr.mxu0 0.0
        %3481 = vmatpush1.msra.mxu0 %v2550
        %3482 = vmatprep.subr.mxu0 0.0
        %3483 = vmatpush1.msra.mxu0 %v2551
        %3484 = vmatprep.subr.mxu0 0.0
        %3485 = vmatpush1.msra.mxu0 %v2552
        %3486 = vmatprep.subr.mxu0 0.0
        %3487 = vmatpush1.msra.mxu0 %v2553
        %3488 = vmatprep.subr.mxu0 0.0
        %3489 = vmatpush1.msra.mxu0 %v2554
        %3490 = vmatprep.subr.mxu0 0.0
        %3491 = vmatpush1.msra.mxu0 %v2555
        %3492 = vmatprep.subr.mxu0 0.0
        %3493 = vmatpush1.msra.mxu0 %v2556
        %3494 = vmatprep.subr.mxu0 0.0
        %3495 = vmatpush1.msra.mxu0 %v2557
        %3496 = vmatprep.subr.mxu0 0.0
        %3497 = vmatpush1.msra.mxu0 %v2558
        %3498 = vmatprep.subr.mxu0 0.0
        %3499 = vmatpush1.msra.mxu0 %v2559
        %3500 = vmatprep.subr.mxu0 0.0
        %3501 = vmatpush1.msra.mxu0 %v2560
        %3502 = vmatprep.subr.mxu0 0.0
        %3503 = vmatpush1.msra.mxu0 %v2561
        %3504 = vmatprep.subr.mxu0 0.0
        %3505 = vmatpush1.msra.mxu0 %v2562
        %3506 = vmatprep.mubr.f32.mxu0 %v2862
        %3507 = vmatmul.mubr.f32.gmra.mrb[0].mxu0 %v2860
        %v3508 = vpop.f32.mrb[0].mxu0
        %v3509 = vadd.f32 %v3439, %v3508
        %v3510 = vpop.f32.mrb[0].mxu0
        %3511 = vdwg.mxu0
        %3512 = vmatprep.subr.mxu0 0.0
        %3513 = vmatpush1.msra.mxu0 %v2563
        %3514 = vmatprep.subr.mxu0 0.0
        %3515 = vmatpush1.msra.mxu0 %v2564
        %3516 = vmatprep.subr.mxu0 0.0
        %3517 = vmatpush1.msra.mxu0 %v2565
        %3518 = vmatprep.subr.mxu0 0.0
        %3519 = vmatpush1.msra.mxu0 %v2566
        %3520 = vmatprep.subr.mxu0 0.0
        %3521 = vmatpush1.msra.mxu0 %v2567
        %3522 = vmatprep.subr.mxu0 0.0
        %3523 = vmatpush1.msra.mxu0 %v2568
        %3524 = vmatprep.subr.mxu0 0.0
        %3525 = vmatpush1.msra.mxu0 %v2569
        %3526 = vmatprep.subr.mxu0 0.0
        %3527 = vmatpush1.msra.mxu0 %v2570
        %3528 = vmatprep.subr.mxu0 0.0
        %3529 = vmatpush1.msra.mxu0 %v2571
        %3530 = vmatprep.subr.mxu0 0.0
        %3531 = vmatpush1.msra.mxu0 %v2572
        %3532 = vmatprep.subr.mxu0 0.0
        %3533 = vmatpush1.msra.mxu0 %v2573
        %3534 = vmatprep.subr.mxu0 0.0
        %3535 = vmatpush1.msra.mxu0 %v2574
        %3536 = vmatprep.subr.mxu0 0.0
        %3537 = vmatpush1.msra.mxu0 %v2575
        %3538 = vmatprep.subr.mxu0 0.0
        %3539 = vmatpush1.msra.mxu0 %v2576
        %3540 = vmatprep.subr.mxu0 0.0
        %3541 = vmatpush1.msra.mxu0 %v2577
        %3542 = vmatprep.subr.mxu0 0.0
        %3543 = vmatpush1.msra.mxu0 %v2578
        %3544 = vmatprep.subr.mxu0 0.0
        %3545 = vmatpush1.msra.mxu0 %v2579
        %3546 = vmatprep.subr.mxu0 0.0
        %3547 = vmatpush1.msra.mxu0 %v2580
        %3548 = vmatprep.subr.mxu0 0.0
        %3549 = vmatpush1.msra.mxu0 %v2581
        %3550 = vmatprep.subr.mxu0 0.0
        %3551 = vmatpush1.msra.mxu0 %v2582
        %3552 = vmatprep.subr.mxu0 0.0
        %3553 = vmatpush1.msra.mxu0 %v2583
        %3554 = vmatprep.subr.mxu0 0.0
        %3555 = vmatpush1.msra.mxu0 %v2584
        %3556 = vmatprep.subr.mxu0 0.0
        %3557 = vmatpush1.msra.mxu0 %v2585
        %3558 = vmatprep.subr.mxu0 0.0
        %3559 = vmatpush1.msra.mxu0 %v2586
        %3560 = vmatprep.subr.mxu0 0.0
        %3561 = vmatpush1.msra.mxu0 %v2587
        %3562 = vmatprep.subr.mxu0 0.0
        %3563 = vmatpush1.msra.mxu0 %v2588
        %3564 = vmatprep.subr.mxu0 0.0
        %3565 = vmatpush1.msra.mxu0 %v2589
        %3566 = vmatprep.subr.mxu0 0.0
        %3567 = vmatpush1.msra.mxu0 %v2590
        %3568 = vmatprep.subr.mxu0 0.0
        %3569 = vmatpush1.msra.mxu0 %v2591
        %3570 = vmatprep.subr.mxu0 0.0
        %3571 = vmatpush1.msra.mxu0 %v2592
        %3572 = vmatprep.subr.mxu0 0.0
        %3573 = vmatpush1.msra.mxu0 %v2593
        %3574 = vmatprep.subr.mxu0 0.0
        %3575 = vmatpush1.msra.mxu0 %v2594
        %3576 = vmatprep.mubr.f32.mxu0 %v2878
        %3577 = vmatmul.mubr.f32.gmra.mrb[0].mxu0 %v2870
        %v3578 = vpop.f32.mrb[0].mxu0
        %v3579 = vadd.f32 %v3509, %v3578
        %v3580 = vpop.f32.mrb[0].mxu0
        %3581 = vdwg.mxu0
        %3582 = vmatprep.subr.mxu0 0.0
        %3583 = vmatpush1.msra.mxu0 %v2595
        %3584 = vmatprep.subr.mxu0 0.0
        %3585 = vmatpush1.msra.mxu0 %v2596
        %3586 = vmatprep.subr.mxu0 0.0
        %3587 = vmatpush1.msra.mxu0 %v2597
        %3588 = vmatprep.subr.mxu0 0.0
        %3589 = vmatpush1.msra.mxu0 %v2598
        %3590 = vmatprep.subr.mxu0 0.0
        %3591 = vmatpush1.msra.mxu0 %v2599
        %3592 = vmatprep.subr.mxu0 0.0
        %3593 = vmatpush1.msra.mxu0 %v2600
        %3594 = vmatprep.subr.mxu0 0.0
        %3595 = vmatpush1.msra.mxu0 %v2601
        %3596 = vmatprep.subr.mxu0 0.0
        %3597 = vmatpush1.msra.mxu0 %v2602
        %3598 = vmatprep.subr.mxu0 0.0
        %3599 = vmatpush1.msra.mxu0 %v2603
        %3600 = vmatprep.subr.mxu0 0.0
        %3601 = vmatpush1.msra.mxu0 %v2604
        %3602 = vmatprep.subr.mxu0 0.0
        %3603 = vmatpush1.msra.mxu0 %v2605
        %3604 = vmatprep.subr.mxu0 0.0
        %3605 = vmatpush1.msra.mxu0 %v2606
        %3606 = vmatprep.subr.mxu0 0.0
        %3607 = vmatpush1.msra.mxu0 %v2607
        %3608 = vmatprep.subr.mxu0 0.0
        %3609 = vmatpush1.msra.mxu0 %v2608
        %3610 = vmatprep.subr.mxu0 0.0
        %3611 = vmatpush1.msra.mxu0 %v2609
        %3612 = vmatprep.subr.mxu0 0.0
        %3613 = vmatpush1.msra.mxu0 %v2610
        %3614 = vmatprep.subr.mxu0 0.0
        %3615 = vmatpush1.msra.mxu0 %v2611
        %3616 = vmatprep.subr.mxu0 0.0
        %3617 = vmatpush1.msra.mxu0 %v2612
        %3618 = vmatprep.subr.mxu0 0.0
        %3619 = vmatpush1.msra.mxu0 %v2613
        %3620 = vmatprep.subr.mxu0 0.0
        %3621 = vmatpush1.msra.mxu0 %v2614
        %3622 = vmatprep.subr.mxu0 0.0
        %3623 = vmatpush1.msra.mxu0 %v2615
        %3624 = vmatprep.subr.mxu0 0.0
        %3625 = vmatpush1.msra.mxu0 %v2616
        %3626 = vmatprep.subr.mxu0 0.0
        %3627 = vmatpush1.msra.mxu0 %v2617
        %3628 = vmatprep.subr.mxu0 0.0
        %3629 = vmatpush1.msra.mxu0 %v2618
        %3630 = vmatprep.subr.mxu0 0.0
        %3631 = vmatpush1.msra.mxu0 %v2619
        %3632 = vmatprep.subr.mxu0 0.0
        %3633 = vmatpush1.msra.mxu0 %v2620
        %3634 = vmatprep.subr.mxu0 0.0
        %3635 = vmatpush1.msra.mxu0 %v2621
        %3636 = vmatprep.subr.mxu0 0.0
        %3637 = vmatpush1.msra.mxu0 %v2622
        %3638 = vmatprep.subr.mxu0 0.0
        %3639 = vmatpush1.msra.mxu0 %v2623
        %3640 = vmatprep.subr.mxu0 0.0
        %3641 = vmatpush1.msra.mxu0 %v2624
        %3642 = vmatprep.subr.mxu0 0.0
        %3643 = vmatpush1.msra.mxu0 %v2625
        %3644 = vmatprep.subr.mxu0 0.0
        %3645 = vmatpush1.msra.mxu0 %v2626
        %3646 = vmatprep.mubr.f32.mxu0 %v2879
        %3647 = vmatmul.mubr.f32.gmra.mrb[0].mxu0 %v2877
        %v3648 = vpop.f32.mrb[0].mxu0
        %v3649 = vadd.f32 %v3579, %v3648
        %v3650 = vpop.f32.mrb[0].mxu0
        %3651 = vdwg.mxu0
        %3652 = vmatprep.subr.mxu0 0.0
        %3653 = vmatpush1.msra.mxu0 %v2627
        %3654 = vmatprep.subr.mxu0 0.0
        %3655 = vmatpush1.msra.mxu0 %v2628
        %3656 = vmatprep.subr.mxu0 0.0
        %3657 = vmatpush1.msra.mxu0 %v2629
        %3658 = vmatprep.subr.mxu0 0.0
        %3659 = vmatpush1.msra.mxu0 %v2630
        %3660 = vmatprep.subr.mxu0 0.0
        %3661 = vmatpush1.msra.mxu0 %v2631
        %3662 = vmatprep.subr.mxu0 0.0
        %3663 = vmatpush1.msra.mxu0 %v2632
        %3664 = vmatprep.subr.mxu0 0.0
        %3665 = vmatpush1.msra.mxu0 %v2633
        %3666 = vmatprep.subr.mxu0 0.0
        %3667 = vmatpush1.msra.mxu0 %v2634
        %3668 = vmatprep.subr.mxu0 0.0
        %3669 = vmatpush1.msra.mxu0 %v2635
        %3670 = vmatprep.subr.mxu0 0.0
        %3671 = vmatpush1.msra.mxu0 %v2636
        %3672 = vmatprep.subr.mxu0 0.0
        %3673 = vmatpush1.msra.mxu0 %v2637
        %3674 = vmatprep.subr.mxu0 0.0
        %3675 = vmatpush1.msra.mxu0 %v2638
        %3676 = vmatprep.subr.mxu0 0.0
        %3677 = vmatpush1.msra.mxu0 %v2639
        %3678 = vmatprep.subr.mxu0 0.0
        %3679 = vmatpush1.msra.mxu0 %v2640
        %3680 = vmatprep.subr.mxu0 0.0
        %3681 = vmatpush1.msra.mxu0 %v2641
        %3682 = vmatprep.subr.mxu0 0.0
        %3683 = vmatpush1.msra.mxu0 %v2642
        %3684 = vmatprep.subr.mxu0 0.0
        %3685 = vmatpush1.msra.mxu0 %v2643
        %3686 = vmatprep.subr.mxu0 0.0
        %3687 = vmatpush1.msra.mxu0 %v2644
        %3688 = vmatprep.subr.mxu0 0.0
        %3689 = vmatpush1.msra.mxu0 %v2645
        %3690 = vmatprep.subr.mxu0 0.0
        %3691 = vmatpush1.msra.mxu0 %v2646
        %3692 = vmatprep.subr.mxu0 0.0
        %3693 = vmatpush1.msra.mxu0 %v2647
        %3694 = vmatprep.subr.mxu0 0.0
        %3695 = vmatpush1.msra.mxu0 %v2648
        %3696 = vmatprep.subr.mxu0 0.0
        %3697 = vmatpush1.msra.mxu0 %v2649
        %3698 = vmatprep.subr.mxu0 0.0
        %3699 = vmatpush1.msra.mxu0 %v2650
        %3700 = vmatprep.subr.mxu0 0.0
        %3701 = vmatpush1.msra.mxu0 %v2651
        %3702 = vmatprep.subr.mxu0 0.0
        %3703 = vmatpush1.msra.mxu0 %v2652
        %3704 = vmatprep.subr.mxu0 0.0
        %3705 = vmatpush1.msra.mxu0 %v2653
        %3706 = vmatprep.subr.mxu0 0.0
        %3707 = vmatpush1.msra.mxu0 %v2654
        %3708 = vmatprep.subr.mxu0 0.0
        %3709 = vmatpush1.msra.mxu0 %v2655
        %3710 = vmatprep.subr.mxu0 0.0
        %3711 = vmatpush1.msra.mxu0 %v2656
        %3712 = vmatprep.subr.mxu0 0.0
        %3713 = vmatpush1.msra.mxu0 %v2657
        %3714 = vmatprep.subr.mxu0 0.0
        %3715 = vmatpush1.msra.mxu0 %v2658
        %3716 = vmatprep.mubr.f32.mxu0 %v2895
        %3717 = vmatmul.mubr.f32.gmra.mrb[0].mxu0 %v2887
        %v3718 = vpop.f32.mrb[0].mxu0
        %v3719 = vadd.f32 %v3649, %v3718
        %v3720 = vpop.f32.mrb[0].mxu0
        %3721 = vdwg.mxu0
        %3722 = vmatprep.subr.mxu0 0.0
        %3723 = vmatpush1.msra.mxu0 %v2659
        %3724 = vmatprep.subr.mxu0 0.0
        %3725 = vmatpush1.msra.mxu0 %v2660
        %3726 = vmatprep.subr.mxu0 0.0
        %3727 = vmatpush1.msra.mxu0 %v2661
        %3728 = vmatprep.subr.mxu0 0.0
        %3729 = vmatpush1.msra.mxu0 %v2662
        %3730 = vmatprep.subr.mxu0 0.0
        %3731 = vmatpush1.msra.mxu0 %v2663
        %3732 = vmatprep.subr.mxu0 0.0
        %3733 = vmatpush1.msra.mxu0 %v2664
        %3734 = vmatprep.subr.mxu0 0.0
        %3735 = vmatpush1.msra.mxu0 %v2665
        %3736 = vmatprep.subr.mxu0 0.0
        %3737 = vmatpush1.msra.mxu0 %v2666
        %3738 = vmatprep.subr.mxu0 0.0
        %3739 = vmatpush1.msra.mxu0 %v2667
        %3740 = vmatprep.subr.mxu0 0.0
        %3741 = vmatpush1.msra.mxu0 %v2668
        %3742 = vmatprep.subr.mxu0 0.0
        %3743 = vmatpush1.msra.mxu0 %v2669
        %3744 = vmatprep.subr.mxu0 0.0
        %3745 = vmatpush1.msra.mxu0 %v2670
        %3746 = vmatprep.subr.mxu0 0.0
        %3747 = vmatpush1.msra.mxu0 %v2671
        %3748 = vmatprep.subr.mxu0 0.0
        %3749 = vmatpush1.msra.mxu0 %v2672
        %3750 = vmatprep.subr.mxu0 0.0
        %3751 = vmatpush1.msra.mxu0 %v2673
        %3752 = vmatprep.subr.mxu0 0.0
        %3753 = vmatpush1.msra.mxu0 %v2674
        %3754 = vmatprep.subr.mxu0 0.0
        %3755 = vmatpush1.msra.mxu0 %v2675
        %3756 = vmatprep.subr.mxu0 0.0
        %3757 = vmatpush1.msra.mxu0 %v2676
        %3758 = vmatprep.subr.mxu0 0.0
        %3759 = vmatpush1.msra.mxu0 %v2677
        %3760 = vmatprep.subr.mxu0 0.0
        %3761 = vmatpush1.msra.mxu0 %v2678
        %3762 = vmatprep.subr.mxu0 0.0
        %3763 = vmatpush1.msra.mxu0 %v2679
        %3764 = vmatprep.subr.mxu0 0.0
        %3765 = vmatpush1.msra.mxu0 %v2680
        %3766 = vmatprep.subr.mxu0 0.0
        %3767 = vmatpush1.msra.mxu0 %v2681
        %3768 = vmatprep.subr.mxu0 0.0
        %3769 = vmatpush1.msra.mxu0 %v2682
        %3770 = vmatprep.subr.mxu0 0.0
        %3771 = vmatpush1.msra.mxu0 %v2683
        %3772 = vmatprep.subr.mxu0 0.0
        %3773 = vmatpush1.msra.mxu0 %v2684
        %3774 = vmatprep.subr.mxu0 0.0
        %3775 = vmatpush1.msra.mxu0 %v2685
        %3776 = vmatprep.subr.mxu0 0.0
        %3777 = vmatpush1.msra.mxu0 %v2686
        %3778 = vmatprep.subr.mxu0 0.0
        %3779 = vmatpush1.msra.mxu0 %v2687
        %3780 = vmatprep.subr.mxu0 0.0
        %3781 = vmatpush1.msra.mxu0 %v2688
        %3782 = vmatprep.subr.mxu0 0.0
        %3783 = vmatpush1.msra.mxu0 %v2689
        %3784 = vmatprep.subr.mxu0 0.0
        %3785 = vmatpush1.msra.mxu0 %v2690
        %3786 = vmatprep.mubr.f32.mxu0 %v2896
        %3787 = vmatmul.mubr.f32.gmra.mrb[0].mxu0 %v2894
        %v3788 = vpop.f32.mrb[0].mxu0
        %v3789 = vadd.f32 %v3719, %v3788
        %v3790 = vpop.f32.mrb[0].mxu0
        %3791 = vdwg.mxu0
        %3792 = vmatprep.subr.mxu0 0.0
        %3793 = vmatpush1.msra.mxu0 %v2691
        %3794 = vmatprep.subr.mxu0 0.0
        %3795 = vmatpush1.msra.mxu0 %v2692
        %3796 = vmatprep.subr.mxu0 0.0
        %3797 = vmatpush1.msra.mxu0 %v2693
        %3798 = vmatprep.subr.mxu0 0.0
        %3799 = vmatpush1.msra.mxu0 %v2694
        %3800 = vmatprep.subr.mxu0 0.0
        %3801 = vmatpush1.msra.mxu0 %v2695
        %3802 = vmatprep.subr.mxu0 0.0
        %3803 = vmatpush1.msra.mxu0 %v2696
        %3804 = vmatprep.subr.mxu0 0.0
        %3805 = vmatpush1.msra.mxu0 %v2697
        %3806 = vmatprep.subr.mxu0 0.0
        %3807 = vmatpush1.msra.mxu0 %v2698
        %3808 = vmatprep.subr.mxu0 0.0
        %3809 = vmatpush1.msra.mxu0 %v2699
        %3810 = vmatprep.subr.mxu0 0.0
        %3811 = vmatpush1.msra.mxu0 %v2700
        %3812 = vmatprep.subr.mxu0 0.0
        %3813 = vmatpush1.msra.mxu0 %v2701
        %3814 = vmatprep.subr.mxu0 0.0
        %3815 = vmatpush1.msra.mxu0 %v2702
        %3816 = vmatprep.subr.mxu0 0.0
        %3817 = vmatpush1.msra.mxu0 %v2703
        %3818 = vmatprep.subr.mxu0 0.0
        %3819 = vmatpush1.msra.mxu0 %v2704
        %3820 = vmatprep.subr.mxu0 0.0
        %3821 = vmatpush1.msra.mxu0 %v2705
        %3822 = vmatprep.subr.mxu0 0.0
        %3823 = vmatpush1.msra.mxu0 %v2706
        %3824 = vmatprep.subr.mxu0 0.0
        %3825 = vmatpush1.msra.mxu0 %v2707
        %3826 = vmatprep.subr.mxu0 0.0
        %3827 = vmatpush1.msra.mxu0 %v2708
        %3828 = vmatprep.subr.mxu0 0.0
        %3829 = vmatpush1.msra.mxu0 %v2709
        %3830 = vmatprep.subr.mxu0 0.0
        %3831 = vmatpush1.msra.mxu0 %v2710
        %3832 = vmatprep.subr.mxu0 0.0
        %3833 = vmatpush1.msra.mxu0 %v2711
        %3834 = vmatprep.subr.mxu0 0.0
        %3835 = vmatpush1.msra.mxu0 %v2712
        %3836 = vmatprep.subr.mxu0 0.0
        %3837 = vmatpush1.msra.mxu0 %v2713
        %3838 = vmatprep.subr.mxu0 0.0
        %3839 = vmatpush1.msra.mxu0 %v2714
        %3840 = vmatprep.subr.mxu0 0.0
        %3841 = vmatpush1.msra.mxu0 %v2715
        %3842 = vmatprep.subr.mxu0 0.0
        %3843 = vmatpush1.msra.mxu0 %v2716
        %3844 = vmatprep.subr.mxu0 0.0
        %3845 = vmatpush1.msra.mxu0 %v2717
        %3846 = vmatprep.subr.mxu0 0.0
        %3847 = vmatpush1.msra.mxu0 %v2718
        %3848 = vmatprep.subr.mxu0 0.0
        %3849 = vmatpush1.msra.mxu0 %v2719
        %3850 = vmatprep.subr.mxu0 0.0
        %3851 = vmatpush1.msra.mxu0 %v2720
        %3852 = vmatprep.subr.mxu0 0.0
        %3853 = vmatpush1.msra.mxu0 %v2721
        %3854 = vmatprep.subr.mxu0 0.0
        %3855 = vmatpush1.msra.mxu0 %v2722
        %3856 = vmatprep.mubr.f32.mxu0 %v2912
        %3857 = vmatmul.mubr.f32.gmra.mrb[0].mxu0 %v2904
        %v3858 = vpop.f32.mrb[0].mxu0
        %v3859 = vadd.f32 %v3789, %v3858
        %v3860 = vpop.f32.mrb[0].mxu0
        %3861 = vdwg.mxu0
        %3862 = vmatprep.subr.mxu0 0.0
        %3863 = vmatpush1.msra.mxu0 %v2723
        %3864 = vmatprep.subr.mxu0 0.0
        %3865 = vmatpush1.msra.mxu0 %v2724
        %3866 = vmatprep.subr.mxu0 0.0
        %3867 = vmatpush1.msra.mxu0 %v2725
        %3868 = vmatprep.subr.mxu0 0.0
        %3869 = vmatpush1.msra.mxu0 %v2726
        %3870 = vmatprep.subr.mxu0 0.0
        %3871 = vmatpush1.msra.mxu0 %v2727
        %3872 = vmatprep.subr.mxu0 0.0
        %3873 = vmatpush1.msra.mxu0 %v2728
        %3874 = vmatprep.subr.mxu0 0.0
        %3875 = vmatpush1.msra.mxu0 %v2729
        %3876 = vmatprep.subr.mxu0 0.0
        %3877 = vmatpush1.msra.mxu0 %v2730
        %3878 = vmatprep.subr.mxu0 0.0
        %3879 = vmatpush1.msra.mxu0 %v2731
        %3880 = vmatprep.subr.mxu0 0.0
        %3881 = vmatpush1.msra.mxu0 %v2732
        %3882 = vmatprep.subr.mxu0 0.0
        %3883 = vmatpush1.msra.mxu0 %v2733
        %3884 = vmatprep.subr.mxu0 0.0
        %3885 = vmatpush1.msra.mxu0 %v2734
        %3886 = vmatprep.subr.mxu0 0.0
        %3887 = vmatpush1.msra.mxu0 %v2735
        %3888 = vmatprep.subr.mxu0 0.0
        %3889 = vmatpush1.msra.mxu0 %v2736
        %3890 = vmatprep.subr.mxu0 0.0
        %3891 = vmatpush1.msra.mxu0 %v2737
        %3892 = vmatprep.subr.mxu0 0.0
        %3893 = vmatpush1.msra.mxu0 %v2738
        %3894 = vmatprep.subr.mxu0 0.0
        %3895 = vmatpush1.msra.mxu0 %v2739
        %3896 = vmatprep.subr.mxu0 0.0
        %3897 = vmatpush1.msra.mxu0 %v2740
        %3898 = vmatprep.subr.mxu0 0.0
        %3899 = vmatpush1.msra.mxu0 %v2741
        %3900 = vmatprep.subr.mxu0 0.0
        %3901 = vmatpush1.msra.mxu0 %v2742
        %3902 = vmatprep.subr.mxu0 0.0
        %3903 = vmatpush1.msra.mxu0 %v2743
        %3904 = vmatprep.subr.mxu0 0.0
        %3905 = vmatpush1.msra.mxu0 %v2744
        %3906 = vmatprep.subr.mxu0 0.0
        %3907 = vmatpush1.msra.mxu0 %v2745
        %3908 = vmatprep.subr.mxu0 0.0
        %3909 = vmatpush1.msra.mxu0 %v2746
        %3910 = vmatprep.subr.mxu0 0.0
        %3911 = vmatpush1.msra.mxu0 %v2747
        %3912 = vmatprep.subr.mxu0 0.0
        %3913 = vmatpush1.msra.mxu0 %v2748
        %3914 = vmatprep.subr.mxu0 0.0
        %3915 = vmatpush1.msra.mxu0 %v2749
        %3916 = vmatprep.subr.mxu0 0.0
        %3917 = vmatpush1.msra.mxu0 %v2750
        %3918 = vmatprep.subr.mxu0 0.0
        %3919 = vmatpush1.msra.mxu0 %v2751
        %3920 = vmatprep.subr.mxu0 0.0
        %3921 = vmatpush1.msra.mxu0 %v2752
        %3922 = vmatprep.subr.mxu0 0.0
        %3923 = vmatpush1.msra.mxu0 %v2753
        %3924 = vmatprep.subr.mxu0 0.0
        %3925 = vmatpush1.msra.mxu0 %v2754
        %3926 = vmatprep.mubr.f32.mxu0 %v2913
        %3927 = vmatmul.mubr.f32.gmra.mrb[0].mxu0 %v2911
        %v3928 = vpop.f32.mrb[0].mxu0
        %v3929 = vadd.f32 %v3859, %v3928
        %v3930 = vpop.f32.mrb[0].mxu0
        %3931 = vdwg.mxu0
        %3932 = vmatprep.subr.mxu0 0.0
        %3933 = vmatpush1.msra.mxu0 %v2755
        %3934 = vmatprep.subr.mxu0 0.0
        %3935 = vmatpush1.msra.mxu0 %v2756
        %3936 = vmatprep.subr.mxu0 0.0
        %3937 = vmatpush1.msra.mxu0 %v2757
        %3938 = vmatprep.subr.mxu0 0.0
        %3939 = vmatpush1.msra.mxu0 %v2758
        %3940 = vmatprep.subr.mxu0 0.0
        %3941 = vmatpush1.msra.mxu0 %v2759
        %3942 = vmatprep.subr.mxu0 0.0
        %3943 = vmatpush1.msra.mxu0 %v2760
        %3944 = vmatprep.subr.mxu0 0.0
        %3945 = vmatpush1.msra.mxu0 %v2761
        %3946 = vmatprep.subr.mxu0 0.0
        %3947 = vmatpush1.msra.mxu0 %v2762
        %3948 = vmatprep.subr.mxu0 0.0
        %3949 = vmatpush1.msra.mxu0 %v2763
        %3950 = vmatprep.subr.mxu0 0.0
        %3951 = vmatpush1.msra.mxu0 %v2764
        %3952 = vmatprep.subr.mxu0 0.0
        %3953 = vmatpush1.msra.mxu0 %v2765
        %3954 = vmatprep.subr.mxu0 0.0
        %3955 = vmatpush1.msra.mxu0 %v2766
        %3956 = vmatprep.subr.mxu0 0.0
        %3957 = vmatpush1.msra.mxu0 %v2767
        %3958 = vmatprep.subr.mxu0 0.0
        %3959 = vmatpush1.msra.mxu0 %v2768
        %3960 = vmatprep.subr.mxu0 0.0
        %3961 = vmatpush1.msra.mxu0 %v2769
        %3962 = vmatprep.subr.mxu0 0.0
        %3963 = vmatpush1.msra.mxu0 %v2770
        %3964 = vmatprep.subr.mxu0 0.0
        %3965 = vmatpush1.msra.mxu0 %v2771
        %3966 = vmatprep.subr.mxu0 0.0
        %3967 = vmatpush1.msra.mxu0 %v2772
        %3968 = vmatprep.subr.mxu0 0.0
        %3969 = vmatpush1.msra.mxu0 %v2773
        %3970 = vmatprep.subr.mxu0 0.0
        %3971 = vmatpush1.msra.mxu0 %v2774
        %3972 = vmatprep.subr.mxu0 0.0
        %3973 = vmatpush1.msra.mxu0 %v2775
        %3974 = vmatprep.subr.mxu0 0.0
        %3975 = vmatpush1.msra.mxu0 %v2776
        %3976 = vmatprep.subr.mxu0 0.0
        %3977 = vmatpush1.msra.mxu0 %v2777
        %3978 = vmatprep.subr.mxu0 0.0
        %3979 = vmatpush1.msra.mxu0 %v2778
        %3980 = vmatprep.subr.mxu0 0.0
        %3981 = vmatpush1.msra.mxu0 %v2779
        %3982 = vmatprep.subr.mxu0 0.0
        %3983 = vmatpush1.msra.mxu0 %v2780
        %3984 = vmatprep.subr.mxu0 0.0
        %3985 = vmatpush1.msra.mxu0 %v2781
        %3986 = vmatprep.subr.mxu0 0.0
        %3987 = vmatpush1.msra.mxu0 %v2782
        %3988 = vmatprep.subr.mxu0 0.0
        %3989 = vmatpush1.msra.mxu0 %v2783
        %3990 = vmatprep.subr.mxu0 0.0
        %3991 = vmatpush1.msra.mxu0 %v2784
        %3992 = vmatprep.subr.mxu0 0.0
        %3993 = vmatpush1.msra.mxu0 %v2785
        %3994 = vmatprep.subr.mxu0 0.0
        %3995 = vmatpush1.msra.mxu0 %v2786
        %3996 = vmatprep.mubr.f32.mxu0 %v2921
        %3997 = vmatmul.mubr.f32.gmra.mrb[0].mxu0 %v2920
        %v3998 = vpop.f32.mrb[0].mxu0
        %v3999 = vadd.f32 %v3929, %v3998
        %v4000 = vpop.f32.mrb[0].mxu0
        %4001 = vdwg.mxu0
        %v4002 = vadd.f32 %v2298, %v3999
        %4003 = vst [vmem:[#allocation2] sm:$0x3] %v4002
        %p4004 = scmp.eq.s32.totalorder %s22, 3
        // Predicated region
        $region87: #{multi_agent_cnn_critic.5} parent=77 // pred_check
          %p4005 = pneg %p4004
        $region88: #{multi_agent_cnn_critic.5} parent=77 // pred_check_branch
          %4007 = sbr.rel (%p4005) target = $region90
        $region89: #{multi_agent_cnn_critic.5} parent=77 // pred_region
          %v4008 = vld [vmem:[#allocation2] sm:$0x3]
          %v4009 = vld [vmem:[%s2] sm:$0x3]
          %v4010 = vld [vmem:[%s2279] sm:$0x3]
          %vm4011 = vcmask 15360
          %v4013 = vsel %vm4011, %v4009, 0
          %vm4015 = vcmask 1041408
          %v4017 = vsel %vm4015, %v4010, 0
          %4019 = vmatprep.subr.mxu0 0.0
          %4020 = vmatpush1.msra.mxu0 %v4017
          %4021 = vmatprep.subr.mxu0 0.0
          %4022 = vmatpush1.msra.mxu0 0.0
          %4023 = vmatprep.subr.mxu0 0.0
          %4024 = vmatpush1.msra.mxu0 0.0
          %4025 = vmatprep.subr.mxu0 0.0
          %4026 = vmatpush1.msra.mxu0 0.0
          %4027 = vmatprep.subr.mxu0 0.0
          %4028 = vmatpush1.msra.mxu0 0.0
          %4029 = vmatprep.subr.mxu0 0.0
          %4030 = vmatpush1.msra.mxu0 0.0
          %4031 = vmatprep.subr.mxu0 0.0
          %4032 = vmatpush1.msra.mxu0 0.0
          %4033 = vmatprep.subr.mxu0 0.0
          %4034 = vmatpush1.msra.mxu0 0.0
          %4035 = vmatprep.subr.mxu0 0.0
          %4036 = vmatpush1.msra.mxu0 0.0
          %4037 = vmatprep.subr.mxu0 0.0
          %4038 = vmatpush1.msra.mxu0 0.0
          %4039 = vmatprep.subr.mxu0 0.0
          %4040 = vmatpush1.msra.mxu0 0.0
          %4041 = vmatprep.subr.mxu0 0.0
          %4042 = vmatpush1.msra.mxu0 0.0
          %4043 = vmatprep.subr.mxu0 0.0
          %4044 = vmatpush1.msra.mxu0 0.0
          %4045 = vmatprep.subr.mxu0 0.0
          %4046 = vmatpush1.msra.mxu0 0.0
          %4047 = vmatprep.subr.mxu0 0.0
          %4048 = vmatpush1.msra.mxu0 0.0
          %4049 = vmatprep.subr.mxu0 0.0
          %4050 = vmatpush1.msra.mxu0 0.0
          %4051 = vmatprep.subr.mxu0 0.0
          %4052 = vmatpush1.msra.mxu0 0.0
          %4053 = vmatprep.subr.mxu0 0.0
          %4054 = vmatpush1.msra.mxu0 0.0
          %4055 = vmatprep.subr.mxu0 0.0
          %4056 = vmatpush1.msra.mxu0 0.0
          %4057 = vmatprep.subr.mxu0 0.0
          %4058 = vmatpush1.msra.mxu0 0.0
          %4059 = vmatprep.subr.mxu0 0.0
          %4060 = vmatpush1.msra.mxu0 0.0
          %4061 = vmatprep.subr.mxu0 0.0
          %4062 = vmatpush1.msra.mxu0 0.0
          %4063 = vmatprep.subr.mxu0 0.0
          %4064 = vmatpush1.msra.mxu0 0.0
          %4065 = vmatprep.subr.mxu0 0.0
          %4066 = vmatpush1.msra.mxu0 0.0
          %4067 = vmatprep.subr.mxu0 0.0
          %4068 = vmatpush1.msra.mxu0 0.0
          %4069 = vmatprep.subr.mxu0 0.0
          %4070 = vmatpush1.msra.mxu0 0.0
          %4071 = vmatprep.subr.mxu0 0.0
          %4072 = vmatpush1.msra.mxu0 0.0
          %4073 = vmatprep.subr.mxu0 0.0
          %4074 = vmatpush1.msra.mxu0 0.0
          %4075 = vmatprep.subr.mxu0 0.0
          %4076 = vmatpush1.msra.mxu0 0.0
          %4077 = vmatprep.subr.mxu0 0.0
          %4078 = vmatpush1.msra.mxu0 0.0
          %4079 = vmatprep.subr.mxu0 0.0
          %4080 = vmatpush1.msra.mxu0 0.0
          %4081 = vmatprep.subr.mxu0 0.0
          %4082 = vmatpush1.msra.mxu0 0.0
          %4083 = vmatprep.mubr.f32.mxu0 0.0
          %4084 = vmatmul.mubr.f32.gmra.mrb[0].mxu0 %v4013
          %v4085 = vpop.f32.mrb[0].mxu0
          %v4086 = vadd.f32 0.0, %v4085
          %v4087 = vpop.f32.mrb[0].mxu0
          %4088 = vdwg.mxu0
          %v4089 = vadd.f32 %v4008, %v4086
          %v4090 = vld [vmem:[%s2282] sm:$0x1]
          %v4092 = vlaneseq
          %v4093 = vshrl.u32 %v4092, 7
          %v4094 = vsub.s32 0, %v4093
          %v4095 = vrot.slane %v4090, %v4094
          %v4097 = vadd.f32 %v4089, %v4095
          %v4098 = vmax.f32 %v4097, 0.0
          %v4099 = vld [vmem:[%s2287] sm:$0xff]
          %v4100 = vld [vmem:[%s2287 + $0x8] sm:$0xff]
          %v4101 = vld [vmem:[%s2287 + $0x10] sm:$0xff]
          %v4102 = vld [vmem:[%s2287 + $0x18] sm:$0xff]
          %v4103 = vld [vmem:[%s2287 + $0x20] sm:$0xff]
          %v4104 = vld [vmem:[%s2287 + $0x28] sm:$0xff]
          %v4105 = vld [vmem:[%s2287 + $0x30] sm:$0xff]
          %v4106 = vld [vmem:[%s2287 + $0x38] sm:$0xff]
          %v4107 = vld [vmem:[%s2287 + $0x40] sm:$0xff]
          %v4108 = vld [vmem:[%s2287 + $0x48] sm:$0xff]
          %v4109 = vld [vmem:[%s2287 + $0x50] sm:$0xff]
          %v4110 = vld [vmem:[%s2287 + $0x58] sm:$0xff]
          %v4111 = vld [vmem:[%s2287 + $0x60] sm:$0xff]
          %v4112 = vld [vmem:[%s2287 + $0x68] sm:$0xff]
          %v4113 = vld [vmem:[%s2287 + $0x70] sm:$0xff]
          %v4114 = vld [vmem:[%s2287 + $0x78] sm:$0xff]
          %4115 = vmatprep.subr.mxu0 0.0
          %4116 = vmatpush1.msra.mxu0 %v4099
          %4117 = vmatprep.subr.mxu0 0.0
          %4118 = vmatpush1.msra.mxu0 %v4100
          %4119 = vmatprep.subr.mxu0 0.0
          %4120 = vmatpush1.msra.mxu0 %v4101
          %4121 = vmatprep.subr.mxu0 0.0
          %4122 = vmatpush1.msra.mxu0 %v4102
          %4123 = vmatprep.subr.mxu0 0.0
          %4124 = vmatpush1.msra.mxu0 %v4103
          %4125 = vmatprep.subr.mxu0 0.0
          %4126 = vmatpush1.msra.mxu0 %v4104
          %4127 = vmatprep.subr.mxu0 0.0
          %4128 = vmatpush1.msra.mxu0 %v4105
          %4129 = vmatprep.subr.mxu0 0.0
          %4130 = vmatpush1.msra.mxu0 %v4106
          %4131 = vmatprep.subr.mxu0 0.0
          %4132 = vmatpush1.msra.mxu0 %v4107
          %4133 = vmatprep.subr.mxu0 0.0
          %4134 = vmatpush1.msra.mxu0 %v4108
          %4135 = vmatprep.subr.mxu0 0.0
          %4136 = vmatpush1.msra.mxu0 %v4109
          %4137 = vmatprep.subr.mxu0 0.0
          %4138 = vmatpush1.msra.mxu0 %v4110
          %4139 = vmatprep.subr.mxu0 0.0
          %4140 = vmatpush1.msra.mxu0 %v4111
          %4141 = vmatprep.subr.mxu0 0.0
          %4142 = vmatpush1.msra.mxu0 %v4112
          %4143 = vmatprep.subr.mxu0 0.0
          %4144 = vmatpush1.msra.mxu0 %v4113
          %4145 = vmatprep.subr.mxu0 0.0
          %4146 = vmatpush1.msra.mxu0 %v4114
          %4147 = vmatprep.subr.mxu0 0.0
          %4148 = vmatpush1.msra.mxu0 0.0
          %4149 = vmatprep.subr.mxu0 0.0
          %4150 = vmatpush1.msra.mxu0 0.0
          %4151 = vmatprep.subr.mxu0 0.0
          %4152 = vmatpush1.msra.mxu0 0.0
          %4153 = vmatprep.subr.mxu0 0.0
          %4154 = vmatpush1.msra.mxu0 0.0
          %4155 = vmatprep.subr.mxu0 0.0
          %4156 = vmatpush1.msra.mxu0 0.0
          %4157 = vmatprep.subr.mxu0 0.0
          %4158 = vmatpush1.msra.mxu0 0.0
          %4159 = vmatprep.subr.mxu0 0.0
          %4160 = vmatpush1.msra.mxu0 0.0
          %4161 = vmatprep.subr.mxu0 0.0
          %4162 = vmatpush1.msra.mxu0 0.0
          %4163 = vmatprep.subr.mxu0 0.0
          %4164 = vmatpush1.msra.mxu0 0.0
          %4165 = vmatprep.subr.mxu0 0.0
          %4166 = vmatpush1.msra.mxu0 0.0
          %4167 = vmatprep.subr.mxu0 0.0
          %4168 = vmatpush1.msra.mxu0 0.0
          %4169 = vmatprep.subr.mxu0 0.0
          %4170 = vmatpush1.msra.mxu0 0.0
          %4171 = vmatprep.subr.mxu0 0.0
          %4172 = vmatpush1.msra.mxu0 0.0
          %4173 = vmatprep.subr.mxu0 0.0
          %4174 = vmatpush1.msra.mxu0 0.0
          %4175 = vmatprep.subr.mxu0 0.0
          %4176 = vmatpush1.msra.mxu0 0.0
          %4177 = vmatprep.subr.mxu0 0.0
          %4178 = vmatpush1.msra.mxu0 0.0
          %4179 = vmatprep.mubr.f32.mxu0 0.0
          %4180 = vmatmul.mubr.f32.gmra.mrb[0].mxu0 %v4098
          %v4181 = vpop.f32.mrb[0].mxu0
          %v4182 = vadd.f32 0.0, %v4181
          %v4183 = vpop.f32.mrb[0].mxu0
          %4184 = vdwg.mxu0
          %vm4185 = vcmask 9216
          %4186 = vst.msk [vmem:[%s2292] sm:$0x3] %vm4185, %v4182
        $region90: #{multi_agent_cnn_critic.5} parent=77 // pred_fallthru
          _
        %p4187 = scmp.lt.s32.totalorder %s21, 1
        %s4188 = scalar_select %p4187, %s21, 1
        %s4189 = smul.addr %s4188, 2
        %s4190 = scalar_lea.vmem %s6, %s4189
        // Predicated region
        $region91: #{multi_agent_cnn_critic.5} parent=77 // pred_check
          %p4191 = pneg %p200
        $region92: #{multi_agent_cnn_critic.5} parent=77 // pred_check_branch
          %4193 = sbr.rel (%p4191) target = $region94
        $region93: #{multi_agent_cnn_critic.5} parent=77 // pred_region
          _
        $region94: #{multi_agent_cnn_critic.5} parent=77 // pred_fallthru
          _
      $region78: #{multi_agent_cnn_critic.5} parent=5 // pred_fallthru
        _
      %p4194 = scmp.le.s32.totalorder 2, %s12
      // Predicated region
      $region95: #{multi_agent_cnn_critic.5} parent=5 // pred_check
        %p4195 = pneg %p4194
      $region96: #{multi_agent_cnn_critic.5} parent=5 // pred_check_branch
        %4197 = sbr.rel (%p4195) target = $region98
      $region97: #{multi_agent_cnn_critic.5} parent=5 // pred_region
        %s4198 = ssub.s32 %s12, 2
        // Predicated region
        $region99: #{multi_agent_cnn_critic.5} parent=97 // pred_check
          %p4199 = pneg %p206
        $region100: #{multi_agent_cnn_critic.5} parent=97 // pred_check_branch
          %4201 = sbr.rel (%p4199) target = $region102
        $region101: #{multi_agent_cnn_critic.5} parent=97 // pred_region
          %p4202 = scmp.lt.s32.totalorder %s23, 1
          %s4203 = scalar_select %p4202, %s23, 1
          %s4204 = smul.addr %s4203, 2
          %s4205 = scalar_lea.vmem %s6, %s4204
        $region102: #{multi_agent_cnn_critic.5} parent=97 // pred_fallthru
          _
      $region98: #{multi_agent_cnn_critic.5} parent=5 // pred_fallthru
        _
    $region6: #{multi_agent_cnn_critic.5} parent=1 // loop_footer
      %s16 = sadd.s32 1, %s12
    $region7: #{multi_agent_cnn_critic.5} parent=1 // loop_footer_branch
      %11 = sbr.rel target = $region3
    $region8: #{multi_agent_cnn_critic.5} parent=1 // loop_exit
      _

</llo_original>
